<compile_context>
chip_gen: v6e
topology: v6e:2x2x1
jax: 0.10.0
libtpu: 0.0.40
codegen_flags: <defaults>
</compile_context>

<pallas_src>
import functools

import jax
import jax.numpy as jnp
from jax import lax
from jax.experimental import pallas as pl
from jax.experimental.pallas import tpu as pltpu


# Matmul operand dtype (weights and the activations fed to the MXU).
# Accumulation is always float32.  Use jnp.float32 for bit-exact f32 matmuls.
MATMUL_DTYPE = jnp.bfloat16


def _lrelu(x, slope):
    return jnp.where(x >= 0, x, slope * x)


def _srscnet_kernel(x_ref, gmask_ref, pmask_ref,
                    w0_ref, b0_ref, w1_ref, b1_ref, w2_ref, b2_ref,
                    uw1_ref, ub1_ref, uw2_ref, ub2_ref,
                    hw_ref, hb_ref, lw_ref, lb_ref, o_ref, *, width):
    """One batch element:
       conv_first + lrelu(0.1) + R x ResidualBlockShift
       + fused bilinear x2 + UpShiftMLP + lrelu(0.1) + conv_hr + lrelu(0.1)
       + conv_last + base.
       Layout: channels on sublanes, flat pixels p = h*W + w on lanes."""
    f32 = jnp.float32
    W = width
    P = x_ref.shape[2]              # H * W
    R = w1_ref.shape[0]

    # ---- masks (precomputed in the wrapper; converted to bool once) --------
    gm = gmask_ref[...] != 0.0                        # (F, 4) channel groups
    m_hp, m_hm = gm[:, 0:1], gm[:, 1:2]               # groups with dh = +1/-1
    m_wp, m_wm = gm[:, 2:3], gm[:, 3:4]               # groups with dw = +1/-1
    pm = pmask_ref[...] != 0.0                        # (4, P) pixel boundaries
    h_first, h_last = pm[0:1, :], pm[1:2, :]
    w_first, w_last = pm[2:3, :], pm[3:4, :]

    def lroll(t, s):
        # Circular roll of the pixel (lane) axis by a static amount -> XLU.
        return pltpu.roll(t, s % t.shape[1], axis=1)

    def croll_w(t, d):
        # torch.roll by d = +/-1 along image width on a (C, P) plane: a flat
        # lane roll everywhere except the wrapped column, fixed with one
        # select so the wrap stays inside each image row.
        if d == 1:
            return jnp.where(w_first, lroll(t, 1 - W), lroll(t, 1))
        return jnp.where(w_last, lroll(t, W - 1), lroll(t, -1))

    def shift8(t):
        # Shift8 on the coarse grid: per-channel-group circular shifts.
        # An H-shift by +/-1 is an exact lane roll by +/-W (wraps in h).
        t = jnp.where(m_hp, lroll(t, W), jnp.where(m_hm, lroll(t, -W), t))
        return jnp.where(m_wp, croll_w(t, 1),
                         jnp.where(m_wm, croll_w(t, -1), t))

    # edge-replicated neighbours for bilinear x2 (align_corners=False)
    prev_h = lambda t: jnp.where(h_first, t, lroll(t, W))
    next_h = lambda t: jnp.where(h_last, t, lroll(t, -W))
    prev_w = lambda t: jnp.where(w_first, t, lroll(t, 1))
    next_w = lambda t: jnp.where(w_last, t, lroll(t, -1))

    def up2x_planes(t):
        # PyTorch-exact bilinear x2 (align_corners=False): the constant
        # {0.25, 0.75} stencil with border clamp.  Returns 4 parity planes
        # with p[rp][cp][:, h*W + w] == upsampled[:, 2h+rp, 2w+cp].
        r0 = 0.25 * prev_h(t) + 0.75 * t          # even output rows
        r1 = 0.75 * t + 0.25 * next_h(t)          # odd output rows

        def colmix(b):
            return (0.25 * prev_w(b) + 0.75 * b,  # even output cols
                    0.75 * b + 0.25 * next_w(b))  # odd output cols

        p00, p01 = colmix(r0)
        p10, p11 = colmix(r1)
        return p00, p01, p10, p11

    def mm(w, act):
        # MXU matmul: operands in the weight storage dtype (bf16 by default),
        # float32 accumulation.
        return jnp.dot(w, act.astype(w.dtype), preferred_element_type=f32)

    # ---------------- trunk: conv_first + lrelu(0.1) + res blocks -----------
    x = x_ref[0]                                                   # (Cp, P)
    y = _lrelu(mm(w0_ref[...], x) + b0_ref[...], 0.1)              # (F, P)

    def res_body(r, y):
        # conv1 -> Shift8 -> ReLU -> conv2 -> + identity   (res_scale = 1)
        t = mm(w1_ref[r], y) + b1_ref[r]
        t = jnp.maximum(shift8(t), 0.0)
        t = mm(w2_ref[r], t) + b2_ref[r]
        return y + t

    y = lax.fori_loop(0, R, res_body, y)

    # ------ UpShiftMLP: fused bilinear x2 + conv / lrelu(0.02) / Shift8 / conv
    p00, p01, p10, p11 = up2x_planes(y)                            # 4 x (F, P)
    cat = jnp.concatenate([p00, p01, p10, p11], axis=1)            # (F, 4P)
    u = _lrelu(mm(uw1_ref[...], cat) + ub1_ref[...], 0.02)         # (F, 4P)

    # Shift8 on the fine (2H, 2W) grid expressed on parity planes: a +/-1
    # spatial shift flips the row/col parity and, for half the planes, adds a
    # +/-1 circular roll on the coarse grid.  Plane slices are lane-tile
    # aligned (width P), so no relayout.
    u00, u01 = u[:, 0 * P:1 * P], u[:, 1 * P:2 * P]
    u10, u11 = u[:, 2 * P:3 * P], u[:, 3 * P:4 * P]
    # vertical (dh) component
    n00 = jnp.where(m_hp, lroll(u10, W), jnp.where(m_hm, u10, u00))
    n10 = jnp.where(m_hm, lroll(u00, -W), jnp.where(m_hp, u00, u10))
    n01 = jnp.where(m_hp, lroll(u11, W), jnp.where(m_hm, u11, u01))
    n11 = jnp.where(m_hm, lroll(u01, -W), jnp.where(m_hp, u01, u11))
    # horizontal (dw) component
    o00 = jnp.where(m_wp, croll_w(n01, 1), jnp.where(m_wm, n01, n00))
    o01 = jnp.where(m_wm, croll_w(n00, -1), jnp.where(m_wp, n00, n01))
    o10 = jnp.where(m_wp, croll_w(n11, 1), jnp.where(m_wm, n11, n10))
    o11 = jnp.where(m_wm, croll_w(n10, -1), jnp.where(m_wp, n10, n11))
    v = jnp.concatenate([o00, o01, o10, o11], axis=1)              # (F, 4P)

    # second 1x1 conv of UpShiftMLP, lrelu(0.1) (pixel_shuffle is Identity),
    # conv_hr + lrelu(0.1), conv_last -- each ONE matmul over all 4 planes.
    v = mm(uw2_ref[...], v) + ub2_ref[...]
    v = _lrelu(v, 0.1)
    v = _lrelu(mm(hw_ref[...], v) + hb_ref[...], 0.1)
    out = mm(lw_ref[...], v) + lb_ref[...]                         # (Cp, 4P)

    # base = bilinear x2 of the (zero-padded) input, same parity-plane order.
    b00, b01, b10, b11 = up2x_planes(x)
    base = jnp.concatenate([b00, b01, b10, b11], axis=1)           # (Cp, 4P)

    o_ref[0] = out + base           # single lane-dense (Cp, 4P) store


def _ceil8(n):
    return max(8, ((n + 7) // 8) * 8)


@jax.jit
def srscnet_forward(x_nchw, params):
    """Public I/O is NCHW float32, matching the PyTorch module."""
    x = x_nchw.astype(jnp.float32)
    N, Cin, H, W = x.shape
    F = params["w0"].shape[0]
    R = params["w1"].shape[0]
    Cout = params["lw"].shape[0]
    assert Cin == Cout, "out += base requires conv_last channels == input channels"
    assert F % 8 == 0, "num_feat must be divisible by 8 (Shift8 groups)"
    Cp = _ceil8(Cin)
    P = H * W

    # Channels -> sublanes, pixels -> lanes: NCHW to (N, Cp, P) is a reshape
    # plus a zero-pad of the tiny channel dim to 8 sublanes (padded channels
    # stay exactly zero through the whole network and are dropped at the end).
    xp = jnp.pad(x.reshape(N, Cin, P), ((0, 0), (0, Cp - Cin), (0, 0)))

    wd = MATMUL_DTYPE
    w0 = jnp.pad(params["w0"], ((0, 0), (0, Cp - Cin))).astype(wd)    # (F, Cp)
    w1 = params["w1"].astype(wd)                                      # (R, F, F)
    w2 = params["w2"].astype(wd)
    uw1 = params["uw1"].astype(wd)
    uw2 = params["uw2"].astype(wd)
    hw = params["hw"].astype(wd)
    lw = jnp.pad(params["lw"], ((0, Cp - Cout), (0, 0))).astype(wd)   # (Cp, F)
    lb = jnp.pad(params["lb"], ((0, Cp - Cout), (0, 0)))              # (Cp, 1)

    # Shift8 channel-group masks: group k (size F//8) gets shift
    # [( 1,0), (-1,0), (0,1), (0,-1), (1,1), (1,-1), (-1,1), (-1,-1)][k].
    grp = jnp.arange(F, dtype=jnp.int32) // (F // 8)
    m_hp = (grp == 0) | (grp == 4) | (grp == 5)       # dh == +1
    m_hm = (grp == 1) | (grp == 6) | (grp == 7)       # dh == -1
    m_wp = (grp == 2) | (grp == 4) | (grp == 6)       # dw == +1
    m_wm = (grp == 3) | (grp == 5) | (grp == 7)       # dw == -1
    gmaskf = jnp.stack([m_hp, m_hm, m_wp, m_wm], axis=1).astype(jnp.float32)

    # Pixel boundary masks on the flat p = h*W + w lane axis.
    pix = jnp.arange(P, dtype=jnp.int32)
    pmaskf = jnp.stack([pix < W,                    # h == 0
                        pix >= P - W,               # h == H-1
                        (pix % W) == 0,             # w == 0
                        (pix % W) == W - 1],        # w == W-1
                       axis=0).astype(jnp.float32)

    c2 = lambda n: (0, 0)
    c3 = lambda n: (0, 0, 0)

    out = pl.pallas_call(
        functools.partial(_srscnet_kernel, width=W),
        out_shape=jax.ShapeDtypeStruct((N, Cp, 4 * P), jnp.float32),
        grid=(N,),
        in_specs=[
            pl.BlockSpec((1, Cp, P), lambda n: (n, 0, 0)),    # x
            pl.BlockSpec((F, 4), c2),                         # group masks
            pl.BlockSpec((4, P), c2),                         # pixel masks
            pl.BlockSpec((F, Cp), c2),                        # conv_first
            pl.BlockSpec((F, 1), c2),
            pl.BlockSpec((R, F, F), c3),                      # res conv1
            pl.BlockSpec((R, F, 1), c3),
            pl.BlockSpec((R, F, F), c3),                      # res conv2
            pl.BlockSpec((R, F, 1), c3),
            pl.BlockSpec((F, F), c2),                         # upconv conv1
            pl.BlockSpec((F, 1), c2),
            pl.BlockSpec((F, F), c2),                         # upconv conv2
            pl.BlockSpec((F, 1), c2),
            pl.BlockSpec((F, F), c2),                         # conv_hr
            pl.BlockSpec((F, 1), c2),
            pl.BlockSpec((Cp, F), c2),                        # conv_last
            pl.BlockSpec((Cp, 1), c2),
        ],
        out_specs=pl.BlockSpec((1, Cp, 4 * P), lambda n: (n, 0, 0)),
        compiler_params=pltpu.CompilerParams(
            dimension_semantics=("parallel",),
            vmem_limit_bytes=32 * 1024 * 1024,
        ),
    )(xp, gmaskf, pmaskf, w0, params["b0"], w1, params["b1"], w2, params["b2"],
      uw1, params["ub1"], uw2, params["ub2"], hw, params["hb"], lw, lb)

    # Drop padded channels and de-interleave the parity planes (tiny output;
    # pure reshape/transpose outside the kernel).
    out = out[:, :Cout, :].reshape(N, Cout, 2, 2, H, W)       # (n,c,rp,cp,h,w)
    out = jnp.transpose(out, (0, 1, 4, 2, 5, 3))              # (n,c,h,rp,w,cp)
    return out.reshape(N, Cout, 2 * H, 2 * W)                 # NCHW, 2x upscaled


def init_params(key, num_ch, num_feat, num_res, scale=0.1):
    """1x1-conv weights stored in torch (out, in) orientation; biases (out, 1)."""
    ks = jax.random.split(key, 14)
    n = lambda k, s: scale * jax.random.normal(k, s, jnp.float32)
    return {
        "w0": n(ks[0], (num_feat, num_ch)),                 # conv_first
        "b0": n(ks[1], (num_feat, 1)),
        "w1": n(ks[2], (num_res, num_feat, num_feat)),      # res conv1
        "b1": n(ks[3], (num_res, num_feat, 1)),
        "w2": n(ks[4], (num_res, num_feat, num_feat)),      # res conv2
        "b2": n(ks[5], (num_res, num_feat, 1)),
        "uw1": n(ks[6], (num_feat, num_feat)),              # upconv conv1
        "ub1": n(ks[7], (num_feat, 1)),
        "uw2": n(ks[8], (num_feat, num_feat)),              # upconv conv2
        "ub2": n(ks[9], (num_feat, 1)),
        "hw": n(ks[10], (num_feat, num_feat)),              # conv_hr
        "hb": n(ks[11], (num_feat, 1)),
        "lw": n(ks[12], (num_ch, num_feat)),                # conv_last
        "lb": n(ks[13], (num_ch, 1)),
    }


if __name__ == "__main__":
    # Small shapes consistent with the module: batch=2, num_ch=1, 16x16 input,
    # num_feat=32 (divisible by 8 for Shift8), num_res=2.
    N, num_ch, H, W = 2, 1, 16, 16
    num_feat, num_res = 32, 2

    key = jax.random.PRNGKey(0)
    k_x, k_p = jax.random.split(key)
    x = jax.random.normal(k_x, (N, num_ch, H, W), jnp.float32)
    params = init_params(k_p, num_ch, num_feat, num_res)

    out = srscnet_forward(x, params)
    out = jax.block_until_ready(out)

    assert out.shape == (N, num_ch, 2 * H, 2 * W), out.shape
    assert bool(jnp.all(jnp.isfinite(out)))
    print("KERNEL_OK")
</pallas_src>

<mosaic_0001>
module attributes {stable_mosaic.version = 11 : i64} {
  func.func @_srscnet_kernel(%arg0: i32, %arg1: memref<1x8x256xf32, #tpu.memory_space<vmem>>, %arg2: memref<32x4xf32, #tpu.memory_space<vmem>>, %arg3: memref<4x256xf32, #tpu.memory_space<vmem>>, %arg4: memref<32x8xbf16, #tpu.memory_space<vmem>>, %arg5: memref<32x1xf32, #tpu.memory_space<vmem>>, %arg6: memref<2x32x32xbf16, #tpu.memory_space<vmem>>, %arg7: memref<2x32x1xf32, #tpu.memory_space<vmem>>, %arg8: memref<2x32x32xbf16, #tpu.memory_space<vmem>>, %arg9: memref<2x32x1xf32, #tpu.memory_space<vmem>>, %arg10: memref<32x32xbf16, #tpu.memory_space<vmem>>, %arg11: memref<32x1xf32, #tpu.memory_space<vmem>>, %arg12: memref<32x32xbf16, #tpu.memory_space<vmem>>, %arg13: memref<32x1xf32, #tpu.memory_space<vmem>>, %arg14: memref<32x32xbf16, #tpu.memory_space<vmem>>, %arg15: memref<32x1xf32, #tpu.memory_space<vmem>>, %arg16: memref<8x32xbf16, #tpu.memory_space<vmem>>, %arg17: memref<8x1xf32, #tpu.memory_space<vmem>>, %arg18: memref<1x8x1024xf32, #tpu.memory_space<vmem>>) attributes {dimension_semantics = [#tpu.dimension_semantics<parallel>], iteration_bounds = array<i64: 2>, scalar_prefetch = 0 : i64, scratch_operands = 0 : i64, tpu.core_type = #tpu.core_type<tc>, window_params = [{transform_indices = @transform_0, window_bounds = array<i64: 1, 8, 256>}, {pipeline_mode = #tpu.pipeline_mode<synchronous>, transform_indices = @transform_1, window_bounds = array<i64: 32, 4>}, {pipeline_mode = #tpu.pipeline_mode<synchronous>, transform_indices = @transform_2, window_bounds = array<i64: 4, 256>}, {pipeline_mode = #tpu.pipeline_mode<synchronous>, transform_indices = @transform_3, window_bounds = array<i64: 32, 8>}, {pipeline_mode = #tpu.pipeline_mode<synchronous>, transform_indices = @transform_4, window_bounds = array<i64: 32, 1>}, {pipeline_mode = #tpu.pipeline_mode<synchronous>, transform_indices = @transform_5, window_bounds = array<i64: 2, 32, 32>}, {pipeline_mode = #tpu.pipeline_mode<synchronous>, transform_indices = @transform_6, window_bounds = array<i64: 2, 32, 1>}, {pipeline_mode = #tpu.pipeline_mode<synchronous>, transform_indices = @transform_7, window_bounds = array<i64: 2, 32, 32>}, {pipeline_mode = #tpu.pipeline_mode<synchronous>, transform_indices = @transform_8, window_bounds = array<i64: 2, 32, 1>}, {pipeline_mode = #tpu.pipeline_mode<synchronous>, transform_indices = @transform_9, window_bounds = array<i64: 32, 32>}, {pipeline_mode = #tpu.pipeline_mode<synchronous>, transform_indices = @transform_10, window_bounds = array<i64: 32, 1>}, {pipeline_mode = #tpu.pipeline_mode<synchronous>, transform_indices = @transform_11, window_bounds = array<i64: 32, 32>}, {pipeline_mode = #tpu.pipeline_mode<synchronous>, transform_indices = @transform_12, window_bounds = array<i64: 32, 1>}, {pipeline_mode = #tpu.pipeline_mode<synchronous>, transform_indices = @transform_13, window_bounds = array<i64: 32, 32>}, {pipeline_mode = #tpu.pipeline_mode<synchronous>, transform_indices = @transform_14, window_bounds = array<i64: 32, 1>}, {pipeline_mode = #tpu.pipeline_mode<synchronous>, transform_indices = @transform_15, window_bounds = array<i64: 8, 32>}, {pipeline_mode = #tpu.pipeline_mode<synchronous>, transform_indices = @transform_16, window_bounds = array<i64: 8, 1>}, {transform_indices = @transform_17, window_bounds = array<i64: 1, 8, 1024>}]} {
    %c0 = arith.constant 0 : index
    %c0_0 = arith.constant 0 : index
    %0 = vector.load %arg2[%c0, %c0_0] : memref<32x4xf32, #tpu.memory_space<vmem>>, vector<32x4xf32>
    %cst = arith.constant 0.000000e+00 : f32
    %1 = vector.broadcast %cst : f32 to vector<32x4xf32>
    %2 = arith.cmpf one, %0, %1 : vector<32x4xf32>
    %3 = vector.extract_strided_slice %2 {offsets = [0, 0], sizes = [32, 1], strides = [1, 1]} : vector<32x4xi1> to vector<32x1xi1>
    %4 = vector.extract_strided_slice %2 {offsets = [0, 1], sizes = [32, 1], strides = [1, 1]} : vector<32x4xi1> to vector<32x1xi1>
    %5 = vector.extract_strided_slice %2 {offsets = [0, 2], sizes = [32, 1], strides = [1, 1]} : vector<32x4xi1> to vector<32x1xi1>
    %6 = vector.extract_strided_slice %2 {offsets = [0, 3], sizes = [32, 1], strides = [1, 1]} : vector<32x4xi1> to vector<32x1xi1>
    %c0_1 = arith.constant 0 : index
    %c0_2 = arith.constant 0 : index
    %7 = vector.load %arg3[%c0_1, %c0_2] : memref<4x256xf32, #tpu.memory_space<vmem>>, vector<4x256xf32>
    %cst_3 = arith.constant 0.000000e+00 : f32
    %8 = vector.broadcast %cst_3 : f32 to vector<4x256xf32>
    %9 = arith.cmpf one, %7, %8 : vector<4x256xf32>
    %10 = vector.extract_strided_slice %9 {offsets = [0, 0], sizes = [1, 256], strides = [1, 1]} : vector<4x256xi1> to vector<1x256xi1>
    %11 = vector.extract_strided_slice %9 {offsets = [1, 0], sizes = [1, 256], strides = [1, 1]} : vector<4x256xi1> to vector<1x256xi1>
    %12 = vector.extract_strided_slice %9 {offsets = [2, 0], sizes = [1, 256], strides = [1, 1]} : vector<4x256xi1> to vector<1x256xi1>
    %13 = vector.extract_strided_slice %9 {offsets = [3, 0], sizes = [1, 256], strides = [1, 1]} : vector<4x256xi1> to vector<1x256xi1>
    %c0_4 = arith.constant 0 : index
    %c0_5 = arith.constant 0 : index
    %c0_6 = arith.constant 0 : index
    %14 = vector.load %arg1[%c0_4, %c0_5, %c0_6] : memref<1x8x256xf32, #tpu.memory_space<vmem>>, vector<1x8x256xf32>
    %15 = vector.shape_cast %14 : vector<1x8x256xf32> to vector<8x256xf32>
    %c0_7 = arith.constant 0 : index
    %c0_8 = arith.constant 0 : index
    %16 = vector.load %arg4[%c0_7, %c0_8] : memref<32x8xbf16, #tpu.memory_space<vmem>>, vector<32x8xbf16>
    %17 = arith.truncf %15 : vector<8x256xf32> to vector<8x256xbf16>
    %cst_9 = arith.constant dense<0.000000e+00> : vector<32x256xf32>
    %18 = tpu.matmul %16, %17, %cst_9 {dimension_numbers = #tpu.dot_dimension_numbers<[1], [0], [0], [1], [0, 0, 1, 1], [], []>} : vector<32x8xbf16>, vector<8x256xbf16>, vector<32x256xf32> -> vector<32x256xf32>
    %c0_10 = arith.constant 0 : index
    %c0_11 = arith.constant 0 : index
    %19 = vector.load %arg5[%c0_10, %c0_11] : memref<32x1xf32, #tpu.memory_space<vmem>>, vector<32x1xf32>
    %20 = vector.broadcast %19 : vector<32x1xf32> to vector<32x256xf32>
    %21 = arith.addf %18, %20 : vector<32x256xf32>
    %cst_12 = arith.constant 0.000000e+00 : f32
    %22 = vector.broadcast %cst_12 : f32 to vector<32x256xf32>
    %23 = arith.cmpf oge, %21, %22 : vector<32x256xf32>
    %cst_13 = arith.constant 1.000000e-01 : f32
    %24 = vector.broadcast %cst_13 : f32 to vector<32x256xf32>
    %25 = arith.mulf %24, %21 : vector<32x256xf32>
    %26 = arith.select %23, %21, %25 : vector<32x256xi1>, vector<32x256xf32>
    %c0_i32 = arith.constant 0 : i32
    %c2_i32 = arith.constant 2 : i32
    %27 = arith.addi %c0_i32, %c2_i32 : i32
    %c1_i32 = arith.constant 1 : i32
    %28 = scf.for %arg19 = %c0_i32 to %27 step %c1_i32 iter_args(%arg20 = %26) -> (vector<32x256xf32>)  : i32 {
      %259 = arith.index_cast %arg19 : i32 to index
      %c0_87 = arith.constant 0 : index
      %c0_88 = arith.constant 0 : index
      %260 = vector.load %arg6[%259, %c0_87, %c0_88] : memref<2x32x32xbf16, #tpu.memory_space<vmem>>, vector<1x32x32xbf16>
      %261 = vector.shape_cast %260 : vector<1x32x32xbf16> to vector<32x32xbf16>
      %262 = arith.truncf %arg20 : vector<32x256xf32> to vector<32x256xbf16>
      %cst_89 = arith.constant dense<0.000000e+00> : vector<32x256xf32>
      %263 = tpu.matmul %261, %262, %cst_89 {dimension_numbers = #tpu.dot_dimension_numbers<[1], [0], [0], [1], [0, 0, 1, 1], [], []>} : vector<32x32xbf16>, vector<32x256xbf16>, vector<32x256xf32> -> vector<32x256xf32>
      %264 = arith.index_cast %arg19 : i32 to index
      %c0_90 = arith.constant 0 : index
      %c0_91 = arith.constant 0 : index
      %265 = vector.load %arg7[%264, %c0_90, %c0_91] : memref<2x32x1xf32, #tpu.memory_space<vmem>>, vector<1x32x1xf32>
      %266 = vector.shape_cast %265 : vector<1x32x1xf32> to vector<32x1xf32>
      %267 = vector.broadcast %266 : vector<32x1xf32> to vector<32x256xf32>
      %268 = arith.addf %263, %267 : vector<32x256xf32>
      %c16_i32_92 = arith.constant 16 : i32
      %269 = tpu.dynamic_rotate %268 by %c16_i32_92 dim 1 : vector<32x256xf32>, i32 -> vector<32x256xf32>
      %c240_i32_93 = arith.constant 240 : i32
      %270 = tpu.dynamic_rotate %268 by %c240_i32_93 dim 1 : vector<32x256xf32>, i32 -> vector<32x256xf32>
      %271 = vector.shape_cast %4 : vector<32x1xi1> to vector<32x1xi1>
      %272 = vector.broadcast %271 : vector<32x1xi1> to vector<32x256xi1>
      %273 = arith.select %272, %270, %268 : vector<32x256xi1>, vector<32x256xf32>
      %274 = vector.shape_cast %3 : vector<32x1xi1> to vector<32x1xi1>
      %275 = vector.broadcast %274 : vector<32x1xi1> to vector<32x256xi1>
      %276 = arith.select %275, %269, %273 : vector<32x256xi1>, vector<32x256xf32>
      %c241_i32_94 = arith.constant 241 : i32
      %277 = tpu.dynamic_rotate %276 by %c241_i32_94 dim 1 : vector<32x256xf32>, i32 -> vector<32x256xf32>
      %c1_i32_95 = arith.constant 1 : i32
      %278 = tpu.dynamic_rotate %276 by %c1_i32_95 dim 1 : vector<32x256xf32>, i32 -> vector<32x256xf32>
      %279 = vector.shape_cast %12 : vector<1x256xi1> to vector<1x256xi1>
      %280 = vector.broadcast %279 : vector<1x256xi1> to vector<32x256xi1>
      %281 = arith.select %280, %277, %278 : vector<32x256xi1>, vector<32x256xf32>
      %c15_i32_96 = arith.constant 15 : i32
      %282 = tpu.dynamic_rotate %276 by %c15_i32_96 dim 1 : vector<32x256xf32>, i32 -> vector<32x256xf32>
      %c255_i32_97 = arith.constant 255 : i32
      %283 = tpu.dynamic_rotate %276 by %c255_i32_97 dim 1 : vector<32x256xf32>, i32 -> vector<32x256xf32>
      %284 = vector.shape_cast %13 : vector<1x256xi1> to vector<1x256xi1>
      %285 = vector.broadcast %284 : vector<1x256xi1> to vector<32x256xi1>
      %286 = arith.select %285, %282, %283 : vector<32x256xi1>, vector<32x256xf32>
      %287 = vector.shape_cast %6 : vector<32x1xi1> to vector<32x1xi1>
      %288 = vector.broadcast %287 : vector<32x1xi1> to vector<32x256xi1>
      %289 = arith.select %288, %286, %276 : vector<32x256xi1>, vector<32x256xf32>
      %290 = vector.shape_cast %5 : vector<32x1xi1> to vector<32x1xi1>
      %291 = vector.broadcast %290 : vector<32x1xi1> to vector<32x256xi1>
      %292 = arith.select %291, %281, %289 : vector<32x256xi1>, vector<32x256xf32>
      %cst_98 = arith.constant 0.000000e+00 : f32
      %293 = vector.broadcast %cst_98 : f32 to vector<32x256xf32>
      %294 = arith.maximumf %292, %293 : vector<32x256xf32>
      %295 = arith.index_cast %arg19 : i32 to index
      %c0_99 = arith.constant 0 : index
      %c0_100 = arith.constant 0 : index
      %296 = vector.load %arg8[%295, %c0_99, %c0_100] : memref<2x32x32xbf16, #tpu.memory_space<vmem>>, vector<1x32x32xbf16>
      %297 = vector.shape_cast %296 : vector<1x32x32xbf16> to vector<32x32xbf16>
      %298 = arith.truncf %294 : vector<32x256xf32> to vector<32x256xbf16>
      %cst_101 = arith.constant dense<0.000000e+00> : vector<32x256xf32>
      %299 = tpu.matmul %297, %298, %cst_101 {dimension_numbers = #tpu.dot_dimension_numbers<[1], [0], [0], [1], [0, 0, 1, 1], [], []>} : vector<32x32xbf16>, vector<32x256xbf16>, vector<32x256xf32> -> vector<32x256xf32>
      %300 = arith.index_cast %arg19 : i32 to index
      %c0_102 = arith.constant 0 : index
      %c0_103 = arith.constant 0 : index
      %301 = vector.load %arg9[%300, %c0_102, %c0_103] : memref<2x32x1xf32, #tpu.memory_space<vmem>>, vector<1x32x1xf32>
      %302 = vector.shape_cast %301 : vector<1x32x1xf32> to vector<32x1xf32>
      %303 = vector.broadcast %302 : vector<32x1xf32> to vector<32x256xf32>
      %304 = arith.addf %299, %303 : vector<32x256xf32>
      %305 = arith.addf %arg20, %304 : vector<32x256xf32>
      scf.yield %305 : vector<32x256xf32>
    }
    %c2_i32_14 = arith.constant 2 : i32
    %c16_i32 = arith.constant 16 : i32
    %29 = tpu.dynamic_rotate %28 by %c16_i32 dim 1 : vector<32x256xf32>, i32 -> vector<32x256xf32>
    %30 = vector.shape_cast %10 : vector<1x256xi1> to vector<1x256xi1>
    %31 = vector.broadcast %30 : vector<1x256xi1> to vector<32x256xi1>
    %32 = arith.select %31, %28, %29 : vector<32x256xi1>, vector<32x256xf32>
    %cst_15 = arith.constant 2.500000e-01 : f32
    %33 = vector.broadcast %cst_15 : f32 to vector<32x256xf32>
    %34 = arith.mulf %33, %32 : vector<32x256xf32>
    %cst_16 = arith.constant 7.500000e-01 : f32
    %35 = vector.broadcast %cst_16 : f32 to vector<32x256xf32>
    %36 = arith.mulf %35, %28 : vector<32x256xf32>
    %37 = arith.addf %34, %36 : vector<32x256xf32>
    %cst_17 = arith.constant 7.500000e-01 : f32
    %38 = vector.broadcast %cst_17 : f32 to vector<32x256xf32>
    %39 = arith.mulf %38, %28 : vector<32x256xf32>
    %c240_i32 = arith.constant 240 : i32
    %40 = tpu.dynamic_rotate %28 by %c240_i32 dim 1 : vector<32x256xf32>, i32 -> vector<32x256xf32>
    %41 = vector.shape_cast %11 : vector<1x256xi1> to vector<1x256xi1>
    %42 = vector.broadcast %41 : vector<1x256xi1> to vector<32x256xi1>
    %43 = arith.select %42, %28, %40 : vector<32x256xi1>, vector<32x256xf32>
    %cst_18 = arith.constant 2.500000e-01 : f32
    %44 = vector.broadcast %cst_18 : f32 to vector<32x256xf32>
    %45 = arith.mulf %44, %43 : vector<32x256xf32>
    %46 = arith.addf %39, %45 : vector<32x256xf32>
    %c1_i32_19 = arith.constant 1 : i32
    %47 = tpu.dynamic_rotate %37 by %c1_i32_19 dim 1 : vector<32x256xf32>, i32 -> vector<32x256xf32>
    %48 = vector.shape_cast %12 : vector<1x256xi1> to vector<1x256xi1>
    %49 = vector.broadcast %48 : vector<1x256xi1> to vector<32x256xi1>
    %50 = arith.select %49, %37, %47 : vector<32x256xi1>, vector<32x256xf32>
    %cst_20 = arith.constant 2.500000e-01 : f32
    %51 = vector.broadcast %cst_20 : f32 to vector<32x256xf32>
    %52 = arith.mulf %51, %50 : vector<32x256xf32>
    %cst_21 = arith.constant 7.500000e-01 : f32
    %53 = vector.broadcast %cst_21 : f32 to vector<32x256xf32>
    %54 = arith.mulf %53, %37 : vector<32x256xf32>
    %55 = arith.addf %52, %54 : vector<32x256xf32>
    %cst_22 = arith.constant 7.500000e-01 : f32
    %56 = vector.broadcast %cst_22 : f32 to vector<32x256xf32>
    %57 = arith.mulf %56, %37 : vector<32x256xf32>
    %c255_i32 = arith.constant 255 : i32
    %58 = tpu.dynamic_rotate %37 by %c255_i32 dim 1 : vector<32x256xf32>, i32 -> vector<32x256xf32>
    %59 = vector.shape_cast %13 : vector<1x256xi1> to vector<1x256xi1>
    %60 = vector.broadcast %59 : vector<1x256xi1> to vector<32x256xi1>
    %61 = arith.select %60, %37, %58 : vector<32x256xi1>, vector<32x256xf32>
    %cst_23 = arith.constant 2.500000e-01 : f32
    %62 = vector.broadcast %cst_23 : f32 to vector<32x256xf32>
    %63 = arith.mulf %62, %61 : vector<32x256xf32>
    %64 = arith.addf %57, %63 : vector<32x256xf32>
    %c1_i32_24 = arith.constant 1 : i32
    %65 = tpu.dynamic_rotate %46 by %c1_i32_24 dim 1 : vector<32x256xf32>, i32 -> vector<32x256xf32>
    %66 = vector.shape_cast %12 : vector<1x256xi1> to vector<1x256xi1>
    %67 = vector.broadcast %66 : vector<1x256xi1> to vector<32x256xi1>
    %68 = arith.select %67, %46, %65 : vector<32x256xi1>, vector<32x256xf32>
    %cst_25 = arith.constant 2.500000e-01 : f32
    %69 = vector.broadcast %cst_25 : f32 to vector<32x256xf32>
    %70 = arith.mulf %69, %68 : vector<32x256xf32>
    %cst_26 = arith.constant 7.500000e-01 : f32
    %71 = vector.broadcast %cst_26 : f32 to vector<32x256xf32>
    %72 = arith.mulf %71, %46 : vector<32x256xf32>
    %73 = arith.addf %70, %72 : vector<32x256xf32>
    %cst_27 = arith.constant 7.500000e-01 : f32
    %74 = vector.broadcast %cst_27 : f32 to vector<32x256xf32>
    %75 = arith.mulf %74, %46 : vector<32x256xf32>
    %c255_i32_28 = arith.constant 255 : i32
    %76 = tpu.dynamic_rotate %46 by %c255_i32_28 dim 1 : vector<32x256xf32>, i32 -> vector<32x256xf32>
    %77 = vector.shape_cast %13 : vector<1x256xi1> to vector<1x256xi1>
    %78 = vector.broadcast %77 : vector<1x256xi1> to vector<32x256xi1>
    %79 = arith.select %78, %46, %76 : vector<32x256xi1>, vector<32x256xf32>
    %cst_29 = arith.constant 2.500000e-01 : f32
    %80 = vector.broadcast %cst_29 : f32 to vector<32x256xf32>
    %81 = arith.mulf %80, %79 : vector<32x256xf32>
    %82 = arith.addf %75, %81 : vector<32x256xf32>
    %83 = tpu.concatenate %55, %64, %73, %82 in 1 : vector<32x256xf32>, vector<32x256xf32>, vector<32x256xf32>, vector<32x256xf32> -> vector<32x1024xf32>
    %c0_30 = arith.constant 0 : index
    %c0_31 = arith.constant 0 : index
    %84 = vector.load %arg10[%c0_30, %c0_31] : memref<32x32xbf16, #tpu.memory_space<vmem>>, vector<32x32xbf16>
    %85 = arith.truncf %83 : vector<32x1024xf32> to vector<32x1024xbf16>
    %cst_32 = arith.constant dense<0.000000e+00> : vector<32x1024xf32>
    %86 = tpu.matmul %84, %85, %cst_32 {dimension_numbers = #tpu.dot_dimension_numbers<[1], [0], [0], [1], [0, 0, 1, 1], [], []>} : vector<32x32xbf16>, vector<32x1024xbf16>, vector<32x1024xf32> -> vector<32x1024xf32>
    %c0_33 = arith.constant 0 : index
    %c0_34 = arith.constant 0 : index
    %87 = vector.load %arg11[%c0_33, %c0_34] : memref<32x1xf32, #tpu.memory_space<vmem>>, vector<32x1xf32>
    %88 = vector.broadcast %87 : vector<32x1xf32> to vector<32x1024xf32>
    %89 = arith.addf %86, %88 : vector<32x1024xf32>
    %cst_35 = arith.constant 0.000000e+00 : f32
    %90 = vector.broadcast %cst_35 : f32 to vector<32x1024xf32>
    %91 = arith.cmpf oge, %89, %90 : vector<32x1024xf32>
    %cst_36 = arith.constant 2.000000e-02 : f32
    %92 = vector.broadcast %cst_36 : f32 to vector<32x1024xf32>
    %93 = arith.mulf %92, %89 : vector<32x1024xf32>
    %94 = arith.select %91, %89, %93 : vector<32x1024xi1>, vector<32x1024xf32>
    %95 = vector.extract_strided_slice %94 {offsets = [0, 0], sizes = [32, 256], strides = [1, 1]} : vector<32x1024xf32> to vector<32x256xf32>
    %96 = vector.extract_strided_slice %94 {offsets = [0, 256], sizes = [32, 256], strides = [1, 1]} : vector<32x1024xf32> to vector<32x256xf32>
    %97 = vector.extract_strided_slice %94 {offsets = [0, 512], sizes = [32, 256], strides = [1, 1]} : vector<32x1024xf32> to vector<32x256xf32>
    %98 = vector.extract_strided_slice %94 {offsets = [0, 768], sizes = [32, 256], strides = [1, 1]} : vector<32x1024xf32> to vector<32x256xf32>
    %c16_i32_37 = arith.constant 16 : i32
    %99 = tpu.dynamic_rotate %97 by %c16_i32_37 dim 1 : vector<32x256xf32>, i32 -> vector<32x256xf32>
    %100 = vector.shape_cast %4 : vector<32x1xi1> to vector<32x1xi1>
    %101 = vector.broadcast %100 : vector<32x1xi1> to vector<32x256xi1>
    %102 = arith.select %101, %97, %95 : vector<32x256xi1>, vector<32x256xf32>
    %103 = vector.shape_cast %3 : vector<32x1xi1> to vector<32x1xi1>
    %104 = vector.broadcast %103 : vector<32x1xi1> to vector<32x256xi1>
    %105 = arith.select %104, %99, %102 : vector<32x256xi1>, vector<32x256xf32>
    %c240_i32_38 = arith.constant 240 : i32
    %106 = tpu.dynamic_rotate %95 by %c240_i32_38 dim 1 : vector<32x256xf32>, i32 -> vector<32x256xf32>
    %107 = vector.shape_cast %3 : vector<32x1xi1> to vector<32x1xi1>
    %108 = vector.broadcast %107 : vector<32x1xi1> to vector<32x256xi1>
    %109 = arith.select %108, %95, %97 : vector<32x256xi1>, vector<32x256xf32>
    %110 = vector.shape_cast %4 : vector<32x1xi1> to vector<32x1xi1>
    %111 = vector.broadcast %110 : vector<32x1xi1> to vector<32x256xi1>
    %112 = arith.select %111, %106, %109 : vector<32x256xi1>, vector<32x256xf32>
    %c16_i32_39 = arith.constant 16 : i32
    %113 = tpu.dynamic_rotate %98 by %c16_i32_39 dim 1 : vector<32x256xf32>, i32 -> vector<32x256xf32>
    %114 = vector.shape_cast %4 : vector<32x1xi1> to vector<32x1xi1>
    %115 = vector.broadcast %114 : vector<32x1xi1> to vector<32x256xi1>
    %116 = arith.select %115, %98, %96 : vector<32x256xi1>, vector<32x256xf32>
    %117 = vector.shape_cast %3 : vector<32x1xi1> to vector<32x1xi1>
    %118 = vector.broadcast %117 : vector<32x1xi1> to vector<32x256xi1>
    %119 = arith.select %118, %113, %116 : vector<32x256xi1>, vector<32x256xf32>
    %c240_i32_40 = arith.constant 240 : i32
    %120 = tpu.dynamic_rotate %96 by %c240_i32_40 dim 1 : vector<32x256xf32>, i32 -> vector<32x256xf32>
    %121 = vector.shape_cast %3 : vector<32x1xi1> to vector<32x1xi1>
    %122 = vector.broadcast %121 : vector<32x1xi1> to vector<32x256xi1>
    %123 = arith.select %122, %96, %98 : vector<32x256xi1>, vector<32x256xf32>
    %124 = vector.shape_cast %4 : vector<32x1xi1> to vector<32x1xi1>
    %125 = vector.broadcast %124 : vector<32x1xi1> to vector<32x256xi1>
    %126 = arith.select %125, %120, %123 : vector<32x256xi1>, vector<32x256xf32>
    %c241_i32 = arith.constant 241 : i32
    %127 = tpu.dynamic_rotate %119 by %c241_i32 dim 1 : vector<32x256xf32>, i32 -> vector<32x256xf32>
    %c1_i32_41 = arith.constant 1 : i32
    %128 = tpu.dynamic_rotate %119 by %c1_i32_41 dim 1 : vector<32x256xf32>, i32 -> vector<32x256xf32>
    %129 = vector.shape_cast %12 : vector<1x256xi1> to vector<1x256xi1>
    %130 = vector.broadcast %129 : vector<1x256xi1> to vector<32x256xi1>
    %131 = arith.select %130, %127, %128 : vector<32x256xi1>, vector<32x256xf32>
    %132 = vector.shape_cast %6 : vector<32x1xi1> to vector<32x1xi1>
    %133 = vector.broadcast %132 : vector<32x1xi1> to vector<32x256xi1>
    %134 = arith.select %133, %119, %105 : vector<32x256xi1>, vector<32x256xf32>
    %135 = vector.shape_cast %5 : vector<32x1xi1> to vector<32x1xi1>
    %136 = vector.broadcast %135 : vector<32x1xi1> to vector<32x256xi1>
    %137 = arith.select %136, %131, %134 : vector<32x256xi1>, vector<32x256xf32>
    %c15_i32 = arith.constant 15 : i32
    %138 = tpu.dynamic_rotate %105 by %c15_i32 dim 1 : vector<32x256xf32>, i32 -> vector<32x256xf32>
    %c255_i32_42 = arith.constant 255 : i32
    %139 = tpu.dynamic_rotate %105 by %c255_i32_42 dim 1 : vector<32x256xf32>, i32 -> vector<32x256xf32>
    %140 = vector.shape_cast %13 : vector<1x256xi1> to vector<1x256xi1>
    %141 = vector.broadcast %140 : vector<1x256xi1> to vector<32x256xi1>
    %142 = arith.select %141, %138, %139 : vector<32x256xi1>, vector<32x256xf32>
    %143 = vector.shape_cast %5 : vector<32x1xi1> to vector<32x1xi1>
    %144 = vector.broadcast %143 : vector<32x1xi1> to vector<32x256xi1>
    %145 = arith.select %144, %105, %119 : vector<32x256xi1>, vector<32x256xf32>
    %146 = vector.shape_cast %6 : vector<32x1xi1> to vector<32x1xi1>
    %147 = vector.broadcast %146 : vector<32x1xi1> to vector<32x256xi1>
    %148 = arith.select %147, %142, %145 : vector<32x256xi1>, vector<32x256xf32>
    %c241_i32_43 = arith.constant 241 : i32
    %149 = tpu.dynamic_rotate %126 by %c241_i32_43 dim 1 : vector<32x256xf32>, i32 -> vector<32x256xf32>
    %c1_i32_44 = arith.constant 1 : i32
    %150 = tpu.dynamic_rotate %126 by %c1_i32_44 dim 1 : vector<32x256xf32>, i32 -> vector<32x256xf32>
    %151 = vector.shape_cast %12 : vector<1x256xi1> to vector<1x256xi1>
    %152 = vector.broadcast %151 : vector<1x256xi1> to vector<32x256xi1>
    %153 = arith.select %152, %149, %150 : vector<32x256xi1>, vector<32x256xf32>
    %154 = vector.shape_cast %6 : vector<32x1xi1> to vector<32x1xi1>
    %155 = vector.broadcast %154 : vector<32x1xi1> to vector<32x256xi1>
    %156 = arith.select %155, %126, %112 : vector<32x256xi1>, vector<32x256xf32>
    %157 = vector.shape_cast %5 : vector<32x1xi1> to vector<32x1xi1>
    %158 = vector.broadcast %157 : vector<32x1xi1> to vector<32x256xi1>
    %159 = arith.select %158, %153, %156 : vector<32x256xi1>, vector<32x256xf32>
    %c15_i32_45 = arith.constant 15 : i32
    %160 = tpu.dynamic_rotate %112 by %c15_i32_45 dim 1 : vector<32x256xf32>, i32 -> vector<32x256xf32>
    %c255_i32_46 = arith.constant 255 : i32
    %161 = tpu.dynamic_rotate %112 by %c255_i32_46 dim 1 : vector<32x256xf32>, i32 -> vector<32x256xf32>
    %162 = vector.shape_cast %13 : vector<1x256xi1> to vector<1x256xi1>
    %163 = vector.broadcast %162 : vector<1x256xi1> to vector<32x256xi1>
    %164 = arith.select %163, %160, %161 : vector<32x256xi1>, vector<32x256xf32>
    %165 = vector.shape_cast %5 : vector<32x1xi1> to vector<32x1xi1>
    %166 = vector.broadcast %165 : vector<32x1xi1> to vector<32x256xi1>
    %167 = arith.select %166, %112, %126 : vector<32x256xi1>, vector<32x256xf32>
    %168 = vector.shape_cast %6 : vector<32x1xi1> to vector<32x1xi1>
    %169 = vector.broadcast %168 : vector<32x1xi1> to vector<32x256xi1>
    %170 = arith.select %169, %164, %167 : vector<32x256xi1>, vector<32x256xf32>
    %171 = tpu.concatenate %137, %148, %159, %170 in 1 : vector<32x256xf32>, vector<32x256xf32>, vector<32x256xf32>, vector<32x256xf32> -> vector<32x1024xf32>
    %c0_47 = arith.constant 0 : index
    %c0_48 = arith.constant 0 : index
    %172 = vector.load %arg12[%c0_47, %c0_48] : memref<32x32xbf16, #tpu.memory_space<vmem>>, vector<32x32xbf16>
    %173 = arith.truncf %171 : vector<32x1024xf32> to vector<32x1024xbf16>
    %cst_49 = arith.constant dense<0.000000e+00> : vector<32x1024xf32>
    %174 = tpu.matmul %172, %173, %cst_49 {dimension_numbers = #tpu.dot_dimension_numbers<[1], [0], [0], [1], [0, 0, 1, 1], [], []>} : vector<32x32xbf16>, vector<32x1024xbf16>, vector<32x1024xf32> -> vector<32x1024xf32>
    %c0_50 = arith.constant 0 : index
    %c0_51 = arith.constant 0 : index
    %175 = vector.load %arg13[%c0_50, %c0_51] : memref<32x1xf32, #tpu.memory_space<vmem>>, vector<32x1xf32>
    %176 = vector.broadcast %175 : vector<32x1xf32> to vector<32x1024xf32>
    %177 = arith.addf %174, %176 : vector<32x1024xf32>
    %cst_52 = arith.constant 0.000000e+00 : f32
    %178 = vector.broadcast %cst_52 : f32 to vector<32x1024xf32>
    %179 = arith.cmpf oge, %177, %178 : vector<32x1024xf32>
    %cst_53 = arith.constant 1.000000e-01 : f32
    %180 = vector.broadcast %cst_53 : f32 to vector<32x1024xf32>
    %181 = arith.mulf %180, %177 : vector<32x1024xf32>
    %182 = arith.select %179, %177, %181 : vector<32x1024xi1>, vector<32x1024xf32>
    %c0_54 = arith.constant 0 : index
    %c0_55 = arith.constant 0 : index
    %183 = vector.load %arg14[%c0_54, %c0_55] : memref<32x32xbf16, #tpu.memory_space<vmem>>, vector<32x32xbf16>
    %184 = arith.truncf %182 : vector<32x1024xf32> to vector<32x1024xbf16>
    %cst_56 = arith.constant dense<0.000000e+00> : vector<32x1024xf32>
    %185 = tpu.matmul %183, %184, %cst_56 {dimension_numbers = #tpu.dot_dimension_numbers<[1], [0], [0], [1], [0, 0, 1, 1], [], []>} : vector<32x32xbf16>, vector<32x1024xbf16>, vector<32x1024xf32> -> vector<32x1024xf32>
    %c0_57 = arith.constant 0 : index
    %c0_58 = arith.constant 0 : index
    %186 = vector.load %arg15[%c0_57, %c0_58] : memref<32x1xf32, #tpu.memory_space<vmem>>, vector<32x1xf32>
    %187 = vector.broadcast %186 : vector<32x1xf32> to vector<32x1024xf32>
    %188 = arith.addf %185, %187 : vector<32x1024xf32>
    %cst_59 = arith.constant 0.000000e+00 : f32
    %189 = vector.broadcast %cst_59 : f32 to vector<32x1024xf32>
    %190 = arith.cmpf oge, %188, %189 : vector<32x1024xf32>
    %cst_60 = arith.constant 1.000000e-01 : f32
    %191 = vector.broadcast %cst_60 : f32 to vector<32x1024xf32>
    %192 = arith.mulf %191, %188 : vector<32x1024xf32>
    %193 = arith.select %190, %188, %192 : vector<32x1024xi1>, vector<32x1024xf32>
    %c0_61 = arith.constant 0 : index
    %c0_62 = arith.constant 0 : index
    %194 = vector.load %arg16[%c0_61, %c0_62] : memref<8x32xbf16, #tpu.memory_space<vmem>>, vector<8x32xbf16>
    %195 = arith.truncf %193 : vector<32x1024xf32> to vector<32x1024xbf16>
    %cst_63 = arith.constant dense<0.000000e+00> : vector<8x1024xf32>
    %196 = tpu.matmul %194, %195, %cst_63 {dimension_numbers = #tpu.dot_dimension_numbers<[1], [0], [0], [1], [0, 0, 1, 1], [], []>} : vector<8x32xbf16>, vector<32x1024xbf16>, vector<8x1024xf32> -> vector<8x1024xf32>
    %c0_64 = arith.constant 0 : index
    %c0_65 = arith.constant 0 : index
    %197 = vector.load %arg17[%c0_64, %c0_65] : memref<8x1xf32, #tpu.memory_space<vmem>>, vector<8x1xf32>
    %198 = vector.broadcast %197 : vector<8x1xf32> to vector<8x1024xf32>
    %199 = arith.addf %196, %198 : vector<8x1024xf32>
    %c16_i32_66 = arith.constant 16 : i32
    %200 = tpu.dynamic_rotate %15 by %c16_i32_66 dim 1 : vector<8x256xf32>, i32 -> vector<8x256xf32>
    %201 = vector.shape_cast %10 : vector<1x256xi1> to vector<1x256xi1>
    %202 = vector.broadcast %201 : vector<1x256xi1> to vector<8x256xi1>
    %203 = arith.select %202, %15, %200 : vector<8x256xi1>, vector<8x256xf32>
    %cst_67 = arith.constant 2.500000e-01 : f32
    %204 = vector.broadcast %cst_67 : f32 to vector<8x256xf32>
    %205 = arith.mulf %204, %203 : vector<8x256xf32>
    %cst_68 = arith.constant 7.500000e-01 : f32
    %206 = vector.broadcast %cst_68 : f32 to vector<8x256xf32>
    %207 = arith.mulf %206, %15 : vector<8x256xf32>
    %208 = arith.addf %205, %207 : vector<8x256xf32>
    %cst_69 = arith.constant 7.500000e-01 : f32
    %209 = vector.broadcast %cst_69 : f32 to vector<8x256xf32>
    %210 = arith.mulf %209, %15 : vector<8x256xf32>
    %c240_i32_70 = arith.constant 240 : i32
    %211 = tpu.dynamic_rotate %15 by %c240_i32_70 dim 1 : vector<8x256xf32>, i32 -> vector<8x256xf32>
    %212 = vector.shape_cast %11 : vector<1x256xi1> to vector<1x256xi1>
    %213 = vector.broadcast %212 : vector<1x256xi1> to vector<8x256xi1>
    %214 = arith.select %213, %15, %211 : vector<8x256xi1>, vector<8x256xf32>
    %cst_71 = arith.constant 2.500000e-01 : f32
    %215 = vector.broadcast %cst_71 : f32 to vector<8x256xf32>
    %216 = arith.mulf %215, %214 : vector<8x256xf32>
    %217 = arith.addf %210, %216 : vector<8x256xf32>
    %c1_i32_72 = arith.constant 1 : i32
    %218 = tpu.dynamic_rotate %208 by %c1_i32_72 dim 1 : vector<8x256xf32>, i32 -> vector<8x256xf32>
    %219 = vector.shape_cast %12 : vector<1x256xi1> to vector<1x256xi1>
    %220 = vector.broadcast %219 : vector<1x256xi1> to vector<8x256xi1>
    %221 = arith.select %220, %208, %218 : vector<8x256xi1>, vector<8x256xf32>
    %cst_73 = arith.constant 2.500000e-01 : f32
    %222 = vector.broadcast %cst_73 : f32 to vector<8x256xf32>
    %223 = arith.mulf %222, %221 : vector<8x256xf32>
    %cst_74 = arith.constant 7.500000e-01 : f32
    %224 = vector.broadcast %cst_74 : f32 to vector<8x256xf32>
    %225 = arith.mulf %224, %208 : vector<8x256xf32>
    %226 = arith.addf %223, %225 : vector<8x256xf32>
    %cst_75 = arith.constant 7.500000e-01 : f32
    %227 = vector.broadcast %cst_75 : f32 to vector<8x256xf32>
    %228 = arith.mulf %227, %208 : vector<8x256xf32>
    %c255_i32_76 = arith.constant 255 : i32
    %229 = tpu.dynamic_rotate %208 by %c255_i32_76 dim 1 : vector<8x256xf32>, i32 -> vector<8x256xf32>
    %230 = vector.shape_cast %13 : vector<1x256xi1> to vector<1x256xi1>
    %231 = vector.broadcast %230 : vector<1x256xi1> to vector<8x256xi1>
    %232 = arith.select %231, %208, %229 : vector<8x256xi1>, vector<8x256xf32>
    %cst_77 = arith.constant 2.500000e-01 : f32
    %233 = vector.broadcast %cst_77 : f32 to vector<8x256xf32>
    %234 = arith.mulf %233, %232 : vector<8x256xf32>
    %235 = arith.addf %228, %234 : vector<8x256xf32>
    %c1_i32_78 = arith.constant 1 : i32
    %236 = tpu.dynamic_rotate %217 by %c1_i32_78 dim 1 : vector<8x256xf32>, i32 -> vector<8x256xf32>
    %237 = vector.shape_cast %12 : vector<1x256xi1> to vector<1x256xi1>
    %238 = vector.broadcast %237 : vector<1x256xi1> to vector<8x256xi1>
    %239 = arith.select %238, %217, %236 : vector<8x256xi1>, vector<8x256xf32>
    %cst_79 = arith.constant 2.500000e-01 : f32
    %240 = vector.broadcast %cst_79 : f32 to vector<8x256xf32>
    %241 = arith.mulf %240, %239 : vector<8x256xf32>
    %cst_80 = arith.constant 7.500000e-01 : f32
    %242 = vector.broadcast %cst_80 : f32 to vector<8x256xf32>
    %243 = arith.mulf %242, %217 : vector<8x256xf32>
    %244 = arith.addf %241, %243 : vector<8x256xf32>
    %cst_81 = arith.constant 7.500000e-01 : f32
    %245 = vector.broadcast %cst_81 : f32 to vector<8x256xf32>
    %246 = arith.mulf %245, %217 : vector<8x256xf32>
    %c255_i32_82 = arith.constant 255 : i32
    %247 = tpu.dynamic_rotate %217 by %c255_i32_82 dim 1 : vector<8x256xf32>, i32 -> vector<8x256xf32>
    %248 = vector.shape_cast %13 : vector<1x256xi1> to vector<1x256xi1>
    %249 = vector.broadcast %248 : vector<1x256xi1> to vector<8x256xi1>
    %250 = arith.select %249, %217, %247 : vector<8x256xi1>, vector<8x256xf32>
    %cst_83 = arith.constant 2.500000e-01 : f32
    %251 = vector.broadcast %cst_83 : f32 to vector<8x256xf32>
    %252 = arith.mulf %251, %250 : vector<8x256xf32>
    %253 = arith.addf %246, %252 : vector<8x256xf32>
    %254 = tpu.concatenate %226, %235, %244, %253 in 1 : vector<8x256xf32>, vector<8x256xf32>, vector<8x256xf32>, vector<8x256xf32> -> vector<8x1024xf32>
    %255 = arith.addf %199, %254 : vector<8x1024xf32>
    %c0_84 = arith.constant 0 : index
    %c0_85 = arith.constant 0 : index
    %c0_86 = arith.constant 0 : index
    %256 = vector.load %arg18[%c0_84, %c0_85, %c0_86] : memref<1x8x1024xf32, #tpu.memory_space<vmem>>, vector<1x8x1024xf32>
    %257 = vector.shape_cast %256 : vector<1x8x1024xf32> to vector<8x1024xf32>
    %258 = vector.shape_cast %255 : vector<8x1024xf32> to vector<1x8x1024xf32>
    tpu.vector_store %arg18[%c0_84, %c0_85, %c0_86], %258 {strides = array<i32>} : memref<1x8x1024xf32, #tpu.memory_space<vmem>>, vector<1x8x1024xf32>,
    return
  }
  func.func @transform_0(%arg0: i32) -> (i32, i32, i32) {
    %c0_i32 = arith.constant 0 : i32
    %c0_i32_0 = arith.constant 0 : i32
    %c0_i32_1 = arith.constant 0 : i32
    return %arg0, %c0_i32, %c0_i32_0 : i32, i32, i32
  }
  func.func @transform_1(%arg0: i32) -> (i32, i32) {
    %c0_i32 = arith.constant 0 : i32
    %c0_i32_0 = arith.constant 0 : i32
    %c0_i32_1 = arith.constant 0 : i32
    return %c0_i32, %c0_i32_0 : i32, i32
  }
  func.func @transform_2(%arg0: i32) -> (i32, i32) {
    %c0_i32 = arith.constant 0 : i32
    %c0_i32_0 = arith.constant 0 : i32
    %c0_i32_1 = arith.constant 0 : i32
    return %c0_i32, %c0_i32_0 : i32, i32
  }
  func.func @transform_3(%arg0: i32) -> (i32, i32) {
    %c0_i32 = arith.constant 0 : i32
    %c0_i32_0 = arith.constant 0 : i32
    %c0_i32_1 = arith.constant 0 : i32
    return %c0_i32, %c0_i32_0 : i32, i32
  }
  func.func @transform_4(%arg0: i32) -> (i32, i32) {
    %c0_i32 = arith.constant 0 : i32
    %c0_i32_0 = arith.constant 0 : i32
    %c0_i32_1 = arith.constant 0 : i32
    return %c0_i32, %c0_i32_0 : i32, i32
  }
  func.func @transform_5(%arg0: i32) -> (i32, i32, i32) {
    %c0_i32 = arith.constant 0 : i32
    %c0_i32_0 = arith.constant 0 : i32
    %c0_i32_1 = arith.constant 0 : i32
    %c0_i32_2 = arith.constant 0 : i32
    return %c0_i32, %c0_i32_0, %c0_i32_1 : i32, i32, i32
  }
  func.func @transform_6(%arg0: i32) -> (i32, i32, i32) {
    %c0_i32 = arith.constant 0 : i32
    %c0_i32_0 = arith.constant 0 : i32
    %c0_i32_1 = arith.constant 0 : i32
    %c0_i32_2 = arith.constant 0 : i32
    return %c0_i32, %c0_i32_0, %c0_i32_1 : i32, i32, i32
  }
  func.func @transform_7(%arg0: i32) -> (i32, i32, i32) {
    %c0_i32 = arith.constant 0 : i32
    %c0_i32_0 = arith.constant 0 : i32
    %c0_i32_1 = arith.constant 0 : i32
    %c0_i32_2 = arith.constant 0 : i32
    return %c0_i32, %c0_i32_0, %c0_i32_1 : i32, i32, i32
  }
  func.func @transform_8(%arg0: i32) -> (i32, i32, i32) {
    %c0_i32 = arith.constant 0 : i32
    %c0_i32_0 = arith.constant 0 : i32
    %c0_i32_1 = arith.constant 0 : i32
    %c0_i32_2 = arith.constant 0 : i32
    return %c0_i32, %c0_i32_0, %c0_i32_1 : i32, i32, i32
  }
  func.func @transform_9(%arg0: i32) -> (i32, i32) {
    %c0_i32 = arith.constant 0 : i32
    %c0_i32_0 = arith.constant 0 : i32
    %c0_i32_1 = arith.constant 0 : i32
    return %c0_i32, %c0_i32_0 : i32, i32
  }
  func.func @transform_10(%arg0: i32) -> (i32, i32) {
    %c0_i32 = arith.constant 0 : i32
    %c0_i32_0 = arith.constant 0 : i32
    %c0_i32_1 = arith.constant 0 : i32
    return %c0_i32, %c0_i32_0 : i32, i32
  }
  func.func @transform_11(%arg0: i32) -> (i32, i32) {
    %c0_i32 = arith.constant 0 : i32
    %c0_i32_0 = arith.constant 0 : i32
    %c0_i32_1 = arith.constant 0 : i32
    return %c0_i32, %c0_i32_0 : i32, i32
  }
  func.func @transform_12(%arg0: i32) -> (i32, i32) {
    %c0_i32 = arith.constant 0 : i32
    %c0_i32_0 = arith.constant 0 : i32
    %c0_i32_1 = arith.constant 0 : i32
    return %c0_i32, %c0_i32_0 : i32, i32
  }
  func.func @transform_13(%arg0: i32) -> (i32, i32) {
    %c0_i32 = arith.constant 0 : i32
    %c0_i32_0 = arith.constant 0 : i32
    %c0_i32_1 = arith.constant 0 : i32
    return %c0_i32, %c0_i32_0 : i32, i32
  }
  func.func @transform_14(%arg0: i32) -> (i32, i32) {
    %c0_i32 = arith.constant 0 : i32
    %c0_i32_0 = arith.constant 0 : i32
    %c0_i32_1 = arith.constant 0 : i32
    return %c0_i32, %c0_i32_0 : i32, i32
  }
  func.func @transform_15(%arg0: i32) -> (i32, i32) {
    %c0_i32 = arith.constant 0 : i32
    %c0_i32_0 = arith.constant 0 : i32
    %c0_i32_1 = arith.constant 0 : i32
    return %c0_i32, %c0_i32_0 : i32, i32
  }
  func.func @transform_16(%arg0: i32) -> (i32, i32) {
    %c0_i32 = arith.constant 0 : i32
    %c0_i32_0 = arith.constant 0 : i32
    %c0_i32_1 = arith.constant 0 : i32
    return %c0_i32, %c0_i32_0 : i32, i32
  }
  func.func @transform_17(%arg0: i32) -> (i32, i32, i32) {
    %c0_i32 = arith.constant 0 : i32
    %c0_i32_0 = arith.constant 0 : i32
    %c0_i32_1 = arith.constant 0 : i32
    return %arg0, %c0_i32, %c0_i32_0 : i32, i32, i32
  }
}

</mosaic_0001>

<llo_original>
// kernel: srscnet_forward.1
$region0: #{srscnet_forward.1}
  #allocation0 [shape = 'u32[]', space=smem, size = 0x4, offset = 0x4, fixed_abs, tag = 'smem constant byte address 0x4 - core index']
  #allocation1 [shape = 'u32[144,128]{1,0:T(1,128)}', space=vmem, size = 0x12000, scoped, tag = 'internal scratch']
  %s0 = inlined_call_operand.vmem [shape: f32[2,8,256], index: 0, kind: input, shape index: {}]
  %s1 = inlined_call_operand.vmem [shape: f32[32,4], index: 1, kind: input, shape index: {}]
  %s2 = inlined_call_operand.vmem [shape: f32[4,256], index: 2, kind: input, shape index: {}]
  %s3 = inlined_call_operand.vmem [shape: bf16[32,8], index: 3, kind: input, shape index: {}]
  %s4 = inlined_call_operand.vmem [shape: f32[32,1], index: 4, kind: input, shape index: {}]
  %s5 = inlined_call_operand.vmem [shape: bf16[2,32,32], index: 5, kind: input, shape index: {}]
  %s6 = inlined_call_operand.vmem [shape: f32[2,32,1], index: 6, kind: input, shape index: {}]
  %s7 = inlined_call_operand.vmem [shape: bf16[2,32,32], index: 7, kind: input, shape index: {}]
  %s8 = inlined_call_operand.vmem [shape: f32[2,32,1], index: 8, kind: input, shape index: {}]
  %s9 = inlined_call_operand.vmem [shape: bf16[32,32], index: 9, kind: input, shape index: {}]
  %s10 = inlined_call_operand.vmem [shape: f32[32,1], index: 10, kind: input, shape index: {}]
  %s11 = inlined_call_operand.vmem [shape: bf16[32,32], index: 11, kind: input, shape index: {}]
  %s12 = inlined_call_operand.vmem [shape: f32[32,1], index: 12, kind: input, shape index: {}]
  %s13 = inlined_call_operand.vmem [shape: bf16[32,32], index: 13, kind: input, shape index: {}]
  %s14 = inlined_call_operand.vmem [shape: f32[32,1], index: 14, kind: input, shape index: {}]
  %s15 = inlined_call_operand.vmem [shape: bf16[8,32], index: 15, kind: input, shape index: {}]
  %s16 = inlined_call_operand.vmem [shape: f32[8,1], index: 16, kind: input, shape index: {}]
  %s17 = inlined_call_operand.vmem [shape: f32[2,8,1024], index: 17, kind: output, shape index: {}]
  %s18 = sld [smem:[#allocation0]]
  $region108: #{srscnet_forward.1} parent=0
    _
  %s20 = ssub.s32 1, %s18
  %s21 = scalar_select 0, %s20, %s18
  loop: start=0, step=1, limit=4
  $region2: #{srscnet_forward.1} parent=0 // loop_pre_header
    _
  $region3: #{srscnet_forward.1} parent=0 // loop_header
    %s23 = sphi 0, %s27
    %p24 = scmp.ge.s32.totalorder %s23, 4
    %s33 = sphi 0, %s35
    %s36 = sphi 0, %s33
    %s37 = sphi 0, %s36
    %s53 = sphi 0, %s37
    %s57 = sphi 0, %s57
    %s59 = sphi 0, %s57
    %s60 = sphi 0, %s59
    %s74 = sphi 0, %s60
    %s78 = sphi 0, %s78
    %s80 = sphi 0, %s78
    %s81 = sphi 0, %s80
    %s95 = sphi 0, %s81
    %s99 = sphi 0, %s99
    %s101 = sphi 0, %s99
    %s102 = sphi 0, %s101
    %s116 = sphi 0, %s102
    %s120 = sphi 0, %s120
    %s122 = sphi 0, %s120
    %s123 = sphi 0, %s122
    %s137 = sphi 0, %s123
    %s141 = sphi 0, %s141
    %s143 = sphi 0, %s141
    %s144 = sphi 0, %s143
    %s158 = sphi 0, %s144
    %s162 = sphi 0, %s162
    %s164 = sphi 0, %s162
    %s165 = sphi 0, %s164
    %s179 = sphi 0, %s165
    %s183 = sphi 0, %s183
    %s185 = sphi 0, %s183
    %s186 = sphi 0, %s185
    %s200 = sphi 0, %s186
    %s204 = sphi 0, %s204
    %s206 = sphi 0, %s204
    %s207 = sphi 0, %s206
    %s221 = sphi 0, %s207
    %s225 = sphi 0, %s225
    %s227 = sphi 0, %s225
    %s228 = sphi 0, %s227
    %s242 = sphi 0, %s228
    %s246 = sphi 0, %s246
    %s248 = sphi 0, %s246
    %s249 = sphi 0, %s248
    %s263 = sphi 0, %s249
    %s267 = sphi 0, %s267
    %s269 = sphi 0, %s267
    %s270 = sphi 0, %s269
    %s284 = sphi 0, %s270
    %s288 = sphi 0, %s288
    %s290 = sphi 0, %s288
    %s291 = sphi 0, %s290
    %s305 = sphi 0, %s291
    %s309 = sphi 0, %s309
    %s311 = sphi 0, %s309
    %s312 = sphi 0, %s311
    %s326 = sphi 0, %s312
    %s330 = sphi 0, %s330
    %s332 = sphi 0, %s330
    %s333 = sphi 0, %s332
    %s347 = sphi 0, %s333
    %s351 = sphi 0, %s351
    %s353 = sphi 0, %s351
    %s354 = sphi 0, %s353
    %s368 = sphi 0, %s354
    %s372 = sphi 0, %s372
    %s374 = sphi 0, %s372
    %s375 = sphi 0, %s374
    %s389 = sphi 0, %s375
    %s395 = sphi 0, %s397
    %s398 = sphi 0, %s395
    %s399 = sphi 0, %s398
    %s415 = sphi 0, %s399
  $region4: #{srscnet_forward.1} parent=0 // loop_header_branch
    %26 = sbr.rel (%p24) target = $region8
  $region5: #{srscnet_forward.1} parent=0 // loop_body
    %s28 = ssub.s32 %s23, 1
    %s29 = ssub.s32 %s23, 2
    %s30 = sadd.s32 %s23, 1
    %s31 = ssub.s32 %s23, %s30
    %p32 = scmp.eq.s32.totalorder %s31, 0
    %s34 = sadd.s32 %s33, 1
    %s35 = scalar_select %p32, %s33, %s34
    %p38 = pneg %p32
    %p39 = scmp.eq.s32.totalorder %s23, 1
    %p40 = por %p38, %p39
    %p41 = scmp.ne.s32.totalorder %s33, %s36
    %p42 = scmp.eq.s32.totalorder %s23, 0
    %p43 = por %p41, %p42
    %p44 = scmp.ne.s32.totalorder %s33, %s36
    %p45 = scmp.eq.s32.totalorder %s28, 1
    %p46 = por %p44, %p45
    %p47 = scmp.ne.s32.totalorder %s36, %s37
    %p48 = scmp.eq.s32.totalorder %s28, 0
    %p49 = por %p47, %p48
    %p50 = scmp.ne.s32.totalorder %s36, %s37
    %p51 = scmp.eq.s32.totalorder %s29, 1
    %p52 = por %p50, %p51
    %p54 = scmp.ne.s32.totalorder %s37, %s53
    %p55 = scmp.eq.s32.totalorder %s29, 0
    %p56 = por %p54, %p55
    %s58 = sadd.s32 %s57, 1
    %p61 = scmp.eq.s32.totalorder %s23, 1
    %p62 = scmp.ne.s32.totalorder %s57, %s59
    %p63 = scmp.eq.s32.totalorder %s23, 0
    %p64 = por %p62, %p63
    %p65 = scmp.ne.s32.totalorder %s57, %s59
    %p66 = scmp.eq.s32.totalorder %s28, 1
    %p67 = por %p65, %p66
    %p68 = scmp.ne.s32.totalorder %s59, %s60
    %p69 = scmp.eq.s32.totalorder %s28, 0
    %p70 = por %p68, %p69
    %p71 = scmp.ne.s32.totalorder %s59, %s60
    %p72 = scmp.eq.s32.totalorder %s29, 1
    %p73 = por %p71, %p72
    %p75 = scmp.ne.s32.totalorder %s60, %s74
    %p76 = scmp.eq.s32.totalorder %s29, 0
    %p77 = por %p75, %p76
    %s79 = sadd.s32 %s78, 1
    %p82 = scmp.eq.s32.totalorder %s23, 1
    %p83 = scmp.ne.s32.totalorder %s78, %s80
    %p84 = scmp.eq.s32.totalorder %s23, 0
    %p85 = por %p83, %p84
    %p86 = scmp.ne.s32.totalorder %s78, %s80
    %p87 = scmp.eq.s32.totalorder %s28, 1
    %p88 = por %p86, %p87
    %p89 = scmp.ne.s32.totalorder %s80, %s81
    %p90 = scmp.eq.s32.totalorder %s28, 0
    %p91 = por %p89, %p90
    %p92 = scmp.ne.s32.totalorder %s80, %s81
    %p93 = scmp.eq.s32.totalorder %s29, 1
    %p94 = por %p92, %p93
    %p96 = scmp.ne.s32.totalorder %s81, %s95
    %p97 = scmp.eq.s32.totalorder %s29, 0
    %p98 = por %p96, %p97
    %s100 = sadd.s32 %s99, 1
    %p103 = scmp.eq.s32.totalorder %s23, 1
    %p104 = scmp.ne.s32.totalorder %s99, %s101
    %p105 = scmp.eq.s32.totalorder %s23, 0
    %p106 = por %p104, %p105
    %p107 = scmp.ne.s32.totalorder %s99, %s101
    %p108 = scmp.eq.s32.totalorder %s28, 1
    %p109 = por %p107, %p108
    %p110 = scmp.ne.s32.totalorder %s101, %s102
    %p111 = scmp.eq.s32.totalorder %s28, 0
    %p112 = por %p110, %p111
    %p113 = scmp.ne.s32.totalorder %s101, %s102
    %p114 = scmp.eq.s32.totalorder %s29, 1
    %p115 = por %p113, %p114
    %p117 = scmp.ne.s32.totalorder %s102, %s116
    %p118 = scmp.eq.s32.totalorder %s29, 0
    %p119 = por %p117, %p118
    %s121 = sadd.s32 %s120, 1
    %p124 = scmp.eq.s32.totalorder %s23, 1
    %p125 = scmp.ne.s32.totalorder %s120, %s122
    %p126 = scmp.eq.s32.totalorder %s23, 0
    %p127 = por %p125, %p126
    %p128 = scmp.ne.s32.totalorder %s120, %s122
    %p129 = scmp.eq.s32.totalorder %s28, 1
    %p130 = por %p128, %p129
    %p131 = scmp.ne.s32.totalorder %s122, %s123
    %p132 = scmp.eq.s32.totalorder %s28, 0
    %p133 = por %p131, %p132
    %p134 = scmp.ne.s32.totalorder %s122, %s123
    %p135 = scmp.eq.s32.totalorder %s29, 1
    %p136 = por %p134, %p135
    %p138 = scmp.ne.s32.totalorder %s123, %s137
    %p139 = scmp.eq.s32.totalorder %s29, 0
    %p140 = por %p138, %p139
    %s142 = sadd.s32 %s141, 1
    %p145 = scmp.eq.s32.totalorder %s23, 1
    %p146 = scmp.ne.s32.totalorder %s141, %s143
    %p147 = scmp.eq.s32.totalorder %s23, 0
    %p148 = por %p146, %p147
    %p149 = scmp.ne.s32.totalorder %s141, %s143
    %p150 = scmp.eq.s32.totalorder %s28, 1
    %p151 = por %p149, %p150
    %p152 = scmp.ne.s32.totalorder %s143, %s144
    %p153 = scmp.eq.s32.totalorder %s28, 0
    %p154 = por %p152, %p153
    %p155 = scmp.ne.s32.totalorder %s143, %s144
    %p156 = scmp.eq.s32.totalorder %s29, 1
    %p157 = por %p155, %p156
    %p159 = scmp.ne.s32.totalorder %s144, %s158
    %p160 = scmp.eq.s32.totalorder %s29, 0
    %p161 = por %p159, %p160
    %s163 = sadd.s32 %s162, 1
    %p166 = scmp.eq.s32.totalorder %s23, 1
    %p167 = scmp.ne.s32.totalorder %s162, %s164
    %p168 = scmp.eq.s32.totalorder %s23, 0
    %p169 = por %p167, %p168
    %p170 = scmp.ne.s32.totalorder %s162, %s164
    %p171 = scmp.eq.s32.totalorder %s28, 1
    %p172 = por %p170, %p171
    %p173 = scmp.ne.s32.totalorder %s164, %s165
    %p174 = scmp.eq.s32.totalorder %s28, 0
    %p175 = por %p173, %p174
    %p176 = scmp.ne.s32.totalorder %s164, %s165
    %p177 = scmp.eq.s32.totalorder %s29, 1
    %p178 = por %p176, %p177
    %p180 = scmp.ne.s32.totalorder %s165, %s179
    %p181 = scmp.eq.s32.totalorder %s29, 0
    %p182 = por %p180, %p181
    %s184 = sadd.s32 %s183, 1
    %p187 = scmp.eq.s32.totalorder %s23, 1
    %p188 = scmp.ne.s32.totalorder %s183, %s185
    %p189 = scmp.eq.s32.totalorder %s23, 0
    %p190 = por %p188, %p189
    %p191 = scmp.ne.s32.totalorder %s183, %s185
    %p192 = scmp.eq.s32.totalorder %s28, 1
    %p193 = por %p191, %p192
    %p194 = scmp.ne.s32.totalorder %s185, %s186
    %p195 = scmp.eq.s32.totalorder %s28, 0
    %p196 = por %p194, %p195
    %p197 = scmp.ne.s32.totalorder %s185, %s186
    %p198 = scmp.eq.s32.totalorder %s29, 1
    %p199 = por %p197, %p198
    %p201 = scmp.ne.s32.totalorder %s186, %s200
    %p202 = scmp.eq.s32.totalorder %s29, 0
    %p203 = por %p201, %p202
    %s205 = sadd.s32 %s204, 1
    %p208 = scmp.eq.s32.totalorder %s23, 1
    %p209 = scmp.ne.s32.totalorder %s204, %s206
    %p210 = scmp.eq.s32.totalorder %s23, 0
    %p211 = por %p209, %p210
    %p212 = scmp.ne.s32.totalorder %s204, %s206
    %p213 = scmp.eq.s32.totalorder %s28, 1
    %p214 = por %p212, %p213
    %p215 = scmp.ne.s32.totalorder %s206, %s207
    %p216 = scmp.eq.s32.totalorder %s28, 0
    %p217 = por %p215, %p216
    %p218 = scmp.ne.s32.totalorder %s206, %s207
    %p219 = scmp.eq.s32.totalorder %s29, 1
    %p220 = por %p218, %p219
    %p222 = scmp.ne.s32.totalorder %s207, %s221
    %p223 = scmp.eq.s32.totalorder %s29, 0
    %p224 = por %p222, %p223
    %s226 = sadd.s32 %s225, 1
    %p229 = scmp.eq.s32.totalorder %s23, 1
    %p230 = scmp.ne.s32.totalorder %s225, %s227
    %p231 = scmp.eq.s32.totalorder %s23, 0
    %p232 = por %p230, %p231
    %p233 = scmp.ne.s32.totalorder %s225, %s227
    %p234 = scmp.eq.s32.totalorder %s28, 1
    %p235 = por %p233, %p234
    %p236 = scmp.ne.s32.totalorder %s227, %s228
    %p237 = scmp.eq.s32.totalorder %s28, 0
    %p238 = por %p236, %p237
    %p239 = scmp.ne.s32.totalorder %s227, %s228
    %p240 = scmp.eq.s32.totalorder %s29, 1
    %p241 = por %p239, %p240
    %p243 = scmp.ne.s32.totalorder %s228, %s242
    %p244 = scmp.eq.s32.totalorder %s29, 0
    %p245 = por %p243, %p244
    %s247 = sadd.s32 %s246, 1
    %p250 = scmp.eq.s32.totalorder %s23, 1
    %p251 = scmp.ne.s32.totalorder %s246, %s248
    %p252 = scmp.eq.s32.totalorder %s23, 0
    %p253 = por %p251, %p252
    %p254 = scmp.ne.s32.totalorder %s246, %s248
    %p255 = scmp.eq.s32.totalorder %s28, 1
    %p256 = por %p254, %p255
    %p257 = scmp.ne.s32.totalorder %s248, %s249
    %p258 = scmp.eq.s32.totalorder %s28, 0
    %p259 = por %p257, %p258
    %p260 = scmp.ne.s32.totalorder %s248, %s249
    %p261 = scmp.eq.s32.totalorder %s29, 1
    %p262 = por %p260, %p261
    %p264 = scmp.ne.s32.totalorder %s249, %s263
    %p265 = scmp.eq.s32.totalorder %s29, 0
    %p266 = por %p264, %p265
    %s268 = sadd.s32 %s267, 1
    %p271 = scmp.eq.s32.totalorder %s23, 1
    %p272 = scmp.ne.s32.totalorder %s267, %s269
    %p273 = scmp.eq.s32.totalorder %s23, 0
    %p274 = por %p272, %p273
    %p275 = scmp.ne.s32.totalorder %s267, %s269
    %p276 = scmp.eq.s32.totalorder %s28, 1
    %p277 = por %p275, %p276
    %p278 = scmp.ne.s32.totalorder %s269, %s270
    %p279 = scmp.eq.s32.totalorder %s28, 0
    %p280 = por %p278, %p279
    %p281 = scmp.ne.s32.totalorder %s269, %s270
    %p282 = scmp.eq.s32.totalorder %s29, 1
    %p283 = por %p281, %p282
    %p285 = scmp.ne.s32.totalorder %s270, %s284
    %p286 = scmp.eq.s32.totalorder %s29, 0
    %p287 = por %p285, %p286
    %s289 = sadd.s32 %s288, 1
    %p292 = scmp.eq.s32.totalorder %s23, 1
    %p293 = scmp.ne.s32.totalorder %s288, %s290
    %p294 = scmp.eq.s32.totalorder %s23, 0
    %p295 = por %p293, %p294
    %p296 = scmp.ne.s32.totalorder %s288, %s290
    %p297 = scmp.eq.s32.totalorder %s28, 1
    %p298 = por %p296, %p297
    %p299 = scmp.ne.s32.totalorder %s290, %s291
    %p300 = scmp.eq.s32.totalorder %s28, 0
    %p301 = por %p299, %p300
    %p302 = scmp.ne.s32.totalorder %s290, %s291
    %p303 = scmp.eq.s32.totalorder %s29, 1
    %p304 = por %p302, %p303
    %p306 = scmp.ne.s32.totalorder %s291, %s305
    %p307 = scmp.eq.s32.totalorder %s29, 0
    %p308 = por %p306, %p307
    %s310 = sadd.s32 %s309, 1
    %p313 = scmp.eq.s32.totalorder %s23, 1
    %p314 = scmp.ne.s32.totalorder %s309, %s311
    %p315 = scmp.eq.s32.totalorder %s23, 0
    %p316 = por %p314, %p315
    %p317 = scmp.ne.s32.totalorder %s309, %s311
    %p318 = scmp.eq.s32.totalorder %s28, 1
    %p319 = por %p317, %p318
    %p320 = scmp.ne.s32.totalorder %s311, %s312
    %p321 = scmp.eq.s32.totalorder %s28, 0
    %p322 = por %p320, %p321
    %p323 = scmp.ne.s32.totalorder %s311, %s312
    %p324 = scmp.eq.s32.totalorder %s29, 1
    %p325 = por %p323, %p324
    %p327 = scmp.ne.s32.totalorder %s312, %s326
    %p328 = scmp.eq.s32.totalorder %s29, 0
    %p329 = por %p327, %p328
    %s331 = sadd.s32 %s330, 1
    %p334 = scmp.eq.s32.totalorder %s23, 1
    %p335 = scmp.ne.s32.totalorder %s330, %s332
    %p336 = scmp.eq.s32.totalorder %s23, 0
    %p337 = por %p335, %p336
    %p338 = scmp.ne.s32.totalorder %s330, %s332
    %p339 = scmp.eq.s32.totalorder %s28, 1
    %p340 = por %p338, %p339
    %p341 = scmp.ne.s32.totalorder %s332, %s333
    %p342 = scmp.eq.s32.totalorder %s28, 0
    %p343 = por %p341, %p342
    %p344 = scmp.ne.s32.totalorder %s332, %s333
    %p345 = scmp.eq.s32.totalorder %s29, 1
    %p346 = por %p344, %p345
    %p348 = scmp.ne.s32.totalorder %s333, %s347
    %p349 = scmp.eq.s32.totalorder %s29, 0
    %p350 = por %p348, %p349
    %s352 = sadd.s32 %s351, 1
    %p355 = scmp.eq.s32.totalorder %s23, 1
    %p356 = scmp.ne.s32.totalorder %s351, %s353
    %p357 = scmp.eq.s32.totalorder %s23, 0
    %p358 = por %p356, %p357
    %p359 = scmp.ne.s32.totalorder %s351, %s353
    %p360 = scmp.eq.s32.totalorder %s28, 1
    %p361 = por %p359, %p360
    %p362 = scmp.ne.s32.totalorder %s353, %s354
    %p363 = scmp.eq.s32.totalorder %s28, 0
    %p364 = por %p362, %p363
    %p365 = scmp.ne.s32.totalorder %s353, %s354
    %p366 = scmp.eq.s32.totalorder %s29, 1
    %p367 = por %p365, %p366
    %p369 = scmp.ne.s32.totalorder %s354, %s368
    %p370 = scmp.eq.s32.totalorder %s29, 0
    %p371 = por %p369, %p370
    %s373 = sadd.s32 %s372, 1
    %p376 = scmp.eq.s32.totalorder %s23, 1
    %p377 = scmp.ne.s32.totalorder %s372, %s374
    %p378 = scmp.eq.s32.totalorder %s23, 0
    %p379 = por %p377, %p378
    %p380 = scmp.ne.s32.totalorder %s372, %s374
    %p381 = scmp.eq.s32.totalorder %s28, 1
    %p382 = por %p380, %p381
    %p383 = scmp.ne.s32.totalorder %s374, %s375
    %p384 = scmp.eq.s32.totalorder %s28, 0
    %p385 = por %p383, %p384
    %p386 = scmp.ne.s32.totalorder %s374, %s375
    %p387 = scmp.eq.s32.totalorder %s29, 1
    %p388 = por %p386, %p387
    %p390 = scmp.ne.s32.totalorder %s375, %s389
    %p391 = scmp.eq.s32.totalorder %s29, 0
    %p392 = por %p390, %p391
    %s393 = ssub.s32 %s23, %s30
    %p394 = scmp.eq.s32.totalorder %s393, 0
    %s396 = sadd.s32 %s395, 1
    %s397 = scalar_select %p394, %s395, %s396
    %p400 = pneg %p394
    %p401 = scmp.eq.s32.totalorder %s23, 1
    %p402 = por %p400, %p401
    %p403 = scmp.ne.s32.totalorder %s395, %s398
    %p404 = scmp.eq.s32.totalorder %s23, 0
    %p405 = por %p403, %p404
    %p406 = scmp.ne.s32.totalorder %s395, %s398
    %p407 = scmp.eq.s32.totalorder %s28, 1
    %p408 = por %p406, %p407
    %p409 = scmp.ne.s32.totalorder %s398, %s399
    %p410 = scmp.eq.s32.totalorder %s28, 0
    %p411 = por %p409, %p410
    %p412 = scmp.ne.s32.totalorder %s398, %s399
    %p413 = scmp.eq.s32.totalorder %s29, 1
    %p414 = por %p412, %p413
    %p416 = scmp.ne.s32.totalorder %s399, %s415
    %p417 = scmp.eq.s32.totalorder %s29, 0
    %p418 = por %p416, %p417
    %p419 = scmp.le.s32.totalorder 1, %s23
    %p420 = scmp.lt.s32.totalorder %s23, 3
    %p421 = pnand %p419, %p420
    %p422 = pneg %p421
    // Predicated region
    $region9: #{srscnet_forward.1} parent=5 // pred_check
      _
    $region10: #{srscnet_forward.1} parent=5 // pred_check_branch
      %424 = sbr.rel (%p421) target = $region12
    $region11: #{srscnet_forward.1} parent=5 // pred_region
      %s425 = ssub.s32 %s23, 1
      // Predicated region
      $region13: #{srscnet_forward.1} parent=11 // pred_check
        %p426 = pneg %p70
      $region14: #{srscnet_forward.1} parent=11 // pred_check_branch
        %428 = sbr.rel (%p426) target = $region16
      $region15: #{srscnet_forward.1} parent=11 // pred_region
        _
      $region16: #{srscnet_forward.1} parent=11 // pred_fallthru
        _
      // Predicated region
      $region17: #{srscnet_forward.1} parent=11 // pred_check
        %p429 = pneg %p91
      $region18: #{srscnet_forward.1} parent=11 // pred_check_branch
        %431 = sbr.rel (%p429) target = $region20
      $region19: #{srscnet_forward.1} parent=11 // pred_region
        _
      $region20: #{srscnet_forward.1} parent=11 // pred_fallthru
        _
      // Predicated region
      $region21: #{srscnet_forward.1} parent=11 // pred_check
        %p432 = pneg %p112
      $region22: #{srscnet_forward.1} parent=11 // pred_check_branch
        %434 = sbr.rel (%p432) target = $region24
      $region23: #{srscnet_forward.1} parent=11 // pred_region
        _
      $region24: #{srscnet_forward.1} parent=11 // pred_fallthru
        _
      // Predicated region
      $region25: #{srscnet_forward.1} parent=11 // pred_check
        %p435 = pneg %p133
      $region26: #{srscnet_forward.1} parent=11 // pred_check_branch
        %437 = sbr.rel (%p435) target = $region28
      $region27: #{srscnet_forward.1} parent=11 // pred_region
        _
      $region28: #{srscnet_forward.1} parent=11 // pred_fallthru
        _
      // Predicated region
      $region29: #{srscnet_forward.1} parent=11 // pred_check
        %p438 = pneg %p154
      $region30: #{srscnet_forward.1} parent=11 // pred_check_branch
        %440 = sbr.rel (%p438) target = $region32
      $region31: #{srscnet_forward.1} parent=11 // pred_region
        _
      $region32: #{srscnet_forward.1} parent=11 // pred_fallthru
        _
      // Predicated region
      $region33: #{srscnet_forward.1} parent=11 // pred_check
        %p441 = pneg %p175
      $region34: #{srscnet_forward.1} parent=11 // pred_check_branch
        %443 = sbr.rel (%p441) target = $region36
      $region35: #{srscnet_forward.1} parent=11 // pred_region
        _
      $region36: #{srscnet_forward.1} parent=11 // pred_fallthru
        _
      // Predicated region
      $region37: #{srscnet_forward.1} parent=11 // pred_check
        %p444 = pneg %p196
      $region38: #{srscnet_forward.1} parent=11 // pred_check_branch
        %446 = sbr.rel (%p444) target = $region40
      $region39: #{srscnet_forward.1} parent=11 // pred_region
        _
      $region40: #{srscnet_forward.1} parent=11 // pred_fallthru
        _
      // Predicated region
      $region41: #{srscnet_forward.1} parent=11 // pred_check
        %p447 = pneg %p217
      $region42: #{srscnet_forward.1} parent=11 // pred_check_branch
        %449 = sbr.rel (%p447) target = $region44
      $region43: #{srscnet_forward.1} parent=11 // pred_region
        _
      $region44: #{srscnet_forward.1} parent=11 // pred_fallthru
        _
      // Predicated region
      $region45: #{srscnet_forward.1} parent=11 // pred_check
        %p450 = pneg %p238
      $region46: #{srscnet_forward.1} parent=11 // pred_check_branch
        %452 = sbr.rel (%p450) target = $region48
      $region47: #{srscnet_forward.1} parent=11 // pred_region
        _
      $region48: #{srscnet_forward.1} parent=11 // pred_fallthru
        _
      // Predicated region
      $region49: #{srscnet_forward.1} parent=11 // pred_check
        %p453 = pneg %p259
      $region50: #{srscnet_forward.1} parent=11 // pred_check_branch
        %455 = sbr.rel (%p453) target = $region52
      $region51: #{srscnet_forward.1} parent=11 // pred_region
        _
      $region52: #{srscnet_forward.1} parent=11 // pred_fallthru
        _
      // Predicated region
      $region53: #{srscnet_forward.1} parent=11 // pred_check
        %p456 = pneg %p280
      $region54: #{srscnet_forward.1} parent=11 // pred_check_branch
        %458 = sbr.rel (%p456) target = $region56
      $region55: #{srscnet_forward.1} parent=11 // pred_region
        _
      $region56: #{srscnet_forward.1} parent=11 // pred_fallthru
        _
      // Predicated region
      $region57: #{srscnet_forward.1} parent=11 // pred_check
        %p459 = pneg %p301
      $region58: #{srscnet_forward.1} parent=11 // pred_check_branch
        %461 = sbr.rel (%p459) target = $region60
      $region59: #{srscnet_forward.1} parent=11 // pred_region
        _
      $region60: #{srscnet_forward.1} parent=11 // pred_fallthru
        _
      // Predicated region
      $region61: #{srscnet_forward.1} parent=11 // pred_check
        %p462 = pneg %p322
      $region62: #{srscnet_forward.1} parent=11 // pred_check_branch
        %464 = sbr.rel (%p462) target = $region64
      $region63: #{srscnet_forward.1} parent=11 // pred_region
        _
      $region64: #{srscnet_forward.1} parent=11 // pred_fallthru
        _
      // Predicated region
      $region65: #{srscnet_forward.1} parent=11 // pred_check
        %p465 = pneg %p343
      $region66: #{srscnet_forward.1} parent=11 // pred_check_branch
        %467 = sbr.rel (%p465) target = $region68
      $region67: #{srscnet_forward.1} parent=11 // pred_region
        _
      $region68: #{srscnet_forward.1} parent=11 // pred_fallthru
        _
      // Predicated region
      $region69: #{srscnet_forward.1} parent=11 // pred_check
        %p468 = pneg %p364
      $region70: #{srscnet_forward.1} parent=11 // pred_check_branch
        %470 = sbr.rel (%p468) target = $region72
      $region71: #{srscnet_forward.1} parent=11 // pred_region
        _
      $region72: #{srscnet_forward.1} parent=11 // pred_fallthru
        _
      // Predicated region
      $region73: #{srscnet_forward.1} parent=11 // pred_check
        %p471 = pneg %p385
      $region74: #{srscnet_forward.1} parent=11 // pred_check_branch
        %473 = sbr.rel (%p471) target = $region76
      $region75: #{srscnet_forward.1} parent=11 // pred_region
        _
      $region76: #{srscnet_forward.1} parent=11 // pred_fallthru
        _
    $region12: #{srscnet_forward.1} parent=5 // pred_fallthru
      _
    %p474 = scmp.lt.s32.totalorder %s23, 2
    // Predicated region
    $region77: #{srscnet_forward.1} parent=5 // pred_check
      %p475 = pneg %p474
    $region78: #{srscnet_forward.1} parent=5 // pred_check_branch
      %477 = sbr.rel (%p475) target = $region80
    $region79: #{srscnet_forward.1} parent=5 // pred_region
      // Predicated region
      $region81: #{srscnet_forward.1} parent=79 // pred_check
        %p478 = pneg %p43
      $region82: #{srscnet_forward.1} parent=79 // pred_check_branch
        %480 = sbr.rel (%p478) target = $region84
      $region83: #{srscnet_forward.1} parent=79 // pred_region
        %p481 = scmp.lt.s32.totalorder %s23, 1
        %s482 = scalar_select %p481, %s23, 1
        %s483 = smul.addr %s482, 2
        %s484 = smul.addr %s483, 8
        %s485 = scalar_lea.vmem %s0, %s484
      $region84: #{srscnet_forward.1} parent=79 // pred_fallthru
        _
    $region80: #{srscnet_forward.1} parent=5 // pred_fallthru
      _
    %p486 = scmp.le.s32.totalorder 1, %s23
    %p487 = scmp.lt.s32.totalorder %s23, 3
    %p488 = pnand %p486, %p487
    %p489 = pneg %p488
    // Predicated region
    $region85: #{srscnet_forward.1} parent=5 // pred_check
      _
    $region86: #{srscnet_forward.1} parent=5 // pred_check_branch
      %491 = sbr.rel (%p488) target = $region88
    $region87: #{srscnet_forward.1} parent=5 // pred_region
      %s492 = ssub.s32 %s23, 1
      %p493 = scmp.lt.s32.totalorder %s28, 1
      %s494 = scalar_select %p493, %s28, 1
      %s495 = smul.addr %s494, 2
      %s496 = smul.addr %s495, 8
      %s497 = scalar_lea.vmem %s0, %s496
      %p498 = pneg %p49
      %p499 = pneg %p46
      %p500 = pneg %p70
      %p501 = pneg %p67
      %p502 = pneg %p91
      %p503 = pneg %p88
      %p504 = pneg %p112
      %p505 = pneg %p109
      %p506 = pneg %p133
      %p507 = pneg %p130
      %p508 = pneg %p154
      %p509 = pneg %p151
      %p510 = pneg %p175
      %p511 = pneg %p172
      %p512 = pneg %p196
      %p513 = pneg %p193
      %p514 = pneg %p217
      %p515 = pneg %p214
      %p516 = pneg %p238
      %p517 = pneg %p235
      %p518 = pneg %p259
      %p519 = pneg %p256
      %p520 = pneg %p280
      %p521 = pneg %p277
      %p522 = pneg %p301
      %p523 = pneg %p298
      %p524 = pneg %p322
      %p525 = pneg %p319
      %p526 = pneg %p343
      %p527 = pneg %p340
      %p528 = pneg %p364
      %p529 = pneg %p361
      %p530 = pneg %p385
      %p531 = pneg %p382
      %p532 = pneg %p411
      %p533 = pneg %p408
      %p534 = scmp.lt.s32.totalorder %s28, 1
      %s535 = scalar_select %p534, %s28, 1
      %s536 = smul.addr %s535, 8
      %s537 = smul.addr %s536, 8
      %s538 = scalar_lea.vmem %s17, %s537
      %p539 = scmp.lt.s32.totalorder %s28, 1
      %s540 = scalar_select %p539, %s28, 1
      %s541 = smul.addr %s540, 2
      %s542 = smul.addr %s541, 8
      %s543 = scalar_lea.vmem %s0, %s542
      %p544 = scmp.lt.s32.totalorder %s28, 1
      %s545 = scalar_select %p544, %s28, 1
      %s546 = smul.addr %s545, 8
      %s547 = smul.addr %s546, 8
      %s548 = scalar_lea.vmem %s17, %s547
      %v550 = vld [vmem:[%s1] sm:$0xff]
      %v551 = vld [vmem:[%s1 + $0x8] sm:$0xff]
      %v552 = vld [vmem:[%s1 + $0x10] sm:$0xff]
      %v553 = vld [vmem:[%s1 + $0x18] sm:$0xff]
      %vm554 = vcmp.ne.f32.partialorder %v550, 0.0
      %vm555 = vcmp.ne.f32.partialorder %v551, 0.0
      %vm556 = vcmp.ne.f32.partialorder %v552, 0.0
      %vm557 = vcmp.ne.f32.partialorder %v553, 0.0
      %v558 = vld [vmem:[%s2] sm:$0xff]
      %vm559 = vcmp.ne.f32.partialorder %v558, 0.0
      %v560 = vld [vmem:[%s543] sm:$0xff]
      %v561 = vld [vmem:[%s543 + $0x8] sm:$0xff]
      %v562 = vld [vmem:[%s3] sm:$0xf]
      %v563 = vld [vmem:[%s3 + $0x4] sm:$0xf]
      %v564 = vld [vmem:[%s3 + $0x8] sm:$0xf]
      %v565 = vld [vmem:[%s3 + $0xc] sm:$0xf]
      %v566 = vpack.c.bf16 %v560, %v560
      %v567 = vpack.c.bf16 %v561, %v561
      %v568 = vld [vmem:[%s4] sm:$0xff]
      %v569 = vld [vmem:[%s4 + $0x8] sm:$0xff]
      %v570 = vld [vmem:[%s4 + $0x10] sm:$0xff]
      %v571 = vld [vmem:[%s4 + $0x18] sm:$0xff]
      %573 = vset.pattern.permute.xlu0 0
      %574 = vperm.xlu0 %573, %v568
      %v575 = vpop.permute.xlu0 %574
      %578 = vset.pattern.permute.xlu0 0
      %579 = vperm.xlu0 %578, %v569
      %v580 = vpop.permute.xlu0 %579
      %583 = vset.pattern.permute.xlu0 0
      %584 = vperm.xlu0 %583, %v570
      %v585 = vpop.permute.xlu0 %584
      %588 = vset.pattern.permute.xlu0 0
      %589 = vperm.xlu0 %588, %v571
      %v590 = vpop.permute.xlu0 %589
      %v596 = vunpack.c.l.b16 %v562
      %v597 = vunpack.c.l.b16 %v563
      %v598 = vunpack.c.l.b16 %v564
      %v599 = vunpack.c.l.b16 %v565
      %v600 = vpack.c.b16 %v597, %v596
      %v601 = vpack.c.b16 %v599, %v598
      %vm602 = vcmask 64512
      %v604 = vsel %vm602, %v600, 0
      %v607 = vsel %vm602, %v601, 0
      %vm609 = vcmask 1043456
      %v611 = vsel %vm609, %v566, 0
      %v614 = vsel %vm609, %v567, 0
      %616 = vmatprep.subr.bf16.mxu0 0
      %617 = vmatpush1.bf16.msra.mxu0 0
      %618 = vmatprep.subr.bf16.mxu0 0
      %619 = vmatpush1.bf16.msra.mxu0 0
      %620 = vmatprep.subr.bf16.mxu0 0
      %621 = vmatpush1.bf16.msra.mxu0 0
      %622 = vmatprep.subr.bf16.mxu0 0
      %623 = vmatpush1.bf16.msra.mxu0 0
      %624 = vmatprep.subr.bf16.mxu0 0
      %625 = vmatpush1.bf16.msra.mxu0 0
      %626 = vmatprep.subr.bf16.mxu0 0
      %627 = vmatpush1.bf16.msra.mxu0 0
      %628 = vmatprep.subr.bf16.mxu0 0
      %629 = vmatpush1.bf16.msra.mxu0 0
      %630 = vmatprep.subr.bf16.mxu0 %v614
      %631 = vmatpush1.bf16.msra.mxu0 %v611
      %632 = vmatprep.subr.bf16.mxu0 0
      %633 = vmatpush2.bf16.msra.mxu0 0
      %634 = vmatprep.subr.bf16.mxu0 0
      %635 = vmatpush2.bf16.msra.mxu0 0
      %636 = vmatprep.subr.bf16.mxu0 0
      %637 = vmatpush2.bf16.msra.mxu0 0
      %638 = vmatprep.subr.bf16.mxu0 0
      %639 = vmatpush2.bf16.msra.mxu0 0
      %640 = vmatprep.subr.bf16.mxu0 0
      %641 = vmatpush2.bf16.msra.mxu0 0
      %642 = vmatprep.subr.bf16.mxu0 0
      %643 = vmatpush2.bf16.msra.mxu0 0
      %644 = vmatprep.subr.bf16.mxu0 0
      %645 = vmatpush2.bf16.msra.mxu0 0
      %646 = vmatprep.subr.bf16.mxu0 0
      %647 = vmatpush2.bf16.msra.mxu0 0
      %648 = vmatprep.mubr.bf16.mxu0 0
      %649 = vmatmul.mubr.bf16.gmra.mxu0 %v604
      %v650 = vpop.f32.mrf.mxu0
      %v651 = vadd.f32 %v575, %v650
      %v652 = vpop.f32.mrf.mxu0
      %v653 = vadd.f32 %v575, %v652
      %v654 = vpop.f32.mrf.mxu0
      %v655 = vadd.f32 %v580, %v654
      %v656 = vpop.f32.mrf.mxu0
      %v657 = vadd.f32 %v580, %v656
      %658 = vmatprep.mubr.bf16.mxu0 0
      %659 = vmatmul.mubr.bf16.gmra.mxu0 %v607
      %v660 = vpop.f32.mrf.mxu0
      %v661 = vadd.f32 %v585, %v660
      %v662 = vpop.f32.mrf.mxu0
      %v663 = vadd.f32 %v585, %v662
      %v664 = vpop.f32.mrf.mxu0
      %v665 = vadd.f32 %v590, %v664
      %v666 = vpop.f32.mrf.mxu0
      %v667 = vadd.f32 %v590, %v666
      %668 = vdwg.mxu0
      %vm669 = vcmp.ge.f32.partialorder %v651, 0.0
      %vm670 = vcmp.ge.f32.partialorder %v653, 0.0
      %vm671 = vcmp.ge.f32.partialorder %v655, 0.0
      %vm672 = vcmp.ge.f32.partialorder %v657, 0.0
      %vm673 = vcmp.ge.f32.partialorder %v661, 0.0
      %vm674 = vcmp.ge.f32.partialorder %v663, 0.0
      %vm675 = vcmp.ge.f32.partialorder %v665, 0.0
      %vm676 = vcmp.ge.f32.partialorder %v667, 0.0
      %v677 = vmul.f32 %v651, 0.1
      %v678 = vmul.f32 %v653, 0.1
      %v679 = vmul.f32 %v655, 0.1
      %v680 = vmul.f32 %v657, 0.1
      %v681 = vmul.f32 %v661, 0.1
      %v682 = vmul.f32 %v663, 0.1
      %v683 = vmul.f32 %v665, 0.1
      %v684 = vmul.f32 %v667, 0.1
      %v685 = vsel %vm669, %v651, %v677
      %v686 = vsel %vm670, %v653, %v678
      %v687 = vsel %vm671, %v655, %v679
      %v688 = vsel %vm672, %v657, %v680
      %v689 = vsel %vm673, %v661, %v681
      %v690 = vsel %vm674, %v663, %v682
      %v691 = vsel %vm675, %v665, %v683
      %v692 = vsel %vm676, %v667, %v684
      loop: start=0, step=1, limit=2
      $region89: #{srscnet_forward.1} parent=87 // loop_pre_header
        _
      $region90: #{srscnet_forward.1} parent=87 // loop_header
        %s694 = sphi 0, %s698
        %p695 = scmp.ge.s32.totalorder %s694, 2
        %v699 = vphi %v685, %v2243
        %v700 = vphi %v686, %v2244
        %v701 = vphi %v687, %v2245
        %v702 = vphi %v688, %v2246
        %v703 = vphi %v689, %v2247
        %v704 = vphi %v690, %v2248
        %v705 = vphi %v691, %v2249
        %v706 = vphi %v692, %v2250
      $region91: #{srscnet_forward.1} parent=87 // loop_header_branch
        %697 = sbr.rel (%p695) target = $region95
      $region92: #{srscnet_forward.1} parent=87 // loop_body
        %s707 = smul.u32 %s694, 4
        %s708 = smul.addr %s707, 4
        %s709 = scalar_lea.vmem %s5, %s708
        %v710 = vld [vmem:[%s709] sm:$0xf]
        %v711 = vld [vmem:[%s709 + $0x4] sm:$0xf]
        %v712 = vld [vmem:[%s709 + $0x8] sm:$0xf]
        %v713 = vld [vmem:[%s709 + $0xc] sm:$0xf]
        %v714 = vpack.c.bf16 %v701, %v699
        %v715 = vpack.c.bf16 %v702, %v700
        %v716 = vpack.c.bf16 %v705, %v703
        %v717 = vpack.c.bf16 %v706, %v704
        %s718 = smul.u32 %s694, 32
        %s719 = scalar_lea.vmem %s6, %s718
        %v720 = vld [vmem:[%s719] sm:$0xff]
        %v721 = vld [vmem:[%s719 + $0x8] sm:$0xff]
        %v722 = vld [vmem:[%s719 + $0x10] sm:$0xff]
        %v723 = vld [vmem:[%s719 + $0x18] sm:$0xff]
        %725 = vset.pattern.permute.xlu0 0
        %726 = vperm.xlu0 %725, %v720
        %v727 = vpop.permute.xlu0 %726
        %730 = vset.pattern.permute.xlu0 0
        %731 = vperm.xlu0 %730, %v721
        %v732 = vpop.permute.xlu0 %731
        %735 = vset.pattern.permute.xlu0 0
        %736 = vperm.xlu0 %735, %v722
        %v737 = vpop.permute.xlu0 %736
        %740 = vset.pattern.permute.xlu0 0
        %741 = vperm.xlu0 %740, %v723
        %v742 = vpop.permute.xlu0 %741
        %v748 = vunpack.c.l.b16 %v710
        %v749 = vunpack.c.l.b16 %v711
        %v750 = vunpack.c.l.b16 %v712
        %v751 = vunpack.c.l.b16 %v713
        %v752 = vpack.c.b16 %v749, %v748
        %v753 = vpack.c.b16 %v751, %v750
        %vm754 = vcmask 261120
        %v756 = vsel %vm754, %v752, 0
        %v759 = vsel %vm754, %v753, 0
        %761 = vmatprep.subr.bf16.mxu0 0
        %762 = vmatpush1.bf16.msra.mxu0 0
        %763 = vmatprep.subr.bf16.mxu0 0
        %764 = vmatpush1.bf16.msra.mxu0 0
        %765 = vmatprep.subr.bf16.mxu0 0
        %766 = vmatpush1.bf16.msra.mxu0 0
        %767 = vmatprep.subr.bf16.mxu0 0
        %768 = vmatpush1.bf16.msra.mxu0 0
        %769 = vmatprep.subr.bf16.mxu0 0
        %770 = vmatpush1.bf16.msra.mxu0 0
        %771 = vmatprep.subr.bf16.mxu0 0
        %772 = vmatpush1.bf16.msra.mxu0 0
        %773 = vmatprep.subr.bf16.mxu0 %v717
        %774 = vmatpush1.bf16.msra.mxu0 %v716
        %775 = vmatprep.subr.bf16.mxu0 %v715
        %776 = vmatpush1.bf16.msra.mxu0 %v714
        %777 = vmatprep.subr.bf16.mxu0 0
        %778 = vmatpush2.bf16.msra.mxu0 0
        %779 = vmatprep.subr.bf16.mxu0 0
        %780 = vmatpush2.bf16.msra.mxu0 0
        %781 = vmatprep.subr.bf16.mxu0 0
        %782 = vmatpush2.bf16.msra.mxu0 0
        %783 = vmatprep.subr.bf16.mxu0 0
        %784 = vmatpush2.bf16.msra.mxu0 0
        %785 = vmatprep.subr.bf16.mxu0 0
        %786 = vmatpush2.bf16.msra.mxu0 0
        %787 = vmatprep.subr.bf16.mxu0 0
        %788 = vmatpush2.bf16.msra.mxu0 0
        %789 = vmatprep.subr.bf16.mxu0 0
        %790 = vmatpush2.bf16.msra.mxu0 0
        %791 = vmatprep.subr.bf16.mxu0 0
        %792 = vmatpush2.bf16.msra.mxu0 0
        %793 = vmatprep.mubr.bf16.mxu0 0
        %794 = vmatmul.mubr.bf16.gmra.mxu0 %v756
        %v795 = vpop.f32.mrf.mxu0
        %v796 = vadd.f32 %v727, %v795
        %v797 = vpop.f32.mrf.mxu0
        %v798 = vadd.f32 %v727, %v797
        %v799 = vpop.f32.mrf.mxu0
        %v800 = vadd.f32 %v732, %v799
        %v801 = vpop.f32.mrf.mxu0
        %v802 = vadd.f32 %v732, %v801
        %803 = vmatprep.mubr.bf16.mxu0 0
        %804 = vmatmul.mubr.bf16.gmra.mxu0 %v759
        %v805 = vpop.f32.mrf.mxu0
        %v806 = vadd.f32 %v737, %v805
        %v807 = vpop.f32.mrf.mxu0
        %v808 = vadd.f32 %v737, %v807
        %v809 = vpop.f32.mrf.mxu0
        %v810 = vadd.f32 %v742, %v809
        %v811 = vpop.f32.mrf.mxu0
        %v812 = vadd.f32 %v742, %v811
        %813 = vdwg.mxu0
        %814 = vrot.lane.b32.xlu0 %v796, 16
        %v815 = vpop.permute.xlu0 %814
        %816 = vrot.lane.b32.xlu0 %v800, 16
        %v817 = vpop.permute.xlu0 %816
        %818 = vrot.lane.b32.xlu0 %v806, 16
        %v819 = vpop.permute.xlu0 %818
        %820 = vrot.lane.b32.xlu0 %v810, 16
        %v821 = vpop.permute.xlu0 %820
        %822 = vrot.lane.b32.xlu0 %v798, 16
        %v823 = vpop.permute.xlu0 %822
        %824 = vrot.lane.b32.xlu0 %v802, 16
        %v825 = vpop.permute.xlu0 %824
        %826 = vrot.lane.b32.xlu0 %v808, 16
        %v827 = vpop.permute.xlu0 %826
        %828 = vrot.lane.b32.xlu0 %v812, 16
        %v829 = vpop.permute.xlu0 %828
        %v830 = vlaneseq
        %v831 = vand.u32 %v830, 127
        %vm832 = vcmp.lt.s32.totalorder %v831, 16
        %v833 = vsel %vm832, %v815, %v823
        %v834 = vsel %vm832, %v817, %v825
        %v835 = vsel %vm832, %v819, %v827
        %v836 = vsel %vm832, %v821, %v829
        %v837 = vsel %vm832, %v823, %v815
        %v838 = vsel %vm832, %v825, %v817
        %v839 = vsel %vm832, %v827, %v819
        %v840 = vsel %vm832, %v829, %v821
        %841 = vrot.lane.b32.xlu0 %v796, 112
        %v842 = vpop.permute.xlu0 %841
        %843 = vrot.lane.b32.xlu0 %v800, 112
        %v844 = vpop.permute.xlu0 %843
        %845 = vrot.lane.b32.xlu0 %v806, 112
        %v846 = vpop.permute.xlu0 %845
        %847 = vrot.lane.b32.xlu0 %v810, 112
        %v848 = vpop.permute.xlu0 %847
        %849 = vrot.lane.b32.xlu0 %v798, 112
        %v850 = vpop.permute.xlu0 %849
        %851 = vrot.lane.b32.xlu0 %v802, 112
        %v852 = vpop.permute.xlu0 %851
        %853 = vrot.lane.b32.xlu0 %v808, 112
        %v854 = vpop.permute.xlu0 %853
        %855 = vrot.lane.b32.xlu0 %v812, 112
        %v856 = vpop.permute.xlu0 %855
        %vm857 = vcmp.lt.s32.totalorder %v831, 112
        %v858 = vsel %vm857, %v842, %v850
        %v859 = vsel %vm857, %v844, %v852
        %v860 = vsel %vm857, %v846, %v854
        %v861 = vsel %vm857, %v848, %v856
        %v862 = vsel %vm857, %v850, %v842
        %v863 = vsel %vm857, %v852, %v844
        %v864 = vsel %vm857, %v854, %v846
        %v865 = vsel %vm857, %v856, %v848
        %v866 = vsel %vm554, 1, 0
        %v867 = vsel %vm555, 1, 0
        %v868 = vsel %vm556, 1, 0
        %v869 = vsel %vm557, 1, 0
        %870 = vset.pattern.permute.xlu0 1
        %871 = vperm.xlu0 %870, %v866
        %v872 = vpop.permute.xlu0 %871
        %873 = vset.pattern.permute.xlu0 1
        %874 = vperm.xlu0 %873, %v867
        %v875 = vpop.permute.xlu0 %874
        %876 = vset.pattern.permute.xlu0 1
        %877 = vperm.xlu0 %876, %v868
        %v878 = vpop.permute.xlu0 %877
        %879 = vset.pattern.permute.xlu0 1
        %880 = vperm.xlu0 %879, %v869
        %v881 = vpop.permute.xlu0 %880
        %vm882 = vcmp.eq.s32.totalorder %v872, 1
        %vm883 = vcmp.eq.s32.totalorder %v875, 1
        %vm884 = vcmp.eq.s32.totalorder %v878, 1
        %vm885 = vcmp.eq.s32.totalorder %v881, 1
        %v886 = vsel %vm882, %v858, %v796
        %v887 = vsel %vm882, %v862, %v798
        %v888 = vsel %vm883, %v859, %v800
        %v889 = vsel %vm883, %v863, %v802
        %v890 = vsel %vm884, %v860, %v806
        %v891 = vsel %vm884, %v864, %v808
        %v892 = vsel %vm885, %v861, %v810
        %v893 = vsel %vm885, %v865, %v812
        %894 = vset.pattern.permute.xlu0 0
        %895 = vperm.xlu0 %894, %v866
        %v896 = vpop.permute.xlu0 %895
        %897 = vset.pattern.permute.xlu0 0
        %898 = vperm.xlu0 %897, %v867
        %v899 = vpop.permute.xlu0 %898
        %900 = vset.pattern.permute.xlu0 0
        %901 = vperm.xlu0 %900, %v868
        %v902 = vpop.permute.xlu0 %901
        %903 = vset.pattern.permute.xlu0 0
        %904 = vperm.xlu0 %903, %v869
        %v905 = vpop.permute.xlu0 %904
        %vm906 = vcmp.eq.s32.totalorder %v896, 1
        %vm907 = vcmp.eq.s32.totalorder %v899, 1
        %vm908 = vcmp.eq.s32.totalorder %v902, 1
        %vm909 = vcmp.eq.s32.totalorder %v905, 1
        %v910 = vsel %vm906, %v837, %v886
        %v911 = vsel %vm906, %v833, %v887
        %v912 = vsel %vm907, %v838, %v888
        %v913 = vsel %vm907, %v834, %v889
        %v914 = vsel %vm908, %v839, %v890
        %v915 = vsel %vm908, %v835, %v891
        %v916 = vsel %vm909, %v840, %v892
        %v917 = vsel %vm909, %v836, %v893
        %918 = vrot.lane.b32.xlu0 %v910, 113
        %v919 = vpop.permute.xlu0 %918
        %920 = vrot.lane.b32.xlu0 %v912, 113
        %v921 = vpop.permute.xlu0 %920
        %922 = vrot.lane.b32.xlu0 %v914, 113
        %v923 = vpop.permute.xlu0 %922
        %924 = vrot.lane.b32.xlu0 %v916, 113
        %v925 = vpop.permute.xlu0 %924
        %926 = vrot.lane.b32.xlu0 %v911, 113
        %v927 = vpop.permute.xlu0 %926
        %928 = vrot.lane.b32.xlu0 %v913, 113
        %v929 = vpop.permute.xlu0 %928
        %930 = vrot.lane.b32.xlu0 %v915, 113
        %v931 = vpop.permute.xlu0 %930
        %932 = vrot.lane.b32.xlu0 %v917, 113
        %v933 = vpop.permute.xlu0 %932
        %vm934 = vcmp.lt.s32.totalorder %v831, 113
        %v935 = vsel %vm934, %v919, %v927
        %v936 = vsel %vm934, %v921, %v929
        %v937 = vsel %vm934, %v923, %v931
        %v938 = vsel %vm934, %v925, %v933
        %v939 = vsel %vm934, %v927, %v919
        %v940 = vsel %vm934, %v929, %v921
        %v941 = vsel %vm934, %v931, %v923
        %v942 = vsel %vm934, %v933, %v925
        %943 = vrot.lane.b32.xlu0 %v910, 1
        %v944 = vpop.permute.xlu0 %943
        %945 = vrot.lane.b32.xlu0 %v912, 1
        %v946 = vpop.permute.xlu0 %945
        %947 = vrot.lane.b32.xlu0 %v914, 1
        %v948 = vpop.permute.xlu0 %947
        %949 = vrot.lane.b32.xlu0 %v916, 1
        %v950 = vpop.permute.xlu0 %949
        %951 = vrot.lane.b32.xlu0 %v911, 1
        %v952 = vpop.permute.xlu0 %951
        %953 = vrot.lane.b32.xlu0 %v913, 1
        %v954 = vpop.permute.xlu0 %953
        %955 = vrot.lane.b32.xlu0 %v915, 1
        %v956 = vpop.permute.xlu0 %955
        %957 = vrot.lane.b32.xlu0 %v917, 1
        %v958 = vpop.permute.xlu0 %957
        %vm959 = vcmp.lt.s32.totalorder %v831, 1
        %v960 = vsel %vm959, %v944, %v952
        %v961 = vsel %vm959, %v946, %v954
        %v962 = vsel %vm959, %v948, %v956
        %v963 = vsel %vm959, %v950, %v958
        %v964 = vsel %vm959, %v952, %v944
        %v965 = vsel %vm959, %v954, %v946
        %v966 = vsel %vm959, %v956, %v948
        %v967 = vsel %vm959, %v958, %v950
        %v968 = vsel %vm559, 1, 0
        %vm969 = vcmp.eq.s32.totalorder %v968, 1
        %v978 = vcombine.low %v935, %v939
        %v979 = vcombine.high %v935, %v939
        %v980 = vcombine.low %v936, %v940
        %v981 = vcombine.high %v936, %v940
        %v982 = vcombine.low %v937, %v941
        %v983 = vcombine.high %v937, %v941
        %v984 = vcombine.low %v938, %v942
        %v985 = vcombine.high %v938, %v942
        %v986 = vrot.slane %v978, 6
        %v987 = vrot.slane %v978, 7
        %v988 = vrot.slane %v978, 1
        %v989 = vrot.slane %v979, 6
        %v990 = vrot.slane %v979, 7
        %v991 = vrot.slane %v979, 1
        %v992 = vrot.slane %v980, 6
        %v993 = vrot.slane %v980, 7
        %v994 = vrot.slane %v980, 1
        %v995 = vrot.slane %v981, 6
        %v996 = vrot.slane %v981, 7
        %v997 = vrot.slane %v981, 1
        %v998 = vrot.slane %v982, 6
        %v999 = vrot.slane %v982, 7
        %v1000 = vrot.slane %v982, 1
        %v1001 = vrot.slane %v983, 6
        %v1002 = vrot.slane %v983, 7
        %v1003 = vrot.slane %v983, 1
        %v1004 = vrot.slane %v984, 6
        %v1005 = vrot.slane %v984, 7
        %v1006 = vrot.slane %v984, 1
        %v1007 = vrot.slane %v985, 6
        %v1008 = vrot.slane %v985, 7
        %v1009 = vrot.slane %v985, 1
        %v1050 = vcombine.low %v964, %v960
        %v1051 = vcombine.high %v964, %v960
        %v1052 = vcombine.low %v965, %v961
        %v1053 = vcombine.high %v965, %v961
        %v1054 = vcombine.low %v966, %v962
        %v1055 = vcombine.high %v966, %v962
        %v1056 = vcombine.low %v967, %v963
        %v1057 = vcombine.high %v967, %v963
        %v1058 = vrot.slane %v1050, 6
        %v1059 = vrot.slane %v1050, 7
        %v1060 = vrot.slane %v1050, 1
        %v1061 = vrot.slane %v1051, 6
        %v1062 = vrot.slane %v1051, 7
        %v1063 = vrot.slane %v1051, 1
        %v1064 = vrot.slane %v1052, 6
        %v1065 = vrot.slane %v1052, 7
        %v1066 = vrot.slane %v1052, 1
        %v1067 = vrot.slane %v1053, 6
        %v1068 = vrot.slane %v1053, 7
        %v1069 = vrot.slane %v1053, 1
        %v1070 = vrot.slane %v1054, 6
        %v1071 = vrot.slane %v1054, 7
        %v1072 = vrot.slane %v1054, 1
        %v1073 = vrot.slane %v1055, 6
        %v1074 = vrot.slane %v1055, 7
        %v1075 = vrot.slane %v1055, 1
        %v1076 = vrot.slane %v1056, 6
        %v1077 = vrot.slane %v1056, 7
        %v1078 = vrot.slane %v1056, 1
        %v1079 = vrot.slane %v1057, 6
        %v1080 = vrot.slane %v1057, 7
        %v1081 = vrot.slane %v1057, 1
        %v1114 = vsel %vm969, %v986, %v1058
        %v1115 = vsel %vm969, %v987, %v1059
        %v1116 = vsel %vm969, %v978, %v1050
        %v1117 = vsel %vm969, %v988, %v1060
        %v1118 = vsel %vm969, %v989, %v1061
        %v1119 = vsel %vm969, %v990, %v1062
        %v1120 = vsel %vm969, %v979, %v1051
        %v1121 = vsel %vm969, %v991, %v1063
        %v1122 = vsel %vm969, %v992, %v1064
        %v1123 = vsel %vm969, %v993, %v1065
        %v1124 = vsel %vm969, %v980, %v1052
        %v1125 = vsel %vm969, %v994, %v1066
        %v1126 = vsel %vm969, %v995, %v1067
        %v1127 = vsel %vm969, %v996, %v1068
        %v1128 = vsel %vm969, %v981, %v1053
        %v1129 = vsel %vm969, %v997, %v1069
        %v1130 = vsel %vm969, %v998, %v1070
        %v1131 = vsel %vm969, %v999, %v1071
        %v1132 = vsel %vm969, %v982, %v1054
        %v1133 = vsel %vm969, %v1000, %v1072
        %v1134 = vsel %vm969, %v1001, %v1073
        %v1135 = vsel %vm969, %v1002, %v1074
        %v1136 = vsel %vm969, %v983, %v1055
        %v1137 = vsel %vm969, %v1003, %v1075
        %v1138 = vsel %vm969, %v1004, %v1076
        %v1139 = vsel %vm969, %v1005, %v1077
        %v1140 = vsel %vm969, %v984, %v1056
        %v1141 = vsel %vm969, %v1006, %v1078
        %v1142 = vsel %vm969, %v1007, %v1079
        %v1143 = vsel %vm969, %v1008, %v1080
        %v1144 = vsel %vm969, %v985, %v1057
        %v1145 = vsel %vm969, %v1009, %v1081
        %1146 = vrot.lane.b32.xlu0 %v910, 15
        %v1147 = vpop.permute.xlu0 %1146
        %1148 = vrot.lane.b32.xlu0 %v912, 15
        %v1149 = vpop.permute.xlu0 %1148
        %1150 = vrot.lane.b32.xlu0 %v914, 15
        %v1151 = vpop.permute.xlu0 %1150
        %1152 = vrot.lane.b32.xlu0 %v916, 15
        %v1153 = vpop.permute.xlu0 %1152
        %1154 = vrot.lane.b32.xlu0 %v911, 15
        %v1155 = vpop.permute.xlu0 %1154
        %1156 = vrot.lane.b32.xlu0 %v913, 15
        %v1157 = vpop.permute.xlu0 %1156
        %1158 = vrot.lane.b32.xlu0 %v915, 15
        %v1159 = vpop.permute.xlu0 %1158
        %1160 = vrot.lane.b32.xlu0 %v917, 15
        %v1161 = vpop.permute.xlu0 %1160
        %vm1162 = vcmp.lt.s32.totalorder %v831, 15
        %v1163 = vsel %vm1162, %v1147, %v1155
        %v1164 = vsel %vm1162, %v1149, %v1157
        %v1165 = vsel %vm1162, %v1151, %v1159
        %v1166 = vsel %vm1162, %v1153, %v1161
        %v1167 = vsel %vm1162, %v1155, %v1147
        %v1168 = vsel %vm1162, %v1157, %v1149
        %v1169 = vsel %vm1162, %v1159, %v1151
        %v1170 = vsel %vm1162, %v1161, %v1153
        %1171 = vrot.lane.b32.xlu0 %v910, 127
        %v1172 = vpop.permute.xlu0 %1171
        %1173 = vrot.lane.b32.xlu0 %v912, 127
        %v1174 = vpop.permute.xlu0 %1173
        %1175 = vrot.lane.b32.xlu0 %v914, 127
        %v1176 = vpop.permute.xlu0 %1175
        %1177 = vrot.lane.b32.xlu0 %v916, 127
        %v1178 = vpop.permute.xlu0 %1177
        %1179 = vrot.lane.b32.xlu0 %v911, 127
        %v1180 = vpop.permute.xlu0 %1179
        %1181 = vrot.lane.b32.xlu0 %v913, 127
        %v1182 = vpop.permute.xlu0 %1181
        %1183 = vrot.lane.b32.xlu0 %v915, 127
        %v1184 = vpop.permute.xlu0 %1183
        %1185 = vrot.lane.b32.xlu0 %v917, 127
        %v1186 = vpop.permute.xlu0 %1185
        %vm1187 = vcmp.lt.s32.totalorder %v831, 127
        %v1188 = vsel %vm1187, %v1172, %v1180
        %v1189 = vsel %vm1187, %v1174, %v1182
        %v1190 = vsel %vm1187, %v1176, %v1184
        %v1191 = vsel %vm1187, %v1178, %v1186
        %v1192 = vsel %vm1187, %v1180, %v1172
        %v1193 = vsel %vm1187, %v1182, %v1174
        %v1194 = vsel %vm1187, %v1184, %v1176
        %v1195 = vsel %vm1187, %v1186, %v1178
        %v1204 = vcombine.low %v1167, %v1163
        %v1205 = vcombine.high %v1167, %v1163
        %v1206 = vcombine.low %v1168, %v1164
        %v1207 = vcombine.high %v1168, %v1164
        %v1208 = vcombine.low %v1169, %v1165
        %v1209 = vcombine.high %v1169, %v1165
        %v1210 = vcombine.low %v1170, %v1166
        %v1211 = vcombine.high %v1170, %v1166
        %v1212 = vrot.slane %v1204, 5
        %v1213 = vrot.slane %v1204, 6
        %v1214 = vrot.slane %v1204, 7
        %v1215 = vrot.slane %v1205, 5
        %v1216 = vrot.slane %v1205, 6
        %v1217 = vrot.slane %v1205, 7
        %v1218 = vrot.slane %v1206, 5
        %v1219 = vrot.slane %v1206, 6
        %v1220 = vrot.slane %v1206, 7
        %v1221 = vrot.slane %v1207, 5
        %v1222 = vrot.slane %v1207, 6
        %v1223 = vrot.slane %v1207, 7
        %v1224 = vrot.slane %v1208, 5
        %v1225 = vrot.slane %v1208, 6
        %v1226 = vrot.slane %v1208, 7
        %v1227 = vrot.slane %v1209, 5
        %v1228 = vrot.slane %v1209, 6
        %v1229 = vrot.slane %v1209, 7
        %v1230 = vrot.slane %v1210, 5
        %v1231 = vrot.slane %v1210, 6
        %v1232 = vrot.slane %v1210, 7
        %v1233 = vrot.slane %v1211, 5
        %v1234 = vrot.slane %v1211, 6
        %v1235 = vrot.slane %v1211, 7
        %v1276 = vcombine.low %v1188, %v1192
        %v1277 = vcombine.high %v1188, %v1192
        %v1278 = vcombine.low %v1189, %v1193
        %v1279 = vcombine.high %v1189, %v1193
        %v1280 = vcombine.low %v1190, %v1194
        %v1281 = vcombine.high %v1190, %v1194
        %v1282 = vcombine.low %v1191, %v1195
        %v1283 = vcombine.high %v1191, %v1195
        %v1284 = vrot.slane %v1276, 5
        %v1285 = vrot.slane %v1276, 6
        %v1286 = vrot.slane %v1276, 7
        %v1287 = vrot.slane %v1277, 5
        %v1288 = vrot.slane %v1277, 6
        %v1289 = vrot.slane %v1277, 7
        %v1290 = vrot.slane %v1278, 5
        %v1291 = vrot.slane %v1278, 6
        %v1292 = vrot.slane %v1278, 7
        %v1293 = vrot.slane %v1279, 5
        %v1294 = vrot.slane %v1279, 6
        %v1295 = vrot.slane %v1279, 7
        %v1296 = vrot.slane %v1280, 5
        %v1297 = vrot.slane %v1280, 6
        %v1298 = vrot.slane %v1280, 7
        %v1299 = vrot.slane %v1281, 5
        %v1300 = vrot.slane %v1281, 6
        %v1301 = vrot.slane %v1281, 7
        %v1302 = vrot.slane %v1282, 5
        %v1303 = vrot.slane %v1282, 6
        %v1304 = vrot.slane %v1282, 7
        %v1305 = vrot.slane %v1283, 5
        %v1306 = vrot.slane %v1283, 6
        %v1307 = vrot.slane %v1283, 7
        %v1340 = vsel %vm969, %v1212, %v1284
        %v1341 = vsel %vm969, %v1213, %v1285
        %v1342 = vsel %vm969, %v1214, %v1286
        %v1343 = vsel %vm969, %v1204, %v1276
        %v1344 = vsel %vm969, %v1215, %v1287
        %v1345 = vsel %vm969, %v1216, %v1288
        %v1346 = vsel %vm969, %v1217, %v1289
        %v1347 = vsel %vm969, %v1205, %v1277
        %v1348 = vsel %vm969, %v1218, %v1290
        %v1349 = vsel %vm969, %v1219, %v1291
        %v1350 = vsel %vm969, %v1220, %v1292
        %v1351 = vsel %vm969, %v1206, %v1278
        %v1352 = vsel %vm969, %v1221, %v1293
        %v1353 = vsel %vm969, %v1222, %v1294
        %v1354 = vsel %vm969, %v1223, %v1295
        %v1355 = vsel %vm969, %v1207, %v1279
        %v1356 = vsel %vm969, %v1224, %v1296
        %v1357 = vsel %vm969, %v1225, %v1297
        %v1358 = vsel %vm969, %v1226, %v1298
        %v1359 = vsel %vm969, %v1208, %v1280
        %v1360 = vsel %vm969, %v1227, %v1299
        %v1361 = vsel %vm969, %v1228, %v1300
        %v1362 = vsel %vm969, %v1229, %v1301
        %v1363 = vsel %vm969, %v1209, %v1281
        %v1364 = vsel %vm969, %v1230, %v1302
        %v1365 = vsel %vm969, %v1231, %v1303
        %v1366 = vsel %vm969, %v1232, %v1304
        %v1367 = vsel %vm969, %v1210, %v1282
        %v1368 = vsel %vm969, %v1233, %v1305
        %v1369 = vsel %vm969, %v1234, %v1306
        %v1370 = vsel %vm969, %v1235, %v1307
        %v1371 = vsel %vm969, %v1211, %v1283
        %1372 = vset.pattern.permute.xlu0 3
        %1373 = vperm.xlu0 %1372, %v866
        %v1374 = vpop.permute.xlu0 %1373
        %1375 = vset.pattern.permute.xlu0 3
        %1376 = vperm.xlu0 %1375, %v867
        %v1377 = vpop.permute.xlu0 %1376
        %1378 = vset.pattern.permute.xlu0 3
        %1379 = vperm.xlu0 %1378, %v868
        %v1380 = vpop.permute.xlu0 %1379
        %1381 = vset.pattern.permute.xlu0 3
        %1382 = vperm.xlu0 %1381, %v869
        %v1383 = vpop.permute.xlu0 %1382
        %vm1384 = vcmp.eq.s32.totalorder %v1374, 1
        %vm1385 = vcmp.eq.s32.totalorder %v1377, 1
        %vm1386 = vcmp.eq.s32.totalorder %v1380, 1
        %vm1387 = vcmp.eq.s32.totalorder %v1383, 1
        %v1420 = vlaneseq
        %v1421 = vshrl.u32 %v1420, 7
        %v1422 = vsub.s32 3, %v1421
        %v1423 = vrot.slane %v1340, %v1422
        %v1424 = vlaneseq
        %v1425 = vshrl.u32 %v1424, 7
        %v1426 = vsub.s32 7, %v1425
        %v1427 = vrot.slane %v1340, %v1426
        %v1428 = vlaneseq
        %v1429 = vshrl.u32 %v1428, 7
        %v1430 = vsub.s32 3, %v1429
        %v1431 = vrot.slane %v1341, %v1430
        %v1432 = vlaneseq
        %v1433 = vshrl.u32 %v1432, 7
        %v1434 = vsub.s32 7, %v1433
        %v1435 = vrot.slane %v1341, %v1434
        %v1436 = vlaneseq
        %v1437 = vshrl.u32 %v1436, 7
        %v1438 = vsub.s32 3, %v1437
        %v1439 = vrot.slane %v1342, %v1438
        %v1440 = vlaneseq
        %v1441 = vshrl.u32 %v1440, 7
        %v1442 = vsub.s32 7, %v1441
        %v1443 = vrot.slane %v1342, %v1442
        %v1444 = vlaneseq
        %v1445 = vshrl.u32 %v1444, 7
        %v1446 = vsub.s32 3, %v1445
        %v1447 = vrot.slane %v1343, %v1446
        %v1448 = vlaneseq
        %v1449 = vshrl.u32 %v1448, 7
        %v1450 = vsub.s32 7, %v1449
        %v1451 = vrot.slane %v1343, %v1450
        %v1452 = vlaneseq
        %v1453 = vshrl.u32 %v1452, 7
        %v1454 = vsub.s32 3, %v1453
        %v1455 = vrot.slane %v1344, %v1454
        %v1456 = vlaneseq
        %v1457 = vshrl.u32 %v1456, 7
        %v1458 = vsub.s32 7, %v1457
        %v1459 = vrot.slane %v1344, %v1458
        %v1460 = vlaneseq
        %v1461 = vshrl.u32 %v1460, 7
        %v1462 = vsub.s32 3, %v1461
        %v1463 = vrot.slane %v1345, %v1462
        %v1464 = vlaneseq
        %v1465 = vshrl.u32 %v1464, 7
        %v1466 = vsub.s32 7, %v1465
        %v1467 = vrot.slane %v1345, %v1466
        %v1468 = vlaneseq
        %v1469 = vshrl.u32 %v1468, 7
        %v1470 = vsub.s32 3, %v1469
        %v1471 = vrot.slane %v1346, %v1470
        %v1472 = vlaneseq
        %v1473 = vshrl.u32 %v1472, 7
        %v1474 = vsub.s32 7, %v1473
        %v1475 = vrot.slane %v1346, %v1474
        %v1476 = vlaneseq
        %v1477 = vshrl.u32 %v1476, 7
        %v1478 = vsub.s32 3, %v1477
        %v1479 = vrot.slane %v1347, %v1478
        %v1480 = vlaneseq
        %v1481 = vshrl.u32 %v1480, 7
        %v1482 = vsub.s32 7, %v1481
        %v1483 = vrot.slane %v1347, %v1482
        %v1484 = vlaneseq
        %v1485 = vshrl.u32 %v1484, 7
        %v1486 = vsub.s32 3, %v1485
        %v1487 = vrot.slane %v1348, %v1486
        %v1488 = vlaneseq
        %v1489 = vshrl.u32 %v1488, 7
        %v1490 = vsub.s32 7, %v1489
        %v1491 = vrot.slane %v1348, %v1490
        %v1492 = vlaneseq
        %v1493 = vshrl.u32 %v1492, 7
        %v1494 = vsub.s32 3, %v1493
        %v1495 = vrot.slane %v1349, %v1494
        %v1496 = vlaneseq
        %v1497 = vshrl.u32 %v1496, 7
        %v1498 = vsub.s32 7, %v1497
        %v1499 = vrot.slane %v1349, %v1498
        %v1500 = vlaneseq
        %v1501 = vshrl.u32 %v1500, 7
        %v1502 = vsub.s32 3, %v1501
        %v1503 = vrot.slane %v1350, %v1502
        %v1504 = vlaneseq
        %v1505 = vshrl.u32 %v1504, 7
        %v1506 = vsub.s32 7, %v1505
        %v1507 = vrot.slane %v1350, %v1506
        %v1508 = vlaneseq
        %v1509 = vshrl.u32 %v1508, 7
        %v1510 = vsub.s32 3, %v1509
        %v1511 = vrot.slane %v1351, %v1510
        %v1512 = vlaneseq
        %v1513 = vshrl.u32 %v1512, 7
        %v1514 = vsub.s32 7, %v1513
        %v1515 = vrot.slane %v1351, %v1514
        %v1516 = vlaneseq
        %v1517 = vshrl.u32 %v1516, 7
        %v1518 = vsub.s32 3, %v1517
        %v1519 = vrot.slane %v1352, %v1518
        %v1520 = vlaneseq
        %v1521 = vshrl.u32 %v1520, 7
        %v1522 = vsub.s32 7, %v1521
        %v1523 = vrot.slane %v1352, %v1522
        %v1524 = vlaneseq
        %v1525 = vshrl.u32 %v1524, 7
        %v1526 = vsub.s32 3, %v1525
        %v1527 = vrot.slane %v1353, %v1526
        %v1528 = vlaneseq
        %v1529 = vshrl.u32 %v1528, 7
        %v1530 = vsub.s32 7, %v1529
        %v1531 = vrot.slane %v1353, %v1530
        %v1532 = vlaneseq
        %v1533 = vshrl.u32 %v1532, 7
        %v1534 = vsub.s32 3, %v1533
        %v1535 = vrot.slane %v1354, %v1534
        %v1536 = vlaneseq
        %v1537 = vshrl.u32 %v1536, 7
        %v1538 = vsub.s32 7, %v1537
        %v1539 = vrot.slane %v1354, %v1538
        %v1540 = vlaneseq
        %v1541 = vshrl.u32 %v1540, 7
        %v1542 = vsub.s32 3, %v1541
        %v1543 = vrot.slane %v1355, %v1542
        %v1544 = vlaneseq
        %v1545 = vshrl.u32 %v1544, 7
        %v1546 = vsub.s32 7, %v1545
        %v1547 = vrot.slane %v1355, %v1546
        %v1548 = vlaneseq
        %v1549 = vshrl.u32 %v1548, 7
        %v1550 = vsub.s32 3, %v1549
        %v1551 = vrot.slane %v1356, %v1550
        %v1552 = vlaneseq
        %v1553 = vshrl.u32 %v1552, 7
        %v1554 = vsub.s32 7, %v1553
        %v1555 = vrot.slane %v1356, %v1554
        %v1556 = vlaneseq
        %v1557 = vshrl.u32 %v1556, 7
        %v1558 = vsub.s32 3, %v1557
        %v1559 = vrot.slane %v1357, %v1558
        %v1560 = vlaneseq
        %v1561 = vshrl.u32 %v1560, 7
        %v1562 = vsub.s32 7, %v1561
        %v1563 = vrot.slane %v1357, %v1562
        %v1564 = vlaneseq
        %v1565 = vshrl.u32 %v1564, 7
        %v1566 = vsub.s32 3, %v1565
        %v1567 = vrot.slane %v1358, %v1566
        %v1568 = vlaneseq
        %v1569 = vshrl.u32 %v1568, 7
        %v1570 = vsub.s32 7, %v1569
        %v1571 = vrot.slane %v1358, %v1570
        %v1572 = vlaneseq
        %v1573 = vshrl.u32 %v1572, 7
        %v1574 = vsub.s32 3, %v1573
        %v1575 = vrot.slane %v1359, %v1574
        %v1576 = vlaneseq
        %v1577 = vshrl.u32 %v1576, 7
        %v1578 = vsub.s32 7, %v1577
        %v1579 = vrot.slane %v1359, %v1578
        %v1580 = vlaneseq
        %v1581 = vshrl.u32 %v1580, 7
        %v1582 = vsub.s32 3, %v1581
        %v1583 = vrot.slane %v1360, %v1582
        %v1584 = vlaneseq
        %v1585 = vshrl.u32 %v1584, 7
        %v1586 = vsub.s32 7, %v1585
        %v1587 = vrot.slane %v1360, %v1586
        %v1588 = vlaneseq
        %v1589 = vshrl.u32 %v1588, 7
        %v1590 = vsub.s32 3, %v1589
        %v1591 = vrot.slane %v1361, %v1590
        %v1592 = vlaneseq
        %v1593 = vshrl.u32 %v1592, 7
        %v1594 = vsub.s32 7, %v1593
        %v1595 = vrot.slane %v1361, %v1594
        %v1596 = vlaneseq
        %v1597 = vshrl.u32 %v1596, 7
        %v1598 = vsub.s32 3, %v1597
        %v1599 = vrot.slane %v1362, %v1598
        %v1600 = vlaneseq
        %v1601 = vshrl.u32 %v1600, 7
        %v1602 = vsub.s32 7, %v1601
        %v1603 = vrot.slane %v1362, %v1602
        %v1604 = vlaneseq
        %v1605 = vshrl.u32 %v1604, 7
        %v1606 = vsub.s32 3, %v1605
        %v1607 = vrot.slane %v1363, %v1606
        %v1608 = vlaneseq
        %v1609 = vshrl.u32 %v1608, 7
        %v1610 = vsub.s32 7, %v1609
        %v1611 = vrot.slane %v1363, %v1610
        %v1612 = vlaneseq
        %v1613 = vshrl.u32 %v1612, 7
        %v1614 = vsub.s32 3, %v1613
        %v1615 = vrot.slane %v1364, %v1614
        %v1616 = vlaneseq
        %v1617 = vshrl.u32 %v1616, 7
        %v1618 = vsub.s32 7, %v1617
        %v1619 = vrot.slane %v1364, %v1618
        %v1620 = vlaneseq
        %v1621 = vshrl.u32 %v1620, 7
        %v1622 = vsub.s32 3, %v1621
        %v1623 = vrot.slane %v1365, %v1622
        %v1624 = vlaneseq
        %v1625 = vshrl.u32 %v1624, 7
        %v1626 = vsub.s32 7, %v1625
        %v1627 = vrot.slane %v1365, %v1626
        %v1628 = vlaneseq
        %v1629 = vshrl.u32 %v1628, 7
        %v1630 = vsub.s32 3, %v1629
        %v1631 = vrot.slane %v1366, %v1630
        %v1632 = vlaneseq
        %v1633 = vshrl.u32 %v1632, 7
        %v1634 = vsub.s32 7, %v1633
        %v1635 = vrot.slane %v1366, %v1634
        %v1636 = vlaneseq
        %v1637 = vshrl.u32 %v1636, 7
        %v1638 = vsub.s32 3, %v1637
        %v1639 = vrot.slane %v1367, %v1638
        %v1640 = vlaneseq
        %v1641 = vshrl.u32 %v1640, 7
        %v1642 = vsub.s32 7, %v1641
        %v1643 = vrot.slane %v1367, %v1642
        %v1644 = vlaneseq
        %v1645 = vshrl.u32 %v1644, 7
        %v1646 = vsub.s32 3, %v1645
        %v1647 = vrot.slane %v1368, %v1646
        %v1648 = vlaneseq
        %v1649 = vshrl.u32 %v1648, 7
        %v1650 = vsub.s32 7, %v1649
        %v1651 = vrot.slane %v1368, %v1650
        %v1652 = vlaneseq
        %v1653 = vshrl.u32 %v1652, 7
        %v1654 = vsub.s32 3, %v1653
        %v1655 = vrot.slane %v1369, %v1654
        %v1656 = vlaneseq
        %v1657 = vshrl.u32 %v1656, 7
        %v1658 = vsub.s32 7, %v1657
        %v1659 = vrot.slane %v1369, %v1658
        %v1660 = vlaneseq
        %v1661 = vshrl.u32 %v1660, 7
        %v1662 = vsub.s32 3, %v1661
        %v1663 = vrot.slane %v1370, %v1662
        %v1664 = vlaneseq
        %v1665 = vshrl.u32 %v1664, 7
        %v1666 = vsub.s32 7, %v1665
        %v1667 = vrot.slane %v1370, %v1666
        %v1668 = vlaneseq
        %v1669 = vshrl.u32 %v1668, 7
        %v1670 = vsub.s32 3, %v1669
        %v1671 = vrot.slane %v1371, %v1670
        %v1672 = vlaneseq
        %v1673 = vshrl.u32 %v1672, 7
        %v1674 = vsub.s32 7, %v1673
        %v1675 = vrot.slane %v1371, %v1674
        %vm1676 = vcmask 1041409
        %v1677 = vsel %vm1676, %v1431, %v1423
        %vm1678 = vcmask 1042434
        %v1679 = vsel %vm1678, %v1439, %v1677
        %vm1680 = vcmask 1043459
        %v1681 = vsel %vm1680, %v1447, %v1679
        %vm1682 = vcmask 1044484
        %v1683 = vsel %vm1682, %v1455, %v1681
        %vm1684 = vcmask 1045509
        %v1685 = vsel %vm1684, %v1463, %v1683
        %vm1686 = vcmask 1046534
        %v1687 = vsel %vm1686, %v1471, %v1685
        %vm1688 = vcmask 1047559
        %v1689 = vsel %vm1688, %v1479, %v1687
        %v1690 = vsel %vm1676, %v1435, %v1427
        %v1691 = vsel %vm1678, %v1443, %v1690
        %v1692 = vsel %vm1680, %v1451, %v1691
        %v1693 = vsel %vm1682, %v1459, %v1692
        %v1694 = vsel %vm1684, %v1467, %v1693
        %v1695 = vsel %vm1686, %v1475, %v1694
        %v1696 = vsel %vm1688, %v1483, %v1695
        %v1697 = vsel %vm1676, %v1495, %v1487
        %v1698 = vsel %vm1678, %v1503, %v1697
        %v1699 = vsel %vm1680, %v1511, %v1698
        %v1700 = vsel %vm1682, %v1519, %v1699
        %v1701 = vsel %vm1684, %v1527, %v1700
        %v1702 = vsel %vm1686, %v1535, %v1701
        %v1703 = vsel %vm1688, %v1543, %v1702
        %v1704 = vsel %vm1676, %v1499, %v1491
        %v1705 = vsel %vm1678, %v1507, %v1704
        %v1706 = vsel %vm1680, %v1515, %v1705
        %v1707 = vsel %vm1682, %v1523, %v1706
        %v1708 = vsel %vm1684, %v1531, %v1707
        %v1709 = vsel %vm1686, %v1539, %v1708
        %v1710 = vsel %vm1688, %v1547, %v1709
        %v1711 = vsel %vm1676, %v1559, %v1551
        %v1712 = vsel %vm1678, %v1567, %v1711
        %v1713 = vsel %vm1680, %v1575, %v1712
        %v1714 = vsel %vm1682, %v1583, %v1713
        %v1715 = vsel %vm1684, %v1591, %v1714
        %v1716 = vsel %vm1686, %v1599, %v1715
        %v1717 = vsel %vm1688, %v1607, %v1716
        %v1718 = vsel %vm1676, %v1563, %v1555
        %v1719 = vsel %vm1678, %v1571, %v1718
        %v1720 = vsel %vm1680, %v1579, %v1719
        %v1721 = vsel %vm1682, %v1587, %v1720
        %v1722 = vsel %vm1684, %v1595, %v1721
        %v1723 = vsel %vm1686, %v1603, %v1722
        %v1724 = vsel %vm1688, %v1611, %v1723
        %v1725 = vsel %vm1676, %v1623, %v1615
        %v1726 = vsel %vm1678, %v1631, %v1725
        %v1727 = vsel %vm1680, %v1639, %v1726
        %v1728 = vsel %vm1682, %v1647, %v1727
        %v1729 = vsel %vm1684, %v1655, %v1728
        %v1730 = vsel %vm1686, %v1663, %v1729
        %v1731 = vsel %vm1688, %v1671, %v1730
        %v1732 = vsel %vm1676, %v1627, %v1619
        %v1733 = vsel %vm1678, %v1635, %v1732
        %v1734 = vsel %vm1680, %v1643, %v1733
        %v1735 = vsel %vm1682, %v1651, %v1734
        %v1736 = vsel %vm1684, %v1659, %v1735
        %v1737 = vsel %vm1686, %v1667, %v1736
        %v1738 = vsel %vm1688, %v1675, %v1737
        %v1747 = vsel %vm1384, %v1689, %v910
        %v1748 = vsel %vm1384, %v1696, %v911
        %v1749 = vsel %vm1385, %v1703, %v912
        %v1750 = vsel %vm1385, %v1710, %v913
        %v1751 = vsel %vm1386, %v1717, %v914
        %v1752 = vsel %vm1386, %v1724, %v915
        %v1753 = vsel %vm1387, %v1731, %v916
        %v1754 = vsel %vm1387, %v1738, %v917
        %1755 = vset.pattern.permute.xlu0 2
        %1756 = vperm.xlu0 %1755, %v866
        %v1757 = vpop.permute.xlu0 %1756
        %1758 = vset.pattern.permute.xlu0 2
        %1759 = vperm.xlu0 %1758, %v867
        %v1760 = vpop.permute.xlu0 %1759
        %1761 = vset.pattern.permute.xlu0 2
        %1762 = vperm.xlu0 %1761, %v868
        %v1763 = vpop.permute.xlu0 %1762
        %1764 = vset.pattern.permute.xlu0 2
        %1765 = vperm.xlu0 %1764, %v869
        %v1766 = vpop.permute.xlu0 %1765
        %vm1767 = vcmp.eq.s32.totalorder %v1757, 1
        %vm1768 = vcmp.eq.s32.totalorder %v1760, 1
        %vm1769 = vcmp.eq.s32.totalorder %v1763, 1
        %vm1770 = vcmp.eq.s32.totalorder %v1766, 1
        %v1803 = vlaneseq
        %v1804 = vshrl.u32 %v1803, 7
        %v1805 = vsub.s32 2, %v1804
        %v1806 = vrot.slane %v1114, %v1805
        %v1807 = vlaneseq
        %v1808 = vshrl.u32 %v1807, 7
        %v1809 = vsub.s32 6, %v1808
        %v1810 = vrot.slane %v1114, %v1809
        %v1811 = vlaneseq
        %v1812 = vshrl.u32 %v1811, 7
        %v1813 = vsub.s32 2, %v1812
        %v1814 = vrot.slane %v1115, %v1813
        %v1815 = vlaneseq
        %v1816 = vshrl.u32 %v1815, 7
        %v1817 = vsub.s32 6, %v1816
        %v1818 = vrot.slane %v1115, %v1817
        %v1819 = vlaneseq
        %v1820 = vshrl.u32 %v1819, 7
        %v1821 = vsub.s32 2, %v1820
        %v1822 = vrot.slane %v1116, %v1821
        %v1823 = vlaneseq
        %v1824 = vshrl.u32 %v1823, 7
        %v1825 = vsub.s32 6, %v1824
        %v1826 = vrot.slane %v1116, %v1825
        %v1827 = vlaneseq
        %v1828 = vshrl.u32 %v1827, 7
        %v1829 = vsub.s32 2, %v1828
        %v1830 = vrot.slane %v1117, %v1829
        %v1831 = vlaneseq
        %v1832 = vshrl.u32 %v1831, 7
        %v1833 = vsub.s32 6, %v1832
        %v1834 = vrot.slane %v1117, %v1833
        %v1835 = vlaneseq
        %v1836 = vshrl.u32 %v1835, 7
        %v1837 = vsub.s32 2, %v1836
        %v1838 = vrot.slane %v1118, %v1837
        %v1839 = vlaneseq
        %v1840 = vshrl.u32 %v1839, 7
        %v1841 = vsub.s32 6, %v1840
        %v1842 = vrot.slane %v1118, %v1841
        %v1843 = vlaneseq
        %v1844 = vshrl.u32 %v1843, 7
        %v1845 = vsub.s32 2, %v1844
        %v1846 = vrot.slane %v1119, %v1845
        %v1847 = vlaneseq
        %v1848 = vshrl.u32 %v1847, 7
        %v1849 = vsub.s32 6, %v1848
        %v1850 = vrot.slane %v1119, %v1849
        %v1851 = vlaneseq
        %v1852 = vshrl.u32 %v1851, 7
        %v1853 = vsub.s32 2, %v1852
        %v1854 = vrot.slane %v1120, %v1853
        %v1855 = vlaneseq
        %v1856 = vshrl.u32 %v1855, 7
        %v1857 = vsub.s32 6, %v1856
        %v1858 = vrot.slane %v1120, %v1857
        %v1859 = vlaneseq
        %v1860 = vshrl.u32 %v1859, 7
        %v1861 = vsub.s32 2, %v1860
        %v1862 = vrot.slane %v1121, %v1861
        %v1863 = vlaneseq
        %v1864 = vshrl.u32 %v1863, 7
        %v1865 = vsub.s32 6, %v1864
        %v1866 = vrot.slane %v1121, %v1865
        %v1867 = vlaneseq
        %v1868 = vshrl.u32 %v1867, 7
        %v1869 = vsub.s32 2, %v1868
        %v1870 = vrot.slane %v1122, %v1869
        %v1871 = vlaneseq
        %v1872 = vshrl.u32 %v1871, 7
        %v1873 = vsub.s32 6, %v1872
        %v1874 = vrot.slane %v1122, %v1873
        %v1875 = vlaneseq
        %v1876 = vshrl.u32 %v1875, 7
        %v1877 = vsub.s32 2, %v1876
        %v1878 = vrot.slane %v1123, %v1877
        %v1879 = vlaneseq
        %v1880 = vshrl.u32 %v1879, 7
        %v1881 = vsub.s32 6, %v1880
        %v1882 = vrot.slane %v1123, %v1881
        %v1883 = vlaneseq
        %v1884 = vshrl.u32 %v1883, 7
        %v1885 = vsub.s32 2, %v1884
        %v1886 = vrot.slane %v1124, %v1885
        %v1887 = vlaneseq
        %v1888 = vshrl.u32 %v1887, 7
        %v1889 = vsub.s32 6, %v1888
        %v1890 = vrot.slane %v1124, %v1889
        %v1891 = vlaneseq
        %v1892 = vshrl.u32 %v1891, 7
        %v1893 = vsub.s32 2, %v1892
        %v1894 = vrot.slane %v1125, %v1893
        %v1895 = vlaneseq
        %v1896 = vshrl.u32 %v1895, 7
        %v1897 = vsub.s32 6, %v1896
        %v1898 = vrot.slane %v1125, %v1897
        %v1899 = vlaneseq
        %v1900 = vshrl.u32 %v1899, 7
        %v1901 = vsub.s32 2, %v1900
        %v1902 = vrot.slane %v1126, %v1901
        %v1903 = vlaneseq
        %v1904 = vshrl.u32 %v1903, 7
        %v1905 = vsub.s32 6, %v1904
        %v1906 = vrot.slane %v1126, %v1905
        %v1907 = vlaneseq
        %v1908 = vshrl.u32 %v1907, 7
        %v1909 = vsub.s32 2, %v1908
        %v1910 = vrot.slane %v1127, %v1909
        %v1911 = vlaneseq
        %v1912 = vshrl.u32 %v1911, 7
        %v1913 = vsub.s32 6, %v1912
        %v1914 = vrot.slane %v1127, %v1913
        %v1915 = vlaneseq
        %v1916 = vshrl.u32 %v1915, 7
        %v1917 = vsub.s32 2, %v1916
        %v1918 = vrot.slane %v1128, %v1917
        %v1919 = vlaneseq
        %v1920 = vshrl.u32 %v1919, 7
        %v1921 = vsub.s32 6, %v1920
        %v1922 = vrot.slane %v1128, %v1921
        %v1923 = vlaneseq
        %v1924 = vshrl.u32 %v1923, 7
        %v1925 = vsub.s32 2, %v1924
        %v1926 = vrot.slane %v1129, %v1925
        %v1927 = vlaneseq
        %v1928 = vshrl.u32 %v1927, 7
        %v1929 = vsub.s32 6, %v1928
        %v1930 = vrot.slane %v1129, %v1929
        %v1931 = vlaneseq
        %v1932 = vshrl.u32 %v1931, 7
        %v1933 = vsub.s32 2, %v1932
        %v1934 = vrot.slane %v1130, %v1933
        %v1935 = vlaneseq
        %v1936 = vshrl.u32 %v1935, 7
        %v1937 = vsub.s32 6, %v1936
        %v1938 = vrot.slane %v1130, %v1937
        %v1939 = vlaneseq
        %v1940 = vshrl.u32 %v1939, 7
        %v1941 = vsub.s32 2, %v1940
        %v1942 = vrot.slane %v1131, %v1941
        %v1943 = vlaneseq
        %v1944 = vshrl.u32 %v1943, 7
        %v1945 = vsub.s32 6, %v1944
        %v1946 = vrot.slane %v1131, %v1945
        %v1947 = vlaneseq
        %v1948 = vshrl.u32 %v1947, 7
        %v1949 = vsub.s32 2, %v1948
        %v1950 = vrot.slane %v1132, %v1949
        %v1951 = vlaneseq
        %v1952 = vshrl.u32 %v1951, 7
        %v1953 = vsub.s32 6, %v1952
        %v1954 = vrot.slane %v1132, %v1953
        %v1955 = vlaneseq
        %v1956 = vshrl.u32 %v1955, 7
        %v1957 = vsub.s32 2, %v1956
        %v1958 = vrot.slane %v1133, %v1957
        %v1959 = vlaneseq
        %v1960 = vshrl.u32 %v1959, 7
        %v1961 = vsub.s32 6, %v1960
        %v1962 = vrot.slane %v1133, %v1961
        %v1963 = vlaneseq
        %v1964 = vshrl.u32 %v1963, 7
        %v1965 = vsub.s32 2, %v1964
        %v1966 = vrot.slane %v1134, %v1965
        %v1967 = vlaneseq
        %v1968 = vshrl.u32 %v1967, 7
        %v1969 = vsub.s32 6, %v1968
        %v1970 = vrot.slane %v1134, %v1969
        %v1971 = vlaneseq
        %v1972 = vshrl.u32 %v1971, 7
        %v1973 = vsub.s32 2, %v1972
        %v1974 = vrot.slane %v1135, %v1973
        %v1975 = vlaneseq
        %v1976 = vshrl.u32 %v1975, 7
        %v1977 = vsub.s32 6, %v1976
        %v1978 = vrot.slane %v1135, %v1977
        %v1979 = vlaneseq
        %v1980 = vshrl.u32 %v1979, 7
        %v1981 = vsub.s32 2, %v1980
        %v1982 = vrot.slane %v1136, %v1981
        %v1983 = vlaneseq
        %v1984 = vshrl.u32 %v1983, 7
        %v1985 = vsub.s32 6, %v1984
        %v1986 = vrot.slane %v1136, %v1985
        %v1987 = vlaneseq
        %v1988 = vshrl.u32 %v1987, 7
        %v1989 = vsub.s32 2, %v1988
        %v1990 = vrot.slane %v1137, %v1989
        %v1991 = vlaneseq
        %v1992 = vshrl.u32 %v1991, 7
        %v1993 = vsub.s32 6, %v1992
        %v1994 = vrot.slane %v1137, %v1993
        %v1995 = vlaneseq
        %v1996 = vshrl.u32 %v1995, 7
        %v1997 = vsub.s32 2, %v1996
        %v1998 = vrot.slane %v1138, %v1997
        %v1999 = vlaneseq
        %v2000 = vshrl.u32 %v1999, 7
        %v2001 = vsub.s32 6, %v2000
        %v2002 = vrot.slane %v1138, %v2001
        %v2003 = vlaneseq
        %v2004 = vshrl.u32 %v2003, 7
        %v2005 = vsub.s32 2, %v2004
        %v2006 = vrot.slane %v1139, %v2005
        %v2007 = vlaneseq
        %v2008 = vshrl.u32 %v2007, 7
        %v2009 = vsub.s32 6, %v2008
        %v2010 = vrot.slane %v1139, %v2009
        %v2011 = vlaneseq
        %v2012 = vshrl.u32 %v2011, 7
        %v2013 = vsub.s32 2, %v2012
        %v2014 = vrot.slane %v1140, %v2013
        %v2015 = vlaneseq
        %v2016 = vshrl.u32 %v2015, 7
        %v2017 = vsub.s32 6, %v2016
        %v2018 = vrot.slane %v1140, %v2017
        %v2019 = vlaneseq
        %v2020 = vshrl.u32 %v2019, 7
        %v2021 = vsub.s32 2, %v2020
        %v2022 = vrot.slane %v1141, %v2021
        %v2023 = vlaneseq
        %v2024 = vshrl.u32 %v2023, 7
        %v2025 = vsub.s32 6, %v2024
        %v2026 = vrot.slane %v1141, %v2025
        %v2027 = vlaneseq
        %v2028 = vshrl.u32 %v2027, 7
        %v2029 = vsub.s32 2, %v2028
        %v2030 = vrot.slane %v1142, %v2029
        %v2031 = vlaneseq
        %v2032 = vshrl.u32 %v2031, 7
        %v2033 = vsub.s32 6, %v2032
        %v2034 = vrot.slane %v1142, %v2033
        %v2035 = vlaneseq
        %v2036 = vshrl.u32 %v2035, 7
        %v2037 = vsub.s32 2, %v2036
        %v2038 = vrot.slane %v1143, %v2037
        %v2039 = vlaneseq
        %v2040 = vshrl.u32 %v2039, 7
        %v2041 = vsub.s32 6, %v2040
        %v2042 = vrot.slane %v1143, %v2041
        %v2043 = vlaneseq
        %v2044 = vshrl.u32 %v2043, 7
        %v2045 = vsub.s32 2, %v2044
        %v2046 = vrot.slane %v1144, %v2045
        %v2047 = vlaneseq
        %v2048 = vshrl.u32 %v2047, 7
        %v2049 = vsub.s32 6, %v2048
        %v2050 = vrot.slane %v1144, %v2049
        %v2051 = vlaneseq
        %v2052 = vshrl.u32 %v2051, 7
        %v2053 = vsub.s32 2, %v2052
        %v2054 = vrot.slane %v1145, %v2053
        %v2055 = vlaneseq
        %v2056 = vshrl.u32 %v2055, 7
        %v2057 = vsub.s32 6, %v2056
        %v2058 = vrot.slane %v1145, %v2057
        %v2059 = vsel %vm1676, %v1814, %v1806
        %v2060 = vsel %vm1678, %v1822, %v2059
        %v2061 = vsel %vm1680, %v1830, %v2060
        %v2062 = vsel %vm1682, %v1838, %v2061
        %v2063 = vsel %vm1684, %v1846, %v2062
        %v2064 = vsel %vm1686, %v1854, %v2063
        %v2065 = vsel %vm1688, %v1862, %v2064
        %v2066 = vsel %vm1676, %v1818, %v1810
        %v2067 = vsel %vm1678, %v1826, %v2066
        %v2068 = vsel %vm1680, %v1834, %v2067
        %v2069 = vsel %vm1682, %v1842, %v2068
        %v2070 = vsel %vm1684, %v1850, %v2069
        %v2071 = vsel %vm1686, %v1858, %v2070
        %v2072 = vsel %vm1688, %v1866, %v2071
        %v2073 = vsel %vm1676, %v1878, %v1870
        %v2074 = vsel %vm1678, %v1886, %v2073
        %v2075 = vsel %vm1680, %v1894, %v2074
        %v2076 = vsel %vm1682, %v1902, %v2075
        %v2077 = vsel %vm1684, %v1910, %v2076
        %v2078 = vsel %vm1686, %v1918, %v2077
        %v2079 = vsel %vm1688, %v1926, %v2078
        %v2080 = vsel %vm1676, %v1882, %v1874
        %v2081 = vsel %vm1678, %v1890, %v2080
        %v2082 = vsel %vm1680, %v1898, %v2081
        %v2083 = vsel %vm1682, %v1906, %v2082
        %v2084 = vsel %vm1684, %v1914, %v2083
        %v2085 = vsel %vm1686, %v1922, %v2084
        %v2086 = vsel %vm1688, %v1930, %v2085
        %v2087 = vsel %vm1676, %v1942, %v1934
        %v2088 = vsel %vm1678, %v1950, %v2087
        %v2089 = vsel %vm1680, %v1958, %v2088
        %v2090 = vsel %vm1682, %v1966, %v2089
        %v2091 = vsel %vm1684, %v1974, %v2090
        %v2092 = vsel %vm1686, %v1982, %v2091
        %v2093 = vsel %vm1688, %v1990, %v2092
        %v2094 = vsel %vm1676, %v1946, %v1938
        %v2095 = vsel %vm1678, %v1954, %v2094
        %v2096 = vsel %vm1680, %v1962, %v2095
        %v2097 = vsel %vm1682, %v1970, %v2096
        %v2098 = vsel %vm1684, %v1978, %v2097
        %v2099 = vsel %vm1686, %v1986, %v2098
        %v2100 = vsel %vm1688, %v1994, %v2099
        %v2101 = vsel %vm1676, %v2006, %v1998
        %v2102 = vsel %vm1678, %v2014, %v2101
        %v2103 = vsel %vm1680, %v2022, %v2102
        %v2104 = vsel %vm1682, %v2030, %v2103
        %v2105 = vsel %vm1684, %v2038, %v2104
        %v2106 = vsel %vm1686, %v2046, %v2105
        %v2107 = vsel %vm1688, %v2054, %v2106
        %v2108 = vsel %vm1676, %v2010, %v2002
        %v2109 = vsel %vm1678, %v2018, %v2108
        %v2110 = vsel %vm1680, %v2026, %v2109
        %v2111 = vsel %vm1682, %v2034, %v2110
        %v2112 = vsel %vm1684, %v2042, %v2111
        %v2113 = vsel %vm1686, %v2050, %v2112
        %v2114 = vsel %vm1688, %v2058, %v2113
        %v2123 = vsel %vm1767, %v2065, %v1747
        %v2124 = vsel %vm1767, %v2072, %v1748
        %v2125 = vsel %vm1768, %v2079, %v1749
        %v2126 = vsel %vm1768, %v2086, %v1750
        %v2127 = vsel %vm1769, %v2093, %v1751
        %v2128 = vsel %vm1769, %v2100, %v1752
        %v2129 = vsel %vm1770, %v2107, %v1753
        %v2130 = vsel %vm1770, %v2114, %v1754
        %v2131 = vmax.f32 %v2123, 0.0
        %v2132 = vmax.f32 %v2124, 0.0
        %v2133 = vmax.f32 %v2125, 0.0
        %v2134 = vmax.f32 %v2126, 0.0
        %v2135 = vmax.f32 %v2127, 0.0
        %v2136 = vmax.f32 %v2128, 0.0
        %v2137 = vmax.f32 %v2129, 0.0
        %v2138 = vmax.f32 %v2130, 0.0
        %s2139 = smul.addr %s707, 4
        %s2140 = scalar_lea.vmem %s7, %s2139
        %v2141 = vld [vmem:[%s2140] sm:$0xf]
        %v2142 = vld [vmem:[%s2140 + $0x4] sm:$0xf]
        %v2143 = vld [vmem:[%s2140 + $0x8] sm:$0xf]
        %v2144 = vld [vmem:[%s2140 + $0xc] sm:$0xf]
        %v2145 = vpack.c.bf16 %v2133, %v2131
        %v2146 = vpack.c.bf16 %v2134, %v2132
        %v2147 = vpack.c.bf16 %v2137, %v2135
        %v2148 = vpack.c.bf16 %v2138, %v2136
        %s2149 = scalar_lea.vmem %s8, %s718
        %v2150 = vld [vmem:[%s2149] sm:$0xff]
        %v2151 = vld [vmem:[%s2149 + $0x8] sm:$0xff]
        %v2152 = vld [vmem:[%s2149 + $0x10] sm:$0xff]
        %v2153 = vld [vmem:[%s2149 + $0x18] sm:$0xff]
        %2155 = vset.pattern.permute.xlu0 0
        %2156 = vperm.xlu0 %2155, %v2150
        %v2157 = vpop.permute.xlu0 %2156
        %2160 = vset.pattern.permute.xlu0 0
        %2161 = vperm.xlu0 %2160, %v2151
        %v2162 = vpop.permute.xlu0 %2161
        %2165 = vset.pattern.permute.xlu0 0
        %2166 = vperm.xlu0 %2165, %v2152
        %v2167 = vpop.permute.xlu0 %2166
        %2170 = vset.pattern.permute.xlu0 0
        %2171 = vperm.xlu0 %2170, %v2153
        %v2172 = vpop.permute.xlu0 %2171
        %v2178 = vunpack.c.l.b16 %v2141
        %v2179 = vunpack.c.l.b16 %v2142
        %v2180 = vunpack.c.l.b16 %v2143
        %v2181 = vunpack.c.l.b16 %v2144
        %v2182 = vpack.c.b16 %v2179, %v2178
        %v2183 = vpack.c.b16 %v2181, %v2180
        %v2185 = vsel %vm754, %v2182, 0
        %v2188 = vsel %vm754, %v2183, 0
        %2190 = vmatprep.subr.bf16.mxu0 0
        %2191 = vmatpush1.bf16.msra.mxu0 0
        %2192 = vmatprep.subr.bf16.mxu0 0
        %2193 = vmatpush1.bf16.msra.mxu0 0
        %2194 = vmatprep.subr.bf16.mxu0 0
        %2195 = vmatpush1.bf16.msra.mxu0 0
        %2196 = vmatprep.subr.bf16.mxu0 0
        %2197 = vmatpush1.bf16.msra.mxu0 0
        %2198 = vmatprep.subr.bf16.mxu0 0
        %2199 = vmatpush1.bf16.msra.mxu0 0
        %2200 = vmatprep.subr.bf16.mxu0 0
        %2201 = vmatpush1.bf16.msra.mxu0 0
        %2202 = vmatprep.subr.bf16.mxu0 %v2148
        %2203 = vmatpush1.bf16.msra.mxu0 %v2147
        %2204 = vmatprep.subr.bf16.mxu0 %v2146
        %2205 = vmatpush1.bf16.msra.mxu0 %v2145
        %2206 = vmatprep.subr.bf16.mxu0 0
        %2207 = vmatpush2.bf16.msra.mxu0 0
        %2208 = vmatprep.subr.bf16.mxu0 0
        %2209 = vmatpush2.bf16.msra.mxu0 0
        %2210 = vmatprep.subr.bf16.mxu0 0
        %2211 = vmatpush2.bf16.msra.mxu0 0
        %2212 = vmatprep.subr.bf16.mxu0 0
        %2213 = vmatpush2.bf16.msra.mxu0 0
        %2214 = vmatprep.subr.bf16.mxu0 0
        %2215 = vmatpush2.bf16.msra.mxu0 0
        %2216 = vmatprep.subr.bf16.mxu0 0
        %2217 = vmatpush2.bf16.msra.mxu0 0
        %2218 = vmatprep.subr.bf16.mxu0 0
        %2219 = vmatpush2.bf16.msra.mxu0 0
        %2220 = vmatprep.subr.bf16.mxu0 0
        %2221 = vmatpush2.bf16.msra.mxu0 0
        %2222 = vmatprep.mubr.bf16.mxu0 0
        %2223 = vmatmul.mubr.bf16.gmra.mxu0 %v2185
        %v2224 = vpop.f32.mrf.mxu0
        %v2225 = vadd.f32 %v2157, %v2224
        %v2226 = vpop.f32.mrf.mxu0
        %v2227 = vadd.f32 %v2157, %v2226
        %v2228 = vpop.f32.mrf.mxu0
        %v2229 = vadd.f32 %v2162, %v2228
        %v2230 = vpop.f32.mrf.mxu0
        %v2231 = vadd.f32 %v2162, %v2230
        %2232 = vmatprep.mubr.bf16.mxu0 0
        %2233 = vmatmul.mubr.bf16.gmra.mxu0 %v2188
        %v2234 = vpop.f32.mrf.mxu0
        %v2235 = vadd.f32 %v2167, %v2234
        %v2236 = vpop.f32.mrf.mxu0
        %v2237 = vadd.f32 %v2167, %v2236
        %v2238 = vpop.f32.mrf.mxu0
        %v2239 = vadd.f32 %v2172, %v2238
        %v2240 = vpop.f32.mrf.mxu0
        %v2241 = vadd.f32 %v2172, %v2240
        %2242 = vdwg.mxu0
        %v2243 = vadd.f32 %v699, %v2225
        %v2244 = vadd.f32 %v700, %v2227
        %v2245 = vadd.f32 %v701, %v2229
        %v2246 = vadd.f32 %v702, %v2231
        %v2247 = vadd.f32 %v703, %v2235
        %v2248 = vadd.f32 %v704, %v2237
        %v2249 = vadd.f32 %v705, %v2239
        %v2250 = vadd.f32 %v706, %v2241
      $region93: #{srscnet_forward.1} parent=87 // loop_footer
        %s698 = sadd.s32 1, %s694
      $region94: #{srscnet_forward.1} parent=87 // loop_footer_branch
        %693 = sbr.rel target = $region90
      $region95: #{srscnet_forward.1} parent=87 // loop_exit
        _
      %2251 = vrot.lane.b32.xlu0 %v699, 16
      %v2252 = vpop.permute.xlu0 %2251
      %2253 = vrot.lane.b32.xlu0 %v701, 16
      %v2254 = vpop.permute.xlu0 %2253
      %2255 = vrot.lane.b32.xlu0 %v703, 16
      %v2256 = vpop.permute.xlu0 %2255
      %2257 = vrot.lane.b32.xlu0 %v705, 16
      %v2258 = vpop.permute.xlu0 %2257
      %2259 = vrot.lane.b32.xlu0 %v700, 16
      %v2260 = vpop.permute.xlu0 %2259
      %2261 = vrot.lane.b32.xlu0 %v702, 16
      %v2262 = vpop.permute.xlu0 %2261
      %2263 = vrot.lane.b32.xlu0 %v704, 16
      %v2264 = vpop.permute.xlu0 %2263
      %2265 = vrot.lane.b32.xlu0 %v706, 16
      %v2266 = vpop.permute.xlu0 %2265
      %v2267 = vlaneseq
      %v2268 = vand.u32 %v2267, 127
      %vm2269 = vcmp.lt.s32.totalorder %v2268, 16
      %v2270 = vsel %vm2269, %v2252, %v2260
      %v2271 = vsel %vm2269, %v2254, %v2262
      %v2272 = vsel %vm2269, %v2256, %v2264
      %v2273 = vsel %vm2269, %v2258, %v2266
      %v2274 = vsel %vm2269, %v2260, %v2252
      %v2275 = vsel %vm2269, %v2262, %v2254
      %v2276 = vsel %vm2269, %v2264, %v2256
      %v2277 = vsel %vm2269, %v2266, %v2258
      %v2278 = vsel %vm559, 1, 0
      %vm2279 = vcmp.eq.s32.totalorder %v2278, 1
      %v2288 = vcombine.low %v699, %v700
      %v2289 = vcombine.high %v699, %v700
      %v2290 = vcombine.low %v701, %v702
      %v2291 = vcombine.high %v701, %v702
      %v2292 = vcombine.low %v703, %v704
      %v2293 = vcombine.high %v703, %v704
      %v2294 = vcombine.low %v705, %v706
      %v2295 = vcombine.high %v705, %v706
      %v2296 = vrot.slane %v2288, 1
      %v2297 = vrot.slane %v2288, 2
      %v2298 = vrot.slane %v2288, 3
      %v2299 = vrot.slane %v2289, 1
      %v2300 = vrot.slane %v2289, 2
      %v2301 = vrot.slane %v2289, 3
      %v2302 = vrot.slane %v2290, 1
      %v2303 = vrot.slane %v2290, 2
      %v2304 = vrot.slane %v2290, 3
      %v2305 = vrot.slane %v2291, 1
      %v2306 = vrot.slane %v2291, 2
      %v2307 = vrot.slane %v2291, 3
      %v2308 = vrot.slane %v2292, 1
      %v2309 = vrot.slane %v2292, 2
      %v2310 = vrot.slane %v2292, 3
      %v2311 = vrot.slane %v2293, 1
      %v2312 = vrot.slane %v2293, 2
      %v2313 = vrot.slane %v2293, 3
      %v2314 = vrot.slane %v2294, 1
      %v2315 = vrot.slane %v2294, 2
      %v2316 = vrot.slane %v2294, 3
      %v2317 = vrot.slane %v2295, 1
      %v2318 = vrot.slane %v2295, 2
      %v2319 = vrot.slane %v2295, 3
      %v2360 = vcombine.low %v2274, %v2270
      %v2361 = vcombine.high %v2274, %v2270
      %v2362 = vcombine.low %v2275, %v2271
      %v2363 = vcombine.high %v2275, %v2271
      %v2364 = vcombine.low %v2276, %v2272
      %v2365 = vcombine.high %v2276, %v2272
      %v2366 = vcombine.low %v2277, %v2273
      %v2367 = vcombine.high %v2277, %v2273
      %v2368 = vrot.slane %v2360, 1
      %v2369 = vrot.slane %v2360, 2
      %v2370 = vrot.slane %v2360, 3
      %v2371 = vrot.slane %v2361, 1
      %v2372 = vrot.slane %v2361, 2
      %v2373 = vrot.slane %v2361, 3
      %v2374 = vrot.slane %v2362, 1
      %v2375 = vrot.slane %v2362, 2
      %v2376 = vrot.slane %v2362, 3
      %v2377 = vrot.slane %v2363, 1
      %v2378 = vrot.slane %v2363, 2
      %v2379 = vrot.slane %v2363, 3
      %v2380 = vrot.slane %v2364, 1
      %v2381 = vrot.slane %v2364, 2
      %v2382 = vrot.slane %v2364, 3
      %v2383 = vrot.slane %v2365, 1
      %v2384 = vrot.slane %v2365, 2
      %v2385 = vrot.slane %v2365, 3
      %v2386 = vrot.slane %v2366, 1
      %v2387 = vrot.slane %v2366, 2
      %v2388 = vrot.slane %v2366, 3
      %v2389 = vrot.slane %v2367, 1
      %v2390 = vrot.slane %v2367, 2
      %v2391 = vrot.slane %v2367, 3
      %v2424 = vsel %vm2279, %v2288, %v2360
      %v2425 = vsel %vm2279, %v2296, %v2368
      %v2426 = vsel %vm2279, %v2297, %v2369
      %v2427 = vsel %vm2279, %v2298, %v2370
      %v2428 = vsel %vm2279, %v2289, %v2361
      %v2429 = vsel %vm2279, %v2299, %v2371
      %v2430 = vsel %vm2279, %v2300, %v2372
      %v2431 = vsel %vm2279, %v2301, %v2373
      %v2432 = vsel %vm2279, %v2290, %v2362
      %v2433 = vsel %vm2279, %v2302, %v2374
      %v2434 = vsel %vm2279, %v2303, %v2375
      %v2435 = vsel %vm2279, %v2304, %v2376
      %v2436 = vsel %vm2279, %v2291, %v2363
      %v2437 = vsel %vm2279, %v2305, %v2377
      %v2438 = vsel %vm2279, %v2306, %v2378
      %v2439 = vsel %vm2279, %v2307, %v2379
      %v2440 = vsel %vm2279, %v2292, %v2364
      %v2441 = vsel %vm2279, %v2308, %v2380
      %v2442 = vsel %vm2279, %v2309, %v2381
      %v2443 = vsel %vm2279, %v2310, %v2382
      %v2444 = vsel %vm2279, %v2293, %v2365
      %v2445 = vsel %vm2279, %v2311, %v2383
      %v2446 = vsel %vm2279, %v2312, %v2384
      %v2447 = vsel %vm2279, %v2313, %v2385
      %v2448 = vsel %vm2279, %v2294, %v2366
      %v2449 = vsel %vm2279, %v2314, %v2386
      %v2450 = vsel %vm2279, %v2315, %v2387
      %v2451 = vsel %vm2279, %v2316, %v2388
      %v2452 = vsel %vm2279, %v2295, %v2367
      %v2453 = vsel %vm2279, %v2317, %v2389
      %v2454 = vsel %vm2279, %v2318, %v2390
      %v2455 = vsel %vm2279, %v2319, %v2391
      %v2456 = vmul.f32 %v2424, 0.25
      %v2457 = vmul.f32 %v2425, 0.25
      %v2458 = vmul.f32 %v2426, 0.25
      %v2459 = vmul.f32 %v2427, 0.25
      %v2460 = vmul.f32 %v2428, 0.25
      %v2461 = vmul.f32 %v2429, 0.25
      %v2462 = vmul.f32 %v2430, 0.25
      %v2463 = vmul.f32 %v2431, 0.25
      %v2464 = vmul.f32 %v2432, 0.25
      %v2465 = vmul.f32 %v2433, 0.25
      %v2466 = vmul.f32 %v2434, 0.25
      %v2467 = vmul.f32 %v2435, 0.25
      %v2468 = vmul.f32 %v2436, 0.25
      %v2469 = vmul.f32 %v2437, 0.25
      %v2470 = vmul.f32 %v2438, 0.25
      %v2471 = vmul.f32 %v2439, 0.25
      %v2472 = vmul.f32 %v2440, 0.25
      %v2473 = vmul.f32 %v2441, 0.25
      %v2474 = vmul.f32 %v2442, 0.25
      %v2475 = vmul.f32 %v2443, 0.25
      %v2476 = vmul.f32 %v2444, 0.25
      %v2477 = vmul.f32 %v2445, 0.25
      %v2478 = vmul.f32 %v2446, 0.25
      %v2479 = vmul.f32 %v2447, 0.25
      %v2480 = vmul.f32 %v2448, 0.25
      %v2481 = vmul.f32 %v2449, 0.25
      %v2482 = vmul.f32 %v2450, 0.25
      %v2483 = vmul.f32 %v2451, 0.25
      %v2484 = vmul.f32 %v2452, 0.25
      %v2485 = vmul.f32 %v2453, 0.25
      %v2486 = vmul.f32 %v2454, 0.25
      %v2487 = vmul.f32 %v2455, 0.25
      %v2488 = vmul.f32 %v699, 0.75
      %v2489 = vmul.f32 %v700, 0.75
      %v2490 = vmul.f32 %v701, 0.75
      %v2491 = vmul.f32 %v702, 0.75
      %v2492 = vmul.f32 %v703, 0.75
      %v2493 = vmul.f32 %v704, 0.75
      %v2494 = vmul.f32 %v705, 0.75
      %v2495 = vmul.f32 %v706, 0.75
      %v2504 = vcombine.low %v2488, %v2489
      %v2505 = vcombine.high %v2488, %v2489
      %v2506 = vcombine.low %v2490, %v2491
      %v2507 = vcombine.high %v2490, %v2491
      %v2508 = vcombine.low %v2492, %v2493
      %v2509 = vcombine.high %v2492, %v2493
      %v2510 = vcombine.low %v2494, %v2495
      %v2511 = vcombine.high %v2494, %v2495
      %v2512 = vrot.slane %v2504, 1
      %v2513 = vrot.slane %v2504, 2
      %v2514 = vrot.slane %v2504, 3
      %v2515 = vrot.slane %v2505, 1
      %v2516 = vrot.slane %v2505, 2
      %v2517 = vrot.slane %v2505, 3
      %v2518 = vrot.slane %v2506, 1
      %v2519 = vrot.slane %v2506, 2
      %v2520 = vrot.slane %v2506, 3
      %v2521 = vrot.slane %v2507, 1
      %v2522 = vrot.slane %v2507, 2
      %v2523 = vrot.slane %v2507, 3
      %v2524 = vrot.slane %v2508, 1
      %v2525 = vrot.slane %v2508, 2
      %v2526 = vrot.slane %v2508, 3
      %v2527 = vrot.slane %v2509, 1
      %v2528 = vrot.slane %v2509, 2
      %v2529 = vrot.slane %v2509, 3
      %v2530 = vrot.slane %v2510, 1
      %v2531 = vrot.slane %v2510, 2
      %v2532 = vrot.slane %v2510, 3
      %v2533 = vrot.slane %v2511, 1
      %v2534 = vrot.slane %v2511, 2
      %v2535 = vrot.slane %v2511, 3
      %v2568 = vadd.f32 %v2456, %v2504
      %v2569 = vadd.f32 %v2457, %v2512
      %v2570 = vadd.f32 %v2458, %v2513
      %v2571 = vadd.f32 %v2459, %v2514
      %v2572 = vadd.f32 %v2460, %v2505
      %v2573 = vadd.f32 %v2461, %v2515
      %v2574 = vadd.f32 %v2462, %v2516
      %v2575 = vadd.f32 %v2463, %v2517
      %v2576 = vadd.f32 %v2464, %v2506
      %v2577 = vadd.f32 %v2465, %v2518
      %v2578 = vadd.f32 %v2466, %v2519
      %v2579 = vadd.f32 %v2467, %v2520
      %v2580 = vadd.f32 %v2468, %v2507
      %v2581 = vadd.f32 %v2469, %v2521
      %v2582 = vadd.f32 %v2470, %v2522
      %v2583 = vadd.f32 %v2471, %v2523
      %v2584 = vadd.f32 %v2472, %v2508
      %v2585 = vadd.f32 %v2473, %v2524
      %v2586 = vadd.f32 %v2474, %v2525
      %v2587 = vadd.f32 %v2475, %v2526
      %v2588 = vadd.f32 %v2476, %v2509
      %v2589 = vadd.f32 %v2477, %v2527
      %v2590 = vadd.f32 %v2478, %v2528
      %v2591 = vadd.f32 %v2479, %v2529
      %v2592 = vadd.f32 %v2480, %v2510
      %v2593 = vadd.f32 %v2481, %v2530
      %v2594 = vadd.f32 %v2482, %v2531
      %v2595 = vadd.f32 %v2483, %v2532
      %v2596 = vadd.f32 %v2484, %v2511
      %v2597 = vadd.f32 %v2485, %v2533
      %v2598 = vadd.f32 %v2486, %v2534
      %v2599 = vadd.f32 %v2487, %v2535
      %2600 = vrot.lane.b32.xlu0 %v699, 112
      %v2601 = vpop.permute.xlu0 %2600
      %2602 = vrot.lane.b32.xlu0 %v701, 112
      %v2603 = vpop.permute.xlu0 %2602
      %2604 = vrot.lane.b32.xlu0 %v703, 112
      %v2605 = vpop.permute.xlu0 %2604
      %2606 = vrot.lane.b32.xlu0 %v705, 112
      %v2607 = vpop.permute.xlu0 %2606
      %2608 = vrot.lane.b32.xlu0 %v700, 112
      %v2609 = vpop.permute.xlu0 %2608
      %2610 = vrot.lane.b32.xlu0 %v702, 112
      %v2611 = vpop.permute.xlu0 %2610
      %2612 = vrot.lane.b32.xlu0 %v704, 112
      %v2613 = vpop.permute.xlu0 %2612
      %2614 = vrot.lane.b32.xlu0 %v706, 112
      %v2615 = vpop.permute.xlu0 %2614
      %vm2616 = vcmp.lt.s32.totalorder %v2268, 112
      %v2617 = vsel %vm2616, %v2601, %v2609
      %v2618 = vsel %vm2616, %v2603, %v2611
      %v2619 = vsel %vm2616, %v2605, %v2613
      %v2620 = vsel %vm2616, %v2607, %v2615
      %v2621 = vsel %vm2616, %v2609, %v2601
      %v2622 = vsel %vm2616, %v2611, %v2603
      %v2623 = vsel %vm2616, %v2613, %v2605
      %v2624 = vsel %vm2616, %v2615, %v2607
      %v2625 = vrot.slane %v2288, 7
      %v2626 = vrot.slane %v2289, 7
      %v2627 = vrot.slane %v2290, 7
      %v2628 = vrot.slane %v2291, 7
      %v2629 = vrot.slane %v2292, 7
      %v2630 = vrot.slane %v2293, 7
      %v2631 = vrot.slane %v2294, 7
      %v2632 = vrot.slane %v2295, 7
      %v2649 = vcombine.low %v2617, %v2621
      %v2650 = vcombine.high %v2617, %v2621
      %v2651 = vcombine.low %v2618, %v2622
      %v2652 = vcombine.high %v2618, %v2622
      %v2653 = vcombine.low %v2619, %v2623
      %v2654 = vcombine.high %v2619, %v2623
      %v2655 = vcombine.low %v2620, %v2624
      %v2656 = vcombine.high %v2620, %v2624
      %v2657 = vrot.slane %v2649, 7
      %v2658 = vrot.slane %v2649, 1
      %v2659 = vrot.slane %v2649, 2
      %v2660 = vrot.slane %v2650, 7
      %v2661 = vrot.slane %v2650, 1
      %v2662 = vrot.slane %v2650, 2
      %v2663 = vrot.slane %v2651, 7
      %v2664 = vrot.slane %v2651, 1
      %v2665 = vrot.slane %v2651, 2
      %v2666 = vrot.slane %v2652, 7
      %v2667 = vrot.slane %v2652, 1
      %v2668 = vrot.slane %v2652, 2
      %v2669 = vrot.slane %v2653, 7
      %v2670 = vrot.slane %v2653, 1
      %v2671 = vrot.slane %v2653, 2
      %v2672 = vrot.slane %v2654, 7
      %v2673 = vrot.slane %v2654, 1
      %v2674 = vrot.slane %v2654, 2
      %v2675 = vrot.slane %v2655, 7
      %v2676 = vrot.slane %v2655, 1
      %v2677 = vrot.slane %v2655, 2
      %v2678 = vrot.slane %v2656, 7
      %v2679 = vrot.slane %v2656, 1
      %v2680 = vrot.slane %v2656, 2
      %v2713 = vsel %vm2279, %v2625, %v2657
      %v2714 = vsel %vm2279, %v2288, %v2649
      %v2715 = vsel %vm2279, %v2296, %v2658
      %v2716 = vsel %vm2279, %v2297, %v2659
      %v2717 = vsel %vm2279, %v2626, %v2660
      %v2718 = vsel %vm2279, %v2289, %v2650
      %v2719 = vsel %vm2279, %v2299, %v2661
      %v2720 = vsel %vm2279, %v2300, %v2662
      %v2721 = vsel %vm2279, %v2627, %v2663
      %v2722 = vsel %vm2279, %v2290, %v2651
      %v2723 = vsel %vm2279, %v2302, %v2664
      %v2724 = vsel %vm2279, %v2303, %v2665
      %v2725 = vsel %vm2279, %v2628, %v2666
      %v2726 = vsel %vm2279, %v2291, %v2652
      %v2727 = vsel %vm2279, %v2305, %v2667
      %v2728 = vsel %vm2279, %v2306, %v2668
      %v2729 = vsel %vm2279, %v2629, %v2669
      %v2730 = vsel %vm2279, %v2292, %v2653
      %v2731 = vsel %vm2279, %v2308, %v2670
      %v2732 = vsel %vm2279, %v2309, %v2671
      %v2733 = vsel %vm2279, %v2630, %v2672
      %v2734 = vsel %vm2279, %v2293, %v2654
      %v2735 = vsel %vm2279, %v2311, %v2673
      %v2736 = vsel %vm2279, %v2312, %v2674
      %v2737 = vsel %vm2279, %v2631, %v2675
      %v2738 = vsel %vm2279, %v2294, %v2655
      %v2739 = vsel %vm2279, %v2314, %v2676
      %v2740 = vsel %vm2279, %v2315, %v2677
      %v2741 = vsel %vm2279, %v2632, %v2678
      %v2742 = vsel %vm2279, %v2295, %v2656
      %v2743 = vsel %vm2279, %v2317, %v2679
      %v2744 = vsel %vm2279, %v2318, %v2680
      %v2745 = vmul.f32 %v2713, 0.25
      %v2746 = vmul.f32 %v2714, 0.25
      %v2747 = vmul.f32 %v2715, 0.25
      %v2748 = vmul.f32 %v2716, 0.25
      %v2749 = vmul.f32 %v2717, 0.25
      %v2750 = vmul.f32 %v2718, 0.25
      %v2751 = vmul.f32 %v2719, 0.25
      %v2752 = vmul.f32 %v2720, 0.25
      %v2753 = vmul.f32 %v2721, 0.25
      %v2754 = vmul.f32 %v2722, 0.25
      %v2755 = vmul.f32 %v2723, 0.25
      %v2756 = vmul.f32 %v2724, 0.25
      %v2757 = vmul.f32 %v2725, 0.25
      %v2758 = vmul.f32 %v2726, 0.25
      %v2759 = vmul.f32 %v2727, 0.25
      %v2760 = vmul.f32 %v2728, 0.25
      %v2761 = vmul.f32 %v2729, 0.25
      %v2762 = vmul.f32 %v2730, 0.25
      %v2763 = vmul.f32 %v2731, 0.25
      %v2764 = vmul.f32 %v2732, 0.25
      %v2765 = vmul.f32 %v2733, 0.25
      %v2766 = vmul.f32 %v2734, 0.25
      %v2767 = vmul.f32 %v2735, 0.25
      %v2768 = vmul.f32 %v2736, 0.25
      %v2769 = vmul.f32 %v2737, 0.25
      %v2770 = vmul.f32 %v2738, 0.25
      %v2771 = vmul.f32 %v2739, 0.25
      %v2772 = vmul.f32 %v2740, 0.25
      %v2773 = vmul.f32 %v2741, 0.25
      %v2774 = vmul.f32 %v2742, 0.25
      %v2775 = vmul.f32 %v2743, 0.25
      %v2776 = vmul.f32 %v2744, 0.25
      %v2809 = vlaneseq
      %v2810 = vshrl.u32 %v2809, 7
      %v2811 = vsub.s32 1, %v2810
      %v2812 = vrot.slane %v2745, %v2811
      %v2813 = vlaneseq
      %v2814 = vshrl.u32 %v2813, 7
      %v2815 = vsub.s32 5, %v2814
      %v2816 = vrot.slane %v2745, %v2815
      %v2817 = vlaneseq
      %v2818 = vshrl.u32 %v2817, 7
      %v2819 = vsub.s32 1, %v2818
      %v2820 = vrot.slane %v2746, %v2819
      %v2821 = vlaneseq
      %v2822 = vshrl.u32 %v2821, 7
      %v2823 = vsub.s32 5, %v2822
      %v2824 = vrot.slane %v2746, %v2823
      %v2825 = vlaneseq
      %v2826 = vshrl.u32 %v2825, 7
      %v2827 = vsub.s32 1, %v2826
      %v2828 = vrot.slane %v2747, %v2827
      %v2829 = vlaneseq
      %v2830 = vshrl.u32 %v2829, 7
      %v2831 = vsub.s32 5, %v2830
      %v2832 = vrot.slane %v2747, %v2831
      %v2833 = vlaneseq
      %v2834 = vshrl.u32 %v2833, 7
      %v2835 = vsub.s32 1, %v2834
      %v2836 = vrot.slane %v2748, %v2835
      %v2837 = vlaneseq
      %v2838 = vshrl.u32 %v2837, 7
      %v2839 = vsub.s32 5, %v2838
      %v2840 = vrot.slane %v2748, %v2839
      %v2841 = vlaneseq
      %v2842 = vshrl.u32 %v2841, 7
      %v2843 = vsub.s32 1, %v2842
      %v2844 = vrot.slane %v2749, %v2843
      %v2845 = vlaneseq
      %v2846 = vshrl.u32 %v2845, 7
      %v2847 = vsub.s32 5, %v2846
      %v2848 = vrot.slane %v2749, %v2847
      %v2849 = vlaneseq
      %v2850 = vshrl.u32 %v2849, 7
      %v2851 = vsub.s32 1, %v2850
      %v2852 = vrot.slane %v2750, %v2851
      %v2853 = vlaneseq
      %v2854 = vshrl.u32 %v2853, 7
      %v2855 = vsub.s32 5, %v2854
      %v2856 = vrot.slane %v2750, %v2855
      %v2857 = vlaneseq
      %v2858 = vshrl.u32 %v2857, 7
      %v2859 = vsub.s32 1, %v2858
      %v2860 = vrot.slane %v2751, %v2859
      %v2861 = vlaneseq
      %v2862 = vshrl.u32 %v2861, 7
      %v2863 = vsub.s32 5, %v2862
      %v2864 = vrot.slane %v2751, %v2863
      %v2865 = vlaneseq
      %v2866 = vshrl.u32 %v2865, 7
      %v2867 = vsub.s32 1, %v2866
      %v2868 = vrot.slane %v2752, %v2867
      %v2869 = vlaneseq
      %v2870 = vshrl.u32 %v2869, 7
      %v2871 = vsub.s32 5, %v2870
      %v2872 = vrot.slane %v2752, %v2871
      %v2873 = vlaneseq
      %v2874 = vshrl.u32 %v2873, 7
      %v2875 = vsub.s32 1, %v2874
      %v2876 = vrot.slane %v2753, %v2875
      %v2877 = vlaneseq
      %v2878 = vshrl.u32 %v2877, 7
      %v2879 = vsub.s32 5, %v2878
      %v2880 = vrot.slane %v2753, %v2879
      %v2881 = vlaneseq
      %v2882 = vshrl.u32 %v2881, 7
      %v2883 = vsub.s32 1, %v2882
      %v2884 = vrot.slane %v2754, %v2883
      %v2885 = vlaneseq
      %v2886 = vshrl.u32 %v2885, 7
      %v2887 = vsub.s32 5, %v2886
      %v2888 = vrot.slane %v2754, %v2887
      %v2889 = vlaneseq
      %v2890 = vshrl.u32 %v2889, 7
      %v2891 = vsub.s32 1, %v2890
      %v2892 = vrot.slane %v2755, %v2891
      %v2893 = vlaneseq
      %v2894 = vshrl.u32 %v2893, 7
      %v2895 = vsub.s32 5, %v2894
      %v2896 = vrot.slane %v2755, %v2895
      %v2897 = vlaneseq
      %v2898 = vshrl.u32 %v2897, 7
      %v2899 = vsub.s32 1, %v2898
      %v2900 = vrot.slane %v2756, %v2899
      %v2901 = vlaneseq
      %v2902 = vshrl.u32 %v2901, 7
      %v2903 = vsub.s32 5, %v2902
      %v2904 = vrot.slane %v2756, %v2903
      %v2905 = vlaneseq
      %v2906 = vshrl.u32 %v2905, 7
      %v2907 = vsub.s32 1, %v2906
      %v2908 = vrot.slane %v2757, %v2907
      %v2909 = vlaneseq
      %v2910 = vshrl.u32 %v2909, 7
      %v2911 = vsub.s32 5, %v2910
      %v2912 = vrot.slane %v2757, %v2911
      %v2913 = vlaneseq
      %v2914 = vshrl.u32 %v2913, 7
      %v2915 = vsub.s32 1, %v2914
      %v2916 = vrot.slane %v2758, %v2915
      %v2917 = vlaneseq
      %v2918 = vshrl.u32 %v2917, 7
      %v2919 = vsub.s32 5, %v2918
      %v2920 = vrot.slane %v2758, %v2919
      %v2921 = vlaneseq
      %v2922 = vshrl.u32 %v2921, 7
      %v2923 = vsub.s32 1, %v2922
      %v2924 = vrot.slane %v2759, %v2923
      %v2925 = vlaneseq
      %v2926 = vshrl.u32 %v2925, 7
      %v2927 = vsub.s32 5, %v2926
      %v2928 = vrot.slane %v2759, %v2927
      %v2929 = vlaneseq
      %v2930 = vshrl.u32 %v2929, 7
      %v2931 = vsub.s32 1, %v2930
      %v2932 = vrot.slane %v2760, %v2931
      %v2933 = vlaneseq
      %v2934 = vshrl.u32 %v2933, 7
      %v2935 = vsub.s32 5, %v2934
      %v2936 = vrot.slane %v2760, %v2935
      %v2937 = vlaneseq
      %v2938 = vshrl.u32 %v2937, 7
      %v2939 = vsub.s32 1, %v2938
      %v2940 = vrot.slane %v2761, %v2939
      %v2941 = vlaneseq
      %v2942 = vshrl.u32 %v2941, 7
      %v2943 = vsub.s32 5, %v2942
      %v2944 = vrot.slane %v2761, %v2943
      %v2945 = vlaneseq
      %v2946 = vshrl.u32 %v2945, 7
      %v2947 = vsub.s32 1, %v2946
      %v2948 = vrot.slane %v2762, %v2947
      %v2949 = vlaneseq
      %v2950 = vshrl.u32 %v2949, 7
      %v2951 = vsub.s32 5, %v2950
      %v2952 = vrot.slane %v2762, %v2951
      %v2953 = vlaneseq
      %v2954 = vshrl.u32 %v2953, 7
      %v2955 = vsub.s32 1, %v2954
      %v2956 = vrot.slane %v2763, %v2955
      %v2957 = vlaneseq
      %v2958 = vshrl.u32 %v2957, 7
      %v2959 = vsub.s32 5, %v2958
      %v2960 = vrot.slane %v2763, %v2959
      %v2961 = vlaneseq
      %v2962 = vshrl.u32 %v2961, 7
      %v2963 = vsub.s32 1, %v2962
      %v2964 = vrot.slane %v2764, %v2963
      %v2965 = vlaneseq
      %v2966 = vshrl.u32 %v2965, 7
      %v2967 = vsub.s32 5, %v2966
      %v2968 = vrot.slane %v2764, %v2967
      %v2969 = vlaneseq
      %v2970 = vshrl.u32 %v2969, 7
      %v2971 = vsub.s32 1, %v2970
      %v2972 = vrot.slane %v2765, %v2971
      %v2973 = vlaneseq
      %v2974 = vshrl.u32 %v2973, 7
      %v2975 = vsub.s32 5, %v2974
      %v2976 = vrot.slane %v2765, %v2975
      %v2977 = vlaneseq
      %v2978 = vshrl.u32 %v2977, 7
      %v2979 = vsub.s32 1, %v2978
      %v2980 = vrot.slane %v2766, %v2979
      %v2981 = vlaneseq
      %v2982 = vshrl.u32 %v2981, 7
      %v2983 = vsub.s32 5, %v2982
      %v2984 = vrot.slane %v2766, %v2983
      %v2985 = vlaneseq
      %v2986 = vshrl.u32 %v2985, 7
      %v2987 = vsub.s32 1, %v2986
      %v2988 = vrot.slane %v2767, %v2987
      %v2989 = vlaneseq
      %v2990 = vshrl.u32 %v2989, 7
      %v2991 = vsub.s32 5, %v2990
      %v2992 = vrot.slane %v2767, %v2991
      %v2993 = vlaneseq
      %v2994 = vshrl.u32 %v2993, 7
      %v2995 = vsub.s32 1, %v2994
      %v2996 = vrot.slane %v2768, %v2995
      %v2997 = vlaneseq
      %v2998 = vshrl.u32 %v2997, 7
      %v2999 = vsub.s32 5, %v2998
      %v3000 = vrot.slane %v2768, %v2999
      %v3001 = vlaneseq
      %v3002 = vshrl.u32 %v3001, 7
      %v3003 = vsub.s32 1, %v3002
      %v3004 = vrot.slane %v2769, %v3003
      %v3005 = vlaneseq
      %v3006 = vshrl.u32 %v3005, 7
      %v3007 = vsub.s32 5, %v3006
      %v3008 = vrot.slane %v2769, %v3007
      %v3009 = vlaneseq
      %v3010 = vshrl.u32 %v3009, 7
      %v3011 = vsub.s32 1, %v3010
      %v3012 = vrot.slane %v2770, %v3011
      %v3013 = vlaneseq
      %v3014 = vshrl.u32 %v3013, 7
      %v3015 = vsub.s32 5, %v3014
      %v3016 = vrot.slane %v2770, %v3015
      %v3017 = vlaneseq
      %v3018 = vshrl.u32 %v3017, 7
      %v3019 = vsub.s32 1, %v3018
      %v3020 = vrot.slane %v2771, %v3019
      %v3021 = vlaneseq
      %v3022 = vshrl.u32 %v3021, 7
      %v3023 = vsub.s32 5, %v3022
      %v3024 = vrot.slane %v2771, %v3023
      %v3025 = vlaneseq
      %v3026 = vshrl.u32 %v3025, 7
      %v3027 = vsub.s32 1, %v3026
      %v3028 = vrot.slane %v2772, %v3027
      %v3029 = vlaneseq
      %v3030 = vshrl.u32 %v3029, 7
      %v3031 = vsub.s32 5, %v3030
      %v3032 = vrot.slane %v2772, %v3031
      %v3033 = vlaneseq
      %v3034 = vshrl.u32 %v3033, 7
      %v3035 = vsub.s32 1, %v3034
      %v3036 = vrot.slane %v2773, %v3035
      %v3037 = vlaneseq
      %v3038 = vshrl.u32 %v3037, 7
      %v3039 = vsub.s32 5, %v3038
      %v3040 = vrot.slane %v2773, %v3039
      %v3041 = vlaneseq
      %v3042 = vshrl.u32 %v3041, 7
      %v3043 = vsub.s32 1, %v3042
      %v3044 = vrot.slane %v2774, %v3043
      %v3045 = vlaneseq
      %v3046 = vshrl.u32 %v3045, 7
      %v3047 = vsub.s32 5, %v3046
      %v3048 = vrot.slane %v2774, %v3047
      %v3049 = vlaneseq
      %v3050 = vshrl.u32 %v3049, 7
      %v3051 = vsub.s32 1, %v3050
      %v3052 = vrot.slane %v2775, %v3051
      %v3053 = vlaneseq
      %v3054 = vshrl.u32 %v3053, 7
      %v3055 = vsub.s32 5, %v3054
      %v3056 = vrot.slane %v2775, %v3055
      %v3057 = vlaneseq
      %v3058 = vshrl.u32 %v3057, 7
      %v3059 = vsub.s32 1, %v3058
      %v3060 = vrot.slane %v2776, %v3059
      %v3061 = vlaneseq
      %v3062 = vshrl.u32 %v3061, 7
      %v3063 = vsub.s32 5, %v3062
      %v3064 = vrot.slane %v2776, %v3063
      %vm3065 = vcmask 1041409
      %v3066 = vsel %vm3065, %v2820, %v2812
      %vm3067 = vcmask 1042434
      %v3068 = vsel %vm3067, %v2828, %v3066
      %vm3069 = vcmask 1043459
      %v3070 = vsel %vm3069, %v2836, %v3068
      %vm3071 = vcmask 1044484
      %v3072 = vsel %vm3071, %v2844, %v3070
      %vm3073 = vcmask 1045509
      %v3074 = vsel %vm3073, %v2852, %v3072
      %vm3075 = vcmask 1046534
      %v3076 = vsel %vm3075, %v2860, %v3074
      %vm3077 = vcmask 1047559
      %v3078 = vsel %vm3077, %v2868, %v3076
      %v3079 = vsel %vm3065, %v2824, %v2816
      %v3080 = vsel %vm3067, %v2832, %v3079
      %v3081 = vsel %vm3069, %v2840, %v3080
      %v3082 = vsel %vm3071, %v2848, %v3081
      %v3083 = vsel %vm3073, %v2856, %v3082
      %v3084 = vsel %vm3075, %v2864, %v3083
      %v3085 = vsel %vm3077, %v2872, %v3084
      %v3086 = vsel %vm3065, %v2884, %v2876
      %v3087 = vsel %vm3067, %v2892, %v3086
      %v3088 = vsel %vm3069, %v2900, %v3087
      %v3089 = vsel %vm3071, %v2908, %v3088
      %v3090 = vsel %vm3073, %v2916, %v3089
      %v3091 = vsel %vm3075, %v2924, %v3090
      %v3092 = vsel %vm3077, %v2932, %v3091
      %v3093 = vsel %vm3065, %v2888, %v2880
      %v3094 = vsel %vm3067, %v2896, %v3093
      %v3095 = vsel %vm3069, %v2904, %v3094
      %v3096 = vsel %vm3071, %v2912, %v3095
      %v3097 = vsel %vm3073, %v2920, %v3096
      %v3098 = vsel %vm3075, %v2928, %v3097
      %v3099 = vsel %vm3077, %v2936, %v3098
      %v3100 = vsel %vm3065, %v2948, %v2940
      %v3101 = vsel %vm3067, %v2956, %v3100
      %v3102 = vsel %vm3069, %v2964, %v3101
      %v3103 = vsel %vm3071, %v2972, %v3102
      %v3104 = vsel %vm3073, %v2980, %v3103
      %v3105 = vsel %vm3075, %v2988, %v3104
      %v3106 = vsel %vm3077, %v2996, %v3105
      %v3107 = vsel %vm3065, %v2952, %v2944
      %v3108 = vsel %vm3067, %v2960, %v3107
      %v3109 = vsel %vm3069, %v2968, %v3108
      %v3110 = vsel %vm3071, %v2976, %v3109
      %v3111 = vsel %vm3073, %v2984, %v3110
      %v3112 = vsel %vm3075, %v2992, %v3111
      %v3113 = vsel %vm3077, %v3000, %v3112
      %v3114 = vsel %vm3065, %v3012, %v3004
      %v3115 = vsel %vm3067, %v3020, %v3114
      %v3116 = vsel %vm3069, %v3028, %v3115
      %v3117 = vsel %vm3071, %v3036, %v3116
      %v3118 = vsel %vm3073, %v3044, %v3117
      %v3119 = vsel %vm3075, %v3052, %v3118
      %v3120 = vsel %vm3077, %v3060, %v3119
      %v3121 = vsel %vm3065, %v3016, %v3008
      %v3122 = vsel %vm3067, %v3024, %v3121
      %v3123 = vsel %vm3069, %v3032, %v3122
      %v3124 = vsel %vm3071, %v3040, %v3123
      %v3125 = vsel %vm3073, %v3048, %v3124
      %v3126 = vsel %vm3075, %v3056, %v3125
      %v3127 = vsel %vm3077, %v3064, %v3126
      %v3136 = vadd.f32 %v2488, %v3078
      %v3137 = vadd.f32 %v2489, %v3085
      %v3138 = vadd.f32 %v2490, %v3092
      %v3139 = vadd.f32 %v2491, %v3099
      %v3140 = vadd.f32 %v2492, %v3106
      %v3141 = vadd.f32 %v2493, %v3113
      %v3142 = vadd.f32 %v2494, %v3120
      %v3143 = vadd.f32 %v2495, %v3127
      %v3176 = vlaneseq
      %v3177 = vshrl.u32 %v3176, 7
      %v3178 = vsub.s32 0, %v3177
      %v3179 = vrot.slane %v2568, %v3178
      %v3180 = vlaneseq
      %v3181 = vshrl.u32 %v3180, 7
      %v3182 = vsub.s32 4, %v3181
      %v3183 = vrot.slane %v2568, %v3182
      %v3184 = vlaneseq
      %v3185 = vshrl.u32 %v3184, 7
      %v3186 = vsub.s32 0, %v3185
      %v3187 = vrot.slane %v2569, %v3186
      %v3188 = vlaneseq
      %v3189 = vshrl.u32 %v3188, 7
      %v3190 = vsub.s32 4, %v3189
      %v3191 = vrot.slane %v2569, %v3190
      %v3192 = vlaneseq
      %v3193 = vshrl.u32 %v3192, 7
      %v3194 = vsub.s32 0, %v3193
      %v3195 = vrot.slane %v2570, %v3194
      %v3196 = vlaneseq
      %v3197 = vshrl.u32 %v3196, 7
      %v3198 = vsub.s32 4, %v3197
      %v3199 = vrot.slane %v2570, %v3198
      %v3200 = vlaneseq
      %v3201 = vshrl.u32 %v3200, 7
      %v3202 = vsub.s32 0, %v3201
      %v3203 = vrot.slane %v2571, %v3202
      %v3204 = vlaneseq
      %v3205 = vshrl.u32 %v3204, 7
      %v3206 = vsub.s32 4, %v3205
      %v3207 = vrot.slane %v2571, %v3206
      %v3208 = vlaneseq
      %v3209 = vshrl.u32 %v3208, 7
      %v3210 = vsub.s32 0, %v3209
      %v3211 = vrot.slane %v2572, %v3210
      %v3212 = vlaneseq
      %v3213 = vshrl.u32 %v3212, 7
      %v3214 = vsub.s32 4, %v3213
      %v3215 = vrot.slane %v2572, %v3214
      %v3216 = vlaneseq
      %v3217 = vshrl.u32 %v3216, 7
      %v3218 = vsub.s32 0, %v3217
      %v3219 = vrot.slane %v2573, %v3218
      %v3220 = vlaneseq
      %v3221 = vshrl.u32 %v3220, 7
      %v3222 = vsub.s32 4, %v3221
      %v3223 = vrot.slane %v2573, %v3222
      %v3224 = vlaneseq
      %v3225 = vshrl.u32 %v3224, 7
      %v3226 = vsub.s32 0, %v3225
      %v3227 = vrot.slane %v2574, %v3226
      %v3228 = vlaneseq
      %v3229 = vshrl.u32 %v3228, 7
      %v3230 = vsub.s32 4, %v3229
      %v3231 = vrot.slane %v2574, %v3230
      %v3232 = vlaneseq
      %v3233 = vshrl.u32 %v3232, 7
      %v3234 = vsub.s32 0, %v3233
      %v3235 = vrot.slane %v2575, %v3234
      %v3236 = vlaneseq
      %v3237 = vshrl.u32 %v3236, 7
      %v3238 = vsub.s32 4, %v3237
      %v3239 = vrot.slane %v2575, %v3238
      %v3240 = vlaneseq
      %v3241 = vshrl.u32 %v3240, 7
      %v3242 = vsub.s32 0, %v3241
      %v3243 = vrot.slane %v2576, %v3242
      %v3244 = vlaneseq
      %v3245 = vshrl.u32 %v3244, 7
      %v3246 = vsub.s32 4, %v3245
      %v3247 = vrot.slane %v2576, %v3246
      %v3248 = vlaneseq
      %v3249 = vshrl.u32 %v3248, 7
      %v3250 = vsub.s32 0, %v3249
      %v3251 = vrot.slane %v2577, %v3250
      %v3252 = vlaneseq
      %v3253 = vshrl.u32 %v3252, 7
      %v3254 = vsub.s32 4, %v3253
      %v3255 = vrot.slane %v2577, %v3254
      %v3256 = vlaneseq
      %v3257 = vshrl.u32 %v3256, 7
      %v3258 = vsub.s32 0, %v3257
      %v3259 = vrot.slane %v2578, %v3258
      %v3260 = vlaneseq
      %v3261 = vshrl.u32 %v3260, 7
      %v3262 = vsub.s32 4, %v3261
      %v3263 = vrot.slane %v2578, %v3262
      %v3264 = vlaneseq
      %v3265 = vshrl.u32 %v3264, 7
      %v3266 = vsub.s32 0, %v3265
      %v3267 = vrot.slane %v2579, %v3266
      %v3268 = vlaneseq
      %v3269 = vshrl.u32 %v3268, 7
      %v3270 = vsub.s32 4, %v3269
      %v3271 = vrot.slane %v2579, %v3270
      %v3272 = vlaneseq
      %v3273 = vshrl.u32 %v3272, 7
      %v3274 = vsub.s32 0, %v3273
      %v3275 = vrot.slane %v2580, %v3274
      %v3276 = vlaneseq
      %v3277 = vshrl.u32 %v3276, 7
      %v3278 = vsub.s32 4, %v3277
      %v3279 = vrot.slane %v2580, %v3278
      %v3280 = vlaneseq
      %v3281 = vshrl.u32 %v3280, 7
      %v3282 = vsub.s32 0, %v3281
      %v3283 = vrot.slane %v2581, %v3282
      %v3284 = vlaneseq
      %v3285 = vshrl.u32 %v3284, 7
      %v3286 = vsub.s32 4, %v3285
      %v3287 = vrot.slane %v2581, %v3286
      %v3288 = vlaneseq
      %v3289 = vshrl.u32 %v3288, 7
      %v3290 = vsub.s32 0, %v3289
      %v3291 = vrot.slane %v2582, %v3290
      %v3292 = vlaneseq
      %v3293 = vshrl.u32 %v3292, 7
      %v3294 = vsub.s32 4, %v3293
      %v3295 = vrot.slane %v2582, %v3294
      %v3296 = vlaneseq
      %v3297 = vshrl.u32 %v3296, 7
      %v3298 = vsub.s32 0, %v3297
      %v3299 = vrot.slane %v2583, %v3298
      %v3300 = vlaneseq
      %v3301 = vshrl.u32 %v3300, 7
      %v3302 = vsub.s32 4, %v3301
      %v3303 = vrot.slane %v2583, %v3302
      %v3304 = vlaneseq
      %v3305 = vshrl.u32 %v3304, 7
      %v3306 = vsub.s32 0, %v3305
      %v3307 = vrot.slane %v2584, %v3306
      %v3308 = vlaneseq
      %v3309 = vshrl.u32 %v3308, 7
      %v3310 = vsub.s32 4, %v3309
      %v3311 = vrot.slane %v2584, %v3310
      %v3312 = vlaneseq
      %v3313 = vshrl.u32 %v3312, 7
      %v3314 = vsub.s32 0, %v3313
      %v3315 = vrot.slane %v2585, %v3314
      %v3316 = vlaneseq
      %v3317 = vshrl.u32 %v3316, 7
      %v3318 = vsub.s32 4, %v3317
      %v3319 = vrot.slane %v2585, %v3318
      %v3320 = vlaneseq
      %v3321 = vshrl.u32 %v3320, 7
      %v3322 = vsub.s32 0, %v3321
      %v3323 = vrot.slane %v2586, %v3322
      %v3324 = vlaneseq
      %v3325 = vshrl.u32 %v3324, 7
      %v3326 = vsub.s32 4, %v3325
      %v3327 = vrot.slane %v2586, %v3326
      %v3328 = vlaneseq
      %v3329 = vshrl.u32 %v3328, 7
      %v3330 = vsub.s32 0, %v3329
      %v3331 = vrot.slane %v2587, %v3330
      %v3332 = vlaneseq
      %v3333 = vshrl.u32 %v3332, 7
      %v3334 = vsub.s32 4, %v3333
      %v3335 = vrot.slane %v2587, %v3334
      %v3336 = vlaneseq
      %v3337 = vshrl.u32 %v3336, 7
      %v3338 = vsub.s32 0, %v3337
      %v3339 = vrot.slane %v2588, %v3338
      %v3340 = vlaneseq
      %v3341 = vshrl.u32 %v3340, 7
      %v3342 = vsub.s32 4, %v3341
      %v3343 = vrot.slane %v2588, %v3342
      %v3344 = vlaneseq
      %v3345 = vshrl.u32 %v3344, 7
      %v3346 = vsub.s32 0, %v3345
      %v3347 = vrot.slane %v2589, %v3346
      %v3348 = vlaneseq
      %v3349 = vshrl.u32 %v3348, 7
      %v3350 = vsub.s32 4, %v3349
      %v3351 = vrot.slane %v2589, %v3350
      %v3352 = vlaneseq
      %v3353 = vshrl.u32 %v3352, 7
      %v3354 = vsub.s32 0, %v3353
      %v3355 = vrot.slane %v2590, %v3354
      %v3356 = vlaneseq
      %v3357 = vshrl.u32 %v3356, 7
      %v3358 = vsub.s32 4, %v3357
      %v3359 = vrot.slane %v2590, %v3358
      %v3360 = vlaneseq
      %v3361 = vshrl.u32 %v3360, 7
      %v3362 = vsub.s32 0, %v3361
      %v3363 = vrot.slane %v2591, %v3362
      %v3364 = vlaneseq
      %v3365 = vshrl.u32 %v3364, 7
      %v3366 = vsub.s32 4, %v3365
      %v3367 = vrot.slane %v2591, %v3366
      %v3368 = vlaneseq
      %v3369 = vshrl.u32 %v3368, 7
      %v3370 = vsub.s32 0, %v3369
      %v3371 = vrot.slane %v2592, %v3370
      %v3372 = vlaneseq
      %v3373 = vshrl.u32 %v3372, 7
      %v3374 = vsub.s32 4, %v3373
      %v3375 = vrot.slane %v2592, %v3374
      %v3376 = vlaneseq
      %v3377 = vshrl.u32 %v3376, 7
      %v3378 = vsub.s32 0, %v3377
      %v3379 = vrot.slane %v2593, %v3378
      %v3380 = vlaneseq
      %v3381 = vshrl.u32 %v3380, 7
      %v3382 = vsub.s32 4, %v3381
      %v3383 = vrot.slane %v2593, %v3382
      %v3384 = vlaneseq
      %v3385 = vshrl.u32 %v3384, 7
      %v3386 = vsub.s32 0, %v3385
      %v3387 = vrot.slane %v2594, %v3386
      %v3388 = vlaneseq
      %v3389 = vshrl.u32 %v3388, 7
      %v3390 = vsub.s32 4, %v3389
      %v3391 = vrot.slane %v2594, %v3390
      %v3392 = vlaneseq
      %v3393 = vshrl.u32 %v3392, 7
      %v3394 = vsub.s32 0, %v3393
      %v3395 = vrot.slane %v2595, %v3394
      %v3396 = vlaneseq
      %v3397 = vshrl.u32 %v3396, 7
      %v3398 = vsub.s32 4, %v3397
      %v3399 = vrot.slane %v2595, %v3398
      %v3400 = vlaneseq
      %v3401 = vshrl.u32 %v3400, 7
      %v3402 = vsub.s32 0, %v3401
      %v3403 = vrot.slane %v2596, %v3402
      %v3404 = vlaneseq
      %v3405 = vshrl.u32 %v3404, 7
      %v3406 = vsub.s32 4, %v3405
      %v3407 = vrot.slane %v2596, %v3406
      %v3408 = vlaneseq
      %v3409 = vshrl.u32 %v3408, 7
      %v3410 = vsub.s32 0, %v3409
      %v3411 = vrot.slane %v2597, %v3410
      %v3412 = vlaneseq
      %v3413 = vshrl.u32 %v3412, 7
      %v3414 = vsub.s32 4, %v3413
      %v3415 = vrot.slane %v2597, %v3414
      %v3416 = vlaneseq
      %v3417 = vshrl.u32 %v3416, 7
      %v3418 = vsub.s32 0, %v3417
      %v3419 = vrot.slane %v2598, %v3418
      %v3420 = vlaneseq
      %v3421 = vshrl.u32 %v3420, 7
      %v3422 = vsub.s32 4, %v3421
      %v3423 = vrot.slane %v2598, %v3422
      %v3424 = vlaneseq
      %v3425 = vshrl.u32 %v3424, 7
      %v3426 = vsub.s32 0, %v3425
      %v3427 = vrot.slane %v2599, %v3426
      %v3428 = vlaneseq
      %v3429 = vshrl.u32 %v3428, 7
      %v3430 = vsub.s32 4, %v3429
      %v3431 = vrot.slane %v2599, %v3430
      %v3432 = vsel %vm3065, %v3187, %v3179
      %v3433 = vsel %vm3067, %v3195, %v3432
      %v3434 = vsel %vm3069, %v3203, %v3433
      %v3435 = vsel %vm3071, %v3211, %v3434
      %v3436 = vsel %vm3073, %v3219, %v3435
      %v3437 = vsel %vm3075, %v3227, %v3436
      %v3438 = vsel %vm3077, %v3235, %v3437
      %v3439 = vsel %vm3065, %v3191, %v3183
      %v3440 = vsel %vm3067, %v3199, %v3439
      %v3441 = vsel %vm3069, %v3207, %v3440
      %v3442 = vsel %vm3071, %v3215, %v3441
      %v3443 = vsel %vm3073, %v3223, %v3442
      %v3444 = vsel %vm3075, %v3231, %v3443
      %v3445 = vsel %vm3077, %v3239, %v3444
      %v3446 = vsel %vm3065, %v3251, %v3243
      %v3447 = vsel %vm3067, %v3259, %v3446
      %v3448 = vsel %vm3069, %v3267, %v3447
      %v3449 = vsel %vm3071, %v3275, %v3448
      %v3450 = vsel %vm3073, %v3283, %v3449
      %v3451 = vsel %vm3075, %v3291, %v3450
      %v3452 = vsel %vm3077, %v3299, %v3451
      %v3453 = vsel %vm3065, %v3255, %v3247
      %v3454 = vsel %vm3067, %v3263, %v3453
      %v3455 = vsel %vm3069, %v3271, %v3454
      %v3456 = vsel %vm3071, %v3279, %v3455
      %v3457 = vsel %vm3073, %v3287, %v3456
      %v3458 = vsel %vm3075, %v3295, %v3457
      %v3459 = vsel %vm3077, %v3303, %v3458
      %v3460 = vsel %vm3065, %v3315, %v3307
      %v3461 = vsel %vm3067, %v3323, %v3460
      %v3462 = vsel %vm3069, %v3331, %v3461
      %v3463 = vsel %vm3071, %v3339, %v3462
      %v3464 = vsel %vm3073, %v3347, %v3463
      %v3465 = vsel %vm3075, %v3355, %v3464
      %v3466 = vsel %vm3077, %v3363, %v3465
      %v3467 = vsel %vm3065, %v3319, %v3311
      %v3468 = vsel %vm3067, %v3327, %v3467
      %v3469 = vsel %vm3069, %v3335, %v3468
      %v3470 = vsel %vm3071, %v3343, %v3469
      %v3471 = vsel %vm3073, %v3351, %v3470
      %v3472 = vsel %vm3075, %v3359, %v3471
      %v3473 = vsel %vm3077, %v3367, %v3472
      %v3474 = vsel %vm3065, %v3379, %v3371
      %v3475 = vsel %vm3067, %v3387, %v3474
      %v3476 = vsel %vm3069, %v3395, %v3475
      %v3477 = vsel %vm3071, %v3403, %v3476
      %v3478 = vsel %vm3073, %v3411, %v3477
      %v3479 = vsel %vm3075, %v3419, %v3478
      %v3480 = vsel %vm3077, %v3427, %v3479
      %v3481 = vsel %vm3065, %v3383, %v3375
      %v3482 = vsel %vm3067, %v3391, %v3481
      %v3483 = vsel %vm3069, %v3399, %v3482
      %v3484 = vsel %vm3071, %v3407, %v3483
      %v3485 = vsel %vm3073, %v3415, %v3484
      %v3486 = vsel %vm3075, %v3423, %v3485
      %v3487 = vsel %vm3077, %v3431, %v3486
      %3496 = vrot.lane.b32.xlu0 %v3438, 1
      %v3497 = vpop.permute.xlu0 %3496
      %3498 = vrot.lane.b32.xlu0 %v3452, 1
      %v3499 = vpop.permute.xlu0 %3498
      %3500 = vrot.lane.b32.xlu0 %v3466, 1
      %v3501 = vpop.permute.xlu0 %3500
      %3502 = vrot.lane.b32.xlu0 %v3480, 1
      %v3503 = vpop.permute.xlu0 %3502
      %3504 = vrot.lane.b32.xlu0 %v3445, 1
      %v3505 = vpop.permute.xlu0 %3504
      %3506 = vrot.lane.b32.xlu0 %v3459, 1
      %v3507 = vpop.permute.xlu0 %3506
      %3508 = vrot.lane.b32.xlu0 %v3473, 1
      %v3509 = vpop.permute.xlu0 %3508
      %3510 = vrot.lane.b32.xlu0 %v3487, 1
      %v3511 = vpop.permute.xlu0 %3510
      %vm3512 = vcmp.lt.s32.totalorder %v2268, 1
      %v3513 = vsel %vm3512, %v3497, %v3505
      %v3514 = vsel %vm3512, %v3499, %v3507
      %v3515 = vsel %vm3512, %v3501, %v3509
      %v3516 = vsel %vm3512, %v3503, %v3511
      %v3517 = vsel %vm3512, %v3505, %v3497
      %v3518 = vsel %vm3512, %v3507, %v3499
      %v3519 = vsel %vm3512, %v3509, %v3501
      %v3520 = vsel %vm3512, %v3511, %v3503
      %v3521 = vrot.slane %v2568, 6
      %v3522 = vrot.slane %v2569, 6
      %v3523 = vrot.slane %v2570, 6
      %v3524 = vrot.slane %v2571, 6
      %v3525 = vrot.slane %v2572, 6
      %v3526 = vrot.slane %v2573, 6
      %v3527 = vrot.slane %v2574, 6
      %v3528 = vrot.slane %v2575, 6
      %v3529 = vrot.slane %v2576, 6
      %v3530 = vrot.slane %v2577, 6
      %v3531 = vrot.slane %v2578, 6
      %v3532 = vrot.slane %v2579, 6
      %v3533 = vrot.slane %v2580, 6
      %v3534 = vrot.slane %v2581, 6
      %v3535 = vrot.slane %v2582, 6
      %v3536 = vrot.slane %v2583, 6
      %v3537 = vrot.slane %v2584, 6
      %v3538 = vrot.slane %v2585, 6
      %v3539 = vrot.slane %v2586, 6
      %v3540 = vrot.slane %v2587, 6
      %v3541 = vrot.slane %v2588, 6
      %v3542 = vrot.slane %v2589, 6
      %v3543 = vrot.slane %v2590, 6
      %v3544 = vrot.slane %v2591, 6
      %v3545 = vrot.slane %v2592, 6
      %v3546 = vrot.slane %v2593, 6
      %v3547 = vrot.slane %v2594, 6
      %v3548 = vrot.slane %v2595, 6
      %v3549 = vrot.slane %v2596, 6
      %v3550 = vrot.slane %v2597, 6
      %v3551 = vrot.slane %v2598, 6
      %v3552 = vrot.slane %v2599, 6
      %v3593 = vcombine.low %v3517, %v3513
      %v3594 = vcombine.high %v3517, %v3513
      %v3595 = vcombine.low %v3518, %v3514
      %v3596 = vcombine.high %v3518, %v3514
      %v3597 = vcombine.low %v3519, %v3515
      %v3598 = vcombine.high %v3519, %v3515
      %v3599 = vcombine.low %v3520, %v3516
      %v3600 = vcombine.high %v3520, %v3516
      %v3601 = vrot.slane %v3593, 6
      %v3602 = vrot.slane %v3593, 7
      %v3603 = vrot.slane %v3593, 1
      %v3604 = vrot.slane %v3594, 6
      %v3605 = vrot.slane %v3594, 7
      %v3606 = vrot.slane %v3594, 1
      %v3607 = vrot.slane %v3595, 6
      %v3608 = vrot.slane %v3595, 7
      %v3609 = vrot.slane %v3595, 1
      %v3610 = vrot.slane %v3596, 6
      %v3611 = vrot.slane %v3596, 7
      %v3612 = vrot.slane %v3596, 1
      %v3613 = vrot.slane %v3597, 6
      %v3614 = vrot.slane %v3597, 7
      %v3615 = vrot.slane %v3597, 1
      %v3616 = vrot.slane %v3598, 6
      %v3617 = vrot.slane %v3598, 7
      %v3618 = vrot.slane %v3598, 1
      %v3619 = vrot.slane %v3599, 6
      %v3620 = vrot.slane %v3599, 7
      %v3621 = vrot.slane %v3599, 1
      %v3622 = vrot.slane %v3600, 6
      %v3623 = vrot.slane %v3600, 7
      %v3624 = vrot.slane %v3600, 1
      %v3657 = vsel %vm2279, %v3521, %v3601
      %v3658 = vsel %vm2279, %v3522, %v3602
      %v3659 = vsel %vm2279, %v3523, %v3593
      %v3660 = vsel %vm2279, %v3524, %v3603
      %v3661 = vsel %vm2279, %v3525, %v3604
      %v3662 = vsel %vm2279, %v3526, %v3605
      %v3663 = vsel %vm2279, %v3527, %v3594
      %v3664 = vsel %vm2279, %v3528, %v3606
      %v3665 = vsel %vm2279, %v3529, %v3607
      %v3666 = vsel %vm2279, %v3530, %v3608
      %v3667 = vsel %vm2279, %v3531, %v3595
      %v3668 = vsel %vm2279, %v3532, %v3609
      %v3669 = vsel %vm2279, %v3533, %v3610
      %v3670 = vsel %vm2279, %v3534, %v3611
      %v3671 = vsel %vm2279, %v3535, %v3596
      %v3672 = vsel %vm2279, %v3536, %v3612
      %v3673 = vsel %vm2279, %v3537, %v3613
      %v3674 = vsel %vm2279, %v3538, %v3614
      %v3675 = vsel %vm2279, %v3539, %v3597
      %v3676 = vsel %vm2279, %v3540, %v3615
      %v3677 = vsel %vm2279, %v3541, %v3616
      %v3678 = vsel %vm2279, %v3542, %v3617
      %v3679 = vsel %vm2279, %v3543, %v3598
      %v3680 = vsel %vm2279, %v3544, %v3618
      %v3681 = vsel %vm2279, %v3545, %v3619
      %v3682 = vsel %vm2279, %v3546, %v3620
      %v3683 = vsel %vm2279, %v3547, %v3599
      %v3684 = vsel %vm2279, %v3548, %v3621
      %v3685 = vsel %vm2279, %v3549, %v3622
      %v3686 = vsel %vm2279, %v3550, %v3623
      %v3687 = vsel %vm2279, %v3551, %v3600
      %v3688 = vsel %vm2279, %v3552, %v3624
      %v3689 = vmul.f32 %v3657, 0.25
      %v3690 = vmul.f32 %v3658, 0.25
      %v3691 = vmul.f32 %v3659, 0.25
      %v3692 = vmul.f32 %v3660, 0.25
      %v3693 = vmul.f32 %v3661, 0.25
      %v3694 = vmul.f32 %v3662, 0.25
      %v3695 = vmul.f32 %v3663, 0.25
      %v3696 = vmul.f32 %v3664, 0.25
      %v3697 = vmul.f32 %v3665, 0.25
      %v3698 = vmul.f32 %v3666, 0.25
      %v3699 = vmul.f32 %v3667, 0.25
      %v3700 = vmul.f32 %v3668, 0.25
      %v3701 = vmul.f32 %v3669, 0.25
      %v3702 = vmul.f32 %v3670, 0.25
      %v3703 = vmul.f32 %v3671, 0.25
      %v3704 = vmul.f32 %v3672, 0.25
      %v3705 = vmul.f32 %v3673, 0.25
      %v3706 = vmul.f32 %v3674, 0.25
      %v3707 = vmul.f32 %v3675, 0.25
      %v3708 = vmul.f32 %v3676, 0.25
      %v3709 = vmul.f32 %v3677, 0.25
      %v3710 = vmul.f32 %v3678, 0.25
      %v3711 = vmul.f32 %v3679, 0.25
      %v3712 = vmul.f32 %v3680, 0.25
      %v3713 = vmul.f32 %v3681, 0.25
      %v3714 = vmul.f32 %v3682, 0.25
      %v3715 = vmul.f32 %v3683, 0.25
      %v3716 = vmul.f32 %v3684, 0.25
      %v3717 = vmul.f32 %v3685, 0.25
      %v3718 = vmul.f32 %v3686, 0.25
      %v3719 = vmul.f32 %v3687, 0.25
      %v3720 = vmul.f32 %v3688, 0.25
      %v3721 = vmul.f32 %v2568, 0.75
      %v3722 = vmul.f32 %v2569, 0.75
      %v3723 = vmul.f32 %v2570, 0.75
      %v3724 = vmul.f32 %v2571, 0.75
      %v3725 = vmul.f32 %v2572, 0.75
      %v3726 = vmul.f32 %v2573, 0.75
      %v3727 = vmul.f32 %v2574, 0.75
      %v3728 = vmul.f32 %v2575, 0.75
      %v3729 = vmul.f32 %v2576, 0.75
      %v3730 = vmul.f32 %v2577, 0.75
      %v3731 = vmul.f32 %v2578, 0.75
      %v3732 = vmul.f32 %v2579, 0.75
      %v3733 = vmul.f32 %v2580, 0.75
      %v3734 = vmul.f32 %v2581, 0.75
      %v3735 = vmul.f32 %v2582, 0.75
      %v3736 = vmul.f32 %v2583, 0.75
      %v3737 = vmul.f32 %v2584, 0.75
      %v3738 = vmul.f32 %v2585, 0.75
      %v3739 = vmul.f32 %v2586, 0.75
      %v3740 = vmul.f32 %v2587, 0.75
      %v3741 = vmul.f32 %v2588, 0.75
      %v3742 = vmul.f32 %v2589, 0.75
      %v3743 = vmul.f32 %v2590, 0.75
      %v3744 = vmul.f32 %v2591, 0.75
      %v3745 = vmul.f32 %v2592, 0.75
      %v3746 = vmul.f32 %v2593, 0.75
      %v3747 = vmul.f32 %v2594, 0.75
      %v3748 = vmul.f32 %v2595, 0.75
      %v3749 = vmul.f32 %v2596, 0.75
      %v3750 = vmul.f32 %v2597, 0.75
      %v3751 = vmul.f32 %v2598, 0.75
      %v3752 = vmul.f32 %v2599, 0.75
      %v3785 = vrot.slane %v3721, 6
      %v3786 = vrot.slane %v3722, 6
      %v3787 = vrot.slane %v3723, 6
      %v3788 = vrot.slane %v3724, 6
      %v3789 = vrot.slane %v3725, 6
      %v3790 = vrot.slane %v3726, 6
      %v3791 = vrot.slane %v3727, 6
      %v3792 = vrot.slane %v3728, 6
      %v3793 = vrot.slane %v3729, 6
      %v3794 = vrot.slane %v3730, 6
      %v3795 = vrot.slane %v3731, 6
      %v3796 = vrot.slane %v3732, 6
      %v3797 = vrot.slane %v3733, 6
      %v3798 = vrot.slane %v3734, 6
      %v3799 = vrot.slane %v3735, 6
      %v3800 = vrot.slane %v3736, 6
      %v3801 = vrot.slane %v3737, 6
      %v3802 = vrot.slane %v3738, 6
      %v3803 = vrot.slane %v3739, 6
      %v3804 = vrot.slane %v3740, 6
      %v3805 = vrot.slane %v3741, 6
      %v3806 = vrot.slane %v3742, 6
      %v3807 = vrot.slane %v3743, 6
      %v3808 = vrot.slane %v3744, 6
      %v3809 = vrot.slane %v3745, 6
      %v3810 = vrot.slane %v3746, 6
      %v3811 = vrot.slane %v3747, 6
      %v3812 = vrot.slane %v3748, 6
      %v3813 = vrot.slane %v3749, 6
      %v3814 = vrot.slane %v3750, 6
      %v3815 = vrot.slane %v3751, 6
      %v3816 = vrot.slane %v3752, 6
      %v3849 = vadd.f32 %v3689, %v3785
      %v3850 = vadd.f32 %v3690, %v3786
      %v3851 = vadd.f32 %v3691, %v3787
      %v3852 = vadd.f32 %v3692, %v3788
      %v3853 = vadd.f32 %v3693, %v3789
      %v3854 = vadd.f32 %v3694, %v3790
      %v3855 = vadd.f32 %v3695, %v3791
      %v3856 = vadd.f32 %v3696, %v3792
      %v3857 = vadd.f32 %v3697, %v3793
      %v3858 = vadd.f32 %v3698, %v3794
      %v3859 = vadd.f32 %v3699, %v3795
      %v3860 = vadd.f32 %v3700, %v3796
      %v3861 = vadd.f32 %v3701, %v3797
      %v3862 = vadd.f32 %v3702, %v3798
      %v3863 = vadd.f32 %v3703, %v3799
      %v3864 = vadd.f32 %v3704, %v3800
      %v3865 = vadd.f32 %v3705, %v3801
      %v3866 = vadd.f32 %v3706, %v3802
      %v3867 = vadd.f32 %v3707, %v3803
      %v3868 = vadd.f32 %v3708, %v3804
      %v3869 = vadd.f32 %v3709, %v3805
      %v3870 = vadd.f32 %v3710, %v3806
      %v3871 = vadd.f32 %v3711, %v3807
      %v3872 = vadd.f32 %v3712, %v3808
      %v3873 = vadd.f32 %v3713, %v3809
      %v3874 = vadd.f32 %v3714, %v3810
      %v3875 = vadd.f32 %v3715, %v3811
      %v3876 = vadd.f32 %v3716, %v3812
      %v3877 = vadd.f32 %v3717, %v3813
      %v3878 = vadd.f32 %v3718, %v3814
      %v3879 = vadd.f32 %v3719, %v3815
      %v3880 = vadd.f32 %v3720, %v3816
      %3881 = vrot.lane.b32.xlu0 %v3438, 127
      %v3882 = vpop.permute.xlu0 %3881
      %3883 = vrot.lane.b32.xlu0 %v3452, 127
      %v3884 = vpop.permute.xlu0 %3883
      %3885 = vrot.lane.b32.xlu0 %v3466, 127
      %v3886 = vpop.permute.xlu0 %3885
      %3887 = vrot.lane.b32.xlu0 %v3480, 127
      %v3888 = vpop.permute.xlu0 %3887
      %3889 = vrot.lane.b32.xlu0 %v3445, 127
      %v3890 = vpop.permute.xlu0 %3889
      %3891 = vrot.lane.b32.xlu0 %v3459, 127
      %v3892 = vpop.permute.xlu0 %3891
      %3893 = vrot.lane.b32.xlu0 %v3473, 127
      %v3894 = vpop.permute.xlu0 %3893
      %3895 = vrot.lane.b32.xlu0 %v3487, 127
      %v3896 = vpop.permute.xlu0 %3895
      %vm3897 = vcmp.lt.s32.totalorder %v2268, 127
      %v3898 = vsel %vm3897, %v3882, %v3890
      %v3899 = vsel %vm3897, %v3884, %v3892
      %v3900 = vsel %vm3897, %v3886, %v3894
      %v3901 = vsel %vm3897, %v3888, %v3896
      %v3902 = vsel %vm3897, %v3890, %v3882
      %v3903 = vsel %vm3897, %v3892, %v3884
      %v3904 = vsel %vm3897, %v3894, %v3886
      %v3905 = vsel %vm3897, %v3896, %v3888
      %v3906 = vrot.slane %v2568, 5
      %v3907 = vrot.slane %v2569, 5
      %v3908 = vrot.slane %v2570, 5
      %v3909 = vrot.slane %v2571, 5
      %v3910 = vrot.slane %v2572, 5
      %v3911 = vrot.slane %v2573, 5
      %v3912 = vrot.slane %v2574, 5
      %v3913 = vrot.slane %v2575, 5
      %v3914 = vrot.slane %v2576, 5
      %v3915 = vrot.slane %v2577, 5
      %v3916 = vrot.slane %v2578, 5
      %v3917 = vrot.slane %v2579, 5
      %v3918 = vrot.slane %v2580, 5
      %v3919 = vrot.slane %v2581, 5
      %v3920 = vrot.slane %v2582, 5
      %v3921 = vrot.slane %v2583, 5
      %v3922 = vrot.slane %v2584, 5
      %v3923 = vrot.slane %v2585, 5
      %v3924 = vrot.slane %v2586, 5
      %v3925 = vrot.slane %v2587, 5
      %v3926 = vrot.slane %v2588, 5
      %v3927 = vrot.slane %v2589, 5
      %v3928 = vrot.slane %v2590, 5
      %v3929 = vrot.slane %v2591, 5
      %v3930 = vrot.slane %v2592, 5
      %v3931 = vrot.slane %v2593, 5
      %v3932 = vrot.slane %v2594, 5
      %v3933 = vrot.slane %v2595, 5
      %v3934 = vrot.slane %v2596, 5
      %v3935 = vrot.slane %v2597, 5
      %v3936 = vrot.slane %v2598, 5
      %v3937 = vrot.slane %v2599, 5
      %v3978 = vcombine.low %v3898, %v3902
      %v3979 = vcombine.high %v3898, %v3902
      %v3980 = vcombine.low %v3899, %v3903
      %v3981 = vcombine.high %v3899, %v3903
      %v3982 = vcombine.low %v3900, %v3904
      %v3983 = vcombine.high %v3900, %v3904
      %v3984 = vcombine.low %v3901, %v3905
      %v3985 = vcombine.high %v3901, %v3905
      %v3986 = vrot.slane %v3978, 5
      %v3987 = vrot.slane %v3978, 6
      %v3988 = vrot.slane %v3978, 7
      %v3989 = vrot.slane %v3979, 5
      %v3990 = vrot.slane %v3979, 6
      %v3991 = vrot.slane %v3979, 7
      %v3992 = vrot.slane %v3980, 5
      %v3993 = vrot.slane %v3980, 6
      %v3994 = vrot.slane %v3980, 7
      %v3995 = vrot.slane %v3981, 5
      %v3996 = vrot.slane %v3981, 6
      %v3997 = vrot.slane %v3981, 7
      %v3998 = vrot.slane %v3982, 5
      %v3999 = vrot.slane %v3982, 6
      %v4000 = vrot.slane %v3982, 7
      %v4001 = vrot.slane %v3983, 5
      %v4002 = vrot.slane %v3983, 6
      %v4003 = vrot.slane %v3983, 7
      %v4004 = vrot.slane %v3984, 5
      %v4005 = vrot.slane %v3984, 6
      %v4006 = vrot.slane %v3984, 7
      %v4007 = vrot.slane %v3985, 5
      %v4008 = vrot.slane %v3985, 6
      %v4009 = vrot.slane %v3985, 7
      %v4042 = vsel %vm2279, %v3906, %v3986
      %v4043 = vsel %vm2279, %v3907, %v3987
      %v4044 = vsel %vm2279, %v3908, %v3988
      %v4045 = vsel %vm2279, %v3909, %v3978
      %v4046 = vsel %vm2279, %v3910, %v3989
      %v4047 = vsel %vm2279, %v3911, %v3990
      %v4048 = vsel %vm2279, %v3912, %v3991
      %v4049 = vsel %vm2279, %v3913, %v3979
      %v4050 = vsel %vm2279, %v3914, %v3992
      %v4051 = vsel %vm2279, %v3915, %v3993
      %v4052 = vsel %vm2279, %v3916, %v3994
      %v4053 = vsel %vm2279, %v3917, %v3980
      %v4054 = vsel %vm2279, %v3918, %v3995
      %v4055 = vsel %vm2279, %v3919, %v3996
      %v4056 = vsel %vm2279, %v3920, %v3997
      %v4057 = vsel %vm2279, %v3921, %v3981
      %v4058 = vsel %vm2279, %v3922, %v3998
      %v4059 = vsel %vm2279, %v3923, %v3999
      %v4060 = vsel %vm2279, %v3924, %v4000
      %v4061 = vsel %vm2279, %v3925, %v3982
      %v4062 = vsel %vm2279, %v3926, %v4001
      %v4063 = vsel %vm2279, %v3927, %v4002
      %v4064 = vsel %vm2279, %v3928, %v4003
      %v4065 = vsel %vm2279, %v3929, %v3983
      %v4066 = vsel %vm2279, %v3930, %v4004
      %v4067 = vsel %vm2279, %v3931, %v4005
      %v4068 = vsel %vm2279, %v3932, %v4006
      %v4069 = vsel %vm2279, %v3933, %v3984
      %v4070 = vsel %vm2279, %v3934, %v4007
      %v4071 = vsel %vm2279, %v3935, %v4008
      %v4072 = vsel %vm2279, %v3936, %v4009
      %v4073 = vsel %vm2279, %v3937, %v3985
      %v4074 = vmul.f32 %v4042, 0.25
      %v4075 = vmul.f32 %v4043, 0.25
      %v4076 = vmul.f32 %v4044, 0.25
      %v4077 = vmul.f32 %v4045, 0.25
      %v4078 = vmul.f32 %v4046, 0.25
      %v4079 = vmul.f32 %v4047, 0.25
      %v4080 = vmul.f32 %v4048, 0.25
      %v4081 = vmul.f32 %v4049, 0.25
      %v4082 = vmul.f32 %v4050, 0.25
      %v4083 = vmul.f32 %v4051, 0.25
      %v4084 = vmul.f32 %v4052, 0.25
      %v4085 = vmul.f32 %v4053, 0.25
      %v4086 = vmul.f32 %v4054, 0.25
      %v4087 = vmul.f32 %v4055, 0.25
      %v4088 = vmul.f32 %v4056, 0.25
      %v4089 = vmul.f32 %v4057, 0.25
      %v4090 = vmul.f32 %v4058, 0.25
      %v4091 = vmul.f32 %v4059, 0.25
      %v4092 = vmul.f32 %v4060, 0.25
      %v4093 = vmul.f32 %v4061, 0.25
      %v4094 = vmul.f32 %v4062, 0.25
      %v4095 = vmul.f32 %v4063, 0.25
      %v4096 = vmul.f32 %v4064, 0.25
      %v4097 = vmul.f32 %v4065, 0.25
      %v4098 = vmul.f32 %v4066, 0.25
      %v4099 = vmul.f32 %v4067, 0.25
      %v4100 = vmul.f32 %v4068, 0.25
      %v4101 = vmul.f32 %v4069, 0.25
      %v4102 = vmul.f32 %v4070, 0.25
      %v4103 = vmul.f32 %v4071, 0.25
      %v4104 = vmul.f32 %v4072, 0.25
      %v4105 = vmul.f32 %v4073, 0.25
      %v4138 = vrot.slane %v4074, 7
      %v4139 = vrot.slane %v4138, 4
      %v4140 = vrot.slane %v4075, 7
      %v4141 = vrot.slane %v4140, 4
      %v4142 = vrot.slane %v4076, 7
      %v4143 = vrot.slane %v4142, 4
      %v4144 = vrot.slane %v4077, 7
      %v4145 = vrot.slane %v4144, 4
      %v4146 = vrot.slane %v4078, 7
      %v4147 = vrot.slane %v4146, 4
      %v4148 = vrot.slane %v4079, 7
      %v4149 = vrot.slane %v4148, 4
      %v4150 = vrot.slane %v4080, 7
      %v4151 = vrot.slane %v4150, 4
      %v4152 = vrot.slane %v4081, 7
      %v4153 = vrot.slane %v4152, 4
      %v4154 = vrot.slane %v4082, 7
      %v4155 = vrot.slane %v4154, 4
      %v4156 = vrot.slane %v4083, 7
      %v4157 = vrot.slane %v4156, 4
      %v4158 = vrot.slane %v4084, 7
      %v4159 = vrot.slane %v4158, 4
      %v4160 = vrot.slane %v4085, 7
      %v4161 = vrot.slane %v4160, 4
      %v4162 = vrot.slane %v4086, 7
      %v4163 = vrot.slane %v4162, 4
      %v4164 = vrot.slane %v4087, 7
      %v4165 = vrot.slane %v4164, 4
      %v4166 = vrot.slane %v4088, 7
      %v4167 = vrot.slane %v4166, 4
      %v4168 = vrot.slane %v4089, 7
      %v4169 = vrot.slane %v4168, 4
      %v4170 = vrot.slane %v4090, 7
      %v4171 = vrot.slane %v4170, 4
      %v4172 = vrot.slane %v4091, 7
      %v4173 = vrot.slane %v4172, 4
      %v4174 = vrot.slane %v4092, 7
      %v4175 = vrot.slane %v4174, 4
      %v4176 = vrot.slane %v4093, 7
      %v4177 = vrot.slane %v4176, 4
      %v4178 = vrot.slane %v4094, 7
      %v4179 = vrot.slane %v4178, 4
      %v4180 = vrot.slane %v4095, 7
      %v4181 = vrot.slane %v4180, 4
      %v4182 = vrot.slane %v4096, 7
      %v4183 = vrot.slane %v4182, 4
      %v4184 = vrot.slane %v4097, 7
      %v4185 = vrot.slane %v4184, 4
      %v4186 = vrot.slane %v4098, 7
      %v4187 = vrot.slane %v4186, 4
      %v4188 = vrot.slane %v4099, 7
      %v4189 = vrot.slane %v4188, 4
      %v4190 = vrot.slane %v4100, 7
      %v4191 = vrot.slane %v4190, 4
      %v4192 = vrot.slane %v4101, 7
      %v4193 = vrot.slane %v4192, 4
      %v4194 = vrot.slane %v4102, 7
      %v4195 = vrot.slane %v4194, 4
      %v4196 = vrot.slane %v4103, 7
      %v4197 = vrot.slane %v4196, 4
      %v4198 = vrot.slane %v4104, 7
      %v4199 = vrot.slane %v4198, 4
      %v4200 = vrot.slane %v4105, 7
      %v4201 = vrot.slane %v4200, 4
      %v4234 = vadd.f32 %v3721, %v4139
      %v4235 = vadd.f32 %v3722, %v4141
      %v4236 = vadd.f32 %v3723, %v4143
      %v4237 = vadd.f32 %v3724, %v4145
      %v4238 = vadd.f32 %v3725, %v4147
      %v4239 = vadd.f32 %v3726, %v4149
      %v4240 = vadd.f32 %v3727, %v4151
      %v4241 = vadd.f32 %v3728, %v4153
      %v4242 = vadd.f32 %v3729, %v4155
      %v4243 = vadd.f32 %v3730, %v4157
      %v4244 = vadd.f32 %v3731, %v4159
      %v4245 = vadd.f32 %v3732, %v4161
      %v4246 = vadd.f32 %v3733, %v4163
      %v4247 = vadd.f32 %v3734, %v4165
      %v4248 = vadd.f32 %v3735, %v4167
      %v4249 = vadd.f32 %v3736, %v4169
      %v4250 = vadd.f32 %v3737, %v4171
      %v4251 = vadd.f32 %v3738, %v4173
      %v4252 = vadd.f32 %v3739, %v4175
      %v4253 = vadd.f32 %v3740, %v4177
      %v4254 = vadd.f32 %v3741, %v4179
      %v4255 = vadd.f32 %v3742, %v4181
      %v4256 = vadd.f32 %v3743, %v4183
      %v4257 = vadd.f32 %v3744, %v4185
      %v4258 = vadd.f32 %v3745, %v4187
      %v4259 = vadd.f32 %v3746, %v4189
      %v4260 = vadd.f32 %v3747, %v4191
      %v4261 = vadd.f32 %v3748, %v4193
      %v4262 = vadd.f32 %v3749, %v4195
      %v4263 = vadd.f32 %v3750, %v4197
      %v4264 = vadd.f32 %v3751, %v4199
      %v4265 = vadd.f32 %v3752, %v4201
      %4266 = vrot.lane.b32.xlu0 %v3136, 1
      %v4267 = vpop.permute.xlu0 %4266
      %4268 = vrot.lane.b32.xlu0 %v3138, 1
      %v4269 = vpop.permute.xlu0 %4268
      %4270 = vrot.lane.b32.xlu0 %v3140, 1
      %v4271 = vpop.permute.xlu0 %4270
      %4272 = vrot.lane.b32.xlu0 %v3142, 1
      %v4273 = vpop.permute.xlu0 %4272
      %4274 = vrot.lane.b32.xlu0 %v3137, 1
      %v4275 = vpop.permute.xlu0 %4274
      %4276 = vrot.lane.b32.xlu0 %v3139, 1
      %v4277 = vpop.permute.xlu0 %4276
      %4278 = vrot.lane.b32.xlu0 %v3141, 1
      %v4279 = vpop.permute.xlu0 %4278
      %4280 = vrot.lane.b32.xlu0 %v3143, 1
      %v4281 = vpop.permute.xlu0 %4280
      %v4282 = vsel %vm3512, %v4267, %v4275
      %v4283 = vsel %vm3512, %v4269, %v4277
      %v4284 = vsel %vm3512, %v4271, %v4279
      %v4285 = vsel %vm3512, %v4273, %v4281
      %v4286 = vsel %vm3512, %v4275, %v4267
      %v4287 = vsel %vm3512, %v4277, %v4269
      %v4288 = vsel %vm3512, %v4279, %v4271
      %v4289 = vsel %vm3512, %v4281, %v4273
      %v4298 = vcombine.low %v3136, %v3137
      %v4299 = vcombine.high %v3136, %v3137
      %v4300 = vcombine.low %v3138, %v3139
      %v4301 = vcombine.high %v3138, %v3139
      %v4302 = vcombine.low %v3140, %v3141
      %v4303 = vcombine.high %v3140, %v3141
      %v4304 = vcombine.low %v3142, %v3143
      %v4305 = vcombine.high %v3142, %v3143
      %v4306 = vrot.slane %v4298, 6
      %v4307 = vrot.slane %v4298, 7
      %v4308 = vrot.slane %v4298, 1
      %v4309 = vrot.slane %v4299, 6
      %v4310 = vrot.slane %v4299, 7
      %v4311 = vrot.slane %v4299, 1
      %v4312 = vrot.slane %v4300, 6
      %v4313 = vrot.slane %v4300, 7
      %v4314 = vrot.slane %v4300, 1
      %v4315 = vrot.slane %v4301, 6
      %v4316 = vrot.slane %v4301, 7
      %v4317 = vrot.slane %v4301, 1
      %v4318 = vrot.slane %v4302, 6
      %v4319 = vrot.slane %v4302, 7
      %v4320 = vrot.slane %v4302, 1
      %v4321 = vrot.slane %v4303, 6
      %v4322 = vrot.slane %v4303, 7
      %v4323 = vrot.slane %v4303, 1
      %v4324 = vrot.slane %v4304, 6
      %v4325 = vrot.slane %v4304, 7
      %v4326 = vrot.slane %v4304, 1
      %v4327 = vrot.slane %v4305, 6
      %v4328 = vrot.slane %v4305, 7
      %v4329 = vrot.slane %v4305, 1
      %v4370 = vcombine.low %v4286, %v4282
      %v4371 = vcombine.high %v4286, %v4282
      %v4372 = vcombine.low %v4287, %v4283
      %v4373 = vcombine.high %v4287, %v4283
      %v4374 = vcombine.low %v4288, %v4284
      %v4375 = vcombine.high %v4288, %v4284
      %v4376 = vcombine.low %v4289, %v4285
      %v4377 = vcombine.high %v4289, %v4285
      %v4378 = vrot.slane %v4370, 6
      %v4379 = vrot.slane %v4370, 7
      %v4380 = vrot.slane %v4370, 1
      %v4381 = vrot.slane %v4371, 6
      %v4382 = vrot.slane %v4371, 7
      %v4383 = vrot.slane %v4371, 1
      %v4384 = vrot.slane %v4372, 6
      %v4385 = vrot.slane %v4372, 7
      %v4386 = vrot.slane %v4372, 1
      %v4387 = vrot.slane %v4373, 6
      %v4388 = vrot.slane %v4373, 7
      %v4389 = vrot.slane %v4373, 1
      %v4390 = vrot.slane %v4374, 6
      %v4391 = vrot.slane %v4374, 7
      %v4392 = vrot.slane %v4374, 1
      %v4393 = vrot.slane %v4375, 6
      %v4394 = vrot.slane %v4375, 7
      %v4395 = vrot.slane %v4375, 1
      %v4396 = vrot.slane %v4376, 6
      %v4397 = vrot.slane %v4376, 7
      %v4398 = vrot.slane %v4376, 1
      %v4399 = vrot.slane %v4377, 6
      %v4400 = vrot.slane %v4377, 7
      %v4401 = vrot.slane %v4377, 1
      %v4434 = vsel %vm2279, %v4306, %v4378
      %v4435 = vsel %vm2279, %v4307, %v4379
      %v4436 = vsel %vm2279, %v4298, %v4370
      %v4437 = vsel %vm2279, %v4308, %v4380
      %v4438 = vsel %vm2279, %v4309, %v4381
      %v4439 = vsel %vm2279, %v4310, %v4382
      %v4440 = vsel %vm2279, %v4299, %v4371
      %v4441 = vsel %vm2279, %v4311, %v4383
      %v4442 = vsel %vm2279, %v4312, %v4384
      %v4443 = vsel %vm2279, %v4313, %v4385
      %v4444 = vsel %vm2279, %v4300, %v4372
      %v4445 = vsel %vm2279, %v4314, %v4386
      %v4446 = vsel %vm2279, %v4315, %v4387
      %v4447 = vsel %vm2279, %v4316, %v4388
      %v4448 = vsel %vm2279, %v4301, %v4373
      %v4449 = vsel %vm2279, %v4317, %v4389
      %v4450 = vsel %vm2279, %v4318, %v4390
      %v4451 = vsel %vm2279, %v4319, %v4391
      %v4452 = vsel %vm2279, %v4302, %v4374
      %v4453 = vsel %vm2279, %v4320, %v4392
      %v4454 = vsel %vm2279, %v4321, %v4393
      %v4455 = vsel %vm2279, %v4322, %v4394
      %v4456 = vsel %vm2279, %v4303, %v4375
      %v4457 = vsel %vm2279, %v4323, %v4395
      %v4458 = vsel %vm2279, %v4324, %v4396
      %v4459 = vsel %vm2279, %v4325, %v4397
      %v4460 = vsel %vm2279, %v4304, %v4376
      %v4461 = vsel %vm2279, %v4326, %v4398
      %v4462 = vsel %vm2279, %v4327, %v4399
      %v4463 = vsel %vm2279, %v4328, %v4400
      %v4464 = vsel %vm2279, %v4305, %v4377
      %v4465 = vsel %vm2279, %v4329, %v4401
      %v4466 = vmul.f32 %v4434, 0.25
      %v4467 = vmul.f32 %v4435, 0.25
      %v4468 = vmul.f32 %v4436, 0.25
      %v4469 = vmul.f32 %v4437, 0.25
      %v4470 = vmul.f32 %v4438, 0.25
      %v4471 = vmul.f32 %v4439, 0.25
      %v4472 = vmul.f32 %v4440, 0.25
      %v4473 = vmul.f32 %v4441, 0.25
      %v4474 = vmul.f32 %v4442, 0.25
      %v4475 = vmul.f32 %v4443, 0.25
      %v4476 = vmul.f32 %v4444, 0.25
      %v4477 = vmul.f32 %v4445, 0.25
      %v4478 = vmul.f32 %v4446, 0.25
      %v4479 = vmul.f32 %v4447, 0.25
      %v4480 = vmul.f32 %v4448, 0.25
      %v4481 = vmul.f32 %v4449, 0.25
      %v4482 = vmul.f32 %v4450, 0.25
      %v4483 = vmul.f32 %v4451, 0.25
      %v4484 = vmul.f32 %v4452, 0.25
      %v4485 = vmul.f32 %v4453, 0.25
      %v4486 = vmul.f32 %v4454, 0.25
      %v4487 = vmul.f32 %v4455, 0.25
      %v4488 = vmul.f32 %v4456, 0.25
      %v4489 = vmul.f32 %v4457, 0.25
      %v4490 = vmul.f32 %v4458, 0.25
      %v4491 = vmul.f32 %v4459, 0.25
      %v4492 = vmul.f32 %v4460, 0.25
      %v4493 = vmul.f32 %v4461, 0.25
      %v4494 = vmul.f32 %v4462, 0.25
      %v4495 = vmul.f32 %v4463, 0.25
      %v4496 = vmul.f32 %v4464, 0.25
      %v4497 = vmul.f32 %v4465, 0.25
      %v4498 = vmul.f32 %v3136, 0.75
      %v4499 = vmul.f32 %v3137, 0.75
      %v4500 = vmul.f32 %v3138, 0.75
      %v4501 = vmul.f32 %v3139, 0.75
      %v4502 = vmul.f32 %v3140, 0.75
      %v4503 = vmul.f32 %v3141, 0.75
      %v4504 = vmul.f32 %v3142, 0.75
      %v4505 = vmul.f32 %v3143, 0.75
      %v4514 = vcombine.low %v4498, %v4499
      %v4515 = vcombine.high %v4498, %v4499
      %v4516 = vcombine.low %v4500, %v4501
      %v4517 = vcombine.high %v4500, %v4501
      %v4518 = vcombine.low %v4502, %v4503
      %v4519 = vcombine.high %v4502, %v4503
      %v4520 = vcombine.low %v4504, %v4505
      %v4521 = vcombine.high %v4504, %v4505
      %v4522 = vrot.slane %v4514, 6
      %v4523 = vrot.slane %v4514, 7
      %v4524 = vrot.slane %v4514, 1
      %v4525 = vrot.slane %v4515, 6
      %v4526 = vrot.slane %v4515, 7
      %v4527 = vrot.slane %v4515, 1
      %v4528 = vrot.slane %v4516, 6
      %v4529 = vrot.slane %v4516, 7
      %v4530 = vrot.slane %v4516, 1
      %v4531 = vrot.slane %v4517, 6
      %v4532 = vrot.slane %v4517, 7
      %v4533 = vrot.slane %v4517, 1
      %v4534 = vrot.slane %v4518, 6
      %v4535 = vrot.slane %v4518, 7
      %v4536 = vrot.slane %v4518, 1
      %v4537 = vrot.slane %v4519, 6
      %v4538 = vrot.slane %v4519, 7
      %v4539 = vrot.slane %v4519, 1
      %v4540 = vrot.slane %v4520, 6
      %v4541 = vrot.slane %v4520, 7
      %v4542 = vrot.slane %v4520, 1
      %v4543 = vrot.slane %v4521, 6
      %v4544 = vrot.slane %v4521, 7
      %v4545 = vrot.slane %v4521, 1
      %v4578 = vadd.f32 %v4466, %v4522
      %v4579 = vadd.f32 %v4467, %v4523
      %v4580 = vadd.f32 %v4468, %v4514
      %v4581 = vadd.f32 %v4469, %v4524
      %v4582 = vadd.f32 %v4470, %v4525
      %v4583 = vadd.f32 %v4471, %v4526
      %v4584 = vadd.f32 %v4472, %v4515
      %v4585 = vadd.f32 %v4473, %v4527
      %v4586 = vadd.f32 %v4474, %v4528
      %v4587 = vadd.f32 %v4475, %v4529
      %v4588 = vadd.f32 %v4476, %v4516
      %v4589 = vadd.f32 %v4477, %v4530
      %v4590 = vadd.f32 %v4478, %v4531
      %v4591 = vadd.f32 %v4479, %v4532
      %v4592 = vadd.f32 %v4480, %v4517
      %v4593 = vadd.f32 %v4481, %v4533
      %v4594 = vadd.f32 %v4482, %v4534
      %v4595 = vadd.f32 %v4483, %v4535
      %v4596 = vadd.f32 %v4484, %v4518
      %v4597 = vadd.f32 %v4485, %v4536
      %v4598 = vadd.f32 %v4486, %v4537
      %v4599 = vadd.f32 %v4487, %v4538
      %v4600 = vadd.f32 %v4488, %v4519
      %v4601 = vadd.f32 %v4489, %v4539
      %v4602 = vadd.f32 %v4490, %v4540
      %v4603 = vadd.f32 %v4491, %v4541
      %v4604 = vadd.f32 %v4492, %v4520
      %v4605 = vadd.f32 %v4493, %v4542
      %v4606 = vadd.f32 %v4494, %v4543
      %v4607 = vadd.f32 %v4495, %v4544
      %v4608 = vadd.f32 %v4496, %v4521
      %v4609 = vadd.f32 %v4497, %v4545
      %4610 = vrot.lane.b32.xlu0 %v3136, 127
      %v4611 = vpop.permute.xlu0 %4610
      %4612 = vrot.lane.b32.xlu0 %v3138, 127
      %v4613 = vpop.permute.xlu0 %4612
      %4614 = vrot.lane.b32.xlu0 %v3140, 127
      %v4615 = vpop.permute.xlu0 %4614
      %4616 = vrot.lane.b32.xlu0 %v3142, 127
      %v4617 = vpop.permute.xlu0 %4616
      %4618 = vrot.lane.b32.xlu0 %v3137, 127
      %v4619 = vpop.permute.xlu0 %4618
      %4620 = vrot.lane.b32.xlu0 %v3139, 127
      %v4621 = vpop.permute.xlu0 %4620
      %4622 = vrot.lane.b32.xlu0 %v3141, 127
      %v4623 = vpop.permute.xlu0 %4622
      %4624 = vrot.lane.b32.xlu0 %v3143, 127
      %v4625 = vpop.permute.xlu0 %4624
      %v4626 = vsel %vm3897, %v4611, %v4619
      %v4627 = vsel %vm3897, %v4613, %v4621
      %v4628 = vsel %vm3897, %v4615, %v4623
      %v4629 = vsel %vm3897, %v4617, %v4625
      %v4630 = vsel %vm3897, %v4619, %v4611
      %v4631 = vsel %vm3897, %v4621, %v4613
      %v4632 = vsel %vm3897, %v4623, %v4615
      %v4633 = vsel %vm3897, %v4625, %v4617
      %v4634 = vrot.slane %v4298, 5
      %v4635 = vrot.slane %v4299, 5
      %v4636 = vrot.slane %v4300, 5
      %v4637 = vrot.slane %v4301, 5
      %v4638 = vrot.slane %v4302, 5
      %v4639 = vrot.slane %v4303, 5
      %v4640 = vrot.slane %v4304, 5
      %v4641 = vrot.slane %v4305, 5
      %v4658 = vcombine.low %v4626, %v4630
      %v4659 = vcombine.high %v4626, %v4630
      %v4660 = vcombine.low %v4627, %v4631
      %v4661 = vcombine.high %v4627, %v4631
      %v4662 = vcombine.low %v4628, %v4632
      %v4663 = vcombine.high %v4628, %v4632
      %v4664 = vcombine.low %v4629, %v4633
      %v4665 = vcombine.high %v4629, %v4633
      %v4666 = vrot.slane %v4658, 5
      %v4667 = vrot.slane %v4658, 6
      %v4668 = vrot.slane %v4658, 7
      %v4669 = vrot.slane %v4659, 5
      %v4670 = vrot.slane %v4659, 6
      %v4671 = vrot.slane %v4659, 7
      %v4672 = vrot.slane %v4660, 5
      %v4673 = vrot.slane %v4660, 6
      %v4674 = vrot.slane %v4660, 7
      %v4675 = vrot.slane %v4661, 5
      %v4676 = vrot.slane %v4661, 6
      %v4677 = vrot.slane %v4661, 7
      %v4678 = vrot.slane %v4662, 5
      %v4679 = vrot.slane %v4662, 6
      %v4680 = vrot.slane %v4662, 7
      %v4681 = vrot.slane %v4663, 5
      %v4682 = vrot.slane %v4663, 6
      %v4683 = vrot.slane %v4663, 7
      %v4684 = vrot.slane %v4664, 5
      %v4685 = vrot.slane %v4664, 6
      %v4686 = vrot.slane %v4664, 7
      %v4687 = vrot.slane %v4665, 5
      %v4688 = vrot.slane %v4665, 6
      %v4689 = vrot.slane %v4665, 7
      %v4722 = vsel %vm2279, %v4634, %v4666
      %v4723 = vsel %vm2279, %v4306, %v4667
      %v4724 = vsel %vm2279, %v4307, %v4668
      %v4725 = vsel %vm2279, %v4298, %v4658
      %v4726 = vsel %vm2279, %v4635, %v4669
      %v4727 = vsel %vm2279, %v4309, %v4670
      %v4728 = vsel %vm2279, %v4310, %v4671
      %v4729 = vsel %vm2279, %v4299, %v4659
      %v4730 = vsel %vm2279, %v4636, %v4672
      %v4731 = vsel %vm2279, %v4312, %v4673
      %v4732 = vsel %vm2279, %v4313, %v4674
      %v4733 = vsel %vm2279, %v4300, %v4660
      %v4734 = vsel %vm2279, %v4637, %v4675
      %v4735 = vsel %vm2279, %v4315, %v4676
      %v4736 = vsel %vm2279, %v4316, %v4677
      %v4737 = vsel %vm2279, %v4301, %v4661
      %v4738 = vsel %vm2279, %v4638, %v4678
      %v4739 = vsel %vm2279, %v4318, %v4679
      %v4740 = vsel %vm2279, %v4319, %v4680
      %v4741 = vsel %vm2279, %v4302, %v4662
      %v4742 = vsel %vm2279, %v4639, %v4681
      %v4743 = vsel %vm2279, %v4321, %v4682
      %v4744 = vsel %vm2279, %v4322, %v4683
      %v4745 = vsel %vm2279, %v4303, %v4663
      %v4746 = vsel %vm2279, %v4640, %v4684
      %v4747 = vsel %vm2279, %v4324, %v4685
      %v4748 = vsel %vm2279, %v4325, %v4686
      %v4749 = vsel %vm2279, %v4304, %v4664
      %v4750 = vsel %vm2279, %v4641, %v4687
      %v4751 = vsel %vm2279, %v4327, %v4688
      %v4752 = vsel %vm2279, %v4328, %v4689
      %v4753 = vsel %vm2279, %v4305, %v4665
      %v4754 = vmul.f32 %v4722, 0.25
      %v4755 = vmul.f32 %v4723, 0.25
      %v4756 = vmul.f32 %v4724, 0.25
      %v4757 = vmul.f32 %v4725, 0.25
      %v4758 = vmul.f32 %v4726, 0.25
      %v4759 = vmul.f32 %v4727, 0.25
      %v4760 = vmul.f32 %v4728, 0.25
      %v4761 = vmul.f32 %v4729, 0.25
      %v4762 = vmul.f32 %v4730, 0.25
      %v4763 = vmul.f32 %v4731, 0.25
      %v4764 = vmul.f32 %v4732, 0.25
      %v4765 = vmul.f32 %v4733, 0.25
      %v4766 = vmul.f32 %v4734, 0.25
      %v4767 = vmul.f32 %v4735, 0.25
      %v4768 = vmul.f32 %v4736, 0.25
      %v4769 = vmul.f32 %v4737, 0.25
      %v4770 = vmul.f32 %v4738, 0.25
      %v4771 = vmul.f32 %v4739, 0.25
      %v4772 = vmul.f32 %v4740, 0.25
      %v4773 = vmul.f32 %v4741, 0.25
      %v4774 = vmul.f32 %v4742, 0.25
      %v4775 = vmul.f32 %v4743, 0.25
      %v4776 = vmul.f32 %v4744, 0.25
      %v4777 = vmul.f32 %v4745, 0.25
      %v4778 = vmul.f32 %v4746, 0.25
      %v4779 = vmul.f32 %v4747, 0.25
      %v4780 = vmul.f32 %v4748, 0.25
      %v4781 = vmul.f32 %v4749, 0.25
      %v4782 = vmul.f32 %v4750, 0.25
      %v4783 = vmul.f32 %v4751, 0.25
      %v4784 = vmul.f32 %v4752, 0.25
      %v4785 = vmul.f32 %v4753, 0.25
      %v4818 = vlaneseq
      %v4819 = vshrl.u32 %v4818, 7
      %v4820 = vsub.s32 3, %v4819
      %v4821 = vrot.slane %v4754, %v4820
      %v4822 = vlaneseq
      %v4823 = vshrl.u32 %v4822, 7
      %v4824 = vsub.s32 7, %v4823
      %v4825 = vrot.slane %v4754, %v4824
      %v4826 = vlaneseq
      %v4827 = vshrl.u32 %v4826, 7
      %v4828 = vsub.s32 3, %v4827
      %v4829 = vrot.slane %v4755, %v4828
      %v4830 = vlaneseq
      %v4831 = vshrl.u32 %v4830, 7
      %v4832 = vsub.s32 7, %v4831
      %v4833 = vrot.slane %v4755, %v4832
      %v4834 = vlaneseq
      %v4835 = vshrl.u32 %v4834, 7
      %v4836 = vsub.s32 3, %v4835
      %v4837 = vrot.slane %v4756, %v4836
      %v4838 = vlaneseq
      %v4839 = vshrl.u32 %v4838, 7
      %v4840 = vsub.s32 7, %v4839
      %v4841 = vrot.slane %v4756, %v4840
      %v4842 = vlaneseq
      %v4843 = vshrl.u32 %v4842, 7
      %v4844 = vsub.s32 3, %v4843
      %v4845 = vrot.slane %v4757, %v4844
      %v4846 = vlaneseq
      %v4847 = vshrl.u32 %v4846, 7
      %v4848 = vsub.s32 7, %v4847
      %v4849 = vrot.slane %v4757, %v4848
      %v4850 = vlaneseq
      %v4851 = vshrl.u32 %v4850, 7
      %v4852 = vsub.s32 3, %v4851
      %v4853 = vrot.slane %v4758, %v4852
      %v4854 = vlaneseq
      %v4855 = vshrl.u32 %v4854, 7
      %v4856 = vsub.s32 7, %v4855
      %v4857 = vrot.slane %v4758, %v4856
      %v4858 = vlaneseq
      %v4859 = vshrl.u32 %v4858, 7
      %v4860 = vsub.s32 3, %v4859
      %v4861 = vrot.slane %v4759, %v4860
      %v4862 = vlaneseq
      %v4863 = vshrl.u32 %v4862, 7
      %v4864 = vsub.s32 7, %v4863
      %v4865 = vrot.slane %v4759, %v4864
      %v4866 = vlaneseq
      %v4867 = vshrl.u32 %v4866, 7
      %v4868 = vsub.s32 3, %v4867
      %v4869 = vrot.slane %v4760, %v4868
      %v4870 = vlaneseq
      %v4871 = vshrl.u32 %v4870, 7
      %v4872 = vsub.s32 7, %v4871
      %v4873 = vrot.slane %v4760, %v4872
      %v4874 = vlaneseq
      %v4875 = vshrl.u32 %v4874, 7
      %v4876 = vsub.s32 3, %v4875
      %v4877 = vrot.slane %v4761, %v4876
      %v4878 = vlaneseq
      %v4879 = vshrl.u32 %v4878, 7
      %v4880 = vsub.s32 7, %v4879
      %v4881 = vrot.slane %v4761, %v4880
      %v4882 = vlaneseq
      %v4883 = vshrl.u32 %v4882, 7
      %v4884 = vsub.s32 3, %v4883
      %v4885 = vrot.slane %v4762, %v4884
      %v4886 = vlaneseq
      %v4887 = vshrl.u32 %v4886, 7
      %v4888 = vsub.s32 7, %v4887
      %v4889 = vrot.slane %v4762, %v4888
      %v4890 = vlaneseq
      %v4891 = vshrl.u32 %v4890, 7
      %v4892 = vsub.s32 3, %v4891
      %v4893 = vrot.slane %v4763, %v4892
      %v4894 = vlaneseq
      %v4895 = vshrl.u32 %v4894, 7
      %v4896 = vsub.s32 7, %v4895
      %v4897 = vrot.slane %v4763, %v4896
      %v4898 = vlaneseq
      %v4899 = vshrl.u32 %v4898, 7
      %v4900 = vsub.s32 3, %v4899
      %v4901 = vrot.slane %v4764, %v4900
      %v4902 = vlaneseq
      %v4903 = vshrl.u32 %v4902, 7
      %v4904 = vsub.s32 7, %v4903
      %v4905 = vrot.slane %v4764, %v4904
      %v4906 = vlaneseq
      %v4907 = vshrl.u32 %v4906, 7
      %v4908 = vsub.s32 3, %v4907
      %v4909 = vrot.slane %v4765, %v4908
      %v4910 = vlaneseq
      %v4911 = vshrl.u32 %v4910, 7
      %v4912 = vsub.s32 7, %v4911
      %v4913 = vrot.slane %v4765, %v4912
      %v4914 = vlaneseq
      %v4915 = vshrl.u32 %v4914, 7
      %v4916 = vsub.s32 3, %v4915
      %v4917 = vrot.slane %v4766, %v4916
      %v4918 = vlaneseq
      %v4919 = vshrl.u32 %v4918, 7
      %v4920 = vsub.s32 7, %v4919
      %v4921 = vrot.slane %v4766, %v4920
      %v4922 = vlaneseq
      %v4923 = vshrl.u32 %v4922, 7
      %v4924 = vsub.s32 3, %v4923
      %v4925 = vrot.slane %v4767, %v4924
      %v4926 = vlaneseq
      %v4927 = vshrl.u32 %v4926, 7
      %v4928 = vsub.s32 7, %v4927
      %v4929 = vrot.slane %v4767, %v4928
      %v4930 = vlaneseq
      %v4931 = vshrl.u32 %v4930, 7
      %v4932 = vsub.s32 3, %v4931
      %v4933 = vrot.slane %v4768, %v4932
      %v4934 = vlaneseq
      %v4935 = vshrl.u32 %v4934, 7
      %v4936 = vsub.s32 7, %v4935
      %v4937 = vrot.slane %v4768, %v4936
      %v4938 = vlaneseq
      %v4939 = vshrl.u32 %v4938, 7
      %v4940 = vsub.s32 3, %v4939
      %v4941 = vrot.slane %v4769, %v4940
      %v4942 = vlaneseq
      %v4943 = vshrl.u32 %v4942, 7
      %v4944 = vsub.s32 7, %v4943
      %v4945 = vrot.slane %v4769, %v4944
      %v4946 = vlaneseq
      %v4947 = vshrl.u32 %v4946, 7
      %v4948 = vsub.s32 3, %v4947
      %v4949 = vrot.slane %v4770, %v4948
      %v4950 = vlaneseq
      %v4951 = vshrl.u32 %v4950, 7
      %v4952 = vsub.s32 7, %v4951
      %v4953 = vrot.slane %v4770, %v4952
      %v4954 = vlaneseq
      %v4955 = vshrl.u32 %v4954, 7
      %v4956 = vsub.s32 3, %v4955
      %v4957 = vrot.slane %v4771, %v4956
      %v4958 = vlaneseq
      %v4959 = vshrl.u32 %v4958, 7
      %v4960 = vsub.s32 7, %v4959
      %v4961 = vrot.slane %v4771, %v4960
      %v4962 = vlaneseq
      %v4963 = vshrl.u32 %v4962, 7
      %v4964 = vsub.s32 3, %v4963
      %v4965 = vrot.slane %v4772, %v4964
      %v4966 = vlaneseq
      %v4967 = vshrl.u32 %v4966, 7
      %v4968 = vsub.s32 7, %v4967
      %v4969 = vrot.slane %v4772, %v4968
      %v4970 = vlaneseq
      %v4971 = vshrl.u32 %v4970, 7
      %v4972 = vsub.s32 3, %v4971
      %v4973 = vrot.slane %v4773, %v4972
      %v4974 = vlaneseq
      %v4975 = vshrl.u32 %v4974, 7
      %v4976 = vsub.s32 7, %v4975
      %v4977 = vrot.slane %v4773, %v4976
      %v4978 = vlaneseq
      %v4979 = vshrl.u32 %v4978, 7
      %v4980 = vsub.s32 3, %v4979
      %v4981 = vrot.slane %v4774, %v4980
      %v4982 = vlaneseq
      %v4983 = vshrl.u32 %v4982, 7
      %v4984 = vsub.s32 7, %v4983
      %v4985 = vrot.slane %v4774, %v4984
      %v4986 = vlaneseq
      %v4987 = vshrl.u32 %v4986, 7
      %v4988 = vsub.s32 3, %v4987
      %v4989 = vrot.slane %v4775, %v4988
      %v4990 = vlaneseq
      %v4991 = vshrl.u32 %v4990, 7
      %v4992 = vsub.s32 7, %v4991
      %v4993 = vrot.slane %v4775, %v4992
      %v4994 = vlaneseq
      %v4995 = vshrl.u32 %v4994, 7
      %v4996 = vsub.s32 3, %v4995
      %v4997 = vrot.slane %v4776, %v4996
      %v4998 = vlaneseq
      %v4999 = vshrl.u32 %v4998, 7
      %v5000 = vsub.s32 7, %v4999
      %v5001 = vrot.slane %v4776, %v5000
      %v5002 = vlaneseq
      %v5003 = vshrl.u32 %v5002, 7
      %v5004 = vsub.s32 3, %v5003
      %v5005 = vrot.slane %v4777, %v5004
      %v5006 = vlaneseq
      %v5007 = vshrl.u32 %v5006, 7
      %v5008 = vsub.s32 7, %v5007
      %v5009 = vrot.slane %v4777, %v5008
      %v5010 = vlaneseq
      %v5011 = vshrl.u32 %v5010, 7
      %v5012 = vsub.s32 3, %v5011
      %v5013 = vrot.slane %v4778, %v5012
      %v5014 = vlaneseq
      %v5015 = vshrl.u32 %v5014, 7
      %v5016 = vsub.s32 7, %v5015
      %v5017 = vrot.slane %v4778, %v5016
      %v5018 = vlaneseq
      %v5019 = vshrl.u32 %v5018, 7
      %v5020 = vsub.s32 3, %v5019
      %v5021 = vrot.slane %v4779, %v5020
      %v5022 = vlaneseq
      %v5023 = vshrl.u32 %v5022, 7
      %v5024 = vsub.s32 7, %v5023
      %v5025 = vrot.slane %v4779, %v5024
      %v5026 = vlaneseq
      %v5027 = vshrl.u32 %v5026, 7
      %v5028 = vsub.s32 3, %v5027
      %v5029 = vrot.slane %v4780, %v5028
      %v5030 = vlaneseq
      %v5031 = vshrl.u32 %v5030, 7
      %v5032 = vsub.s32 7, %v5031
      %v5033 = vrot.slane %v4780, %v5032
      %v5034 = vlaneseq
      %v5035 = vshrl.u32 %v5034, 7
      %v5036 = vsub.s32 3, %v5035
      %v5037 = vrot.slane %v4781, %v5036
      %v5038 = vlaneseq
      %v5039 = vshrl.u32 %v5038, 7
      %v5040 = vsub.s32 7, %v5039
      %v5041 = vrot.slane %v4781, %v5040
      %v5042 = vlaneseq
      %v5043 = vshrl.u32 %v5042, 7
      %v5044 = vsub.s32 3, %v5043
      %v5045 = vrot.slane %v4782, %v5044
      %v5046 = vlaneseq
      %v5047 = vshrl.u32 %v5046, 7
      %v5048 = vsub.s32 7, %v5047
      %v5049 = vrot.slane %v4782, %v5048
      %v5050 = vlaneseq
      %v5051 = vshrl.u32 %v5050, 7
      %v5052 = vsub.s32 3, %v5051
      %v5053 = vrot.slane %v4783, %v5052
      %v5054 = vlaneseq
      %v5055 = vshrl.u32 %v5054, 7
      %v5056 = vsub.s32 7, %v5055
      %v5057 = vrot.slane %v4783, %v5056
      %v5058 = vlaneseq
      %v5059 = vshrl.u32 %v5058, 7
      %v5060 = vsub.s32 3, %v5059
      %v5061 = vrot.slane %v4784, %v5060
      %v5062 = vlaneseq
      %v5063 = vshrl.u32 %v5062, 7
      %v5064 = vsub.s32 7, %v5063
      %v5065 = vrot.slane %v4784, %v5064
      %v5066 = vlaneseq
      %v5067 = vshrl.u32 %v5066, 7
      %v5068 = vsub.s32 3, %v5067
      %v5069 = vrot.slane %v4785, %v5068
      %v5070 = vlaneseq
      %v5071 = vshrl.u32 %v5070, 7
      %v5072 = vsub.s32 7, %v5071
      %v5073 = vrot.slane %v4785, %v5072
      %v5074 = vsel %vm3065, %v4829, %v4821
      %v5075 = vsel %vm3067, %v4837, %v5074
      %v5076 = vsel %vm3069, %v4845, %v5075
      %v5077 = vsel %vm3071, %v4853, %v5076
      %v5078 = vsel %vm3073, %v4861, %v5077
      %v5079 = vsel %vm3075, %v4869, %v5078
      %v5080 = vsel %vm3077, %v4877, %v5079
      %v5081 = vsel %vm3065, %v4833, %v4825
      %v5082 = vsel %vm3067, %v4841, %v5081
      %v5083 = vsel %vm3069, %v4849, %v5082
      %v5084 = vsel %vm3071, %v4857, %v5083
      %v5085 = vsel %vm3073, %v4865, %v5084
      %v5086 = vsel %vm3075, %v4873, %v5085
      %v5087 = vsel %vm3077, %v4881, %v5086
      %v5088 = vsel %vm3065, %v4893, %v4885
      %v5089 = vsel %vm3067, %v4901, %v5088
      %v5090 = vsel %vm3069, %v4909, %v5089
      %v5091 = vsel %vm3071, %v4917, %v5090
      %v5092 = vsel %vm3073, %v4925, %v5091
      %v5093 = vsel %vm3075, %v4933, %v5092
      %v5094 = vsel %vm3077, %v4941, %v5093
      %v5095 = vsel %vm3065, %v4897, %v4889
      %v5096 = vsel %vm3067, %v4905, %v5095
      %v5097 = vsel %vm3069, %v4913, %v5096
      %v5098 = vsel %vm3071, %v4921, %v5097
      %v5099 = vsel %vm3073, %v4929, %v5098
      %v5100 = vsel %vm3075, %v4937, %v5099
      %v5101 = vsel %vm3077, %v4945, %v5100
      %v5102 = vsel %vm3065, %v4957, %v4949
      %v5103 = vsel %vm3067, %v4965, %v5102
      %v5104 = vsel %vm3069, %v4973, %v5103
      %v5105 = vsel %vm3071, %v4981, %v5104
      %v5106 = vsel %vm3073, %v4989, %v5105
      %v5107 = vsel %vm3075, %v4997, %v5106
      %v5108 = vsel %vm3077, %v5005, %v5107
      %v5109 = vsel %vm3065, %v4961, %v4953
      %v5110 = vsel %vm3067, %v4969, %v5109
      %v5111 = vsel %vm3069, %v4977, %v5110
      %v5112 = vsel %vm3071, %v4985, %v5111
      %v5113 = vsel %vm3073, %v4993, %v5112
      %v5114 = vsel %vm3075, %v5001, %v5113
      %v5115 = vsel %vm3077, %v5009, %v5114
      %v5116 = vsel %vm3065, %v5021, %v5013
      %v5117 = vsel %vm3067, %v5029, %v5116
      %v5118 = vsel %vm3069, %v5037, %v5117
      %v5119 = vsel %vm3071, %v5045, %v5118
      %v5120 = vsel %vm3073, %v5053, %v5119
      %v5121 = vsel %vm3075, %v5061, %v5120
      %v5122 = vsel %vm3077, %v5069, %v5121
      %v5123 = vsel %vm3065, %v5025, %v5017
      %v5124 = vsel %vm3067, %v5033, %v5123
      %v5125 = vsel %vm3069, %v5041, %v5124
      %v5126 = vsel %vm3071, %v5049, %v5125
      %v5127 = vsel %vm3073, %v5057, %v5126
      %v5128 = vsel %vm3075, %v5065, %v5127
      %v5129 = vsel %vm3077, %v5073, %v5128
      %v5138 = vadd.f32 %v4498, %v5080
      %v5139 = vadd.f32 %v4499, %v5087
      %v5140 = vadd.f32 %v4500, %v5094
      %v5141 = vadd.f32 %v4501, %v5101
      %v5142 = vadd.f32 %v4502, %v5108
      %v5143 = vadd.f32 %v4503, %v5115
      %v5144 = vadd.f32 %v4504, %v5122
      %v5145 = vadd.f32 %v4505, %v5129
      %v5178 = vlaneseq
      %v5179 = vshrl.u32 %v5178, 7
      %v5180 = vsub.s32 2, %v5179
      %v5181 = vrot.slane %v3849, %v5180
      %v5182 = vlaneseq
      %v5183 = vshrl.u32 %v5182, 7
      %v5184 = vsub.s32 6, %v5183
      %v5185 = vrot.slane %v3849, %v5184
      %v5186 = vlaneseq
      %v5187 = vshrl.u32 %v5186, 7
      %v5188 = vsub.s32 2, %v5187
      %v5189 = vrot.slane %v3850, %v5188
      %v5190 = vlaneseq
      %v5191 = vshrl.u32 %v5190, 7
      %v5192 = vsub.s32 6, %v5191
      %v5193 = vrot.slane %v3850, %v5192
      %v5194 = vlaneseq
      %v5195 = vshrl.u32 %v5194, 7
      %v5196 = vsub.s32 2, %v5195
      %v5197 = vrot.slane %v3851, %v5196
      %v5198 = vlaneseq
      %v5199 = vshrl.u32 %v5198, 7
      %v5200 = vsub.s32 6, %v5199
      %v5201 = vrot.slane %v3851, %v5200
      %v5202 = vlaneseq
      %v5203 = vshrl.u32 %v5202, 7
      %v5204 = vsub.s32 2, %v5203
      %v5205 = vrot.slane %v3852, %v5204
      %v5206 = vlaneseq
      %v5207 = vshrl.u32 %v5206, 7
      %v5208 = vsub.s32 6, %v5207
      %v5209 = vrot.slane %v3852, %v5208
      %v5210 = vlaneseq
      %v5211 = vshrl.u32 %v5210, 7
      %v5212 = vsub.s32 2, %v5211
      %v5213 = vrot.slane %v3853, %v5212
      %v5214 = vlaneseq
      %v5215 = vshrl.u32 %v5214, 7
      %v5216 = vsub.s32 6, %v5215
      %v5217 = vrot.slane %v3853, %v5216
      %v5218 = vlaneseq
      %v5219 = vshrl.u32 %v5218, 7
      %v5220 = vsub.s32 2, %v5219
      %v5221 = vrot.slane %v3854, %v5220
      %v5222 = vlaneseq
      %v5223 = vshrl.u32 %v5222, 7
      %v5224 = vsub.s32 6, %v5223
      %v5225 = vrot.slane %v3854, %v5224
      %v5226 = vlaneseq
      %v5227 = vshrl.u32 %v5226, 7
      %v5228 = vsub.s32 2, %v5227
      %v5229 = vrot.slane %v3855, %v5228
      %v5230 = vlaneseq
      %v5231 = vshrl.u32 %v5230, 7
      %v5232 = vsub.s32 6, %v5231
      %v5233 = vrot.slane %v3855, %v5232
      %v5234 = vlaneseq
      %v5235 = vshrl.u32 %v5234, 7
      %v5236 = vsub.s32 2, %v5235
      %v5237 = vrot.slane %v3856, %v5236
      %v5238 = vlaneseq
      %v5239 = vshrl.u32 %v5238, 7
      %v5240 = vsub.s32 6, %v5239
      %v5241 = vrot.slane %v3856, %v5240
      %v5242 = vlaneseq
      %v5243 = vshrl.u32 %v5242, 7
      %v5244 = vsub.s32 2, %v5243
      %v5245 = vrot.slane %v3857, %v5244
      %v5246 = vlaneseq
      %v5247 = vshrl.u32 %v5246, 7
      %v5248 = vsub.s32 6, %v5247
      %v5249 = vrot.slane %v3857, %v5248
      %v5250 = vlaneseq
      %v5251 = vshrl.u32 %v5250, 7
      %v5252 = vsub.s32 2, %v5251
      %v5253 = vrot.slane %v3858, %v5252
      %v5254 = vlaneseq
      %v5255 = vshrl.u32 %v5254, 7
      %v5256 = vsub.s32 6, %v5255
      %v5257 = vrot.slane %v3858, %v5256
      %v5258 = vlaneseq
      %v5259 = vshrl.u32 %v5258, 7
      %v5260 = vsub.s32 2, %v5259
      %v5261 = vrot.slane %v3859, %v5260
      %v5262 = vlaneseq
      %v5263 = vshrl.u32 %v5262, 7
      %v5264 = vsub.s32 6, %v5263
      %v5265 = vrot.slane %v3859, %v5264
      %v5266 = vlaneseq
      %v5267 = vshrl.u32 %v5266, 7
      %v5268 = vsub.s32 2, %v5267
      %v5269 = vrot.slane %v3860, %v5268
      %v5270 = vlaneseq
      %v5271 = vshrl.u32 %v5270, 7
      %v5272 = vsub.s32 6, %v5271
      %v5273 = vrot.slane %v3860, %v5272
      %v5274 = vlaneseq
      %v5275 = vshrl.u32 %v5274, 7
      %v5276 = vsub.s32 2, %v5275
      %v5277 = vrot.slane %v3861, %v5276
      %v5278 = vlaneseq
      %v5279 = vshrl.u32 %v5278, 7
      %v5280 = vsub.s32 6, %v5279
      %v5281 = vrot.slane %v3861, %v5280
      %v5282 = vlaneseq
      %v5283 = vshrl.u32 %v5282, 7
      %v5284 = vsub.s32 2, %v5283
      %v5285 = vrot.slane %v3862, %v5284
      %v5286 = vlaneseq
      %v5287 = vshrl.u32 %v5286, 7
      %v5288 = vsub.s32 6, %v5287
      %v5289 = vrot.slane %v3862, %v5288
      %v5290 = vlaneseq
      %v5291 = vshrl.u32 %v5290, 7
      %v5292 = vsub.s32 2, %v5291
      %v5293 = vrot.slane %v3863, %v5292
      %v5294 = vlaneseq
      %v5295 = vshrl.u32 %v5294, 7
      %v5296 = vsub.s32 6, %v5295
      %v5297 = vrot.slane %v3863, %v5296
      %v5298 = vlaneseq
      %v5299 = vshrl.u32 %v5298, 7
      %v5300 = vsub.s32 2, %v5299
      %v5301 = vrot.slane %v3864, %v5300
      %v5302 = vlaneseq
      %v5303 = vshrl.u32 %v5302, 7
      %v5304 = vsub.s32 6, %v5303
      %v5305 = vrot.slane %v3864, %v5304
      %v5306 = vlaneseq
      %v5307 = vshrl.u32 %v5306, 7
      %v5308 = vsub.s32 2, %v5307
      %v5309 = vrot.slane %v3865, %v5308
      %v5310 = vlaneseq
      %v5311 = vshrl.u32 %v5310, 7
      %v5312 = vsub.s32 6, %v5311
      %v5313 = vrot.slane %v3865, %v5312
      %v5314 = vlaneseq
      %v5315 = vshrl.u32 %v5314, 7
      %v5316 = vsub.s32 2, %v5315
      %v5317 = vrot.slane %v3866, %v5316
      %v5318 = vlaneseq
      %v5319 = vshrl.u32 %v5318, 7
      %v5320 = vsub.s32 6, %v5319
      %v5321 = vrot.slane %v3866, %v5320
      %v5322 = vlaneseq
      %v5323 = vshrl.u32 %v5322, 7
      %v5324 = vsub.s32 2, %v5323
      %v5325 = vrot.slane %v3867, %v5324
      %v5326 = vlaneseq
      %v5327 = vshrl.u32 %v5326, 7
      %v5328 = vsub.s32 6, %v5327
      %v5329 = vrot.slane %v3867, %v5328
      %v5330 = vlaneseq
      %v5331 = vshrl.u32 %v5330, 7
      %v5332 = vsub.s32 2, %v5331
      %v5333 = vrot.slane %v3868, %v5332
      %v5334 = vlaneseq
      %v5335 = vshrl.u32 %v5334, 7
      %v5336 = vsub.s32 6, %v5335
      %v5337 = vrot.slane %v3868, %v5336
      %v5338 = vlaneseq
      %v5339 = vshrl.u32 %v5338, 7
      %v5340 = vsub.s32 2, %v5339
      %v5341 = vrot.slane %v3869, %v5340
      %v5342 = vlaneseq
      %v5343 = vshrl.u32 %v5342, 7
      %v5344 = vsub.s32 6, %v5343
      %v5345 = vrot.slane %v3869, %v5344
      %v5346 = vlaneseq
      %v5347 = vshrl.u32 %v5346, 7
      %v5348 = vsub.s32 2, %v5347
      %v5349 = vrot.slane %v3870, %v5348
      %v5350 = vlaneseq
      %v5351 = vshrl.u32 %v5350, 7
      %v5352 = vsub.s32 6, %v5351
      %v5353 = vrot.slane %v3870, %v5352
      %v5354 = vlaneseq
      %v5355 = vshrl.u32 %v5354, 7
      %v5356 = vsub.s32 2, %v5355
      %v5357 = vrot.slane %v3871, %v5356
      %v5358 = vlaneseq
      %v5359 = vshrl.u32 %v5358, 7
      %v5360 = vsub.s32 6, %v5359
      %v5361 = vrot.slane %v3871, %v5360
      %v5362 = vlaneseq
      %v5363 = vshrl.u32 %v5362, 7
      %v5364 = vsub.s32 2, %v5363
      %v5365 = vrot.slane %v3872, %v5364
      %v5366 = vlaneseq
      %v5367 = vshrl.u32 %v5366, 7
      %v5368 = vsub.s32 6, %v5367
      %v5369 = vrot.slane %v3872, %v5368
      %v5370 = vlaneseq
      %v5371 = vshrl.u32 %v5370, 7
      %v5372 = vsub.s32 2, %v5371
      %v5373 = vrot.slane %v3873, %v5372
      %v5374 = vlaneseq
      %v5375 = vshrl.u32 %v5374, 7
      %v5376 = vsub.s32 6, %v5375
      %v5377 = vrot.slane %v3873, %v5376
      %v5378 = vlaneseq
      %v5379 = vshrl.u32 %v5378, 7
      %v5380 = vsub.s32 2, %v5379
      %v5381 = vrot.slane %v3874, %v5380
      %v5382 = vlaneseq
      %v5383 = vshrl.u32 %v5382, 7
      %v5384 = vsub.s32 6, %v5383
      %v5385 = vrot.slane %v3874, %v5384
      %v5386 = vlaneseq
      %v5387 = vshrl.u32 %v5386, 7
      %v5388 = vsub.s32 2, %v5387
      %v5389 = vrot.slane %v3875, %v5388
      %v5390 = vlaneseq
      %v5391 = vshrl.u32 %v5390, 7
      %v5392 = vsub.s32 6, %v5391
      %v5393 = vrot.slane %v3875, %v5392
      %v5394 = vlaneseq
      %v5395 = vshrl.u32 %v5394, 7
      %v5396 = vsub.s32 2, %v5395
      %v5397 = vrot.slane %v3876, %v5396
      %v5398 = vlaneseq
      %v5399 = vshrl.u32 %v5398, 7
      %v5400 = vsub.s32 6, %v5399
      %v5401 = vrot.slane %v3876, %v5400
      %v5402 = vlaneseq
      %v5403 = vshrl.u32 %v5402, 7
      %v5404 = vsub.s32 2, %v5403
      %v5405 = vrot.slane %v3877, %v5404
      %v5406 = vlaneseq
      %v5407 = vshrl.u32 %v5406, 7
      %v5408 = vsub.s32 6, %v5407
      %v5409 = vrot.slane %v3877, %v5408
      %v5410 = vlaneseq
      %v5411 = vshrl.u32 %v5410, 7
      %v5412 = vsub.s32 2, %v5411
      %v5413 = vrot.slane %v3878, %v5412
      %v5414 = vlaneseq
      %v5415 = vshrl.u32 %v5414, 7
      %v5416 = vsub.s32 6, %v5415
      %v5417 = vrot.slane %v3878, %v5416
      %v5418 = vlaneseq
      %v5419 = vshrl.u32 %v5418, 7
      %v5420 = vsub.s32 2, %v5419
      %v5421 = vrot.slane %v3879, %v5420
      %v5422 = vlaneseq
      %v5423 = vshrl.u32 %v5422, 7
      %v5424 = vsub.s32 6, %v5423
      %v5425 = vrot.slane %v3879, %v5424
      %v5426 = vlaneseq
      %v5427 = vshrl.u32 %v5426, 7
      %v5428 = vsub.s32 2, %v5427
      %v5429 = vrot.slane %v3880, %v5428
      %v5430 = vlaneseq
      %v5431 = vshrl.u32 %v5430, 7
      %v5432 = vsub.s32 6, %v5431
      %v5433 = vrot.slane %v3880, %v5432
      %v5434 = vsel %vm3069, %v5189, %v5181
      %v5435 = vsel %vm3071, %v5197, %v5434
      %v5436 = vsel %vm3073, %v5205, %v5435
      %v5437 = vsel %vm3075, %v5213, %v5436
      %v5438 = vsel %vm3077, %v5221, %v5437
      %v5439 = vsel %vm3069, %v5193, %v5185
      %v5440 = vsel %vm3071, %v5201, %v5439
      %v5441 = vsel %vm3073, %v5209, %v5440
      %v5442 = vsel %vm3075, %v5217, %v5441
      %v5443 = vsel %vm3077, %v5225, %v5442
      %v5444 = vsel %vm3065, %v5237, %v5229
      %v5445 = vsel %vm3067, %v5245, %v5444
      %v5446 = vsel %vm3069, %v5253, %v5445
      %v5447 = vsel %vm3071, %v5261, %v5446
      %v5448 = vsel %vm3073, %v5269, %v5447
      %v5449 = vsel %vm3075, %v5277, %v5448
      %v5450 = vsel %vm3077, %v5285, %v5449
      %v5451 = vsel %vm3065, %v5241, %v5233
      %v5452 = vsel %vm3067, %v5249, %v5451
      %v5453 = vsel %vm3069, %v5257, %v5452
      %v5454 = vsel %vm3071, %v5265, %v5453
      %v5455 = vsel %vm3073, %v5273, %v5454
      %v5456 = vsel %vm3075, %v5281, %v5455
      %v5457 = vsel %vm3077, %v5289, %v5456
      %v5458 = vsel %vm3065, %v5301, %v5293
      %v5459 = vsel %vm3067, %v5309, %v5458
      %v5460 = vsel %vm3069, %v5317, %v5459
      %v5461 = vsel %vm3071, %v5325, %v5460
      %v5462 = vsel %vm3073, %v5333, %v5461
      %v5463 = vsel %vm3075, %v5341, %v5462
      %v5464 = vsel %vm3077, %v5349, %v5463
      %v5465 = vsel %vm3065, %v5305, %v5297
      %v5466 = vsel %vm3067, %v5313, %v5465
      %v5467 = vsel %vm3069, %v5321, %v5466
      %v5468 = vsel %vm3071, %v5329, %v5467
      %v5469 = vsel %vm3073, %v5337, %v5468
      %v5470 = vsel %vm3075, %v5345, %v5469
      %v5471 = vsel %vm3077, %v5353, %v5470
      %v5472 = vsel %vm3065, %v5365, %v5357
      %v5473 = vsel %vm3067, %v5373, %v5472
      %v5474 = vsel %vm3069, %v5381, %v5473
      %v5475 = vsel %vm3071, %v5389, %v5474
      %v5476 = vsel %vm3073, %v5397, %v5475
      %v5477 = vsel %vm3075, %v5405, %v5476
      %v5478 = vsel %vm3077, %v5413, %v5477
      %v5479 = vsel %vm3065, %v5369, %v5361
      %v5480 = vsel %vm3067, %v5377, %v5479
      %v5481 = vsel %vm3069, %v5385, %v5480
      %v5482 = vsel %vm3071, %v5393, %v5481
      %v5483 = vsel %vm3073, %v5401, %v5482
      %v5484 = vsel %vm3075, %v5409, %v5483
      %v5485 = vsel %vm3077, %v5417, %v5484
      %v5486 = vsel %vm3065, %v5429, %v5421
      %v5487 = vsel %vm3065, %v5433, %v5425
      %v5530 = vlaneseq
      %v5531 = vshrl.u32 %v5530, 7
      %v5532 = vsub.s32 0, %v5531
      %v5533 = vrot.slane %v4234, %v5532
      %v5534 = vlaneseq
      %v5535 = vshrl.u32 %v5534, 7
      %v5536 = vsub.s32 4, %v5535
      %v5537 = vrot.slane %v4234, %v5536
      %v5538 = vlaneseq
      %v5539 = vshrl.u32 %v5538, 7
      %v5540 = vsub.s32 0, %v5539
      %v5541 = vrot.slane %v4235, %v5540
      %v5542 = vlaneseq
      %v5543 = vshrl.u32 %v5542, 7
      %v5544 = vsub.s32 4, %v5543
      %v5545 = vrot.slane %v4235, %v5544
      %v5546 = vlaneseq
      %v5547 = vshrl.u32 %v5546, 7
      %v5548 = vsub.s32 0, %v5547
      %v5549 = vrot.slane %v4236, %v5548
      %v5550 = vlaneseq
      %v5551 = vshrl.u32 %v5550, 7
      %v5552 = vsub.s32 4, %v5551
      %v5553 = vrot.slane %v4236, %v5552
      %v5554 = vlaneseq
      %v5555 = vshrl.u32 %v5554, 7
      %v5556 = vsub.s32 0, %v5555
      %v5557 = vrot.slane %v4237, %v5556
      %v5558 = vlaneseq
      %v5559 = vshrl.u32 %v5558, 7
      %v5560 = vsub.s32 4, %v5559
      %v5561 = vrot.slane %v4237, %v5560
      %v5562 = vlaneseq
      %v5563 = vshrl.u32 %v5562, 7
      %v5564 = vsub.s32 0, %v5563
      %v5565 = vrot.slane %v4238, %v5564
      %v5566 = vlaneseq
      %v5567 = vshrl.u32 %v5566, 7
      %v5568 = vsub.s32 4, %v5567
      %v5569 = vrot.slane %v4238, %v5568
      %v5570 = vlaneseq
      %v5571 = vshrl.u32 %v5570, 7
      %v5572 = vsub.s32 0, %v5571
      %v5573 = vrot.slane %v4239, %v5572
      %v5574 = vlaneseq
      %v5575 = vshrl.u32 %v5574, 7
      %v5576 = vsub.s32 4, %v5575
      %v5577 = vrot.slane %v4239, %v5576
      %v5578 = vlaneseq
      %v5579 = vshrl.u32 %v5578, 7
      %v5580 = vsub.s32 0, %v5579
      %v5581 = vrot.slane %v4240, %v5580
      %v5582 = vlaneseq
      %v5583 = vshrl.u32 %v5582, 7
      %v5584 = vsub.s32 4, %v5583
      %v5585 = vrot.slane %v4240, %v5584
      %v5586 = vlaneseq
      %v5587 = vshrl.u32 %v5586, 7
      %v5588 = vsub.s32 0, %v5587
      %v5589 = vrot.slane %v4241, %v5588
      %v5590 = vlaneseq
      %v5591 = vshrl.u32 %v5590, 7
      %v5592 = vsub.s32 4, %v5591
      %v5593 = vrot.slane %v4241, %v5592
      %v5594 = vlaneseq
      %v5595 = vshrl.u32 %v5594, 7
      %v5596 = vsub.s32 0, %v5595
      %v5597 = vrot.slane %v4242, %v5596
      %v5598 = vlaneseq
      %v5599 = vshrl.u32 %v5598, 7
      %v5600 = vsub.s32 4, %v5599
      %v5601 = vrot.slane %v4242, %v5600
      %v5602 = vlaneseq
      %v5603 = vshrl.u32 %v5602, 7
      %v5604 = vsub.s32 0, %v5603
      %v5605 = vrot.slane %v4243, %v5604
      %v5606 = vlaneseq
      %v5607 = vshrl.u32 %v5606, 7
      %v5608 = vsub.s32 4, %v5607
      %v5609 = vrot.slane %v4243, %v5608
      %v5610 = vlaneseq
      %v5611 = vshrl.u32 %v5610, 7
      %v5612 = vsub.s32 0, %v5611
      %v5613 = vrot.slane %v4244, %v5612
      %v5614 = vlaneseq
      %v5615 = vshrl.u32 %v5614, 7
      %v5616 = vsub.s32 4, %v5615
      %v5617 = vrot.slane %v4244, %v5616
      %v5618 = vlaneseq
      %v5619 = vshrl.u32 %v5618, 7
      %v5620 = vsub.s32 0, %v5619
      %v5621 = vrot.slane %v4245, %v5620
      %v5622 = vlaneseq
      %v5623 = vshrl.u32 %v5622, 7
      %v5624 = vsub.s32 4, %v5623
      %v5625 = vrot.slane %v4245, %v5624
      %v5626 = vlaneseq
      %v5627 = vshrl.u32 %v5626, 7
      %v5628 = vsub.s32 0, %v5627
      %v5629 = vrot.slane %v4246, %v5628
      %v5630 = vlaneseq
      %v5631 = vshrl.u32 %v5630, 7
      %v5632 = vsub.s32 4, %v5631
      %v5633 = vrot.slane %v4246, %v5632
      %v5634 = vlaneseq
      %v5635 = vshrl.u32 %v5634, 7
      %v5636 = vsub.s32 0, %v5635
      %v5637 = vrot.slane %v4247, %v5636
      %v5638 = vlaneseq
      %v5639 = vshrl.u32 %v5638, 7
      %v5640 = vsub.s32 4, %v5639
      %v5641 = vrot.slane %v4247, %v5640
      %v5642 = vlaneseq
      %v5643 = vshrl.u32 %v5642, 7
      %v5644 = vsub.s32 0, %v5643
      %v5645 = vrot.slane %v4248, %v5644
      %v5646 = vlaneseq
      %v5647 = vshrl.u32 %v5646, 7
      %v5648 = vsub.s32 4, %v5647
      %v5649 = vrot.slane %v4248, %v5648
      %v5650 = vlaneseq
      %v5651 = vshrl.u32 %v5650, 7
      %v5652 = vsub.s32 0, %v5651
      %v5653 = vrot.slane %v4249, %v5652
      %v5654 = vlaneseq
      %v5655 = vshrl.u32 %v5654, 7
      %v5656 = vsub.s32 4, %v5655
      %v5657 = vrot.slane %v4249, %v5656
      %v5658 = vlaneseq
      %v5659 = vshrl.u32 %v5658, 7
      %v5660 = vsub.s32 0, %v5659
      %v5661 = vrot.slane %v4250, %v5660
      %v5662 = vlaneseq
      %v5663 = vshrl.u32 %v5662, 7
      %v5664 = vsub.s32 4, %v5663
      %v5665 = vrot.slane %v4250, %v5664
      %v5666 = vlaneseq
      %v5667 = vshrl.u32 %v5666, 7
      %v5668 = vsub.s32 0, %v5667
      %v5669 = vrot.slane %v4251, %v5668
      %v5670 = vlaneseq
      %v5671 = vshrl.u32 %v5670, 7
      %v5672 = vsub.s32 4, %v5671
      %v5673 = vrot.slane %v4251, %v5672
      %v5674 = vlaneseq
      %v5675 = vshrl.u32 %v5674, 7
      %v5676 = vsub.s32 0, %v5675
      %v5677 = vrot.slane %v4252, %v5676
      %v5678 = vlaneseq
      %v5679 = vshrl.u32 %v5678, 7
      %v5680 = vsub.s32 4, %v5679
      %v5681 = vrot.slane %v4252, %v5680
      %v5682 = vlaneseq
      %v5683 = vshrl.u32 %v5682, 7
      %v5684 = vsub.s32 0, %v5683
      %v5685 = vrot.slane %v4253, %v5684
      %v5686 = vlaneseq
      %v5687 = vshrl.u32 %v5686, 7
      %v5688 = vsub.s32 4, %v5687
      %v5689 = vrot.slane %v4253, %v5688
      %v5690 = vlaneseq
      %v5691 = vshrl.u32 %v5690, 7
      %v5692 = vsub.s32 0, %v5691
      %v5693 = vrot.slane %v4254, %v5692
      %v5694 = vlaneseq
      %v5695 = vshrl.u32 %v5694, 7
      %v5696 = vsub.s32 4, %v5695
      %v5697 = vrot.slane %v4254, %v5696
      %v5698 = vlaneseq
      %v5699 = vshrl.u32 %v5698, 7
      %v5700 = vsub.s32 0, %v5699
      %v5701 = vrot.slane %v4255, %v5700
      %v5702 = vlaneseq
      %v5703 = vshrl.u32 %v5702, 7
      %v5704 = vsub.s32 4, %v5703
      %v5705 = vrot.slane %v4255, %v5704
      %v5706 = vlaneseq
      %v5707 = vshrl.u32 %v5706, 7
      %v5708 = vsub.s32 0, %v5707
      %v5709 = vrot.slane %v4256, %v5708
      %v5710 = vlaneseq
      %v5711 = vshrl.u32 %v5710, 7
      %v5712 = vsub.s32 4, %v5711
      %v5713 = vrot.slane %v4256, %v5712
      %v5714 = vlaneseq
      %v5715 = vshrl.u32 %v5714, 7
      %v5716 = vsub.s32 0, %v5715
      %v5717 = vrot.slane %v4257, %v5716
      %v5718 = vlaneseq
      %v5719 = vshrl.u32 %v5718, 7
      %v5720 = vsub.s32 4, %v5719
      %v5721 = vrot.slane %v4257, %v5720
      %v5722 = vlaneseq
      %v5723 = vshrl.u32 %v5722, 7
      %v5724 = vsub.s32 0, %v5723
      %v5725 = vrot.slane %v4258, %v5724
      %v5726 = vlaneseq
      %v5727 = vshrl.u32 %v5726, 7
      %v5728 = vsub.s32 4, %v5727
      %v5729 = vrot.slane %v4258, %v5728
      %v5730 = vlaneseq
      %v5731 = vshrl.u32 %v5730, 7
      %v5732 = vsub.s32 0, %v5731
      %v5733 = vrot.slane %v4259, %v5732
      %v5734 = vlaneseq
      %v5735 = vshrl.u32 %v5734, 7
      %v5736 = vsub.s32 4, %v5735
      %v5737 = vrot.slane %v4259, %v5736
      %v5738 = vlaneseq
      %v5739 = vshrl.u32 %v5738, 7
      %v5740 = vsub.s32 0, %v5739
      %v5741 = vrot.slane %v4260, %v5740
      %v5742 = vlaneseq
      %v5743 = vshrl.u32 %v5742, 7
      %v5744 = vsub.s32 4, %v5743
      %v5745 = vrot.slane %v4260, %v5744
      %v5746 = vlaneseq
      %v5747 = vshrl.u32 %v5746, 7
      %v5748 = vsub.s32 0, %v5747
      %v5749 = vrot.slane %v4261, %v5748
      %v5750 = vlaneseq
      %v5751 = vshrl.u32 %v5750, 7
      %v5752 = vsub.s32 4, %v5751
      %v5753 = vrot.slane %v4261, %v5752
      %v5754 = vlaneseq
      %v5755 = vshrl.u32 %v5754, 7
      %v5756 = vsub.s32 0, %v5755
      %v5757 = vrot.slane %v4262, %v5756
      %v5758 = vlaneseq
      %v5759 = vshrl.u32 %v5758, 7
      %v5760 = vsub.s32 4, %v5759
      %v5761 = vrot.slane %v4262, %v5760
      %v5762 = vlaneseq
      %v5763 = vshrl.u32 %v5762, 7
      %v5764 = vsub.s32 0, %v5763
      %v5765 = vrot.slane %v4263, %v5764
      %v5766 = vlaneseq
      %v5767 = vshrl.u32 %v5766, 7
      %v5768 = vsub.s32 4, %v5767
      %v5769 = vrot.slane %v4263, %v5768
      %v5770 = vlaneseq
      %v5771 = vshrl.u32 %v5770, 7
      %v5772 = vsub.s32 0, %v5771
      %v5773 = vrot.slane %v4264, %v5772
      %v5774 = vlaneseq
      %v5775 = vshrl.u32 %v5774, 7
      %v5776 = vsub.s32 4, %v5775
      %v5777 = vrot.slane %v4264, %v5776
      %v5778 = vlaneseq
      %v5779 = vshrl.u32 %v5778, 7
      %v5780 = vsub.s32 0, %v5779
      %v5781 = vrot.slane %v4265, %v5780
      %v5782 = vlaneseq
      %v5783 = vshrl.u32 %v5782, 7
      %v5784 = vsub.s32 4, %v5783
      %v5785 = vrot.slane %v4265, %v5784
      %v5786 = vsel %vm3069, %v5541, %v5533
      %v5787 = vsel %vm3071, %v5549, %v5786
      %v5788 = vsel %vm3073, %v5557, %v5787
      %v5789 = vsel %vm3075, %v5565, %v5788
      %v5790 = vsel %vm3077, %v5573, %v5789
      %v5791 = vsel %vm3069, %v5545, %v5537
      %v5792 = vsel %vm3071, %v5553, %v5791
      %v5793 = vsel %vm3073, %v5561, %v5792
      %v5794 = vsel %vm3075, %v5569, %v5793
      %v5795 = vsel %vm3077, %v5577, %v5794
      %v5796 = vsel %vm3065, %v5589, %v5581
      %v5797 = vsel %vm3067, %v5597, %v5796
      %v5798 = vsel %vm3069, %v5605, %v5797
      %v5799 = vsel %vm3071, %v5613, %v5798
      %v5800 = vsel %vm3073, %v5621, %v5799
      %v5801 = vsel %vm3075, %v5629, %v5800
      %v5802 = vsel %vm3077, %v5637, %v5801
      %v5803 = vsel %vm3065, %v5593, %v5585
      %v5804 = vsel %vm3067, %v5601, %v5803
      %v5805 = vsel %vm3069, %v5609, %v5804
      %v5806 = vsel %vm3071, %v5617, %v5805
      %v5807 = vsel %vm3073, %v5625, %v5806
      %v5808 = vsel %vm3075, %v5633, %v5807
      %v5809 = vsel %vm3077, %v5641, %v5808
      %v5810 = vsel %vm3065, %v5653, %v5645
      %v5811 = vsel %vm3067, %v5661, %v5810
      %v5812 = vsel %vm3069, %v5669, %v5811
      %v5813 = vsel %vm3071, %v5677, %v5812
      %v5814 = vsel %vm3073, %v5685, %v5813
      %v5815 = vsel %vm3075, %v5693, %v5814
      %v5816 = vsel %vm3077, %v5701, %v5815
      %v5817 = vsel %vm3065, %v5657, %v5649
      %v5818 = vsel %vm3067, %v5665, %v5817
      %v5819 = vsel %vm3069, %v5673, %v5818
      %v5820 = vsel %vm3071, %v5681, %v5819
      %v5821 = vsel %vm3073, %v5689, %v5820
      %v5822 = vsel %vm3075, %v5697, %v5821
      %v5823 = vsel %vm3077, %v5705, %v5822
      %v5824 = vsel %vm3065, %v5717, %v5709
      %v5825 = vsel %vm3067, %v5725, %v5824
      %v5826 = vsel %vm3069, %v5733, %v5825
      %v5827 = vsel %vm3071, %v5741, %v5826
      %v5828 = vsel %vm3073, %v5749, %v5827
      %v5829 = vsel %vm3075, %v5757, %v5828
      %v5830 = vsel %vm3077, %v5765, %v5829
      %v5831 = vsel %vm3065, %v5721, %v5713
      %v5832 = vsel %vm3067, %v5729, %v5831
      %v5833 = vsel %vm3069, %v5737, %v5832
      %v5834 = vsel %vm3071, %v5745, %v5833
      %v5835 = vsel %vm3073, %v5753, %v5834
      %v5836 = vsel %vm3075, %v5761, %v5835
      %v5837 = vsel %vm3077, %v5769, %v5836
      %v5838 = vsel %vm3065, %v5781, %v5773
      %v5839 = vsel %vm3065, %v5785, %v5777
      %v5882 = vlaneseq
      %v5883 = vshrl.u32 %v5882, 7
      %v5884 = vsub.s32 2, %v5883
      %v5885 = vrot.slane %v4578, %v5884
      %v5886 = vlaneseq
      %v5887 = vshrl.u32 %v5886, 7
      %v5888 = vsub.s32 6, %v5887
      %v5889 = vrot.slane %v4578, %v5888
      %v5890 = vlaneseq
      %v5891 = vshrl.u32 %v5890, 7
      %v5892 = vsub.s32 2, %v5891
      %v5893 = vrot.slane %v4579, %v5892
      %v5894 = vlaneseq
      %v5895 = vshrl.u32 %v5894, 7
      %v5896 = vsub.s32 6, %v5895
      %v5897 = vrot.slane %v4579, %v5896
      %v5898 = vlaneseq
      %v5899 = vshrl.u32 %v5898, 7
      %v5900 = vsub.s32 2, %v5899
      %v5901 = vrot.slane %v4580, %v5900
      %v5902 = vlaneseq
      %v5903 = vshrl.u32 %v5902, 7
      %v5904 = vsub.s32 6, %v5903
      %v5905 = vrot.slane %v4580, %v5904
      %v5906 = vlaneseq
      %v5907 = vshrl.u32 %v5906, 7
      %v5908 = vsub.s32 2, %v5907
      %v5909 = vrot.slane %v4581, %v5908
      %v5910 = vlaneseq
      %v5911 = vshrl.u32 %v5910, 7
      %v5912 = vsub.s32 6, %v5911
      %v5913 = vrot.slane %v4581, %v5912
      %v5914 = vlaneseq
      %v5915 = vshrl.u32 %v5914, 7
      %v5916 = vsub.s32 2, %v5915
      %v5917 = vrot.slane %v4582, %v5916
      %v5918 = vlaneseq
      %v5919 = vshrl.u32 %v5918, 7
      %v5920 = vsub.s32 6, %v5919
      %v5921 = vrot.slane %v4582, %v5920
      %v5922 = vlaneseq
      %v5923 = vshrl.u32 %v5922, 7
      %v5924 = vsub.s32 2, %v5923
      %v5925 = vrot.slane %v4583, %v5924
      %v5926 = vlaneseq
      %v5927 = vshrl.u32 %v5926, 7
      %v5928 = vsub.s32 6, %v5927
      %v5929 = vrot.slane %v4583, %v5928
      %v5930 = vlaneseq
      %v5931 = vshrl.u32 %v5930, 7
      %v5932 = vsub.s32 2, %v5931
      %v5933 = vrot.slane %v4584, %v5932
      %v5934 = vlaneseq
      %v5935 = vshrl.u32 %v5934, 7
      %v5936 = vsub.s32 6, %v5935
      %v5937 = vrot.slane %v4584, %v5936
      %v5938 = vlaneseq
      %v5939 = vshrl.u32 %v5938, 7
      %v5940 = vsub.s32 2, %v5939
      %v5941 = vrot.slane %v4585, %v5940
      %v5942 = vlaneseq
      %v5943 = vshrl.u32 %v5942, 7
      %v5944 = vsub.s32 6, %v5943
      %v5945 = vrot.slane %v4585, %v5944
      %v5946 = vlaneseq
      %v5947 = vshrl.u32 %v5946, 7
      %v5948 = vsub.s32 2, %v5947
      %v5949 = vrot.slane %v4586, %v5948
      %v5950 = vlaneseq
      %v5951 = vshrl.u32 %v5950, 7
      %v5952 = vsub.s32 6, %v5951
      %v5953 = vrot.slane %v4586, %v5952
      %v5954 = vlaneseq
      %v5955 = vshrl.u32 %v5954, 7
      %v5956 = vsub.s32 2, %v5955
      %v5957 = vrot.slane %v4587, %v5956
      %v5958 = vlaneseq
      %v5959 = vshrl.u32 %v5958, 7
      %v5960 = vsub.s32 6, %v5959
      %v5961 = vrot.slane %v4587, %v5960
      %v5962 = vlaneseq
      %v5963 = vshrl.u32 %v5962, 7
      %v5964 = vsub.s32 2, %v5963
      %v5965 = vrot.slane %v4588, %v5964
      %v5966 = vlaneseq
      %v5967 = vshrl.u32 %v5966, 7
      %v5968 = vsub.s32 6, %v5967
      %v5969 = vrot.slane %v4588, %v5968
      %v5970 = vlaneseq
      %v5971 = vshrl.u32 %v5970, 7
      %v5972 = vsub.s32 2, %v5971
      %v5973 = vrot.slane %v4589, %v5972
      %v5974 = vlaneseq
      %v5975 = vshrl.u32 %v5974, 7
      %v5976 = vsub.s32 6, %v5975
      %v5977 = vrot.slane %v4589, %v5976
      %v5978 = vlaneseq
      %v5979 = vshrl.u32 %v5978, 7
      %v5980 = vsub.s32 2, %v5979
      %v5981 = vrot.slane %v4590, %v5980
      %v5982 = vlaneseq
      %v5983 = vshrl.u32 %v5982, 7
      %v5984 = vsub.s32 6, %v5983
      %v5985 = vrot.slane %v4590, %v5984
      %v5986 = vlaneseq
      %v5987 = vshrl.u32 %v5986, 7
      %v5988 = vsub.s32 2, %v5987
      %v5989 = vrot.slane %v4591, %v5988
      %v5990 = vlaneseq
      %v5991 = vshrl.u32 %v5990, 7
      %v5992 = vsub.s32 6, %v5991
      %v5993 = vrot.slane %v4591, %v5992
      %v5994 = vlaneseq
      %v5995 = vshrl.u32 %v5994, 7
      %v5996 = vsub.s32 2, %v5995
      %v5997 = vrot.slane %v4592, %v5996
      %v5998 = vlaneseq
      %v5999 = vshrl.u32 %v5998, 7
      %v6000 = vsub.s32 6, %v5999
      %v6001 = vrot.slane %v4592, %v6000
      %v6002 = vlaneseq
      %v6003 = vshrl.u32 %v6002, 7
      %v6004 = vsub.s32 2, %v6003
      %v6005 = vrot.slane %v4593, %v6004
      %v6006 = vlaneseq
      %v6007 = vshrl.u32 %v6006, 7
      %v6008 = vsub.s32 6, %v6007
      %v6009 = vrot.slane %v4593, %v6008
      %v6010 = vlaneseq
      %v6011 = vshrl.u32 %v6010, 7
      %v6012 = vsub.s32 2, %v6011
      %v6013 = vrot.slane %v4594, %v6012
      %v6014 = vlaneseq
      %v6015 = vshrl.u32 %v6014, 7
      %v6016 = vsub.s32 6, %v6015
      %v6017 = vrot.slane %v4594, %v6016
      %v6018 = vlaneseq
      %v6019 = vshrl.u32 %v6018, 7
      %v6020 = vsub.s32 2, %v6019
      %v6021 = vrot.slane %v4595, %v6020
      %v6022 = vlaneseq
      %v6023 = vshrl.u32 %v6022, 7
      %v6024 = vsub.s32 6, %v6023
      %v6025 = vrot.slane %v4595, %v6024
      %v6026 = vlaneseq
      %v6027 = vshrl.u32 %v6026, 7
      %v6028 = vsub.s32 2, %v6027
      %v6029 = vrot.slane %v4596, %v6028
      %v6030 = vlaneseq
      %v6031 = vshrl.u32 %v6030, 7
      %v6032 = vsub.s32 6, %v6031
      %v6033 = vrot.slane %v4596, %v6032
      %v6034 = vlaneseq
      %v6035 = vshrl.u32 %v6034, 7
      %v6036 = vsub.s32 2, %v6035
      %v6037 = vrot.slane %v4597, %v6036
      %v6038 = vlaneseq
      %v6039 = vshrl.u32 %v6038, 7
      %v6040 = vsub.s32 6, %v6039
      %v6041 = vrot.slane %v4597, %v6040
      %v6042 = vlaneseq
      %v6043 = vshrl.u32 %v6042, 7
      %v6044 = vsub.s32 2, %v6043
      %v6045 = vrot.slane %v4598, %v6044
      %v6046 = vlaneseq
      %v6047 = vshrl.u32 %v6046, 7
      %v6048 = vsub.s32 6, %v6047
      %v6049 = vrot.slane %v4598, %v6048
      %v6050 = vlaneseq
      %v6051 = vshrl.u32 %v6050, 7
      %v6052 = vsub.s32 2, %v6051
      %v6053 = vrot.slane %v4599, %v6052
      %v6054 = vlaneseq
      %v6055 = vshrl.u32 %v6054, 7
      %v6056 = vsub.s32 6, %v6055
      %v6057 = vrot.slane %v4599, %v6056
      %v6058 = vlaneseq
      %v6059 = vshrl.u32 %v6058, 7
      %v6060 = vsub.s32 2, %v6059
      %v6061 = vrot.slane %v4600, %v6060
      %v6062 = vlaneseq
      %v6063 = vshrl.u32 %v6062, 7
      %v6064 = vsub.s32 6, %v6063
      %v6065 = vrot.slane %v4600, %v6064
      %v6066 = vlaneseq
      %v6067 = vshrl.u32 %v6066, 7
      %v6068 = vsub.s32 2, %v6067
      %v6069 = vrot.slane %v4601, %v6068
      %v6070 = vlaneseq
      %v6071 = vshrl.u32 %v6070, 7
      %v6072 = vsub.s32 6, %v6071
      %v6073 = vrot.slane %v4601, %v6072
      %v6074 = vlaneseq
      %v6075 = vshrl.u32 %v6074, 7
      %v6076 = vsub.s32 2, %v6075
      %v6077 = vrot.slane %v4602, %v6076
      %v6078 = vlaneseq
      %v6079 = vshrl.u32 %v6078, 7
      %v6080 = vsub.s32 6, %v6079
      %v6081 = vrot.slane %v4602, %v6080
      %v6082 = vlaneseq
      %v6083 = vshrl.u32 %v6082, 7
      %v6084 = vsub.s32 2, %v6083
      %v6085 = vrot.slane %v4603, %v6084
      %v6086 = vlaneseq
      %v6087 = vshrl.u32 %v6086, 7
      %v6088 = vsub.s32 6, %v6087
      %v6089 = vrot.slane %v4603, %v6088
      %v6090 = vlaneseq
      %v6091 = vshrl.u32 %v6090, 7
      %v6092 = vsub.s32 2, %v6091
      %v6093 = vrot.slane %v4604, %v6092
      %v6094 = vlaneseq
      %v6095 = vshrl.u32 %v6094, 7
      %v6096 = vsub.s32 6, %v6095
      %v6097 = vrot.slane %v4604, %v6096
      %v6098 = vlaneseq
      %v6099 = vshrl.u32 %v6098, 7
      %v6100 = vsub.s32 2, %v6099
      %v6101 = vrot.slane %v4605, %v6100
      %v6102 = vlaneseq
      %v6103 = vshrl.u32 %v6102, 7
      %v6104 = vsub.s32 6, %v6103
      %v6105 = vrot.slane %v4605, %v6104
      %v6106 = vlaneseq
      %v6107 = vshrl.u32 %v6106, 7
      %v6108 = vsub.s32 2, %v6107
      %v6109 = vrot.slane %v4606, %v6108
      %v6110 = vlaneseq
      %v6111 = vshrl.u32 %v6110, 7
      %v6112 = vsub.s32 6, %v6111
      %v6113 = vrot.slane %v4606, %v6112
      %v6114 = vlaneseq
      %v6115 = vshrl.u32 %v6114, 7
      %v6116 = vsub.s32 2, %v6115
      %v6117 = vrot.slane %v4607, %v6116
      %v6118 = vlaneseq
      %v6119 = vshrl.u32 %v6118, 7
      %v6120 = vsub.s32 6, %v6119
      %v6121 = vrot.slane %v4607, %v6120
      %v6122 = vlaneseq
      %v6123 = vshrl.u32 %v6122, 7
      %v6124 = vsub.s32 2, %v6123
      %v6125 = vrot.slane %v4608, %v6124
      %v6126 = vlaneseq
      %v6127 = vshrl.u32 %v6126, 7
      %v6128 = vsub.s32 6, %v6127
      %v6129 = vrot.slane %v4608, %v6128
      %v6130 = vlaneseq
      %v6131 = vshrl.u32 %v6130, 7
      %v6132 = vsub.s32 2, %v6131
      %v6133 = vrot.slane %v4609, %v6132
      %v6134 = vlaneseq
      %v6135 = vshrl.u32 %v6134, 7
      %v6136 = vsub.s32 6, %v6135
      %v6137 = vrot.slane %v4609, %v6136
      %v6138 = vsel %vm3069, %v5893, %v5885
      %v6139 = vsel %vm3071, %v5901, %v6138
      %v6140 = vsel %vm3073, %v5909, %v6139
      %v6141 = vsel %vm3075, %v5917, %v6140
      %v6142 = vsel %vm3077, %v5925, %v6141
      %v6143 = vsel %vm3069, %v5897, %v5889
      %v6144 = vsel %vm3071, %v5905, %v6143
      %v6145 = vsel %vm3073, %v5913, %v6144
      %v6146 = vsel %vm3075, %v5921, %v6145
      %v6147 = vsel %vm3077, %v5929, %v6146
      %v6148 = vsel %vm3065, %v5941, %v5933
      %v6149 = vsel %vm3067, %v5949, %v6148
      %v6150 = vsel %vm3069, %v5957, %v6149
      %v6151 = vsel %vm3071, %v5965, %v6150
      %v6152 = vsel %vm3073, %v5973, %v6151
      %v6153 = vsel %vm3075, %v5981, %v6152
      %v6154 = vsel %vm3077, %v5989, %v6153
      %v6155 = vsel %vm3065, %v5945, %v5937
      %v6156 = vsel %vm3067, %v5953, %v6155
      %v6157 = vsel %vm3069, %v5961, %v6156
      %v6158 = vsel %vm3071, %v5969, %v6157
      %v6159 = vsel %vm3073, %v5977, %v6158
      %v6160 = vsel %vm3075, %v5985, %v6159
      %v6161 = vsel %vm3077, %v5993, %v6160
      %v6162 = vsel %vm3065, %v6005, %v5997
      %v6163 = vsel %vm3067, %v6013, %v6162
      %v6164 = vsel %vm3069, %v6021, %v6163
      %v6165 = vsel %vm3071, %v6029, %v6164
      %v6166 = vsel %vm3073, %v6037, %v6165
      %v6167 = vsel %vm3075, %v6045, %v6166
      %v6168 = vsel %vm3077, %v6053, %v6167
      %v6169 = vsel %vm3065, %v6009, %v6001
      %v6170 = vsel %vm3067, %v6017, %v6169
      %v6171 = vsel %vm3069, %v6025, %v6170
      %v6172 = vsel %vm3071, %v6033, %v6171
      %v6173 = vsel %vm3073, %v6041, %v6172
      %v6174 = vsel %vm3075, %v6049, %v6173
      %v6175 = vsel %vm3077, %v6057, %v6174
      %v6176 = vsel %vm3065, %v6069, %v6061
      %v6177 = vsel %vm3067, %v6077, %v6176
      %v6178 = vsel %vm3069, %v6085, %v6177
      %v6179 = vsel %vm3071, %v6093, %v6178
      %v6180 = vsel %vm3073, %v6101, %v6179
      %v6181 = vsel %vm3075, %v6109, %v6180
      %v6182 = vsel %vm3077, %v6117, %v6181
      %v6183 = vsel %vm3065, %v6073, %v6065
      %v6184 = vsel %vm3067, %v6081, %v6183
      %v6185 = vsel %vm3069, %v6089, %v6184
      %v6186 = vsel %vm3071, %v6097, %v6185
      %v6187 = vsel %vm3073, %v6105, %v6186
      %v6188 = vsel %vm3075, %v6113, %v6187
      %v6189 = vsel %vm3077, %v6121, %v6188
      %v6190 = vsel %vm3065, %v6133, %v6125
      %v6191 = vsel %vm3065, %v6137, %v6129
      %vm6210 = vcmask 1041408
      %v6211 = vrot.slane %v5138, 6
      %v6212 = vrot.slane %v5139, 6
      %v6213 = vrot.slane %v5140, 6
      %v6214 = vsel %vm6210, %v6211, %v6213
      %v6215 = vrot.slane %v5141, 6
      %v6216 = vsel %vm6210, %v6212, %v6215
      %v6217 = vrot.slane %v5142, 6
      %v6218 = vsel %vm6210, %v6213, %v6217
      %v6219 = vrot.slane %v5143, 6
      %v6220 = vsel %vm6210, %v6215, %v6219
      %v6221 = vrot.slane %v5144, 6
      %v6222 = vsel %vm6210, %v6217, %v6221
      %v6223 = vrot.slane %v5145, 6
      %v6224 = vsel %vm6210, %v6219, %v6223
      %v6235 = vld [vmem:[%s9] sm:$0xf]
      %v6236 = vld [vmem:[%s9 + $0x4] sm:$0xf]
      %v6237 = vld [vmem:[%s9 + $0x8] sm:$0xf]
      %v6238 = vld [vmem:[%s9 + $0xc] sm:$0xf]
      %v6239 = vpack.c.bf16 %v5450, %v5438
      %v6240 = vpack.c.bf16 %v5457, %v5443
      %v6241 = vpack.c.bf16 %v5802, %v5790
      %v6242 = vpack.c.bf16 %v5809, %v5795
      %v6243 = vpack.c.bf16 %v6154, %v6142
      %v6244 = vpack.c.bf16 %v6161, %v6147
      %v6245 = vpack.c.bf16 %v6214, %v6211
      %v6246 = vpack.c.bf16 %v6216, %v6212
      %v6247 = vpack.c.bf16 %v5478, %v5464
      %v6248 = vpack.c.bf16 %v5485, %v5471
      %v6249 = vpack.c.bf16 %v5830, %v5816
      %v6250 = vpack.c.bf16 %v5837, %v5823
      %v6251 = vpack.c.bf16 %v6182, %v6168
      %v6252 = vpack.c.bf16 %v6189, %v6175
      %v6253 = vpack.c.bf16 %v6222, %v6218
      %v6254 = vpack.c.bf16 %v6224, %v6220
      %v6255 = vpack.c.bf16 %v5486, %v5486
      %v6256 = vpack.c.bf16 %v5487, %v5487
      %v6257 = vpack.c.bf16 %v5838, %v5838
      %v6258 = vpack.c.bf16 %v5839, %v5839
      %v6259 = vpack.c.bf16 %v6190, %v6190
      %v6260 = vpack.c.bf16 %v6191, %v6191
      %v6261 = vpack.c.bf16 %v6221, %v6221
      %v6262 = vpack.c.bf16 %v6223, %v6223
      %v6263 = vld [vmem:[%s10] sm:$0xff]
      %v6264 = vld [vmem:[%s10 + $0x8] sm:$0xff]
      %v6265 = vld [vmem:[%s10 + $0x10] sm:$0xff]
      %v6266 = vld [vmem:[%s10 + $0x18] sm:$0xff]
      %6268 = vset.pattern.permute.xlu0 0
      %6269 = vperm.xlu0 %6268, %v6263
      %v6270 = vpop.permute.xlu0 %6269
      %6273 = vset.pattern.permute.xlu0 0
      %6274 = vperm.xlu0 %6273, %v6264
      %v6275 = vpop.permute.xlu0 %6274
      %6278 = vset.pattern.permute.xlu0 0
      %6279 = vperm.xlu0 %6278, %v6265
      %v6280 = vpop.permute.xlu0 %6279
      %6283 = vset.pattern.permute.xlu0 0
      %6284 = vperm.xlu0 %6283, %v6266
      %v6285 = vpop.permute.xlu0 %6284
      %v6291 = vunpack.c.l.b16 %v6235
      %v6292 = vunpack.c.l.b16 %v6236
      %v6293 = vunpack.c.l.b16 %v6237
      %v6294 = vunpack.c.l.b16 %v6238
      %v6295 = vpack.c.b16 %v6292, %v6291
      %v6296 = vpack.c.b16 %v6294, %v6293
      %vm6321 = vcmask 1046528
      %v6322 = vrot.slane %v6239, 1
      %v6323 = vrot.slane %v6247, 1
      %v6324 = vsel %vm6321, %v6322, %v6323
      %v6325 = vrot.slane %v6240, 1
      %v6326 = vrot.slane %v6248, 1
      %v6327 = vsel %vm6321, %v6325, %v6326
      %v6328 = vrot.slane %v6241, 1
      %v6329 = vrot.slane %v6249, 1
      %v6330 = vsel %vm6321, %v6328, %v6329
      %v6331 = vrot.slane %v6242, 1
      %v6332 = vrot.slane %v6250, 1
      %v6333 = vsel %vm6321, %v6331, %v6332
      %v6334 = vrot.slane %v6243, 1
      %v6335 = vrot.slane %v6251, 1
      %v6336 = vsel %vm6321, %v6334, %v6335
      %v6337 = vrot.slane %v6244, 1
      %v6338 = vrot.slane %v6252, 1
      %v6339 = vsel %vm6321, %v6337, %v6338
      %v6340 = vrot.slane %v6245, 1
      %v6341 = vrot.slane %v6253, 1
      %v6342 = vsel %vm6321, %v6340, %v6341
      %v6343 = vrot.slane %v6246, 1
      %v6344 = vrot.slane %v6254, 1
      %v6345 = vsel %vm6321, %v6343, %v6344
      %v6346 = vrot.slane %v6255, 1
      %v6347 = vsel %vm6321, %v6323, %v6346
      %v6348 = vrot.slane %v6256, 1
      %v6349 = vsel %vm6321, %v6326, %v6348
      %v6350 = vrot.slane %v6257, 1
      %v6351 = vsel %vm6321, %v6329, %v6350
      %v6352 = vrot.slane %v6258, 1
      %v6353 = vsel %vm6321, %v6332, %v6352
      %v6354 = vrot.slane %v6259, 1
      %v6355 = vsel %vm6321, %v6335, %v6354
      %v6356 = vrot.slane %v6260, 1
      %v6357 = vsel %vm6321, %v6338, %v6356
      %v6358 = vrot.slane %v6261, 1
      %v6359 = vsel %vm6321, %v6341, %v6358
      %v6360 = vrot.slane %v6262, 1
      %v6361 = vsel %vm6321, %v6344, %v6360
      %vm6378 = vcmask 261120
      %v6380 = vsel %vm6378, %v6295, 0
      %v6383 = vsel %vm6378, %v6296, 0
      %6385 = vmatprep.subr.bf16.mxu0 0
      %6386 = vmatpush1.bf16.msra.mxu0 0
      %6387 = vmatprep.subr.bf16.mxu0 0
      %6388 = vmatpush1.bf16.msra.mxu0 0
      %6389 = vmatprep.subr.bf16.mxu0 0
      %6390 = vmatpush1.bf16.msra.mxu0 0
      %6391 = vmatprep.subr.bf16.mxu0 0
      %6392 = vmatpush1.bf16.msra.mxu0 0
      %6393 = vmatprep.subr.bf16.mxu0 0
      %6394 = vmatpush1.bf16.msra.mxu0 0
      %6395 = vmatprep.subr.bf16.mxu0 0
      %6396 = vmatpush1.bf16.msra.mxu0 0
      %6397 = vmatprep.subr.bf16.mxu0 %v6349
      %6398 = vmatpush1.bf16.msra.mxu0 %v6347
      %6399 = vmatprep.subr.bf16.mxu0 %v6327
      %6400 = vmatpush1.bf16.msra.mxu0 %v6324
      %6401 = vmatprep.subr.bf16.mxu0 0
      %6402 = vmatpush2.bf16.msra.mxu0 0
      %6403 = vmatprep.subr.bf16.mxu0 0
      %6404 = vmatpush2.bf16.msra.mxu0 0
      %6405 = vmatprep.subr.bf16.mxu0 0
      %6406 = vmatpush2.bf16.msra.mxu0 0
      %6407 = vmatprep.subr.bf16.mxu0 0
      %6408 = vmatpush2.bf16.msra.mxu0 0
      %6409 = vmatprep.subr.bf16.mxu0 0
      %6410 = vmatpush2.bf16.msra.mxu0 0
      %6411 = vmatprep.subr.bf16.mxu0 0
      %6412 = vmatpush2.bf16.msra.mxu0 0
      %6413 = vmatprep.subr.bf16.mxu0 0
      %6414 = vmatpush2.bf16.msra.mxu0 0
      %6415 = vmatprep.subr.bf16.mxu0 0
      %6416 = vmatpush2.bf16.msra.mxu0 0
      %6417 = vmatprep.mubr.bf16.mxu0 0
      %6418 = vmatmul.mubr.bf16.gmra.mxu0 %v6380
      %v6419 = vpop.f32.mrf.mxu0
      %v6420 = vadd.f32 %v6270, %v6419
      %v6421 = vpop.f32.mrf.mxu0
      %v6422 = vadd.f32 %v6270, %v6421
      %v6423 = vpop.f32.mrf.mxu0
      %v6424 = vadd.f32 %v6275, %v6423
      %v6425 = vpop.f32.mrf.mxu0
      %v6426 = vadd.f32 %v6275, %v6425
      %6427 = vmatprep.mubr.bf16.mxu0 0
      %6428 = vmatmul.mubr.bf16.gmra.mxu0 %v6383
      %v6429 = vpop.f32.mrf.mxu0
      %v6430 = vadd.f32 %v6280, %v6429
      %v6431 = vpop.f32.mrf.mxu0
      %v6432 = vadd.f32 %v6280, %v6431
      %v6433 = vpop.f32.mrf.mxu0
      %v6434 = vadd.f32 %v6285, %v6433
      %v6435 = vpop.f32.mrf.mxu0
      %v6436 = vadd.f32 %v6285, %v6435
      %6437 = vdwg.mxu0
      %6438 = vmatprep.subr.bf16.mxu0 0
      %6439 = vmatpush1.bf16.msra.mxu0 0
      %6440 = vmatprep.subr.bf16.mxu0 0
      %6441 = vmatpush1.bf16.msra.mxu0 0
      %6442 = vmatprep.subr.bf16.mxu0 0
      %6443 = vmatpush1.bf16.msra.mxu0 0
      %6444 = vmatprep.subr.bf16.mxu0 0
      %6445 = vmatpush1.bf16.msra.mxu0 0
      %6446 = vmatprep.subr.bf16.mxu0 0
      %6447 = vmatpush1.bf16.msra.mxu0 0
      %6448 = vmatprep.subr.bf16.mxu0 0
      %6449 = vmatpush1.bf16.msra.mxu0 0
      %6450 = vmatprep.subr.bf16.mxu0 %v6353
      %6451 = vmatpush1.bf16.msra.mxu0 %v6351
      %6452 = vmatprep.subr.bf16.mxu0 %v6333
      %6453 = vmatpush1.bf16.msra.mxu0 %v6330
      %6454 = vmatprep.subr.bf16.mxu0 0
      %6455 = vmatpush2.bf16.msra.mxu0 0
      %6456 = vmatprep.subr.bf16.mxu0 0
      %6457 = vmatpush2.bf16.msra.mxu0 0
      %6458 = vmatprep.subr.bf16.mxu0 0
      %6459 = vmatpush2.bf16.msra.mxu0 0
      %6460 = vmatprep.subr.bf16.mxu0 0
      %6461 = vmatpush2.bf16.msra.mxu0 0
      %6462 = vmatprep.subr.bf16.mxu0 0
      %6463 = vmatpush2.bf16.msra.mxu0 0
      %6464 = vmatprep.subr.bf16.mxu0 0
      %6465 = vmatpush2.bf16.msra.mxu0 0
      %6466 = vmatprep.subr.bf16.mxu0 0
      %6467 = vmatpush2.bf16.msra.mxu0 0
      %6468 = vmatprep.subr.bf16.mxu0 0
      %6469 = vmatpush2.bf16.msra.mxu0 0
      %6470 = vmatprep.mubr.bf16.mxu0 0
      %6471 = vmatmul.mubr.bf16.gmra.mxu0 %v6380
      %v6472 = vpop.f32.mrf.mxu0
      %v6473 = vadd.f32 %v6270, %v6472
      %v6474 = vpop.f32.mrf.mxu0
      %v6475 = vadd.f32 %v6270, %v6474
      %v6476 = vpop.f32.mrf.mxu0
      %v6477 = vadd.f32 %v6275, %v6476
      %v6478 = vpop.f32.mrf.mxu0
      %v6479 = vadd.f32 %v6275, %v6478
      %6480 = vmatprep.mubr.bf16.mxu0 0
      %6481 = vmatmul.mubr.bf16.gmra.mxu0 %v6383
      %v6482 = vpop.f32.mrf.mxu0
      %v6483 = vadd.f32 %v6280, %v6482
      %v6484 = vpop.f32.mrf.mxu0
      %v6485 = vadd.f32 %v6280, %v6484
      %v6486 = vpop.f32.mrf.mxu0
      %v6487 = vadd.f32 %v6285, %v6486
      %v6488 = vpop.f32.mrf.mxu0
      %v6489 = vadd.f32 %v6285, %v6488
      %6490 = vdwg.mxu0
      %6491 = vmatprep.subr.bf16.mxu0 0
      %6492 = vmatpush1.bf16.msra.mxu0 0
      %6493 = vmatprep.subr.bf16.mxu0 0
      %6494 = vmatpush1.bf16.msra.mxu0 0
      %6495 = vmatprep.subr.bf16.mxu0 0
      %6496 = vmatpush1.bf16.msra.mxu0 0
      %6497 = vmatprep.subr.bf16.mxu0 0
      %6498 = vmatpush1.bf16.msra.mxu0 0
      %6499 = vmatprep.subr.bf16.mxu0 0
      %6500 = vmatpush1.bf16.msra.mxu0 0
      %6501 = vmatprep.subr.bf16.mxu0 0
      %6502 = vmatpush1.bf16.msra.mxu0 0
      %6503 = vmatprep.subr.bf16.mxu0 %v6357
      %6504 = vmatpush1.bf16.msra.mxu0 %v6355
      %6505 = vmatprep.subr.bf16.mxu0 %v6339
      %6506 = vmatpush1.bf16.msra.mxu0 %v6336
      %6507 = vmatprep.subr.bf16.mxu0 0
      %6508 = vmatpush2.bf16.msra.mxu0 0
      %6509 = vmatprep.subr.bf16.mxu0 0
      %6510 = vmatpush2.bf16.msra.mxu0 0
      %6511 = vmatprep.subr.bf16.mxu0 0
      %6512 = vmatpush2.bf16.msra.mxu0 0
      %6513 = vmatprep.subr.bf16.mxu0 0
      %6514 = vmatpush2.bf16.msra.mxu0 0
      %6515 = vmatprep.subr.bf16.mxu0 0
      %6516 = vmatpush2.bf16.msra.mxu0 0
      %6517 = vmatprep.subr.bf16.mxu0 0
      %6518 = vmatpush2.bf16.msra.mxu0 0
      %6519 = vmatprep.subr.bf16.mxu0 0
      %6520 = vmatpush2.bf16.msra.mxu0 0
      %6521 = vmatprep.subr.bf16.mxu0 0
      %6522 = vmatpush2.bf16.msra.mxu0 0
      %6523 = vmatprep.mubr.bf16.mxu0 0
      %6524 = vmatmul.mubr.bf16.gmra.mxu0 %v6380
      %v6525 = vpop.f32.mrf.mxu0
      %v6526 = vadd.f32 %v6270, %v6525
      %v6527 = vpop.f32.mrf.mxu0
      %v6528 = vadd.f32 %v6270, %v6527
      %v6529 = vpop.f32.mrf.mxu0
      %v6530 = vadd.f32 %v6275, %v6529
      %v6531 = vpop.f32.mrf.mxu0
      %v6532 = vadd.f32 %v6275, %v6531
      %6533 = vmatprep.mubr.bf16.mxu0 0
      %6534 = vmatmul.mubr.bf16.gmra.mxu0 %v6383
      %v6535 = vpop.f32.mrf.mxu0
      %v6536 = vadd.f32 %v6280, %v6535
      %v6537 = vpop.f32.mrf.mxu0
      %v6538 = vadd.f32 %v6280, %v6537
      %v6539 = vpop.f32.mrf.mxu0
      %v6540 = vadd.f32 %v6285, %v6539
      %v6541 = vpop.f32.mrf.mxu0
      %v6542 = vadd.f32 %v6285, %v6541
      %6543 = vdwg.mxu0
      %6544 = vmatprep.subr.bf16.mxu0 0
      %6545 = vmatpush1.bf16.msra.mxu0 0
      %6546 = vmatprep.subr.bf16.mxu0 0
      %6547 = vmatpush1.bf16.msra.mxu0 0
      %6548 = vmatprep.subr.bf16.mxu0 0
      %6549 = vmatpush1.bf16.msra.mxu0 0
      %6550 = vmatprep.subr.bf16.mxu0 0
      %6551 = vmatpush1.bf16.msra.mxu0 0
      %6552 = vmatprep.subr.bf16.mxu0 0
      %6553 = vmatpush1.bf16.msra.mxu0 0
      %6554 = vmatprep.subr.bf16.mxu0 0
      %6555 = vmatpush1.bf16.msra.mxu0 0
      %6556 = vmatprep.subr.bf16.mxu0 %v6361
      %6557 = vmatpush1.bf16.msra.mxu0 %v6359
      %6558 = vmatprep.subr.bf16.mxu0 %v6345
      %6559 = vmatpush1.bf16.msra.mxu0 %v6342
      %6560 = vmatprep.subr.bf16.mxu0 0
      %6561 = vmatpush2.bf16.msra.mxu0 0
      %6562 = vmatprep.subr.bf16.mxu0 0
      %6563 = vmatpush2.bf16.msra.mxu0 0
      %6564 = vmatprep.subr.bf16.mxu0 0
      %6565 = vmatpush2.bf16.msra.mxu0 0
      %6566 = vmatprep.subr.bf16.mxu0 0
      %6567 = vmatpush2.bf16.msra.mxu0 0
      %6568 = vmatprep.subr.bf16.mxu0 0
      %6569 = vmatpush2.bf16.msra.mxu0 0
      %6570 = vmatprep.subr.bf16.mxu0 0
      %6571 = vmatpush2.bf16.msra.mxu0 0
      %6572 = vmatprep.subr.bf16.mxu0 0
      %6573 = vmatpush2.bf16.msra.mxu0 0
      %6574 = vmatprep.subr.bf16.mxu0 0
      %6575 = vmatpush2.bf16.msra.mxu0 0
      %6576 = vmatprep.mubr.bf16.mxu0 0
      %6577 = vmatmul.mubr.bf16.gmra.mxu0 %v6380
      %v6578 = vpop.f32.mrf.mxu0
      %v6579 = vadd.f32 %v6270, %v6578
      %v6580 = vpop.f32.mrf.mxu0
      %v6581 = vadd.f32 %v6270, %v6580
      %v6582 = vpop.f32.mrf.mxu0
      %v6583 = vadd.f32 %v6275, %v6582
      %v6584 = vpop.f32.mrf.mxu0
      %v6585 = vadd.f32 %v6275, %v6584
      %6586 = vmatprep.mubr.bf16.mxu0 0
      %6587 = vmatmul.mubr.bf16.gmra.mxu0 %v6383
      %v6588 = vpop.f32.mrf.mxu0
      %v6589 = vadd.f32 %v6280, %v6588
      %v6590 = vpop.f32.mrf.mxu0
      %v6591 = vadd.f32 %v6280, %v6590
      %v6592 = vpop.f32.mrf.mxu0
      %v6593 = vadd.f32 %v6285, %v6592
      %v6594 = vpop.f32.mrf.mxu0
      %v6595 = vadd.f32 %v6285, %v6594
      %6596 = vdwg.mxu0
      %vm6597 = vcmp.ge.f32.partialorder %v6420, 0.0
      %vm6598 = vcmp.ge.f32.partialorder %v6422, 0.0
      %vm6599 = vcmp.ge.f32.partialorder %v6473, 0.0
      %vm6600 = vcmp.ge.f32.partialorder %v6475, 0.0
      %vm6601 = vcmp.ge.f32.partialorder %v6526, 0.0
      %vm6602 = vcmp.ge.f32.partialorder %v6528, 0.0
      %vm6603 = vcmp.ge.f32.partialorder %v6579, 0.0
      %vm6604 = vcmp.ge.f32.partialorder %v6581, 0.0
      %vm6605 = vcmp.ge.f32.partialorder %v6424, 0.0
      %vm6606 = vcmp.ge.f32.partialorder %v6426, 0.0
      %vm6607 = vcmp.ge.f32.partialorder %v6477, 0.0
      %vm6608 = vcmp.ge.f32.partialorder %v6479, 0.0
      %vm6609 = vcmp.ge.f32.partialorder %v6530, 0.0
      %vm6610 = vcmp.ge.f32.partialorder %v6532, 0.0
      %vm6611 = vcmp.ge.f32.partialorder %v6583, 0.0
      %vm6612 = vcmp.ge.f32.partialorder %v6585, 0.0
      %vm6613 = vcmp.ge.f32.partialorder %v6430, 0.0
      %vm6614 = vcmp.ge.f32.partialorder %v6432, 0.0
      %vm6615 = vcmp.ge.f32.partialorder %v6483, 0.0
      %vm6616 = vcmp.ge.f32.partialorder %v6485, 0.0
      %vm6617 = vcmp.ge.f32.partialorder %v6536, 0.0
      %vm6618 = vcmp.ge.f32.partialorder %v6538, 0.0
      %vm6619 = vcmp.ge.f32.partialorder %v6589, 0.0
      %vm6620 = vcmp.ge.f32.partialorder %v6591, 0.0
      %vm6621 = vcmp.ge.f32.partialorder %v6434, 0.0
      %vm6622 = vcmp.ge.f32.partialorder %v6436, 0.0
      %vm6623 = vcmp.ge.f32.partialorder %v6487, 0.0
      %vm6624 = vcmp.ge.f32.partialorder %v6489, 0.0
      %vm6625 = vcmp.ge.f32.partialorder %v6540, 0.0
      %vm6626 = vcmp.ge.f32.partialorder %v6542, 0.0
      %vm6627 = vcmp.ge.f32.partialorder %v6593, 0.0
      %vm6628 = vcmp.ge.f32.partialorder %v6595, 0.0
      %v6629 = vmul.f32 %v6420, 0.02
      %v6630 = vmul.f32 %v6422, 0.02
      %v6631 = vmul.f32 %v6473, 0.02
      %v6632 = vmul.f32 %v6475, 0.02
      %v6633 = vmul.f32 %v6526, 0.02
      %v6634 = vmul.f32 %v6528, 0.02
      %v6635 = vmul.f32 %v6579, 0.02
      %v6636 = vmul.f32 %v6581, 0.02
      %v6637 = vmul.f32 %v6424, 0.02
      %v6638 = vmul.f32 %v6426, 0.02
      %v6639 = vmul.f32 %v6477, 0.02
      %v6640 = vmul.f32 %v6479, 0.02
      %v6641 = vmul.f32 %v6530, 0.02
      %v6642 = vmul.f32 %v6532, 0.02
      %v6643 = vmul.f32 %v6583, 0.02
      %v6644 = vmul.f32 %v6585, 0.02
      %v6645 = vmul.f32 %v6430, 0.02
      %v6646 = vmul.f32 %v6432, 0.02
      %v6647 = vmul.f32 %v6483, 0.02
      %v6648 = vmul.f32 %v6485, 0.02
      %v6649 = vmul.f32 %v6536, 0.02
      %v6650 = vmul.f32 %v6538, 0.02
      %v6651 = vmul.f32 %v6589, 0.02
      %v6652 = vmul.f32 %v6591, 0.02
      %v6653 = vmul.f32 %v6434, 0.02
      %v6654 = vmul.f32 %v6436, 0.02
      %v6655 = vmul.f32 %v6487, 0.02
      %v6656 = vmul.f32 %v6489, 0.02
      %v6657 = vmul.f32 %v6540, 0.02
      %v6658 = vmul.f32 %v6542, 0.02
      %v6659 = vmul.f32 %v6593, 0.02
      %v6660 = vmul.f32 %v6595, 0.02
      %v6661 = vsel %vm6597, %v6420, %v6629
      %v6662 = vsel %vm6598, %v6422, %v6630
      %v6663 = vsel %vm6599, %v6473, %v6631
      %v6664 = vsel %vm6600, %v6475, %v6632
      %v6665 = vsel %vm6601, %v6526, %v6633
      %v6666 = vsel %vm6602, %v6528, %v6634
      %v6667 = vsel %vm6603, %v6579, %v6635
      %v6668 = vsel %vm6604, %v6581, %v6636
      %v6669 = vsel %vm6605, %v6424, %v6637
      %v6670 = vsel %vm6606, %v6426, %v6638
      %v6671 = vsel %vm6607, %v6477, %v6639
      %v6672 = vsel %vm6608, %v6479, %v6640
      %v6673 = vsel %vm6609, %v6530, %v6641
      %v6674 = vsel %vm6610, %v6532, %v6642
      %v6675 = vsel %vm6611, %v6583, %v6643
      %v6676 = vsel %vm6612, %v6585, %v6644
      %v6677 = vsel %vm6613, %v6430, %v6645
      %v6678 = vsel %vm6614, %v6432, %v6646
      %v6679 = vsel %vm6615, %v6483, %v6647
      %v6680 = vsel %vm6616, %v6485, %v6648
      %v6681 = vsel %vm6617, %v6536, %v6649
      %v6682 = vsel %vm6618, %v6538, %v6650
      %v6683 = vsel %vm6619, %v6589, %v6651
      %v6684 = vsel %vm6620, %v6591, %v6652
      %v6685 = vsel %vm6621, %v6434, %v6653
      %v6686 = vsel %vm6622, %v6436, %v6654
      %v6687 = vsel %vm6623, %v6487, %v6655
      %v6688 = vsel %vm6624, %v6489, %v6656
      %v6689 = vsel %vm6625, %v6540, %v6657
      %v6690 = vsel %vm6626, %v6542, %v6658
      %v6691 = vsel %vm6627, %v6593, %v6659
      %v6692 = vsel %vm6628, %v6595, %v6660
      %6693 = vrot.lane.b32.xlu0 %v6665, 16
      %v6694 = vpop.permute.xlu0 %6693
      %6695 = vrot.lane.b32.xlu0 %v6673, 16
      %v6696 = vpop.permute.xlu0 %6695
      %6697 = vrot.lane.b32.xlu0 %v6681, 16
      %v6698 = vpop.permute.xlu0 %6697
      %6699 = vrot.lane.b32.xlu0 %v6689, 16
      %v6700 = vpop.permute.xlu0 %6699
      %6701 = vrot.lane.b32.xlu0 %v6666, 16
      %v6702 = vpop.permute.xlu0 %6701
      %6703 = vrot.lane.b32.xlu0 %v6674, 16
      %v6704 = vpop.permute.xlu0 %6703
      %6705 = vrot.lane.b32.xlu0 %v6682, 16
      %v6706 = vpop.permute.xlu0 %6705
      %6707 = vrot.lane.b32.xlu0 %v6690, 16
      %v6708 = vpop.permute.xlu0 %6707
      %v6709 = vsel %vm2269, %v6694, %v6702
      %v6710 = vsel %vm2269, %v6696, %v6704
      %v6711 = vsel %vm2269, %v6698, %v6706
      %v6712 = vsel %vm2269, %v6700, %v6708
      %v6713 = vsel %vm2269, %v6702, %v6694
      %v6714 = vsel %vm2269, %v6704, %v6696
      %v6715 = vsel %vm2269, %v6706, %v6698
      %v6716 = vsel %vm2269, %v6708, %v6700
      %v6717 = vsel %vm554, 1, 0
      %v6718 = vsel %vm555, 1, 0
      %v6719 = vsel %vm556, 1, 0
      %v6720 = vsel %vm557, 1, 0
      %6721 = vset.pattern.permute.xlu0 1
      %6722 = vperm.xlu0 %6721, %v6717
      %v6723 = vpop.permute.xlu0 %6722
      %6724 = vset.pattern.permute.xlu0 1
      %6725 = vperm.xlu0 %6724, %v6718
      %v6726 = vpop.permute.xlu0 %6725
      %6727 = vset.pattern.permute.xlu0 1
      %6728 = vperm.xlu0 %6727, %v6719
      %v6729 = vpop.permute.xlu0 %6728
      %6730 = vset.pattern.permute.xlu0 1
      %6731 = vperm.xlu0 %6730, %v6720
      %v6732 = vpop.permute.xlu0 %6731
      %vm6733 = vcmp.eq.s32.totalorder %v6723, 1
      %vm6734 = vcmp.eq.s32.totalorder %v6726, 1
      %vm6735 = vcmp.eq.s32.totalorder %v6729, 1
      %vm6736 = vcmp.eq.s32.totalorder %v6732, 1
      %v6737 = vsel %vm6733, %v6665, %v6661
      %v6738 = vsel %vm6733, %v6666, %v6662
      %v6739 = vsel %vm6734, %v6673, %v6669
      %v6740 = vsel %vm6734, %v6674, %v6670
      %v6741 = vsel %vm6735, %v6681, %v6677
      %v6742 = vsel %vm6735, %v6682, %v6678
      %v6743 = vsel %vm6736, %v6689, %v6685
      %v6744 = vsel %vm6736, %v6690, %v6686
      %6745 = vset.pattern.permute.xlu0 0
      %6746 = vperm.xlu0 %6745, %v6717
      %v6747 = vpop.permute.xlu0 %6746
      %6748 = vset.pattern.permute.xlu0 0
      %6749 = vperm.xlu0 %6748, %v6718
      %v6750 = vpop.permute.xlu0 %6749
      %6751 = vset.pattern.permute.xlu0 0
      %6752 = vperm.xlu0 %6751, %v6719
      %v6753 = vpop.permute.xlu0 %6752
      %6754 = vset.pattern.permute.xlu0 0
      %6755 = vperm.xlu0 %6754, %v6720
      %v6756 = vpop.permute.xlu0 %6755
      %vm6757 = vcmp.eq.s32.totalorder %v6747, 1
      %vm6758 = vcmp.eq.s32.totalorder %v6750, 1
      %vm6759 = vcmp.eq.s32.totalorder %v6753, 1
      %vm6760 = vcmp.eq.s32.totalorder %v6756, 1
      %v6761 = vsel %vm6757, %v6713, %v6737
      %v6762 = vsel %vm6757, %v6709, %v6738
      %v6763 = vsel %vm6758, %v6714, %v6739
      %v6764 = vsel %vm6758, %v6710, %v6740
      %v6765 = vsel %vm6759, %v6715, %v6741
      %v6766 = vsel %vm6759, %v6711, %v6742
      %v6767 = vsel %vm6760, %v6716, %v6743
      %v6768 = vsel %vm6760, %v6712, %v6744
      %6769 = vrot.lane.b32.xlu0 %v6661, 112
      %v6770 = vpop.permute.xlu0 %6769
      %6771 = vrot.lane.b32.xlu0 %v6669, 112
      %v6772 = vpop.permute.xlu0 %6771
      %6773 = vrot.lane.b32.xlu0 %v6677, 112
      %v6774 = vpop.permute.xlu0 %6773
      %6775 = vrot.lane.b32.xlu0 %v6685, 112
      %v6776 = vpop.permute.xlu0 %6775
      %6777 = vrot.lane.b32.xlu0 %v6662, 112
      %v6778 = vpop.permute.xlu0 %6777
      %6779 = vrot.lane.b32.xlu0 %v6670, 112
      %v6780 = vpop.permute.xlu0 %6779
      %6781 = vrot.lane.b32.xlu0 %v6678, 112
      %v6782 = vpop.permute.xlu0 %6781
      %6783 = vrot.lane.b32.xlu0 %v6686, 112
      %v6784 = vpop.permute.xlu0 %6783
      %v6785 = vsel %vm2616, %v6770, %v6778
      %v6786 = vsel %vm2616, %v6772, %v6780
      %v6787 = vsel %vm2616, %v6774, %v6782
      %v6788 = vsel %vm2616, %v6776, %v6784
      %v6789 = vsel %vm2616, %v6778, %v6770
      %v6790 = vsel %vm2616, %v6780, %v6772
      %v6791 = vsel %vm2616, %v6782, %v6774
      %v6792 = vsel %vm2616, %v6784, %v6776
      %v6793 = vsel %vm6757, %v6661, %v6665
      %v6794 = vsel %vm6757, %v6662, %v6666
      %v6795 = vsel %vm6758, %v6669, %v6673
      %v6796 = vsel %vm6758, %v6670, %v6674
      %v6797 = vsel %vm6759, %v6677, %v6681
      %v6798 = vsel %vm6759, %v6678, %v6682
      %v6799 = vsel %vm6760, %v6685, %v6689
      %v6800 = vsel %vm6760, %v6686, %v6690
      %v6801 = vsel %vm6733, %v6785, %v6793
      %v6802 = vsel %vm6733, %v6789, %v6794
      %v6803 = vsel %vm6734, %v6786, %v6795
      %v6804 = vsel %vm6734, %v6790, %v6796
      %v6805 = vsel %vm6735, %v6787, %v6797
      %v6806 = vsel %vm6735, %v6791, %v6798
      %v6807 = vsel %vm6736, %v6788, %v6799
      %v6808 = vsel %vm6736, %v6792, %v6800
      %6809 = vrot.lane.b32.xlu0 %v6667, 16
      %v6810 = vpop.permute.xlu0 %6809
      %6811 = vrot.lane.b32.xlu0 %v6675, 16
      %v6812 = vpop.permute.xlu0 %6811
      %6813 = vrot.lane.b32.xlu0 %v6683, 16
      %v6814 = vpop.permute.xlu0 %6813
      %6815 = vrot.lane.b32.xlu0 %v6691, 16
      %v6816 = vpop.permute.xlu0 %6815
      %6817 = vrot.lane.b32.xlu0 %v6668, 16
      %v6818 = vpop.permute.xlu0 %6817
      %6819 = vrot.lane.b32.xlu0 %v6676, 16
      %v6820 = vpop.permute.xlu0 %6819
      %6821 = vrot.lane.b32.xlu0 %v6684, 16
      %v6822 = vpop.permute.xlu0 %6821
      %6823 = vrot.lane.b32.xlu0 %v6692, 16
      %v6824 = vpop.permute.xlu0 %6823
      %v6825 = vsel %vm2269, %v6810, %v6818
      %v6826 = vsel %vm2269, %v6812, %v6820
      %v6827 = vsel %vm2269, %v6814, %v6822
      %v6828 = vsel %vm2269, %v6816, %v6824
      %v6829 = vsel %vm2269, %v6818, %v6810
      %v6830 = vsel %vm2269, %v6820, %v6812
      %v6831 = vsel %vm2269, %v6822, %v6814
      %v6832 = vsel %vm2269, %v6824, %v6816
      %v6833 = vsel %vm6733, %v6667, %v6663
      %v6834 = vsel %vm6733, %v6668, %v6664
      %v6835 = vsel %vm6734, %v6675, %v6671
      %v6836 = vsel %vm6734, %v6676, %v6672
      %v6837 = vsel %vm6735, %v6683, %v6679
      %v6838 = vsel %vm6735, %v6684, %v6680
      %v6839 = vsel %vm6736, %v6691, %v6687
      %v6840 = vsel %vm6736, %v6692, %v6688
      %v6841 = vsel %vm6757, %v6829, %v6833
      %v6842 = vsel %vm6757, %v6825, %v6834
      %v6843 = vsel %vm6758, %v6830, %v6835
      %v6844 = vsel %vm6758, %v6826, %v6836
      %v6845 = vsel %vm6759, %v6831, %v6837
      %v6846 = vsel %vm6759, %v6827, %v6838
      %v6847 = vsel %vm6760, %v6832, %v6839
      %v6848 = vsel %vm6760, %v6828, %v6840
      %6849 = vrot.lane.b32.xlu0 %v6663, 112
      %v6850 = vpop.permute.xlu0 %6849
      %6851 = vrot.lane.b32.xlu0 %v6671, 112
      %v6852 = vpop.permute.xlu0 %6851
      %6853 = vrot.lane.b32.xlu0 %v6679, 112
      %v6854 = vpop.permute.xlu0 %6853
      %6855 = vrot.lane.b32.xlu0 %v6687, 112
      %v6856 = vpop.permute.xlu0 %6855
      %6857 = vrot.lane.b32.xlu0 %v6664, 112
      %v6858 = vpop.permute.xlu0 %6857
      %6859 = vrot.lane.b32.xlu0 %v6672, 112
      %v6860 = vpop.permute.xlu0 %6859
      %6861 = vrot.lane.b32.xlu0 %v6680, 112
      %v6862 = vpop.permute.xlu0 %6861
      %6863 = vrot.lane.b32.xlu0 %v6688, 112
      %v6864 = vpop.permute.xlu0 %6863
      %v6865 = vsel %vm2616, %v6850, %v6858
      %v6866 = vsel %vm2616, %v6852, %v6860
      %v6867 = vsel %vm2616, %v6854, %v6862
      %v6868 = vsel %vm2616, %v6856, %v6864
      %v6869 = vsel %vm2616, %v6858, %v6850
      %v6870 = vsel %vm2616, %v6860, %v6852
      %v6871 = vsel %vm2616, %v6862, %v6854
      %v6872 = vsel %vm2616, %v6864, %v6856
      %v6873 = vsel %vm6757, %v6663, %v6667
      %v6874 = vsel %vm6757, %v6664, %v6668
      %v6875 = vsel %vm6758, %v6671, %v6675
      %v6876 = vsel %vm6758, %v6672, %v6676
      %v6877 = vsel %vm6759, %v6679, %v6683
      %v6878 = vsel %vm6759, %v6680, %v6684
      %v6879 = vsel %vm6760, %v6687, %v6691
      %v6880 = vsel %vm6760, %v6688, %v6692
      %v6881 = vsel %vm6733, %v6865, %v6873
      %v6882 = vsel %vm6733, %v6869, %v6874
      %v6883 = vsel %vm6734, %v6866, %v6875
      %v6884 = vsel %vm6734, %v6870, %v6876
      %v6885 = vsel %vm6735, %v6867, %v6877
      %v6886 = vsel %vm6735, %v6871, %v6878
      %v6887 = vsel %vm6736, %v6868, %v6879
      %v6888 = vsel %vm6736, %v6872, %v6880
      %6889 = vrot.lane.b32.xlu0 %v6841, 113
      %v6890 = vpop.permute.xlu0 %6889
      %6891 = vrot.lane.b32.xlu0 %v6843, 113
      %v6892 = vpop.permute.xlu0 %6891
      %6893 = vrot.lane.b32.xlu0 %v6845, 113
      %v6894 = vpop.permute.xlu0 %6893
      %6895 = vrot.lane.b32.xlu0 %v6847, 113
      %v6896 = vpop.permute.xlu0 %6895
      %6897 = vrot.lane.b32.xlu0 %v6842, 113
      %v6898 = vpop.permute.xlu0 %6897
      %6899 = vrot.lane.b32.xlu0 %v6844, 113
      %v6900 = vpop.permute.xlu0 %6899
      %6901 = vrot.lane.b32.xlu0 %v6846, 113
      %v6902 = vpop.permute.xlu0 %6901
      %6903 = vrot.lane.b32.xlu0 %v6848, 113
      %v6904 = vpop.permute.xlu0 %6903
      %vm6905 = vcmp.lt.s32.totalorder %v2268, 113
      %v6906 = vsel %vm6905, %v6890, %v6898
      %v6907 = vsel %vm6905, %v6892, %v6900
      %v6908 = vsel %vm6905, %v6894, %v6902
      %v6909 = vsel %vm6905, %v6896, %v6904
      %v6910 = vsel %vm6905, %v6898, %v6890
      %v6911 = vsel %vm6905, %v6900, %v6892
      %v6912 = vsel %vm6905, %v6902, %v6894
      %v6913 = vsel %vm6905, %v6904, %v6896
      %6914 = vrot.lane.b32.xlu0 %v6841, 1
      %v6915 = vpop.permute.xlu0 %6914
      %6916 = vrot.lane.b32.xlu0 %v6843, 1
      %v6917 = vpop.permute.xlu0 %6916
      %6918 = vrot.lane.b32.xlu0 %v6845, 1
      %v6919 = vpop.permute.xlu0 %6918
      %6920 = vrot.lane.b32.xlu0 %v6847, 1
      %v6921 = vpop.permute.xlu0 %6920
      %6922 = vrot.lane.b32.xlu0 %v6842, 1
      %v6923 = vpop.permute.xlu0 %6922
      %6924 = vrot.lane.b32.xlu0 %v6844, 1
      %v6925 = vpop.permute.xlu0 %6924
      %6926 = vrot.lane.b32.xlu0 %v6846, 1
      %v6927 = vpop.permute.xlu0 %6926
      %6928 = vrot.lane.b32.xlu0 %v6848, 1
      %v6929 = vpop.permute.xlu0 %6928
      %v6930 = vsel %vm3512, %v6915, %v6923
      %v6931 = vsel %vm3512, %v6917, %v6925
      %v6932 = vsel %vm3512, %v6919, %v6927
      %v6933 = vsel %vm3512, %v6921, %v6929
      %v6934 = vsel %vm3512, %v6923, %v6915
      %v6935 = vsel %vm3512, %v6925, %v6917
      %v6936 = vsel %vm3512, %v6927, %v6919
      %v6937 = vsel %vm3512, %v6929, %v6921
      %v6946 = vcombine.low %v6906, %v6910
      %v6947 = vcombine.high %v6906, %v6910
      %v6948 = vcombine.low %v6907, %v6911
      %v6949 = vcombine.high %v6907, %v6911
      %v6950 = vcombine.low %v6908, %v6912
      %v6951 = vcombine.high %v6908, %v6912
      %v6952 = vcombine.low %v6909, %v6913
      %v6953 = vcombine.high %v6909, %v6913
      %v6954 = vrot.slane %v6946, 6
      %v6955 = vrot.slane %v6946, 7
      %v6956 = vrot.slane %v6946, 1
      %v6957 = vrot.slane %v6947, 6
      %v6958 = vrot.slane %v6947, 7
      %v6959 = vrot.slane %v6947, 1
      %v6960 = vrot.slane %v6948, 6
      %v6961 = vrot.slane %v6948, 7
      %v6962 = vrot.slane %v6948, 1
      %v6963 = vrot.slane %v6949, 6
      %v6964 = vrot.slane %v6949, 7
      %v6965 = vrot.slane %v6949, 1
      %v6966 = vrot.slane %v6950, 6
      %v6967 = vrot.slane %v6950, 7
      %v6968 = vrot.slane %v6950, 1
      %v6969 = vrot.slane %v6951, 6
      %v6970 = vrot.slane %v6951, 7
      %v6971 = vrot.slane %v6951, 1
      %v6972 = vrot.slane %v6952, 6
      %v6973 = vrot.slane %v6952, 7
      %v6974 = vrot.slane %v6952, 1
      %v6975 = vrot.slane %v6953, 6
      %v6976 = vrot.slane %v6953, 7
      %v6977 = vrot.slane %v6953, 1
      %v7018 = vcombine.low %v6934, %v6930
      %v7019 = vcombine.high %v6934, %v6930
      %v7020 = vcombine.low %v6935, %v6931
      %v7021 = vcombine.high %v6935, %v6931
      %v7022 = vcombine.low %v6936, %v6932
      %v7023 = vcombine.high %v6936, %v6932
      %v7024 = vcombine.low %v6937, %v6933
      %v7025 = vcombine.high %v6937, %v6933
      %v7026 = vrot.slane %v7018, 6
      %v7027 = vrot.slane %v7018, 7
      %v7028 = vrot.slane %v7018, 1
      %v7029 = vrot.slane %v7019, 6
      %v7030 = vrot.slane %v7019, 7
      %v7031 = vrot.slane %v7019, 1
      %v7032 = vrot.slane %v7020, 6
      %v7033 = vrot.slane %v7020, 7
      %v7034 = vrot.slane %v7020, 1
      %v7035 = vrot.slane %v7021, 6
      %v7036 = vrot.slane %v7021, 7
      %v7037 = vrot.slane %v7021, 1
      %v7038 = vrot.slane %v7022, 6
      %v7039 = vrot.slane %v7022, 7
      %v7040 = vrot.slane %v7022, 1
      %v7041 = vrot.slane %v7023, 6
      %v7042 = vrot.slane %v7023, 7
      %v7043 = vrot.slane %v7023, 1
      %v7044 = vrot.slane %v7024, 6
      %v7045 = vrot.slane %v7024, 7
      %v7046 = vrot.slane %v7024, 1
      %v7047 = vrot.slane %v7025, 6
      %v7048 = vrot.slane %v7025, 7
      %v7049 = vrot.slane %v7025, 1
      %v7082 = vsel %vm2279, %v6954, %v7026
      %v7083 = vsel %vm2279, %v6955, %v7027
      %v7084 = vsel %vm2279, %v6946, %v7018
      %v7085 = vsel %vm2279, %v6956, %v7028
      %v7086 = vsel %vm2279, %v6957, %v7029
      %v7087 = vsel %vm2279, %v6958, %v7030
      %v7088 = vsel %vm2279, %v6947, %v7019
      %v7089 = vsel %vm2279, %v6959, %v7031
      %v7090 = vsel %vm2279, %v6960, %v7032
      %v7091 = vsel %vm2279, %v6961, %v7033
      %v7092 = vsel %vm2279, %v6948, %v7020
      %v7093 = vsel %vm2279, %v6962, %v7034
      %v7094 = vsel %vm2279, %v6963, %v7035
      %v7095 = vsel %vm2279, %v6964, %v7036
      %v7096 = vsel %vm2279, %v6949, %v7021
      %v7097 = vsel %vm2279, %v6965, %v7037
      %v7098 = vsel %vm2279, %v6966, %v7038
      %v7099 = vsel %vm2279, %v6967, %v7039
      %v7100 = vsel %vm2279, %v6950, %v7022
      %v7101 = vsel %vm2279, %v6968, %v7040
      %v7102 = vsel %vm2279, %v6969, %v7041
      %v7103 = vsel %vm2279, %v6970, %v7042
      %v7104 = vsel %vm2279, %v6951, %v7023
      %v7105 = vsel %vm2279, %v6971, %v7043
      %v7106 = vsel %vm2279, %v6972, %v7044
      %v7107 = vsel %vm2279, %v6973, %v7045
      %v7108 = vsel %vm2279, %v6952, %v7024
      %v7109 = vsel %vm2279, %v6974, %v7046
      %v7110 = vsel %vm2279, %v6975, %v7047
      %v7111 = vsel %vm2279, %v6976, %v7048
      %v7112 = vsel %vm2279, %v6953, %v7025
      %v7113 = vsel %vm2279, %v6977, %v7049
      %7114 = vset.pattern.permute.xlu0 3
      %7115 = vperm.xlu0 %7114, %v6717
      %v7116 = vpop.permute.xlu0 %7115
      %7117 = vset.pattern.permute.xlu0 3
      %7118 = vperm.xlu0 %7117, %v6718
      %v7119 = vpop.permute.xlu0 %7118
      %7120 = vset.pattern.permute.xlu0 3
      %7121 = vperm.xlu0 %7120, %v6719
      %v7122 = vpop.permute.xlu0 %7121
      %7123 = vset.pattern.permute.xlu0 3
      %7124 = vperm.xlu0 %7123, %v6720
      %v7125 = vpop.permute.xlu0 %7124
      %vm7126 = vcmp.eq.s32.totalorder %v7116, 1
      %vm7127 = vcmp.eq.s32.totalorder %v7119, 1
      %vm7128 = vcmp.eq.s32.totalorder %v7122, 1
      %vm7129 = vcmp.eq.s32.totalorder %v7125, 1
      %v7130 = vsel %vm7126, %v6841, %v6761
      %v7131 = vsel %vm7126, %v6842, %v6762
      %v7132 = vsel %vm7127, %v6843, %v6763
      %v7133 = vsel %vm7127, %v6844, %v6764
      %v7134 = vsel %vm7128, %v6845, %v6765
      %v7135 = vsel %vm7128, %v6846, %v6766
      %v7136 = vsel %vm7129, %v6847, %v6767
      %v7137 = vsel %vm7129, %v6848, %v6768
      %7138 = vset.pattern.permute.xlu0 2
      %7139 = vperm.xlu0 %7138, %v6717
      %v7140 = vpop.permute.xlu0 %7139
      %7141 = vset.pattern.permute.xlu0 2
      %7142 = vperm.xlu0 %7141, %v6718
      %v7143 = vpop.permute.xlu0 %7142
      %7144 = vset.pattern.permute.xlu0 2
      %7145 = vperm.xlu0 %7144, %v6719
      %v7146 = vpop.permute.xlu0 %7145
      %7147 = vset.pattern.permute.xlu0 2
      %7148 = vperm.xlu0 %7147, %v6720
      %v7149 = vpop.permute.xlu0 %7148
      %vm7150 = vcmp.eq.s32.totalorder %v7140, 1
      %vm7151 = vcmp.eq.s32.totalorder %v7143, 1
      %vm7152 = vcmp.eq.s32.totalorder %v7146, 1
      %vm7153 = vcmp.eq.s32.totalorder %v7149, 1
      %v7186 = vlaneseq
      %v7187 = vshrl.u32 %v7186, 7
      %v7188 = vsub.s32 2, %v7187
      %v7189 = vrot.slane %v7082, %v7188
      %v7190 = vlaneseq
      %v7191 = vshrl.u32 %v7190, 7
      %v7192 = vsub.s32 6, %v7191
      %v7193 = vrot.slane %v7082, %v7192
      %v7194 = vlaneseq
      %v7195 = vshrl.u32 %v7194, 7
      %v7196 = vsub.s32 2, %v7195
      %v7197 = vrot.slane %v7083, %v7196
      %v7198 = vlaneseq
      %v7199 = vshrl.u32 %v7198, 7
      %v7200 = vsub.s32 6, %v7199
      %v7201 = vrot.slane %v7083, %v7200
      %v7202 = vlaneseq
      %v7203 = vshrl.u32 %v7202, 7
      %v7204 = vsub.s32 2, %v7203
      %v7205 = vrot.slane %v7084, %v7204
      %v7206 = vlaneseq
      %v7207 = vshrl.u32 %v7206, 7
      %v7208 = vsub.s32 6, %v7207
      %v7209 = vrot.slane %v7084, %v7208
      %v7210 = vlaneseq
      %v7211 = vshrl.u32 %v7210, 7
      %v7212 = vsub.s32 2, %v7211
      %v7213 = vrot.slane %v7085, %v7212
      %v7214 = vlaneseq
      %v7215 = vshrl.u32 %v7214, 7
      %v7216 = vsub.s32 6, %v7215
      %v7217 = vrot.slane %v7085, %v7216
      %v7218 = vlaneseq
      %v7219 = vshrl.u32 %v7218, 7
      %v7220 = vsub.s32 2, %v7219
      %v7221 = vrot.slane %v7086, %v7220
      %v7222 = vlaneseq
      %v7223 = vshrl.u32 %v7222, 7
      %v7224 = vsub.s32 6, %v7223
      %v7225 = vrot.slane %v7086, %v7224
      %v7226 = vlaneseq
      %v7227 = vshrl.u32 %v7226, 7
      %v7228 = vsub.s32 2, %v7227
      %v7229 = vrot.slane %v7087, %v7228
      %v7230 = vlaneseq
      %v7231 = vshrl.u32 %v7230, 7
      %v7232 = vsub.s32 6, %v7231
      %v7233 = vrot.slane %v7087, %v7232
      %v7234 = vlaneseq
      %v7235 = vshrl.u32 %v7234, 7
      %v7236 = vsub.s32 2, %v7235
      %v7237 = vrot.slane %v7088, %v7236
      %v7238 = vlaneseq
      %v7239 = vshrl.u32 %v7238, 7
      %v7240 = vsub.s32 6, %v7239
      %v7241 = vrot.slane %v7088, %v7240
      %v7242 = vlaneseq
      %v7243 = vshrl.u32 %v7242, 7
      %v7244 = vsub.s32 2, %v7243
      %v7245 = vrot.slane %v7089, %v7244
      %v7246 = vlaneseq
      %v7247 = vshrl.u32 %v7246, 7
      %v7248 = vsub.s32 6, %v7247
      %v7249 = vrot.slane %v7089, %v7248
      %v7250 = vlaneseq
      %v7251 = vshrl.u32 %v7250, 7
      %v7252 = vsub.s32 2, %v7251
      %v7253 = vrot.slane %v7090, %v7252
      %v7254 = vlaneseq
      %v7255 = vshrl.u32 %v7254, 7
      %v7256 = vsub.s32 6, %v7255
      %v7257 = vrot.slane %v7090, %v7256
      %v7258 = vlaneseq
      %v7259 = vshrl.u32 %v7258, 7
      %v7260 = vsub.s32 2, %v7259
      %v7261 = vrot.slane %v7091, %v7260
      %v7262 = vlaneseq
      %v7263 = vshrl.u32 %v7262, 7
      %v7264 = vsub.s32 6, %v7263
      %v7265 = vrot.slane %v7091, %v7264
      %v7266 = vlaneseq
      %v7267 = vshrl.u32 %v7266, 7
      %v7268 = vsub.s32 2, %v7267
      %v7269 = vrot.slane %v7092, %v7268
      %v7270 = vlaneseq
      %v7271 = vshrl.u32 %v7270, 7
      %v7272 = vsub.s32 6, %v7271
      %v7273 = vrot.slane %v7092, %v7272
      %v7274 = vlaneseq
      %v7275 = vshrl.u32 %v7274, 7
      %v7276 = vsub.s32 2, %v7275
      %v7277 = vrot.slane %v7093, %v7276
      %v7278 = vlaneseq
      %v7279 = vshrl.u32 %v7278, 7
      %v7280 = vsub.s32 6, %v7279
      %v7281 = vrot.slane %v7093, %v7280
      %v7282 = vlaneseq
      %v7283 = vshrl.u32 %v7282, 7
      %v7284 = vsub.s32 2, %v7283
      %v7285 = vrot.slane %v7094, %v7284
      %v7286 = vlaneseq
      %v7287 = vshrl.u32 %v7286, 7
      %v7288 = vsub.s32 6, %v7287
      %v7289 = vrot.slane %v7094, %v7288
      %v7290 = vlaneseq
      %v7291 = vshrl.u32 %v7290, 7
      %v7292 = vsub.s32 2, %v7291
      %v7293 = vrot.slane %v7095, %v7292
      %v7294 = vlaneseq
      %v7295 = vshrl.u32 %v7294, 7
      %v7296 = vsub.s32 6, %v7295
      %v7297 = vrot.slane %v7095, %v7296
      %v7298 = vlaneseq
      %v7299 = vshrl.u32 %v7298, 7
      %v7300 = vsub.s32 2, %v7299
      %v7301 = vrot.slane %v7096, %v7300
      %v7302 = vlaneseq
      %v7303 = vshrl.u32 %v7302, 7
      %v7304 = vsub.s32 6, %v7303
      %v7305 = vrot.slane %v7096, %v7304
      %v7306 = vlaneseq
      %v7307 = vshrl.u32 %v7306, 7
      %v7308 = vsub.s32 2, %v7307
      %v7309 = vrot.slane %v7097, %v7308
      %v7310 = vlaneseq
      %v7311 = vshrl.u32 %v7310, 7
      %v7312 = vsub.s32 6, %v7311
      %v7313 = vrot.slane %v7097, %v7312
      %v7314 = vlaneseq
      %v7315 = vshrl.u32 %v7314, 7
      %v7316 = vsub.s32 2, %v7315
      %v7317 = vrot.slane %v7098, %v7316
      %v7318 = vlaneseq
      %v7319 = vshrl.u32 %v7318, 7
      %v7320 = vsub.s32 6, %v7319
      %v7321 = vrot.slane %v7098, %v7320
      %v7322 = vlaneseq
      %v7323 = vshrl.u32 %v7322, 7
      %v7324 = vsub.s32 2, %v7323
      %v7325 = vrot.slane %v7099, %v7324
      %v7326 = vlaneseq
      %v7327 = vshrl.u32 %v7326, 7
      %v7328 = vsub.s32 6, %v7327
      %v7329 = vrot.slane %v7099, %v7328
      %v7330 = vlaneseq
      %v7331 = vshrl.u32 %v7330, 7
      %v7332 = vsub.s32 2, %v7331
      %v7333 = vrot.slane %v7100, %v7332
      %v7334 = vlaneseq
      %v7335 = vshrl.u32 %v7334, 7
      %v7336 = vsub.s32 6, %v7335
      %v7337 = vrot.slane %v7100, %v7336
      %v7338 = vlaneseq
      %v7339 = vshrl.u32 %v7338, 7
      %v7340 = vsub.s32 2, %v7339
      %v7341 = vrot.slane %v7101, %v7340
      %v7342 = vlaneseq
      %v7343 = vshrl.u32 %v7342, 7
      %v7344 = vsub.s32 6, %v7343
      %v7345 = vrot.slane %v7101, %v7344
      %v7346 = vlaneseq
      %v7347 = vshrl.u32 %v7346, 7
      %v7348 = vsub.s32 2, %v7347
      %v7349 = vrot.slane %v7102, %v7348
      %v7350 = vlaneseq
      %v7351 = vshrl.u32 %v7350, 7
      %v7352 = vsub.s32 6, %v7351
      %v7353 = vrot.slane %v7102, %v7352
      %v7354 = vlaneseq
      %v7355 = vshrl.u32 %v7354, 7
      %v7356 = vsub.s32 2, %v7355
      %v7357 = vrot.slane %v7103, %v7356
      %v7358 = vlaneseq
      %v7359 = vshrl.u32 %v7358, 7
      %v7360 = vsub.s32 6, %v7359
      %v7361 = vrot.slane %v7103, %v7360
      %v7362 = vlaneseq
      %v7363 = vshrl.u32 %v7362, 7
      %v7364 = vsub.s32 2, %v7363
      %v7365 = vrot.slane %v7104, %v7364
      %v7366 = vlaneseq
      %v7367 = vshrl.u32 %v7366, 7
      %v7368 = vsub.s32 6, %v7367
      %v7369 = vrot.slane %v7104, %v7368
      %v7370 = vlaneseq
      %v7371 = vshrl.u32 %v7370, 7
      %v7372 = vsub.s32 2, %v7371
      %v7373 = vrot.slane %v7105, %v7372
      %v7374 = vlaneseq
      %v7375 = vshrl.u32 %v7374, 7
      %v7376 = vsub.s32 6, %v7375
      %v7377 = vrot.slane %v7105, %v7376
      %v7378 = vlaneseq
      %v7379 = vshrl.u32 %v7378, 7
      %v7380 = vsub.s32 2, %v7379
      %v7381 = vrot.slane %v7106, %v7380
      %v7382 = vlaneseq
      %v7383 = vshrl.u32 %v7382, 7
      %v7384 = vsub.s32 6, %v7383
      %v7385 = vrot.slane %v7106, %v7384
      %v7386 = vlaneseq
      %v7387 = vshrl.u32 %v7386, 7
      %v7388 = vsub.s32 2, %v7387
      %v7389 = vrot.slane %v7107, %v7388
      %v7390 = vlaneseq
      %v7391 = vshrl.u32 %v7390, 7
      %v7392 = vsub.s32 6, %v7391
      %v7393 = vrot.slane %v7107, %v7392
      %v7394 = vlaneseq
      %v7395 = vshrl.u32 %v7394, 7
      %v7396 = vsub.s32 2, %v7395
      %v7397 = vrot.slane %v7108, %v7396
      %v7398 = vlaneseq
      %v7399 = vshrl.u32 %v7398, 7
      %v7400 = vsub.s32 6, %v7399
      %v7401 = vrot.slane %v7108, %v7400
      %v7402 = vlaneseq
      %v7403 = vshrl.u32 %v7402, 7
      %v7404 = vsub.s32 2, %v7403
      %v7405 = vrot.slane %v7109, %v7404
      %v7406 = vlaneseq
      %v7407 = vshrl.u32 %v7406, 7
      %v7408 = vsub.s32 6, %v7407
      %v7409 = vrot.slane %v7109, %v7408
      %v7410 = vlaneseq
      %v7411 = vshrl.u32 %v7410, 7
      %v7412 = vsub.s32 2, %v7411
      %v7413 = vrot.slane %v7110, %v7412
      %v7414 = vlaneseq
      %v7415 = vshrl.u32 %v7414, 7
      %v7416 = vsub.s32 6, %v7415
      %v7417 = vrot.slane %v7110, %v7416
      %v7418 = vlaneseq
      %v7419 = vshrl.u32 %v7418, 7
      %v7420 = vsub.s32 2, %v7419
      %v7421 = vrot.slane %v7111, %v7420
      %v7422 = vlaneseq
      %v7423 = vshrl.u32 %v7422, 7
      %v7424 = vsub.s32 6, %v7423
      %v7425 = vrot.slane %v7111, %v7424
      %v7426 = vlaneseq
      %v7427 = vshrl.u32 %v7426, 7
      %v7428 = vsub.s32 2, %v7427
      %v7429 = vrot.slane %v7112, %v7428
      %v7430 = vlaneseq
      %v7431 = vshrl.u32 %v7430, 7
      %v7432 = vsub.s32 6, %v7431
      %v7433 = vrot.slane %v7112, %v7432
      %v7434 = vlaneseq
      %v7435 = vshrl.u32 %v7434, 7
      %v7436 = vsub.s32 2, %v7435
      %v7437 = vrot.slane %v7113, %v7436
      %v7438 = vlaneseq
      %v7439 = vshrl.u32 %v7438, 7
      %v7440 = vsub.s32 6, %v7439
      %v7441 = vrot.slane %v7113, %v7440
      %v7442 = vsel %vm3065, %v7197, %v7189
      %v7443 = vsel %vm3067, %v7205, %v7442
      %v7444 = vsel %vm3069, %v7213, %v7443
      %v7445 = vsel %vm3071, %v7221, %v7444
      %v7446 = vsel %vm3073, %v7229, %v7445
      %v7447 = vsel %vm3075, %v7237, %v7446
      %v7448 = vsel %vm3077, %v7245, %v7447
      %v7449 = vsel %vm3065, %v7201, %v7193
      %v7450 = vsel %vm3067, %v7209, %v7449
      %v7451 = vsel %vm3069, %v7217, %v7450
      %v7452 = vsel %vm3071, %v7225, %v7451
      %v7453 = vsel %vm3073, %v7233, %v7452
      %v7454 = vsel %vm3075, %v7241, %v7453
      %v7455 = vsel %vm3077, %v7249, %v7454
      %v7456 = vsel %vm3065, %v7261, %v7253
      %v7457 = vsel %vm3067, %v7269, %v7456
      %v7458 = vsel %vm3069, %v7277, %v7457
      %v7459 = vsel %vm3071, %v7285, %v7458
      %v7460 = vsel %vm3073, %v7293, %v7459
      %v7461 = vsel %vm3075, %v7301, %v7460
      %v7462 = vsel %vm3077, %v7309, %v7461
      %v7463 = vsel %vm3065, %v7265, %v7257
      %v7464 = vsel %vm3067, %v7273, %v7463
      %v7465 = vsel %vm3069, %v7281, %v7464
      %v7466 = vsel %vm3071, %v7289, %v7465
      %v7467 = vsel %vm3073, %v7297, %v7466
      %v7468 = vsel %vm3075, %v7305, %v7467
      %v7469 = vsel %vm3077, %v7313, %v7468
      %v7470 = vsel %vm3065, %v7325, %v7317
      %v7471 = vsel %vm3067, %v7333, %v7470
      %v7472 = vsel %vm3069, %v7341, %v7471
      %v7473 = vsel %vm3071, %v7349, %v7472
      %v7474 = vsel %vm3073, %v7357, %v7473
      %v7475 = vsel %vm3075, %v7365, %v7474
      %v7476 = vsel %vm3077, %v7373, %v7475
      %v7477 = vsel %vm3065, %v7329, %v7321
      %v7478 = vsel %vm3067, %v7337, %v7477
      %v7479 = vsel %vm3069, %v7345, %v7478
      %v7480 = vsel %vm3071, %v7353, %v7479
      %v7481 = vsel %vm3073, %v7361, %v7480
      %v7482 = vsel %vm3075, %v7369, %v7481
      %v7483 = vsel %vm3077, %v7377, %v7482
      %v7484 = vsel %vm3065, %v7389, %v7381
      %v7485 = vsel %vm3067, %v7397, %v7484
      %v7486 = vsel %vm3069, %v7405, %v7485
      %v7487 = vsel %vm3071, %v7413, %v7486
      %v7488 = vsel %vm3073, %v7421, %v7487
      %v7489 = vsel %vm3075, %v7429, %v7488
      %v7490 = vsel %vm3077, %v7437, %v7489
      %v7491 = vsel %vm3065, %v7393, %v7385
      %v7492 = vsel %vm3067, %v7401, %v7491
      %v7493 = vsel %vm3069, %v7409, %v7492
      %v7494 = vsel %vm3071, %v7417, %v7493
      %v7495 = vsel %vm3073, %v7425, %v7494
      %v7496 = vsel %vm3075, %v7433, %v7495
      %v7497 = vsel %vm3077, %v7441, %v7496
      %v7506 = vsel %vm7150, %v7448, %v7130
      %v7507 = vsel %vm7150, %v7455, %v7131
      %v7508 = vsel %vm7151, %v7462, %v7132
      %v7509 = vsel %vm7151, %v7469, %v7133
      %v7510 = vsel %vm7152, %v7476, %v7134
      %v7511 = vsel %vm7152, %v7483, %v7135
      %v7512 = vsel %vm7153, %v7490, %v7136
      %v7513 = vsel %vm7153, %v7497, %v7137
      %7514 = vrot.lane.b32.xlu0 %v6761, 15
      %v7515 = vpop.permute.xlu0 %7514
      %7516 = vrot.lane.b32.xlu0 %v6763, 15
      %v7517 = vpop.permute.xlu0 %7516
      %7518 = vrot.lane.b32.xlu0 %v6765, 15
      %v7519 = vpop.permute.xlu0 %7518
      %7520 = vrot.lane.b32.xlu0 %v6767, 15
      %v7521 = vpop.permute.xlu0 %7520
      %7522 = vrot.lane.b32.xlu0 %v6762, 15
      %v7523 = vpop.permute.xlu0 %7522
      %7524 = vrot.lane.b32.xlu0 %v6764, 15
      %v7525 = vpop.permute.xlu0 %7524
      %7526 = vrot.lane.b32.xlu0 %v6766, 15
      %v7527 = vpop.permute.xlu0 %7526
      %7528 = vrot.lane.b32.xlu0 %v6768, 15
      %v7529 = vpop.permute.xlu0 %7528
      %vm7530 = vcmp.lt.s32.totalorder %v2268, 15
      %v7531 = vsel %vm7530, %v7515, %v7523
      %v7532 = vsel %vm7530, %v7517, %v7525
      %v7533 = vsel %vm7530, %v7519, %v7527
      %v7534 = vsel %vm7530, %v7521, %v7529
      %v7535 = vsel %vm7530, %v7523, %v7515
      %v7536 = vsel %vm7530, %v7525, %v7517
      %v7537 = vsel %vm7530, %v7527, %v7519
      %v7538 = vsel %vm7530, %v7529, %v7521
      %7539 = vrot.lane.b32.xlu0 %v6761, 127
      %v7540 = vpop.permute.xlu0 %7539
      %7541 = vrot.lane.b32.xlu0 %v6763, 127
      %v7542 = vpop.permute.xlu0 %7541
      %7543 = vrot.lane.b32.xlu0 %v6765, 127
      %v7544 = vpop.permute.xlu0 %7543
      %7545 = vrot.lane.b32.xlu0 %v6767, 127
      %v7546 = vpop.permute.xlu0 %7545
      %7547 = vrot.lane.b32.xlu0 %v6762, 127
      %v7548 = vpop.permute.xlu0 %7547
      %7549 = vrot.lane.b32.xlu0 %v6764, 127
      %v7550 = vpop.permute.xlu0 %7549
      %7551 = vrot.lane.b32.xlu0 %v6766, 127
      %v7552 = vpop.permute.xlu0 %7551
      %7553 = vrot.lane.b32.xlu0 %v6768, 127
      %v7554 = vpop.permute.xlu0 %7553
      %v7555 = vsel %vm3897, %v7540, %v7548
      %v7556 = vsel %vm3897, %v7542, %v7550
      %v7557 = vsel %vm3897, %v7544, %v7552
      %v7558 = vsel %vm3897, %v7546, %v7554
      %v7559 = vsel %vm3897, %v7548, %v7540
      %v7560 = vsel %vm3897, %v7550, %v7542
      %v7561 = vsel %vm3897, %v7552, %v7544
      %v7562 = vsel %vm3897, %v7554, %v7546
      %v7571 = vcombine.low %v7535, %v7531
      %v7572 = vcombine.high %v7535, %v7531
      %v7573 = vcombine.low %v7536, %v7532
      %v7574 = vcombine.high %v7536, %v7532
      %v7575 = vcombine.low %v7537, %v7533
      %v7576 = vcombine.high %v7537, %v7533
      %v7577 = vcombine.low %v7538, %v7534
      %v7578 = vcombine.high %v7538, %v7534
      %v7579 = vrot.slane %v7571, 5
      %v7580 = vrot.slane %v7571, 6
      %v7581 = vrot.slane %v7571, 7
      %v7582 = vrot.slane %v7572, 5
      %v7583 = vrot.slane %v7572, 6
      %v7584 = vrot.slane %v7572, 7
      %v7585 = vrot.slane %v7573, 5
      %v7586 = vrot.slane %v7573, 6
      %v7587 = vrot.slane %v7573, 7
      %v7588 = vrot.slane %v7574, 5
      %v7589 = vrot.slane %v7574, 6
      %v7590 = vrot.slane %v7574, 7
      %v7591 = vrot.slane %v7575, 5
      %v7592 = vrot.slane %v7575, 6
      %v7593 = vrot.slane %v7575, 7
      %v7594 = vrot.slane %v7576, 5
      %v7595 = vrot.slane %v7576, 6
      %v7596 = vrot.slane %v7576, 7
      %v7597 = vrot.slane %v7577, 5
      %v7598 = vrot.slane %v7577, 6
      %v7599 = vrot.slane %v7577, 7
      %v7600 = vrot.slane %v7578, 5
      %v7601 = vrot.slane %v7578, 6
      %v7602 = vrot.slane %v7578, 7
      %v7643 = vcombine.low %v7555, %v7559
      %v7644 = vcombine.high %v7555, %v7559
      %v7645 = vcombine.low %v7556, %v7560
      %v7646 = vcombine.high %v7556, %v7560
      %v7647 = vcombine.low %v7557, %v7561
      %v7648 = vcombine.high %v7557, %v7561
      %v7649 = vcombine.low %v7558, %v7562
      %v7650 = vcombine.high %v7558, %v7562
      %v7651 = vrot.slane %v7643, 5
      %v7652 = vrot.slane %v7643, 6
      %v7653 = vrot.slane %v7643, 7
      %v7654 = vrot.slane %v7644, 5
      %v7655 = vrot.slane %v7644, 6
      %v7656 = vrot.slane %v7644, 7
      %v7657 = vrot.slane %v7645, 5
      %v7658 = vrot.slane %v7645, 6
      %v7659 = vrot.slane %v7645, 7
      %v7660 = vrot.slane %v7646, 5
      %v7661 = vrot.slane %v7646, 6
      %v7662 = vrot.slane %v7646, 7
      %v7663 = vrot.slane %v7647, 5
      %v7664 = vrot.slane %v7647, 6
      %v7665 = vrot.slane %v7647, 7
      %v7666 = vrot.slane %v7648, 5
      %v7667 = vrot.slane %v7648, 6
      %v7668 = vrot.slane %v7648, 7
      %v7669 = vrot.slane %v7649, 5
      %v7670 = vrot.slane %v7649, 6
      %v7671 = vrot.slane %v7649, 7
      %v7672 = vrot.slane %v7650, 5
      %v7673 = vrot.slane %v7650, 6
      %v7674 = vrot.slane %v7650, 7
      %v7707 = vsel %vm2279, %v7579, %v7651
      %v7708 = vsel %vm2279, %v7580, %v7652
      %v7709 = vsel %vm2279, %v7581, %v7653
      %v7710 = vsel %vm2279, %v7571, %v7643
      %v7711 = vsel %vm2279, %v7582, %v7654
      %v7712 = vsel %vm2279, %v7583, %v7655
      %v7713 = vsel %vm2279, %v7584, %v7656
      %v7714 = vsel %vm2279, %v7572, %v7644
      %v7715 = vsel %vm2279, %v7585, %v7657
      %v7716 = vsel %vm2279, %v7586, %v7658
      %v7717 = vsel %vm2279, %v7587, %v7659
      %v7718 = vsel %vm2279, %v7573, %v7645
      %v7719 = vsel %vm2279, %v7588, %v7660
      %v7720 = vsel %vm2279, %v7589, %v7661
      %v7721 = vsel %vm2279, %v7590, %v7662
      %v7722 = vsel %vm2279, %v7574, %v7646
      %v7723 = vsel %vm2279, %v7591, %v7663
      %v7724 = vsel %vm2279, %v7592, %v7664
      %v7725 = vsel %vm2279, %v7593, %v7665
      %v7726 = vsel %vm2279, %v7575, %v7647
      %v7727 = vsel %vm2279, %v7594, %v7666
      %v7728 = vsel %vm2279, %v7595, %v7667
      %v7729 = vsel %vm2279, %v7596, %v7668
      %v7730 = vsel %vm2279, %v7576, %v7648
      %v7731 = vsel %vm2279, %v7597, %v7669
      %v7732 = vsel %vm2279, %v7598, %v7670
      %v7733 = vsel %vm2279, %v7599, %v7671
      %v7734 = vsel %vm2279, %v7577, %v7649
      %v7735 = vsel %vm2279, %v7600, %v7672
      %v7736 = vsel %vm2279, %v7601, %v7673
      %v7737 = vsel %vm2279, %v7602, %v7674
      %v7738 = vsel %vm2279, %v7578, %v7650
      %v7739 = vsel %vm7150, %v6761, %v6841
      %v7740 = vsel %vm7150, %v6762, %v6842
      %v7741 = vsel %vm7151, %v6763, %v6843
      %v7742 = vsel %vm7151, %v6764, %v6844
      %v7743 = vsel %vm7152, %v6765, %v6845
      %v7744 = vsel %vm7152, %v6766, %v6846
      %v7745 = vsel %vm7153, %v6767, %v6847
      %v7746 = vsel %vm7153, %v6768, %v6848
      %v7779 = vlaneseq
      %v7780 = vshrl.u32 %v7779, 7
      %v7781 = vsub.s32 3, %v7780
      %v7782 = vrot.slane %v7707, %v7781
      %v7783 = vlaneseq
      %v7784 = vshrl.u32 %v7783, 7
      %v7785 = vsub.s32 7, %v7784
      %v7786 = vrot.slane %v7707, %v7785
      %v7787 = vlaneseq
      %v7788 = vshrl.u32 %v7787, 7
      %v7789 = vsub.s32 3, %v7788
      %v7790 = vrot.slane %v7708, %v7789
      %v7791 = vlaneseq
      %v7792 = vshrl.u32 %v7791, 7
      %v7793 = vsub.s32 7, %v7792
      %v7794 = vrot.slane %v7708, %v7793
      %v7795 = vlaneseq
      %v7796 = vshrl.u32 %v7795, 7
      %v7797 = vsub.s32 3, %v7796
      %v7798 = vrot.slane %v7709, %v7797
      %v7799 = vlaneseq
      %v7800 = vshrl.u32 %v7799, 7
      %v7801 = vsub.s32 7, %v7800
      %v7802 = vrot.slane %v7709, %v7801
      %v7803 = vlaneseq
      %v7804 = vshrl.u32 %v7803, 7
      %v7805 = vsub.s32 3, %v7804
      %v7806 = vrot.slane %v7710, %v7805
      %v7807 = vlaneseq
      %v7808 = vshrl.u32 %v7807, 7
      %v7809 = vsub.s32 7, %v7808
      %v7810 = vrot.slane %v7710, %v7809
      %v7811 = vlaneseq
      %v7812 = vshrl.u32 %v7811, 7
      %v7813 = vsub.s32 3, %v7812
      %v7814 = vrot.slane %v7711, %v7813
      %v7815 = vlaneseq
      %v7816 = vshrl.u32 %v7815, 7
      %v7817 = vsub.s32 7, %v7816
      %v7818 = vrot.slane %v7711, %v7817
      %v7819 = vlaneseq
      %v7820 = vshrl.u32 %v7819, 7
      %v7821 = vsub.s32 3, %v7820
      %v7822 = vrot.slane %v7712, %v7821
      %v7823 = vlaneseq
      %v7824 = vshrl.u32 %v7823, 7
      %v7825 = vsub.s32 7, %v7824
      %v7826 = vrot.slane %v7712, %v7825
      %v7827 = vlaneseq
      %v7828 = vshrl.u32 %v7827, 7
      %v7829 = vsub.s32 3, %v7828
      %v7830 = vrot.slane %v7713, %v7829
      %v7831 = vlaneseq
      %v7832 = vshrl.u32 %v7831, 7
      %v7833 = vsub.s32 7, %v7832
      %v7834 = vrot.slane %v7713, %v7833
      %v7835 = vlaneseq
      %v7836 = vshrl.u32 %v7835, 7
      %v7837 = vsub.s32 3, %v7836
      %v7838 = vrot.slane %v7714, %v7837
      %v7839 = vlaneseq
      %v7840 = vshrl.u32 %v7839, 7
      %v7841 = vsub.s32 7, %v7840
      %v7842 = vrot.slane %v7714, %v7841
      %v7843 = vlaneseq
      %v7844 = vshrl.u32 %v7843, 7
      %v7845 = vsub.s32 3, %v7844
      %v7846 = vrot.slane %v7715, %v7845
      %v7847 = vlaneseq
      %v7848 = vshrl.u32 %v7847, 7
      %v7849 = vsub.s32 7, %v7848
      %v7850 = vrot.slane %v7715, %v7849
      %v7851 = vlaneseq
      %v7852 = vshrl.u32 %v7851, 7
      %v7853 = vsub.s32 3, %v7852
      %v7854 = vrot.slane %v7716, %v7853
      %v7855 = vlaneseq
      %v7856 = vshrl.u32 %v7855, 7
      %v7857 = vsub.s32 7, %v7856
      %v7858 = vrot.slane %v7716, %v7857
      %v7859 = vlaneseq
      %v7860 = vshrl.u32 %v7859, 7
      %v7861 = vsub.s32 3, %v7860
      %v7862 = vrot.slane %v7717, %v7861
      %v7863 = vlaneseq
      %v7864 = vshrl.u32 %v7863, 7
      %v7865 = vsub.s32 7, %v7864
      %v7866 = vrot.slane %v7717, %v7865
      %v7867 = vlaneseq
      %v7868 = vshrl.u32 %v7867, 7
      %v7869 = vsub.s32 3, %v7868
      %v7870 = vrot.slane %v7718, %v7869
      %v7871 = vlaneseq
      %v7872 = vshrl.u32 %v7871, 7
      %v7873 = vsub.s32 7, %v7872
      %v7874 = vrot.slane %v7718, %v7873
      %v7875 = vlaneseq
      %v7876 = vshrl.u32 %v7875, 7
      %v7877 = vsub.s32 3, %v7876
      %v7878 = vrot.slane %v7719, %v7877
      %v7879 = vlaneseq
      %v7880 = vshrl.u32 %v7879, 7
      %v7881 = vsub.s32 7, %v7880
      %v7882 = vrot.slane %v7719, %v7881
      %v7883 = vlaneseq
      %v7884 = vshrl.u32 %v7883, 7
      %v7885 = vsub.s32 3, %v7884
      %v7886 = vrot.slane %v7720, %v7885
      %v7887 = vlaneseq
      %v7888 = vshrl.u32 %v7887, 7
      %v7889 = vsub.s32 7, %v7888
      %v7890 = vrot.slane %v7720, %v7889
      %v7891 = vlaneseq
      %v7892 = vshrl.u32 %v7891, 7
      %v7893 = vsub.s32 3, %v7892
      %v7894 = vrot.slane %v7721, %v7893
      %v7895 = vlaneseq
      %v7896 = vshrl.u32 %v7895, 7
      %v7897 = vsub.s32 7, %v7896
      %v7898 = vrot.slane %v7721, %v7897
      %v7899 = vlaneseq
      %v7900 = vshrl.u32 %v7899, 7
      %v7901 = vsub.s32 3, %v7900
      %v7902 = vrot.slane %v7722, %v7901
      %v7903 = vlaneseq
      %v7904 = vshrl.u32 %v7903, 7
      %v7905 = vsub.s32 7, %v7904
      %v7906 = vrot.slane %v7722, %v7905
      %v7907 = vlaneseq
      %v7908 = vshrl.u32 %v7907, 7
      %v7909 = vsub.s32 3, %v7908
      %v7910 = vrot.slane %v7723, %v7909
      %v7911 = vlaneseq
      %v7912 = vshrl.u32 %v7911, 7
      %v7913 = vsub.s32 7, %v7912
      %v7914 = vrot.slane %v7723, %v7913
      %v7915 = vlaneseq
      %v7916 = vshrl.u32 %v7915, 7
      %v7917 = vsub.s32 3, %v7916
      %v7918 = vrot.slane %v7724, %v7917
      %v7919 = vlaneseq
      %v7920 = vshrl.u32 %v7919, 7
      %v7921 = vsub.s32 7, %v7920
      %v7922 = vrot.slane %v7724, %v7921
      %v7923 = vlaneseq
      %v7924 = vshrl.u32 %v7923, 7
      %v7925 = vsub.s32 3, %v7924
      %v7926 = vrot.slane %v7725, %v7925
      %v7927 = vlaneseq
      %v7928 = vshrl.u32 %v7927, 7
      %v7929 = vsub.s32 7, %v7928
      %v7930 = vrot.slane %v7725, %v7929
      %v7931 = vlaneseq
      %v7932 = vshrl.u32 %v7931, 7
      %v7933 = vsub.s32 3, %v7932
      %v7934 = vrot.slane %v7726, %v7933
      %v7935 = vlaneseq
      %v7936 = vshrl.u32 %v7935, 7
      %v7937 = vsub.s32 7, %v7936
      %v7938 = vrot.slane %v7726, %v7937
      %v7939 = vlaneseq
      %v7940 = vshrl.u32 %v7939, 7
      %v7941 = vsub.s32 3, %v7940
      %v7942 = vrot.slane %v7727, %v7941
      %v7943 = vlaneseq
      %v7944 = vshrl.u32 %v7943, 7
      %v7945 = vsub.s32 7, %v7944
      %v7946 = vrot.slane %v7727, %v7945
      %v7947 = vlaneseq
      %v7948 = vshrl.u32 %v7947, 7
      %v7949 = vsub.s32 3, %v7948
      %v7950 = vrot.slane %v7728, %v7949
      %v7951 = vlaneseq
      %v7952 = vshrl.u32 %v7951, 7
      %v7953 = vsub.s32 7, %v7952
      %v7954 = vrot.slane %v7728, %v7953
      %v7955 = vlaneseq
      %v7956 = vshrl.u32 %v7955, 7
      %v7957 = vsub.s32 3, %v7956
      %v7958 = vrot.slane %v7729, %v7957
      %v7959 = vlaneseq
      %v7960 = vshrl.u32 %v7959, 7
      %v7961 = vsub.s32 7, %v7960
      %v7962 = vrot.slane %v7729, %v7961
      %v7963 = vlaneseq
      %v7964 = vshrl.u32 %v7963, 7
      %v7965 = vsub.s32 3, %v7964
      %v7966 = vrot.slane %v7730, %v7965
      %v7967 = vlaneseq
      %v7968 = vshrl.u32 %v7967, 7
      %v7969 = vsub.s32 7, %v7968
      %v7970 = vrot.slane %v7730, %v7969
      %v7971 = vlaneseq
      %v7972 = vshrl.u32 %v7971, 7
      %v7973 = vsub.s32 3, %v7972
      %v7974 = vrot.slane %v7731, %v7973
      %v7975 = vlaneseq
      %v7976 = vshrl.u32 %v7975, 7
      %v7977 = vsub.s32 7, %v7976
      %v7978 = vrot.slane %v7731, %v7977
      %v7979 = vlaneseq
      %v7980 = vshrl.u32 %v7979, 7
      %v7981 = vsub.s32 3, %v7980
      %v7982 = vrot.slane %v7732, %v7981
      %v7983 = vlaneseq
      %v7984 = vshrl.u32 %v7983, 7
      %v7985 = vsub.s32 7, %v7984
      %v7986 = vrot.slane %v7732, %v7985
      %v7987 = vlaneseq
      %v7988 = vshrl.u32 %v7987, 7
      %v7989 = vsub.s32 3, %v7988
      %v7990 = vrot.slane %v7733, %v7989
      %v7991 = vlaneseq
      %v7992 = vshrl.u32 %v7991, 7
      %v7993 = vsub.s32 7, %v7992
      %v7994 = vrot.slane %v7733, %v7993
      %v7995 = vlaneseq
      %v7996 = vshrl.u32 %v7995, 7
      %v7997 = vsub.s32 3, %v7996
      %v7998 = vrot.slane %v7734, %v7997
      %v7999 = vlaneseq
      %v8000 = vshrl.u32 %v7999, 7
      %v8001 = vsub.s32 7, %v8000
      %v8002 = vrot.slane %v7734, %v8001
      %v8003 = vlaneseq
      %v8004 = vshrl.u32 %v8003, 7
      %v8005 = vsub.s32 3, %v8004
      %v8006 = vrot.slane %v7735, %v8005
      %v8007 = vlaneseq
      %v8008 = vshrl.u32 %v8007, 7
      %v8009 = vsub.s32 7, %v8008
      %v8010 = vrot.slane %v7735, %v8009
      %v8011 = vlaneseq
      %v8012 = vshrl.u32 %v8011, 7
      %v8013 = vsub.s32 3, %v8012
      %v8014 = vrot.slane %v7736, %v8013
      %v8015 = vlaneseq
      %v8016 = vshrl.u32 %v8015, 7
      %v8017 = vsub.s32 7, %v8016
      %v8018 = vrot.slane %v7736, %v8017
      %v8019 = vlaneseq
      %v8020 = vshrl.u32 %v8019, 7
      %v8021 = vsub.s32 3, %v8020
      %v8022 = vrot.slane %v7737, %v8021
      %v8023 = vlaneseq
      %v8024 = vshrl.u32 %v8023, 7
      %v8025 = vsub.s32 7, %v8024
      %v8026 = vrot.slane %v7737, %v8025
      %v8027 = vlaneseq
      %v8028 = vshrl.u32 %v8027, 7
      %v8029 = vsub.s32 3, %v8028
      %v8030 = vrot.slane %v7738, %v8029
      %v8031 = vlaneseq
      %v8032 = vshrl.u32 %v8031, 7
      %v8033 = vsub.s32 7, %v8032
      %v8034 = vrot.slane %v7738, %v8033
      %v8035 = vsel %vm3065, %v7790, %v7782
      %v8036 = vsel %vm3067, %v7798, %v8035
      %v8037 = vsel %vm3069, %v7806, %v8036
      %v8038 = vsel %vm3071, %v7814, %v8037
      %v8039 = vsel %vm3073, %v7822, %v8038
      %v8040 = vsel %vm3075, %v7830, %v8039
      %v8041 = vsel %vm3077, %v7838, %v8040
      %v8042 = vsel %vm3065, %v7794, %v7786
      %v8043 = vsel %vm3067, %v7802, %v8042
      %v8044 = vsel %vm3069, %v7810, %v8043
      %v8045 = vsel %vm3071, %v7818, %v8044
      %v8046 = vsel %vm3073, %v7826, %v8045
      %v8047 = vsel %vm3075, %v7834, %v8046
      %v8048 = vsel %vm3077, %v7842, %v8047
      %v8049 = vsel %vm3065, %v7854, %v7846
      %v8050 = vsel %vm3067, %v7862, %v8049
      %v8051 = vsel %vm3069, %v7870, %v8050
      %v8052 = vsel %vm3071, %v7878, %v8051
      %v8053 = vsel %vm3073, %v7886, %v8052
      %v8054 = vsel %vm3075, %v7894, %v8053
      %v8055 = vsel %vm3077, %v7902, %v8054
      %v8056 = vsel %vm3065, %v7858, %v7850
      %v8057 = vsel %vm3067, %v7866, %v8056
      %v8058 = vsel %vm3069, %v7874, %v8057
      %v8059 = vsel %vm3071, %v7882, %v8058
      %v8060 = vsel %vm3073, %v7890, %v8059
      %v8061 = vsel %vm3075, %v7898, %v8060
      %v8062 = vsel %vm3077, %v7906, %v8061
      %v8063 = vsel %vm3065, %v7918, %v7910
      %v8064 = vsel %vm3067, %v7926, %v8063
      %v8065 = vsel %vm3069, %v7934, %v8064
      %v8066 = vsel %vm3071, %v7942, %v8065
      %v8067 = vsel %vm3073, %v7950, %v8066
      %v8068 = vsel %vm3075, %v7958, %v8067
      %v8069 = vsel %vm3077, %v7966, %v8068
      %v8070 = vsel %vm3065, %v7922, %v7914
      %v8071 = vsel %vm3067, %v7930, %v8070
      %v8072 = vsel %vm3069, %v7938, %v8071
      %v8073 = vsel %vm3071, %v7946, %v8072
      %v8074 = vsel %vm3073, %v7954, %v8073
      %v8075 = vsel %vm3075, %v7962, %v8074
      %v8076 = vsel %vm3077, %v7970, %v8075
      %v8077 = vsel %vm3065, %v7982, %v7974
      %v8078 = vsel %vm3067, %v7990, %v8077
      %v8079 = vsel %vm3069, %v7998, %v8078
      %v8080 = vsel %vm3071, %v8006, %v8079
      %v8081 = vsel %vm3073, %v8014, %v8080
      %v8082 = vsel %vm3075, %v8022, %v8081
      %v8083 = vsel %vm3077, %v8030, %v8082
      %v8084 = vsel %vm3065, %v7986, %v7978
      %v8085 = vsel %vm3067, %v7994, %v8084
      %v8086 = vsel %vm3069, %v8002, %v8085
      %v8087 = vsel %vm3071, %v8010, %v8086
      %v8088 = vsel %vm3073, %v8018, %v8087
      %v8089 = vsel %vm3075, %v8026, %v8088
      %v8090 = vsel %vm3077, %v8034, %v8089
      %v8099 = vsel %vm7126, %v8041, %v7739
      %v8100 = vsel %vm7126, %v8048, %v7740
      %v8101 = vsel %vm7127, %v8055, %v7741
      %v8102 = vsel %vm7127, %v8062, %v7742
      %v8103 = vsel %vm7128, %v8069, %v7743
      %v8104 = vsel %vm7128, %v8076, %v7744
      %v8105 = vsel %vm7129, %v8083, %v7745
      %v8106 = vsel %vm7129, %v8090, %v7746
      %8107 = vrot.lane.b32.xlu0 %v6881, 113
      %v8108 = vpop.permute.xlu0 %8107
      %8109 = vrot.lane.b32.xlu0 %v6883, 113
      %v8110 = vpop.permute.xlu0 %8109
      %8111 = vrot.lane.b32.xlu0 %v6885, 113
      %v8112 = vpop.permute.xlu0 %8111
      %8113 = vrot.lane.b32.xlu0 %v6887, 113
      %v8114 = vpop.permute.xlu0 %8113
      %8115 = vrot.lane.b32.xlu0 %v6882, 113
      %v8116 = vpop.permute.xlu0 %8115
      %8117 = vrot.lane.b32.xlu0 %v6884, 113
      %v8118 = vpop.permute.xlu0 %8117
      %8119 = vrot.lane.b32.xlu0 %v6886, 113
      %v8120 = vpop.permute.xlu0 %8119
      %8121 = vrot.lane.b32.xlu0 %v6888, 113
      %v8122 = vpop.permute.xlu0 %8121
      %v8123 = vsel %vm6905, %v8108, %v8116
      %v8124 = vsel %vm6905, %v8110, %v8118
      %v8125 = vsel %vm6905, %v8112, %v8120
      %v8126 = vsel %vm6905, %v8114, %v8122
      %v8127 = vsel %vm6905, %v8116, %v8108
      %v8128 = vsel %vm6905, %v8118, %v8110
      %v8129 = vsel %vm6905, %v8120, %v8112
      %v8130 = vsel %vm6905, %v8122, %v8114
      %8131 = vrot.lane.b32.xlu0 %v6881, 1
      %v8132 = vpop.permute.xlu0 %8131
      %8133 = vrot.lane.b32.xlu0 %v6883, 1
      %v8134 = vpop.permute.xlu0 %8133
      %8135 = vrot.lane.b32.xlu0 %v6885, 1
      %v8136 = vpop.permute.xlu0 %8135
      %8137 = vrot.lane.b32.xlu0 %v6887, 1
      %v8138 = vpop.permute.xlu0 %8137
      %8139 = vrot.lane.b32.xlu0 %v6882, 1
      %v8140 = vpop.permute.xlu0 %8139
      %8141 = vrot.lane.b32.xlu0 %v6884, 1
      %v8142 = vpop.permute.xlu0 %8141
      %8143 = vrot.lane.b32.xlu0 %v6886, 1
      %v8144 = vpop.permute.xlu0 %8143
      %8145 = vrot.lane.b32.xlu0 %v6888, 1
      %v8146 = vpop.permute.xlu0 %8145
      %v8147 = vsel %vm3512, %v8132, %v8140
      %v8148 = vsel %vm3512, %v8134, %v8142
      %v8149 = vsel %vm3512, %v8136, %v8144
      %v8150 = vsel %vm3512, %v8138, %v8146
      %v8151 = vsel %vm3512, %v8140, %v8132
      %v8152 = vsel %vm3512, %v8142, %v8134
      %v8153 = vsel %vm3512, %v8144, %v8136
      %v8154 = vsel %vm3512, %v8146, %v8138
      %v8163 = vcombine.low %v8123, %v8127
      %v8164 = vcombine.high %v8123, %v8127
      %v8165 = vcombine.low %v8124, %v8128
      %v8166 = vcombine.high %v8124, %v8128
      %v8167 = vcombine.low %v8125, %v8129
      %v8168 = vcombine.high %v8125, %v8129
      %v8169 = vcombine.low %v8126, %v8130
      %v8170 = vcombine.high %v8126, %v8130
      %v8171 = vrot.slane %v8163, 6
      %v8172 = vrot.slane %v8163, 7
      %v8173 = vrot.slane %v8163, 1
      %v8174 = vrot.slane %v8164, 6
      %v8175 = vrot.slane %v8164, 7
      %v8176 = vrot.slane %v8164, 1
      %v8177 = vrot.slane %v8165, 6
      %v8178 = vrot.slane %v8165, 7
      %v8179 = vrot.slane %v8165, 1
      %v8180 = vrot.slane %v8166, 6
      %v8181 = vrot.slane %v8166, 7
      %v8182 = vrot.slane %v8166, 1
      %v8183 = vrot.slane %v8167, 6
      %v8184 = vrot.slane %v8167, 7
      %v8185 = vrot.slane %v8167, 1
      %v8186 = vrot.slane %v8168, 6
      %v8187 = vrot.slane %v8168, 7
      %v8188 = vrot.slane %v8168, 1
      %v8189 = vrot.slane %v8169, 6
      %v8190 = vrot.slane %v8169, 7
      %v8191 = vrot.slane %v8169, 1
      %v8192 = vrot.slane %v8170, 6
      %v8193 = vrot.slane %v8170, 7
      %v8194 = vrot.slane %v8170, 1
      %v8235 = vcombine.low %v8151, %v8147
      %v8236 = vcombine.high %v8151, %v8147
      %v8237 = vcombine.low %v8152, %v8148
      %v8238 = vcombine.high %v8152, %v8148
      %v8239 = vcombine.low %v8153, %v8149
      %v8240 = vcombine.high %v8153, %v8149
      %v8241 = vcombine.low %v8154, %v8150
      %v8242 = vcombine.high %v8154, %v8150
      %v8243 = vrot.slane %v8235, 6
      %v8244 = vrot.slane %v8235, 7
      %v8245 = vrot.slane %v8235, 1
      %v8246 = vrot.slane %v8236, 6
      %v8247 = vrot.slane %v8236, 7
      %v8248 = vrot.slane %v8236, 1
      %v8249 = vrot.slane %v8237, 6
      %v8250 = vrot.slane %v8237, 7
      %v8251 = vrot.slane %v8237, 1
      %v8252 = vrot.slane %v8238, 6
      %v8253 = vrot.slane %v8238, 7
      %v8254 = vrot.slane %v8238, 1
      %v8255 = vrot.slane %v8239, 6
      %v8256 = vrot.slane %v8239, 7
      %v8257 = vrot.slane %v8239, 1
      %v8258 = vrot.slane %v8240, 6
      %v8259 = vrot.slane %v8240, 7
      %v8260 = vrot.slane %v8240, 1
      %v8261 = vrot.slane %v8241, 6
      %v8262 = vrot.slane %v8241, 7
      %v8263 = vrot.slane %v8241, 1
      %v8264 = vrot.slane %v8242, 6
      %v8265 = vrot.slane %v8242, 7
      %v8266 = vrot.slane %v8242, 1
      %v8299 = vsel %vm2279, %v8171, %v8243
      %v8300 = vsel %vm2279, %v8172, %v8244
      %v8301 = vsel %vm2279, %v8163, %v8235
      %v8302 = vsel %vm2279, %v8173, %v8245
      %v8303 = vsel %vm2279, %v8174, %v8246
      %v8304 = vsel %vm2279, %v8175, %v8247
      %v8305 = vsel %vm2279, %v8164, %v8236
      %v8306 = vsel %vm2279, %v8176, %v8248
      %v8307 = vsel %vm2279, %v8177, %v8249
      %v8308 = vsel %vm2279, %v8178, %v8250
      %v8309 = vsel %vm2279, %v8165, %v8237
      %v8310 = vsel %vm2279, %v8179, %v8251
      %v8311 = vsel %vm2279, %v8180, %v8252
      %v8312 = vsel %vm2279, %v8181, %v8253
      %v8313 = vsel %vm2279, %v8166, %v8238
      %v8314 = vsel %vm2279, %v8182, %v8254
      %v8315 = vsel %vm2279, %v8183, %v8255
      %v8316 = vsel %vm2279, %v8184, %v8256
      %v8317 = vsel %vm2279, %v8167, %v8239
      %v8318 = vsel %vm2279, %v8185, %v8257
      %v8319 = vsel %vm2279, %v8186, %v8258
      %v8320 = vsel %vm2279, %v8187, %v8259
      %v8321 = vsel %vm2279, %v8168, %v8240
      %v8322 = vsel %vm2279, %v8188, %v8260
      %v8323 = vsel %vm2279, %v8189, %v8261
      %v8324 = vsel %vm2279, %v8190, %v8262
      %v8325 = vsel %vm2279, %v8169, %v8241
      %v8326 = vsel %vm2279, %v8191, %v8263
      %v8327 = vsel %vm2279, %v8192, %v8264
      %v8328 = vsel %vm2279, %v8193, %v8265
      %v8329 = vsel %vm2279, %v8170, %v8242
      %v8330 = vsel %vm2279, %v8194, %v8266
      %v8331 = vsel %vm7126, %v6881, %v6801
      %v8332 = vsel %vm7126, %v6882, %v6802
      %v8333 = vsel %vm7127, %v6883, %v6803
      %v8334 = vsel %vm7127, %v6884, %v6804
      %v8335 = vsel %vm7128, %v6885, %v6805
      %v8336 = vsel %vm7128, %v6886, %v6806
      %v8337 = vsel %vm7129, %v6887, %v6807
      %v8338 = vsel %vm7129, %v6888, %v6808
      %v8371 = vlaneseq
      %v8372 = vshrl.u32 %v8371, 7
      %v8373 = vsub.s32 2, %v8372
      %v8374 = vrot.slane %v8299, %v8373
      %v8375 = vlaneseq
      %v8376 = vshrl.u32 %v8375, 7
      %v8377 = vsub.s32 6, %v8376
      %v8378 = vrot.slane %v8299, %v8377
      %v8379 = vlaneseq
      %v8380 = vshrl.u32 %v8379, 7
      %v8381 = vsub.s32 2, %v8380
      %v8382 = vrot.slane %v8300, %v8381
      %v8383 = vlaneseq
      %v8384 = vshrl.u32 %v8383, 7
      %v8385 = vsub.s32 6, %v8384
      %v8386 = vrot.slane %v8300, %v8385
      %v8387 = vlaneseq
      %v8388 = vshrl.u32 %v8387, 7
      %v8389 = vsub.s32 2, %v8388
      %v8390 = vrot.slane %v8301, %v8389
      %v8391 = vlaneseq
      %v8392 = vshrl.u32 %v8391, 7
      %v8393 = vsub.s32 6, %v8392
      %v8394 = vrot.slane %v8301, %v8393
      %v8395 = vlaneseq
      %v8396 = vshrl.u32 %v8395, 7
      %v8397 = vsub.s32 2, %v8396
      %v8398 = vrot.slane %v8302, %v8397
      %v8399 = vlaneseq
      %v8400 = vshrl.u32 %v8399, 7
      %v8401 = vsub.s32 6, %v8400
      %v8402 = vrot.slane %v8302, %v8401
      %v8403 = vlaneseq
      %v8404 = vshrl.u32 %v8403, 7
      %v8405 = vsub.s32 2, %v8404
      %v8406 = vrot.slane %v8303, %v8405
      %v8407 = vlaneseq
      %v8408 = vshrl.u32 %v8407, 7
      %v8409 = vsub.s32 6, %v8408
      %v8410 = vrot.slane %v8303, %v8409
      %v8411 = vlaneseq
      %v8412 = vshrl.u32 %v8411, 7
      %v8413 = vsub.s32 2, %v8412
      %v8414 = vrot.slane %v8304, %v8413
      %v8415 = vlaneseq
      %v8416 = vshrl.u32 %v8415, 7
      %v8417 = vsub.s32 6, %v8416
      %v8418 = vrot.slane %v8304, %v8417
      %v8419 = vlaneseq
      %v8420 = vshrl.u32 %v8419, 7
      %v8421 = vsub.s32 2, %v8420
      %v8422 = vrot.slane %v8305, %v8421
      %v8423 = vlaneseq
      %v8424 = vshrl.u32 %v8423, 7
      %v8425 = vsub.s32 6, %v8424
      %v8426 = vrot.slane %v8305, %v8425
      %v8427 = vlaneseq
      %v8428 = vshrl.u32 %v8427, 7
      %v8429 = vsub.s32 2, %v8428
      %v8430 = vrot.slane %v8306, %v8429
      %v8431 = vlaneseq
      %v8432 = vshrl.u32 %v8431, 7
      %v8433 = vsub.s32 6, %v8432
      %v8434 = vrot.slane %v8306, %v8433
      %v8435 = vlaneseq
      %v8436 = vshrl.u32 %v8435, 7
      %v8437 = vsub.s32 2, %v8436
      %v8438 = vrot.slane %v8307, %v8437
      %v8439 = vlaneseq
      %v8440 = vshrl.u32 %v8439, 7
      %v8441 = vsub.s32 6, %v8440
      %v8442 = vrot.slane %v8307, %v8441
      %v8443 = vlaneseq
      %v8444 = vshrl.u32 %v8443, 7
      %v8445 = vsub.s32 2, %v8444
      %v8446 = vrot.slane %v8308, %v8445
      %v8447 = vlaneseq
      %v8448 = vshrl.u32 %v8447, 7
      %v8449 = vsub.s32 6, %v8448
      %v8450 = vrot.slane %v8308, %v8449
      %v8451 = vlaneseq
      %v8452 = vshrl.u32 %v8451, 7
      %v8453 = vsub.s32 2, %v8452
      %v8454 = vrot.slane %v8309, %v8453
      %v8455 = vlaneseq
      %v8456 = vshrl.u32 %v8455, 7
      %v8457 = vsub.s32 6, %v8456
      %v8458 = vrot.slane %v8309, %v8457
      %v8459 = vlaneseq
      %v8460 = vshrl.u32 %v8459, 7
      %v8461 = vsub.s32 2, %v8460
      %v8462 = vrot.slane %v8310, %v8461
      %v8463 = vlaneseq
      %v8464 = vshrl.u32 %v8463, 7
      %v8465 = vsub.s32 6, %v8464
      %v8466 = vrot.slane %v8310, %v8465
      %v8467 = vlaneseq
      %v8468 = vshrl.u32 %v8467, 7
      %v8469 = vsub.s32 2, %v8468
      %v8470 = vrot.slane %v8311, %v8469
      %v8471 = vlaneseq
      %v8472 = vshrl.u32 %v8471, 7
      %v8473 = vsub.s32 6, %v8472
      %v8474 = vrot.slane %v8311, %v8473
      %v8475 = vlaneseq
      %v8476 = vshrl.u32 %v8475, 7
      %v8477 = vsub.s32 2, %v8476
      %v8478 = vrot.slane %v8312, %v8477
      %v8479 = vlaneseq
      %v8480 = vshrl.u32 %v8479, 7
      %v8481 = vsub.s32 6, %v8480
      %v8482 = vrot.slane %v8312, %v8481
      %v8483 = vlaneseq
      %v8484 = vshrl.u32 %v8483, 7
      %v8485 = vsub.s32 2, %v8484
      %v8486 = vrot.slane %v8313, %v8485
      %v8487 = vlaneseq
      %v8488 = vshrl.u32 %v8487, 7
      %v8489 = vsub.s32 6, %v8488
      %v8490 = vrot.slane %v8313, %v8489
      %v8491 = vlaneseq
      %v8492 = vshrl.u32 %v8491, 7
      %v8493 = vsub.s32 2, %v8492
      %v8494 = vrot.slane %v8314, %v8493
      %v8495 = vlaneseq
      %v8496 = vshrl.u32 %v8495, 7
      %v8497 = vsub.s32 6, %v8496
      %v8498 = vrot.slane %v8314, %v8497
      %v8499 = vlaneseq
      %v8500 = vshrl.u32 %v8499, 7
      %v8501 = vsub.s32 2, %v8500
      %v8502 = vrot.slane %v8315, %v8501
      %v8503 = vlaneseq
      %v8504 = vshrl.u32 %v8503, 7
      %v8505 = vsub.s32 6, %v8504
      %v8506 = vrot.slane %v8315, %v8505
      %v8507 = vlaneseq
      %v8508 = vshrl.u32 %v8507, 7
      %v8509 = vsub.s32 2, %v8508
      %v8510 = vrot.slane %v8316, %v8509
      %v8511 = vlaneseq
      %v8512 = vshrl.u32 %v8511, 7
      %v8513 = vsub.s32 6, %v8512
      %v8514 = vrot.slane %v8316, %v8513
      %v8515 = vlaneseq
      %v8516 = vshrl.u32 %v8515, 7
      %v8517 = vsub.s32 2, %v8516
      %v8518 = vrot.slane %v8317, %v8517
      %v8519 = vlaneseq
      %v8520 = vshrl.u32 %v8519, 7
      %v8521 = vsub.s32 6, %v8520
      %v8522 = vrot.slane %v8317, %v8521
      %v8523 = vlaneseq
      %v8524 = vshrl.u32 %v8523, 7
      %v8525 = vsub.s32 2, %v8524
      %v8526 = vrot.slane %v8318, %v8525
      %v8527 = vlaneseq
      %v8528 = vshrl.u32 %v8527, 7
      %v8529 = vsub.s32 6, %v8528
      %v8530 = vrot.slane %v8318, %v8529
      %v8531 = vlaneseq
      %v8532 = vshrl.u32 %v8531, 7
      %v8533 = vsub.s32 2, %v8532
      %v8534 = vrot.slane %v8319, %v8533
      %v8535 = vlaneseq
      %v8536 = vshrl.u32 %v8535, 7
      %v8537 = vsub.s32 6, %v8536
      %v8538 = vrot.slane %v8319, %v8537
      %v8539 = vlaneseq
      %v8540 = vshrl.u32 %v8539, 7
      %v8541 = vsub.s32 2, %v8540
      %v8542 = vrot.slane %v8320, %v8541
      %v8543 = vlaneseq
      %v8544 = vshrl.u32 %v8543, 7
      %v8545 = vsub.s32 6, %v8544
      %v8546 = vrot.slane %v8320, %v8545
      %v8547 = vlaneseq
      %v8548 = vshrl.u32 %v8547, 7
      %v8549 = vsub.s32 2, %v8548
      %v8550 = vrot.slane %v8321, %v8549
      %v8551 = vlaneseq
      %v8552 = vshrl.u32 %v8551, 7
      %v8553 = vsub.s32 6, %v8552
      %v8554 = vrot.slane %v8321, %v8553
      %v8555 = vlaneseq
      %v8556 = vshrl.u32 %v8555, 7
      %v8557 = vsub.s32 2, %v8556
      %v8558 = vrot.slane %v8322, %v8557
      %v8559 = vlaneseq
      %v8560 = vshrl.u32 %v8559, 7
      %v8561 = vsub.s32 6, %v8560
      %v8562 = vrot.slane %v8322, %v8561
      %v8563 = vlaneseq
      %v8564 = vshrl.u32 %v8563, 7
      %v8565 = vsub.s32 2, %v8564
      %v8566 = vrot.slane %v8323, %v8565
      %v8567 = vlaneseq
      %v8568 = vshrl.u32 %v8567, 7
      %v8569 = vsub.s32 6, %v8568
      %v8570 = vrot.slane %v8323, %v8569
      %v8571 = vlaneseq
      %v8572 = vshrl.u32 %v8571, 7
      %v8573 = vsub.s32 2, %v8572
      %v8574 = vrot.slane %v8324, %v8573
      %v8575 = vlaneseq
      %v8576 = vshrl.u32 %v8575, 7
      %v8577 = vsub.s32 6, %v8576
      %v8578 = vrot.slane %v8324, %v8577
      %v8579 = vlaneseq
      %v8580 = vshrl.u32 %v8579, 7
      %v8581 = vsub.s32 2, %v8580
      %v8582 = vrot.slane %v8325, %v8581
      %v8583 = vlaneseq
      %v8584 = vshrl.u32 %v8583, 7
      %v8585 = vsub.s32 6, %v8584
      %v8586 = vrot.slane %v8325, %v8585
      %v8587 = vlaneseq
      %v8588 = vshrl.u32 %v8587, 7
      %v8589 = vsub.s32 2, %v8588
      %v8590 = vrot.slane %v8326, %v8589
      %v8591 = vlaneseq
      %v8592 = vshrl.u32 %v8591, 7
      %v8593 = vsub.s32 6, %v8592
      %v8594 = vrot.slane %v8326, %v8593
      %v8595 = vlaneseq
      %v8596 = vshrl.u32 %v8595, 7
      %v8597 = vsub.s32 2, %v8596
      %v8598 = vrot.slane %v8327, %v8597
      %v8599 = vlaneseq
      %v8600 = vshrl.u32 %v8599, 7
      %v8601 = vsub.s32 6, %v8600
      %v8602 = vrot.slane %v8327, %v8601
      %v8603 = vlaneseq
      %v8604 = vshrl.u32 %v8603, 7
      %v8605 = vsub.s32 2, %v8604
      %v8606 = vrot.slane %v8328, %v8605
      %v8607 = vlaneseq
      %v8608 = vshrl.u32 %v8607, 7
      %v8609 = vsub.s32 6, %v8608
      %v8610 = vrot.slane %v8328, %v8609
      %v8611 = vlaneseq
      %v8612 = vshrl.u32 %v8611, 7
      %v8613 = vsub.s32 2, %v8612
      %v8614 = vrot.slane %v8329, %v8613
      %v8615 = vlaneseq
      %v8616 = vshrl.u32 %v8615, 7
      %v8617 = vsub.s32 6, %v8616
      %v8618 = vrot.slane %v8329, %v8617
      %v8619 = vlaneseq
      %v8620 = vshrl.u32 %v8619, 7
      %v8621 = vsub.s32 2, %v8620
      %v8622 = vrot.slane %v8330, %v8621
      %v8623 = vlaneseq
      %v8624 = vshrl.u32 %v8623, 7
      %v8625 = vsub.s32 6, %v8624
      %v8626 = vrot.slane %v8330, %v8625
      %v8627 = vsel %vm3065, %v8382, %v8374
      %v8628 = vsel %vm3067, %v8390, %v8627
      %v8629 = vsel %vm3069, %v8398, %v8628
      %v8630 = vsel %vm3071, %v8406, %v8629
      %v8631 = vsel %vm3073, %v8414, %v8630
      %v8632 = vsel %vm3075, %v8422, %v8631
      %v8633 = vsel %vm3077, %v8430, %v8632
      %v8634 = vsel %vm3065, %v8386, %v8378
      %v8635 = vsel %vm3067, %v8394, %v8634
      %v8636 = vsel %vm3069, %v8402, %v8635
      %v8637 = vsel %vm3071, %v8410, %v8636
      %v8638 = vsel %vm3073, %v8418, %v8637
      %v8639 = vsel %vm3075, %v8426, %v8638
      %v8640 = vsel %vm3077, %v8434, %v8639
      %v8641 = vsel %vm3065, %v8446, %v8438
      %v8642 = vsel %vm3067, %v8454, %v8641
      %v8643 = vsel %vm3069, %v8462, %v8642
      %v8644 = vsel %vm3071, %v8470, %v8643
      %v8645 = vsel %vm3073, %v8478, %v8644
      %v8646 = vsel %vm3075, %v8486, %v8645
      %v8647 = vsel %vm3077, %v8494, %v8646
      %v8648 = vsel %vm3065, %v8450, %v8442
      %v8649 = vsel %vm3067, %v8458, %v8648
      %v8650 = vsel %vm3069, %v8466, %v8649
      %v8651 = vsel %vm3071, %v8474, %v8650
      %v8652 = vsel %vm3073, %v8482, %v8651
      %v8653 = vsel %vm3075, %v8490, %v8652
      %v8654 = vsel %vm3077, %v8498, %v8653
      %v8655 = vsel %vm3065, %v8510, %v8502
      %v8656 = vsel %vm3067, %v8518, %v8655
      %v8657 = vsel %vm3069, %v8526, %v8656
      %v8658 = vsel %vm3071, %v8534, %v8657
      %v8659 = vsel %vm3073, %v8542, %v8658
      %v8660 = vsel %vm3075, %v8550, %v8659
      %v8661 = vsel %vm3077, %v8558, %v8660
      %v8662 = vsel %vm3065, %v8514, %v8506
      %v8663 = vsel %vm3067, %v8522, %v8662
      %v8664 = vsel %vm3069, %v8530, %v8663
      %v8665 = vsel %vm3071, %v8538, %v8664
      %v8666 = vsel %vm3073, %v8546, %v8665
      %v8667 = vsel %vm3075, %v8554, %v8666
      %v8668 = vsel %vm3077, %v8562, %v8667
      %v8669 = vsel %vm3065, %v8574, %v8566
      %v8670 = vsel %vm3067, %v8582, %v8669
      %v8671 = vsel %vm3069, %v8590, %v8670
      %v8672 = vsel %vm3071, %v8598, %v8671
      %v8673 = vsel %vm3073, %v8606, %v8672
      %v8674 = vsel %vm3075, %v8614, %v8673
      %v8675 = vsel %vm3077, %v8622, %v8674
      %v8676 = vsel %vm3065, %v8578, %v8570
      %v8677 = vsel %vm3067, %v8586, %v8676
      %v8678 = vsel %vm3069, %v8594, %v8677
      %v8679 = vsel %vm3071, %v8602, %v8678
      %v8680 = vsel %vm3073, %v8610, %v8679
      %v8681 = vsel %vm3075, %v8618, %v8680
      %v8682 = vsel %vm3077, %v8626, %v8681
      %v8691 = vsel %vm7150, %v8633, %v8331
      %v8692 = vsel %vm7150, %v8640, %v8332
      %v8693 = vsel %vm7151, %v8647, %v8333
      %v8694 = vsel %vm7151, %v8654, %v8334
      %v8695 = vsel %vm7152, %v8661, %v8335
      %v8696 = vsel %vm7152, %v8668, %v8336
      %v8697 = vsel %vm7153, %v8675, %v8337
      %v8698 = vsel %vm7153, %v8682, %v8338
      %8699 = vrot.lane.b32.xlu0 %v6801, 15
      %v8700 = vpop.permute.xlu0 %8699
      %8701 = vrot.lane.b32.xlu0 %v6803, 15
      %v8702 = vpop.permute.xlu0 %8701
      %8703 = vrot.lane.b32.xlu0 %v6805, 15
      %v8704 = vpop.permute.xlu0 %8703
      %8705 = vrot.lane.b32.xlu0 %v6807, 15
      %v8706 = vpop.permute.xlu0 %8705
      %8707 = vrot.lane.b32.xlu0 %v6802, 15
      %v8708 = vpop.permute.xlu0 %8707
      %8709 = vrot.lane.b32.xlu0 %v6804, 15
      %v8710 = vpop.permute.xlu0 %8709
      %8711 = vrot.lane.b32.xlu0 %v6806, 15
      %v8712 = vpop.permute.xlu0 %8711
      %8713 = vrot.lane.b32.xlu0 %v6808, 15
      %v8714 = vpop.permute.xlu0 %8713
      %v8715 = vsel %vm7530, %v8700, %v8708
      %v8716 = vsel %vm7530, %v8702, %v8710
      %v8717 = vsel %vm7530, %v8704, %v8712
      %v8718 = vsel %vm7530, %v8706, %v8714
      %v8719 = vsel %vm7530, %v8708, %v8700
      %v8720 = vsel %vm7530, %v8710, %v8702
      %v8721 = vsel %vm7530, %v8712, %v8704
      %v8722 = vsel %vm7530, %v8714, %v8706
      %8723 = vrot.lane.b32.xlu0 %v6801, 127
      %v8724 = vpop.permute.xlu0 %8723
      %8725 = vrot.lane.b32.xlu0 %v6803, 127
      %v8726 = vpop.permute.xlu0 %8725
      %8727 = vrot.lane.b32.xlu0 %v6805, 127
      %v8728 = vpop.permute.xlu0 %8727
      %8729 = vrot.lane.b32.xlu0 %v6807, 127
      %v8730 = vpop.permute.xlu0 %8729
      %8731 = vrot.lane.b32.xlu0 %v6802, 127
      %v8732 = vpop.permute.xlu0 %8731
      %8733 = vrot.lane.b32.xlu0 %v6804, 127
      %v8734 = vpop.permute.xlu0 %8733
      %8735 = vrot.lane.b32.xlu0 %v6806, 127
      %v8736 = vpop.permute.xlu0 %8735
      %8737 = vrot.lane.b32.xlu0 %v6808, 127
      %v8738 = vpop.permute.xlu0 %8737
      %v8739 = vsel %vm3897, %v8724, %v8732
      %v8740 = vsel %vm3897, %v8726, %v8734
      %v8741 = vsel %vm3897, %v8728, %v8736
      %v8742 = vsel %vm3897, %v8730, %v8738
      %v8743 = vsel %vm3897, %v8732, %v8724
      %v8744 = vsel %vm3897, %v8734, %v8726
      %v8745 = vsel %vm3897, %v8736, %v8728
      %v8746 = vsel %vm3897, %v8738, %v8730
      %v8755 = vcombine.low %v8719, %v8715
      %v8756 = vcombine.high %v8719, %v8715
      %v8757 = vcombine.low %v8720, %v8716
      %v8758 = vcombine.high %v8720, %v8716
      %v8759 = vcombine.low %v8721, %v8717
      %v8760 = vcombine.high %v8721, %v8717
      %v8761 = vcombine.low %v8722, %v8718
      %v8762 = vcombine.high %v8722, %v8718
      %v8763 = vrot.slane %v8755, 5
      %v8764 = vrot.slane %v8755, 6
      %v8765 = vrot.slane %v8755, 7
      %v8766 = vrot.slane %v8756, 5
      %v8767 = vrot.slane %v8756, 6
      %v8768 = vrot.slane %v8756, 7
      %v8769 = vrot.slane %v8757, 5
      %v8770 = vrot.slane %v8757, 6
      %v8771 = vrot.slane %v8757, 7
      %v8772 = vrot.slane %v8758, 5
      %v8773 = vrot.slane %v8758, 6
      %v8774 = vrot.slane %v8758, 7
      %v8775 = vrot.slane %v8759, 5
      %v8776 = vrot.slane %v8759, 6
      %v8777 = vrot.slane %v8759, 7
      %v8778 = vrot.slane %v8760, 5
      %v8779 = vrot.slane %v8760, 6
      %v8780 = vrot.slane %v8760, 7
      %v8781 = vrot.slane %v8761, 5
      %v8782 = vrot.slane %v8761, 6
      %v8783 = vrot.slane %v8761, 7
      %v8784 = vrot.slane %v8762, 5
      %v8785 = vrot.slane %v8762, 6
      %v8786 = vrot.slane %v8762, 7
      %v8827 = vcombine.low %v8739, %v8743
      %v8828 = vcombine.high %v8739, %v8743
      %v8829 = vcombine.low %v8740, %v8744
      %v8830 = vcombine.high %v8740, %v8744
      %v8831 = vcombine.low %v8741, %v8745
      %v8832 = vcombine.high %v8741, %v8745
      %v8833 = vcombine.low %v8742, %v8746
      %v8834 = vcombine.high %v8742, %v8746
      %v8835 = vrot.slane %v8827, 5
      %v8836 = vrot.slane %v8827, 6
      %v8837 = vrot.slane %v8827, 7
      %v8838 = vrot.slane %v8828, 5
      %v8839 = vrot.slane %v8828, 6
      %v8840 = vrot.slane %v8828, 7
      %v8841 = vrot.slane %v8829, 5
      %v8842 = vrot.slane %v8829, 6
      %v8843 = vrot.slane %v8829, 7
      %v8844 = vrot.slane %v8830, 5
      %v8845 = vrot.slane %v8830, 6
      %v8846 = vrot.slane %v8830, 7
      %v8847 = vrot.slane %v8831, 5
      %v8848 = vrot.slane %v8831, 6
      %v8849 = vrot.slane %v8831, 7
      %v8850 = vrot.slane %v8832, 5
      %v8851 = vrot.slane %v8832, 6
      %v8852 = vrot.slane %v8832, 7
      %v8853 = vrot.slane %v8833, 5
      %v8854 = vrot.slane %v8833, 6
      %v8855 = vrot.slane %v8833, 7
      %v8856 = vrot.slane %v8834, 5
      %v8857 = vrot.slane %v8834, 6
      %v8858 = vrot.slane %v8834, 7
      %v8891 = vsel %vm2279, %v8763, %v8835
      %v8892 = vsel %vm2279, %v8764, %v8836
      %v8893 = vsel %vm2279, %v8765, %v8837
      %v8894 = vsel %vm2279, %v8755, %v8827
      %v8895 = vsel %vm2279, %v8766, %v8838
      %v8896 = vsel %vm2279, %v8767, %v8839
      %v8897 = vsel %vm2279, %v8768, %v8840
      %v8898 = vsel %vm2279, %v8756, %v8828
      %v8899 = vsel %vm2279, %v8769, %v8841
      %v8900 = vsel %vm2279, %v8770, %v8842
      %v8901 = vsel %vm2279, %v8771, %v8843
      %v8902 = vsel %vm2279, %v8757, %v8829
      %v8903 = vsel %vm2279, %v8772, %v8844
      %v8904 = vsel %vm2279, %v8773, %v8845
      %v8905 = vsel %vm2279, %v8774, %v8846
      %v8906 = vsel %vm2279, %v8758, %v8830
      %v8907 = vsel %vm2279, %v8775, %v8847
      %v8908 = vsel %vm2279, %v8776, %v8848
      %v8909 = vsel %vm2279, %v8777, %v8849
      %v8910 = vsel %vm2279, %v8759, %v8831
      %v8911 = vsel %vm2279, %v8778, %v8850
      %v8912 = vsel %vm2279, %v8779, %v8851
      %v8913 = vsel %vm2279, %v8780, %v8852
      %v8914 = vsel %vm2279, %v8760, %v8832
      %v8915 = vsel %vm2279, %v8781, %v8853
      %v8916 = vsel %vm2279, %v8782, %v8854
      %v8917 = vsel %vm2279, %v8783, %v8855
      %v8918 = vsel %vm2279, %v8761, %v8833
      %v8919 = vsel %vm2279, %v8784, %v8856
      %v8920 = vsel %vm2279, %v8785, %v8857
      %v8921 = vsel %vm2279, %v8786, %v8858
      %v8922 = vsel %vm2279, %v8762, %v8834
      %v8923 = vsel %vm7150, %v6801, %v6881
      %v8924 = vsel %vm7150, %v6802, %v6882
      %v8925 = vsel %vm7151, %v6803, %v6883
      %v8926 = vsel %vm7151, %v6804, %v6884
      %v8927 = vsel %vm7152, %v6805, %v6885
      %v8928 = vsel %vm7152, %v6806, %v6886
      %v8929 = vsel %vm7153, %v6807, %v6887
      %v8930 = vsel %vm7153, %v6808, %v6888
      %v8963 = vlaneseq
      %v8964 = vshrl.u32 %v8963, 7
      %v8965 = vsub.s32 3, %v8964
      %v8966 = vrot.slane %v8891, %v8965
      %v8967 = vlaneseq
      %v8968 = vshrl.u32 %v8967, 7
      %v8969 = vsub.s32 7, %v8968
      %v8970 = vrot.slane %v8891, %v8969
      %v8971 = vlaneseq
      %v8972 = vshrl.u32 %v8971, 7
      %v8973 = vsub.s32 3, %v8972
      %v8974 = vrot.slane %v8892, %v8973
      %v8975 = vlaneseq
      %v8976 = vshrl.u32 %v8975, 7
      %v8977 = vsub.s32 7, %v8976
      %v8978 = vrot.slane %v8892, %v8977
      %v8979 = vlaneseq
      %v8980 = vshrl.u32 %v8979, 7
      %v8981 = vsub.s32 3, %v8980
      %v8982 = vrot.slane %v8893, %v8981
      %v8983 = vlaneseq
      %v8984 = vshrl.u32 %v8983, 7
      %v8985 = vsub.s32 7, %v8984
      %v8986 = vrot.slane %v8893, %v8985
      %v8987 = vlaneseq
      %v8988 = vshrl.u32 %v8987, 7
      %v8989 = vsub.s32 3, %v8988
      %v8990 = vrot.slane %v8894, %v8989
      %v8991 = vlaneseq
      %v8992 = vshrl.u32 %v8991, 7
      %v8993 = vsub.s32 7, %v8992
      %v8994 = vrot.slane %v8894, %v8993
      %v8995 = vlaneseq
      %v8996 = vshrl.u32 %v8995, 7
      %v8997 = vsub.s32 3, %v8996
      %v8998 = vrot.slane %v8895, %v8997
      %v8999 = vlaneseq
      %v9000 = vshrl.u32 %v8999, 7
      %v9001 = vsub.s32 7, %v9000
      %v9002 = vrot.slane %v8895, %v9001
      %v9003 = vlaneseq
      %v9004 = vshrl.u32 %v9003, 7
      %v9005 = vsub.s32 3, %v9004
      %v9006 = vrot.slane %v8896, %v9005
      %v9007 = vlaneseq
      %v9008 = vshrl.u32 %v9007, 7
      %v9009 = vsub.s32 7, %v9008
      %v9010 = vrot.slane %v8896, %v9009
      %v9011 = vlaneseq
      %v9012 = vshrl.u32 %v9011, 7
      %v9013 = vsub.s32 3, %v9012
      %v9014 = vrot.slane %v8897, %v9013
      %v9015 = vlaneseq
      %v9016 = vshrl.u32 %v9015, 7
      %v9017 = vsub.s32 7, %v9016
      %v9018 = vrot.slane %v8897, %v9017
      %v9019 = vlaneseq
      %v9020 = vshrl.u32 %v9019, 7
      %v9021 = vsub.s32 3, %v9020
      %v9022 = vrot.slane %v8898, %v9021
      %v9023 = vlaneseq
      %v9024 = vshrl.u32 %v9023, 7
      %v9025 = vsub.s32 7, %v9024
      %v9026 = vrot.slane %v8898, %v9025
      %v9027 = vlaneseq
      %v9028 = vshrl.u32 %v9027, 7
      %v9029 = vsub.s32 3, %v9028
      %v9030 = vrot.slane %v8899, %v9029
      %v9031 = vlaneseq
      %v9032 = vshrl.u32 %v9031, 7
      %v9033 = vsub.s32 7, %v9032
      %v9034 = vrot.slane %v8899, %v9033
      %v9035 = vlaneseq
      %v9036 = vshrl.u32 %v9035, 7
      %v9037 = vsub.s32 3, %v9036
      %v9038 = vrot.slane %v8900, %v9037
      %v9039 = vlaneseq
      %v9040 = vshrl.u32 %v9039, 7
      %v9041 = vsub.s32 7, %v9040
      %v9042 = vrot.slane %v8900, %v9041
      %v9043 = vlaneseq
      %v9044 = vshrl.u32 %v9043, 7
      %v9045 = vsub.s32 3, %v9044
      %v9046 = vrot.slane %v8901, %v9045
      %v9047 = vlaneseq
      %v9048 = vshrl.u32 %v9047, 7
      %v9049 = vsub.s32 7, %v9048
      %v9050 = vrot.slane %v8901, %v9049
      %v9051 = vlaneseq
      %v9052 = vshrl.u32 %v9051, 7
      %v9053 = vsub.s32 3, %v9052
      %v9054 = vrot.slane %v8902, %v9053
      %v9055 = vlaneseq
      %v9056 = vshrl.u32 %v9055, 7
      %v9057 = vsub.s32 7, %v9056
      %v9058 = vrot.slane %v8902, %v9057
      %v9059 = vlaneseq
      %v9060 = vshrl.u32 %v9059, 7
      %v9061 = vsub.s32 3, %v9060
      %v9062 = vrot.slane %v8903, %v9061
      %v9063 = vlaneseq
      %v9064 = vshrl.u32 %v9063, 7
      %v9065 = vsub.s32 7, %v9064
      %v9066 = vrot.slane %v8903, %v9065
      %v9067 = vlaneseq
      %v9068 = vshrl.u32 %v9067, 7
      %v9069 = vsub.s32 3, %v9068
      %v9070 = vrot.slane %v8904, %v9069
      %v9071 = vlaneseq
      %v9072 = vshrl.u32 %v9071, 7
      %v9073 = vsub.s32 7, %v9072
      %v9074 = vrot.slane %v8904, %v9073
      %v9075 = vlaneseq
      %v9076 = vshrl.u32 %v9075, 7
      %v9077 = vsub.s32 3, %v9076
      %v9078 = vrot.slane %v8905, %v9077
      %v9079 = vlaneseq
      %v9080 = vshrl.u32 %v9079, 7
      %v9081 = vsub.s32 7, %v9080
      %v9082 = vrot.slane %v8905, %v9081
      %v9083 = vlaneseq
      %v9084 = vshrl.u32 %v9083, 7
      %v9085 = vsub.s32 3, %v9084
      %v9086 = vrot.slane %v8906, %v9085
      %v9087 = vlaneseq
      %v9088 = vshrl.u32 %v9087, 7
      %v9089 = vsub.s32 7, %v9088
      %v9090 = vrot.slane %v8906, %v9089
      %v9091 = vlaneseq
      %v9092 = vshrl.u32 %v9091, 7
      %v9093 = vsub.s32 3, %v9092
      %v9094 = vrot.slane %v8907, %v9093
      %v9095 = vlaneseq
      %v9096 = vshrl.u32 %v9095, 7
      %v9097 = vsub.s32 7, %v9096
      %v9098 = vrot.slane %v8907, %v9097
      %v9099 = vlaneseq
      %v9100 = vshrl.u32 %v9099, 7
      %v9101 = vsub.s32 3, %v9100
      %v9102 = vrot.slane %v8908, %v9101
      %v9103 = vlaneseq
      %v9104 = vshrl.u32 %v9103, 7
      %v9105 = vsub.s32 7, %v9104
      %v9106 = vrot.slane %v8908, %v9105
      %v9107 = vlaneseq
      %v9108 = vshrl.u32 %v9107, 7
      %v9109 = vsub.s32 3, %v9108
      %v9110 = vrot.slane %v8909, %v9109
      %v9111 = vlaneseq
      %v9112 = vshrl.u32 %v9111, 7
      %v9113 = vsub.s32 7, %v9112
      %v9114 = vrot.slane %v8909, %v9113
      %v9115 = vlaneseq
      %v9116 = vshrl.u32 %v9115, 7
      %v9117 = vsub.s32 3, %v9116
      %v9118 = vrot.slane %v8910, %v9117
      %v9119 = vlaneseq
      %v9120 = vshrl.u32 %v9119, 7
      %v9121 = vsub.s32 7, %v9120
      %v9122 = vrot.slane %v8910, %v9121
      %v9123 = vlaneseq
      %v9124 = vshrl.u32 %v9123, 7
      %v9125 = vsub.s32 3, %v9124
      %v9126 = vrot.slane %v8911, %v9125
      %v9127 = vlaneseq
      %v9128 = vshrl.u32 %v9127, 7
      %v9129 = vsub.s32 7, %v9128
      %v9130 = vrot.slane %v8911, %v9129
      %v9131 = vlaneseq
      %v9132 = vshrl.u32 %v9131, 7
      %v9133 = vsub.s32 3, %v9132
      %v9134 = vrot.slane %v8912, %v9133
      %v9135 = vlaneseq
      %v9136 = vshrl.u32 %v9135, 7
      %v9137 = vsub.s32 7, %v9136
      %v9138 = vrot.slane %v8912, %v9137
      %v9139 = vlaneseq
      %v9140 = vshrl.u32 %v9139, 7
      %v9141 = vsub.s32 3, %v9140
      %v9142 = vrot.slane %v8913, %v9141
      %v9143 = vlaneseq
      %v9144 = vshrl.u32 %v9143, 7
      %v9145 = vsub.s32 7, %v9144
      %v9146 = vrot.slane %v8913, %v9145
      %v9147 = vlaneseq
      %v9148 = vshrl.u32 %v9147, 7
      %v9149 = vsub.s32 3, %v9148
      %v9150 = vrot.slane %v8914, %v9149
      %v9151 = vlaneseq
      %v9152 = vshrl.u32 %v9151, 7
      %v9153 = vsub.s32 7, %v9152
      %v9154 = vrot.slane %v8914, %v9153
      %v9155 = vlaneseq
      %v9156 = vshrl.u32 %v9155, 7
      %v9157 = vsub.s32 3, %v9156
      %v9158 = vrot.slane %v8915, %v9157
      %v9159 = vlaneseq
      %v9160 = vshrl.u32 %v9159, 7
      %v9161 = vsub.s32 7, %v9160
      %v9162 = vrot.slane %v8915, %v9161
      %v9163 = vlaneseq
      %v9164 = vshrl.u32 %v9163, 7
      %v9165 = vsub.s32 3, %v9164
      %v9166 = vrot.slane %v8916, %v9165
      %v9167 = vlaneseq
      %v9168 = vshrl.u32 %v9167, 7
      %v9169 = vsub.s32 7, %v9168
      %v9170 = vrot.slane %v8916, %v9169
      %v9171 = vlaneseq
      %v9172 = vshrl.u32 %v9171, 7
      %v9173 = vsub.s32 3, %v9172
      %v9174 = vrot.slane %v8917, %v9173
      %v9175 = vlaneseq
      %v9176 = vshrl.u32 %v9175, 7
      %v9177 = vsub.s32 7, %v9176
      %v9178 = vrot.slane %v8917, %v9177
      %v9179 = vlaneseq
      %v9180 = vshrl.u32 %v9179, 7
      %v9181 = vsub.s32 3, %v9180
      %v9182 = vrot.slane %v8918, %v9181
      %v9183 = vlaneseq
      %v9184 = vshrl.u32 %v9183, 7
      %v9185 = vsub.s32 7, %v9184
      %v9186 = vrot.slane %v8918, %v9185
      %v9187 = vlaneseq
      %v9188 = vshrl.u32 %v9187, 7
      %v9189 = vsub.s32 3, %v9188
      %v9190 = vrot.slane %v8919, %v9189
      %v9191 = vlaneseq
      %v9192 = vshrl.u32 %v9191, 7
      %v9193 = vsub.s32 7, %v9192
      %v9194 = vrot.slane %v8919, %v9193
      %v9195 = vlaneseq
      %v9196 = vshrl.u32 %v9195, 7
      %v9197 = vsub.s32 3, %v9196
      %v9198 = vrot.slane %v8920, %v9197
      %v9199 = vlaneseq
      %v9200 = vshrl.u32 %v9199, 7
      %v9201 = vsub.s32 7, %v9200
      %v9202 = vrot.slane %v8920, %v9201
      %v9203 = vlaneseq
      %v9204 = vshrl.u32 %v9203, 7
      %v9205 = vsub.s32 3, %v9204
      %v9206 = vrot.slane %v8921, %v9205
      %v9207 = vlaneseq
      %v9208 = vshrl.u32 %v9207, 7
      %v9209 = vsub.s32 7, %v9208
      %v9210 = vrot.slane %v8921, %v9209
      %v9211 = vlaneseq
      %v9212 = vshrl.u32 %v9211, 7
      %v9213 = vsub.s32 3, %v9212
      %v9214 = vrot.slane %v8922, %v9213
      %v9215 = vlaneseq
      %v9216 = vshrl.u32 %v9215, 7
      %v9217 = vsub.s32 7, %v9216
      %v9218 = vrot.slane %v8922, %v9217
      %v9219 = vsel %vm3065, %v8974, %v8966
      %v9220 = vsel %vm3067, %v8982, %v9219
      %v9221 = vsel %vm3069, %v8990, %v9220
      %v9222 = vsel %vm3071, %v8998, %v9221
      %v9223 = vsel %vm3073, %v9006, %v9222
      %v9224 = vsel %vm3075, %v9014, %v9223
      %v9225 = vsel %vm3077, %v9022, %v9224
      %v9226 = vsel %vm3065, %v8978, %v8970
      %v9227 = vsel %vm3067, %v8986, %v9226
      %v9228 = vsel %vm3069, %v8994, %v9227
      %v9229 = vsel %vm3071, %v9002, %v9228
      %v9230 = vsel %vm3073, %v9010, %v9229
      %v9231 = vsel %vm3075, %v9018, %v9230
      %v9232 = vsel %vm3077, %v9026, %v9231
      %v9233 = vsel %vm3065, %v9038, %v9030
      %v9234 = vsel %vm3067, %v9046, %v9233
      %v9235 = vsel %vm3069, %v9054, %v9234
      %v9236 = vsel %vm3071, %v9062, %v9235
      %v9237 = vsel %vm3073, %v9070, %v9236
      %v9238 = vsel %vm3075, %v9078, %v9237
      %v9239 = vsel %vm3077, %v9086, %v9238
      %v9240 = vsel %vm3065, %v9042, %v9034
      %v9241 = vsel %vm3067, %v9050, %v9240
      %v9242 = vsel %vm3069, %v9058, %v9241
      %v9243 = vsel %vm3071, %v9066, %v9242
      %v9244 = vsel %vm3073, %v9074, %v9243
      %v9245 = vsel %vm3075, %v9082, %v9244
      %v9246 = vsel %vm3077, %v9090, %v9245
      %v9247 = vsel %vm3065, %v9102, %v9094
      %v9248 = vsel %vm3067, %v9110, %v9247
      %v9249 = vsel %vm3069, %v9118, %v9248
      %v9250 = vsel %vm3071, %v9126, %v9249
      %v9251 = vsel %vm3073, %v9134, %v9250
      %v9252 = vsel %vm3075, %v9142, %v9251
      %v9253 = vsel %vm3077, %v9150, %v9252
      %v9254 = vsel %vm3065, %v9106, %v9098
      %v9255 = vsel %vm3067, %v9114, %v9254
      %v9256 = vsel %vm3069, %v9122, %v9255
      %v9257 = vsel %vm3071, %v9130, %v9256
      %v9258 = vsel %vm3073, %v9138, %v9257
      %v9259 = vsel %vm3075, %v9146, %v9258
      %v9260 = vsel %vm3077, %v9154, %v9259
      %v9261 = vsel %vm3065, %v9166, %v9158
      %v9262 = vsel %vm3067, %v9174, %v9261
      %v9263 = vsel %vm3069, %v9182, %v9262
      %v9264 = vsel %vm3071, %v9190, %v9263
      %v9265 = vsel %vm3073, %v9198, %v9264
      %v9266 = vsel %vm3075, %v9206, %v9265
      %v9267 = vsel %vm3077, %v9214, %v9266
      %v9268 = vsel %vm3065, %v9170, %v9162
      %v9269 = vsel %vm3067, %v9178, %v9268
      %v9270 = vsel %vm3069, %v9186, %v9269
      %v9271 = vsel %vm3071, %v9194, %v9270
      %v9272 = vsel %vm3073, %v9202, %v9271
      %v9273 = vsel %vm3075, %v9210, %v9272
      %v9274 = vsel %vm3077, %v9218, %v9273
      %v9283 = vsel %vm7126, %v9225, %v8923
      %v9284 = vsel %vm7126, %v9232, %v8924
      %v9285 = vsel %vm7127, %v9239, %v8925
      %v9286 = vsel %vm7127, %v9246, %v8926
      %v9287 = vsel %vm7128, %v9253, %v8927
      %v9288 = vsel %vm7128, %v9260, %v8928
      %v9289 = vsel %vm7129, %v9267, %v8929
      %v9290 = vsel %vm7129, %v9274, %v8930
      %v9291 = vld [vmem:[%s11] sm:$0xf]
      %v9292 = vld [vmem:[%s11 + $0x4] sm:$0xf]
      %v9293 = vld [vmem:[%s11 + $0x8] sm:$0xf]
      %v9294 = vld [vmem:[%s11 + $0xc] sm:$0xf]
      %v9295 = vpack.c.bf16 %v7508, %v7506
      %v9296 = vpack.c.bf16 %v7509, %v7507
      %v9297 = vpack.c.bf16 %v8101, %v8099
      %v9298 = vpack.c.bf16 %v8102, %v8100
      %v9299 = vpack.c.bf16 %v8693, %v8691
      %v9300 = vpack.c.bf16 %v8694, %v8692
      %v9301 = vpack.c.bf16 %v9285, %v9283
      %v9302 = vpack.c.bf16 %v9286, %v9284
      %v9303 = vpack.c.bf16 %v7512, %v7510
      %v9304 = vpack.c.bf16 %v7513, %v7511
      %v9305 = vpack.c.bf16 %v8105, %v8103
      %v9306 = vpack.c.bf16 %v8106, %v8104
      %v9307 = vpack.c.bf16 %v8697, %v8695
      %v9308 = vpack.c.bf16 %v8698, %v8696
      %v9309 = vpack.c.bf16 %v9289, %v9287
      %v9310 = vpack.c.bf16 %v9290, %v9288
      %v9311 = vld [vmem:[%s12] sm:$0xff]
      %v9312 = vld [vmem:[%s12 + $0x8] sm:$0xff]
      %v9313 = vld [vmem:[%s12 + $0x10] sm:$0xff]
      %v9314 = vld [vmem:[%s12 + $0x18] sm:$0xff]
      %9316 = vset.pattern.permute.xlu0 0
      %9317 = vperm.xlu0 %9316, %v9311
      %v9318 = vpop.permute.xlu0 %9317
      %9321 = vset.pattern.permute.xlu0 0
      %9322 = vperm.xlu0 %9321, %v9312
      %v9323 = vpop.permute.xlu0 %9322
      %9326 = vset.pattern.permute.xlu0 0
      %9327 = vperm.xlu0 %9326, %v9313
      %v9328 = vpop.permute.xlu0 %9327
      %9331 = vset.pattern.permute.xlu0 0
      %9332 = vperm.xlu0 %9331, %v9314
      %v9333 = vpop.permute.xlu0 %9332
      %v9339 = vunpack.c.l.b16 %v9291
      %v9340 = vunpack.c.l.b16 %v9292
      %v9341 = vunpack.c.l.b16 %v9293
      %v9342 = vunpack.c.l.b16 %v9294
      %v9343 = vpack.c.b16 %v9340, %v9339
      %v9344 = vpack.c.b16 %v9342, %v9341
      %v9346 = vsel %vm6378, %v9343, 0
      %v9349 = vsel %vm6378, %v9344, 0
      %9351 = vmatprep.subr.bf16.mxu0 0
      %9352 = vmatpush1.bf16.msra.mxu0 0
      %9353 = vmatprep.subr.bf16.mxu0 0
      %9354 = vmatpush1.bf16.msra.mxu0 0
      %9355 = vmatprep.subr.bf16.mxu0 0
      %9356 = vmatpush1.bf16.msra.mxu0 0
      %9357 = vmatprep.subr.bf16.mxu0 0
      %9358 = vmatpush1.bf16.msra.mxu0 0
      %9359 = vmatprep.subr.bf16.mxu0 0
      %9360 = vmatpush1.bf16.msra.mxu0 0
      %9361 = vmatprep.subr.bf16.mxu0 0
      %9362 = vmatpush1.bf16.msra.mxu0 0
      %9363 = vmatprep.subr.bf16.mxu0 %v9304
      %9364 = vmatpush1.bf16.msra.mxu0 %v9303
      %9365 = vmatprep.subr.bf16.mxu0 %v9296
      %9366 = vmatpush1.bf16.msra.mxu0 %v9295
      %9367 = vmatprep.subr.bf16.mxu0 0
      %9368 = vmatpush2.bf16.msra.mxu0 0
      %9369 = vmatprep.subr.bf16.mxu0 0
      %9370 = vmatpush2.bf16.msra.mxu0 0
      %9371 = vmatprep.subr.bf16.mxu0 0
      %9372 = vmatpush2.bf16.msra.mxu0 0
      %9373 = vmatprep.subr.bf16.mxu0 0
      %9374 = vmatpush2.bf16.msra.mxu0 0
      %9375 = vmatprep.subr.bf16.mxu0 0
      %9376 = vmatpush2.bf16.msra.mxu0 0
      %9377 = vmatprep.subr.bf16.mxu0 0
      %9378 = vmatpush2.bf16.msra.mxu0 0
      %9379 = vmatprep.subr.bf16.mxu0 0
      %9380 = vmatpush2.bf16.msra.mxu0 0
      %9381 = vmatprep.subr.bf16.mxu0 0
      %9382 = vmatpush2.bf16.msra.mxu0 0
      %9383 = vmatprep.mubr.bf16.mxu0 0
      %9384 = vmatmul.mubr.bf16.gmra.mxu0 %v9346
      %v9385 = vpop.f32.mrf.mxu0
      %v9386 = vadd.f32 %v9318, %v9385
      %v9387 = vpop.f32.mrf.mxu0
      %v9388 = vadd.f32 %v9318, %v9387
      %v9389 = vpop.f32.mrf.mxu0
      %v9390 = vadd.f32 %v9323, %v9389
      %v9391 = vpop.f32.mrf.mxu0
      %v9392 = vadd.f32 %v9323, %v9391
      %9393 = vmatprep.mubr.bf16.mxu0 0
      %9394 = vmatmul.mubr.bf16.gmra.mxu0 %v9349
      %v9395 = vpop.f32.mrf.mxu0
      %v9396 = vadd.f32 %v9328, %v9395
      %v9397 = vpop.f32.mrf.mxu0
      %v9398 = vadd.f32 %v9328, %v9397
      %v9399 = vpop.f32.mrf.mxu0
      %v9400 = vadd.f32 %v9333, %v9399
      %v9401 = vpop.f32.mrf.mxu0
      %v9402 = vadd.f32 %v9333, %v9401
      %9403 = vdwg.mxu0
      %9404 = vmatprep.subr.bf16.mxu0 0
      %9405 = vmatpush1.bf16.msra.mxu0 0
      %9406 = vmatprep.subr.bf16.mxu0 0
      %9407 = vmatpush1.bf16.msra.mxu0 0
      %9408 = vmatprep.subr.bf16.mxu0 0
      %9409 = vmatpush1.bf16.msra.mxu0 0
      %9410 = vmatprep.subr.bf16.mxu0 0
      %9411 = vmatpush1.bf16.msra.mxu0 0
      %9412 = vmatprep.subr.bf16.mxu0 0
      %9413 = vmatpush1.bf16.msra.mxu0 0
      %9414 = vmatprep.subr.bf16.mxu0 0
      %9415 = vmatpush1.bf16.msra.mxu0 0
      %9416 = vmatprep.subr.bf16.mxu0 %v9306
      %9417 = vmatpush1.bf16.msra.mxu0 %v9305
      %9418 = vmatprep.subr.bf16.mxu0 %v9298
      %9419 = vmatpush1.bf16.msra.mxu0 %v9297
      %9420 = vmatprep.subr.bf16.mxu0 0
      %9421 = vmatpush2.bf16.msra.mxu0 0
      %9422 = vmatprep.subr.bf16.mxu0 0
      %9423 = vmatpush2.bf16.msra.mxu0 0
      %9424 = vmatprep.subr.bf16.mxu0 0
      %9425 = vmatpush2.bf16.msra.mxu0 0
      %9426 = vmatprep.subr.bf16.mxu0 0
      %9427 = vmatpush2.bf16.msra.mxu0 0
      %9428 = vmatprep.subr.bf16.mxu0 0
      %9429 = vmatpush2.bf16.msra.mxu0 0
      %9430 = vmatprep.subr.bf16.mxu0 0
      %9431 = vmatpush2.bf16.msra.mxu0 0
      %9432 = vmatprep.subr.bf16.mxu0 0
      %9433 = vmatpush2.bf16.msra.mxu0 0
      %9434 = vmatprep.subr.bf16.mxu0 0
      %9435 = vmatpush2.bf16.msra.mxu0 0
      %9436 = vmatprep.mubr.bf16.mxu0 0
      %9437 = vmatmul.mubr.bf16.gmra.mxu0 %v9346
      %v9438 = vpop.f32.mrf.mxu0
      %v9439 = vadd.f32 %v9318, %v9438
      %v9440 = vpop.f32.mrf.mxu0
      %v9441 = vadd.f32 %v9318, %v9440
      %v9442 = vpop.f32.mrf.mxu0
      %v9443 = vadd.f32 %v9323, %v9442
      %v9444 = vpop.f32.mrf.mxu0
      %v9445 = vadd.f32 %v9323, %v9444
      %9446 = vmatprep.mubr.bf16.mxu0 0
      %9447 = vmatmul.mubr.bf16.gmra.mxu0 %v9349
      %v9448 = vpop.f32.mrf.mxu0
      %v9449 = vadd.f32 %v9328, %v9448
      %v9450 = vpop.f32.mrf.mxu0
      %v9451 = vadd.f32 %v9328, %v9450
      %v9452 = vpop.f32.mrf.mxu0
      %v9453 = vadd.f32 %v9333, %v9452
      %v9454 = vpop.f32.mrf.mxu0
      %v9455 = vadd.f32 %v9333, %v9454
      %9456 = vdwg.mxu0
      %9457 = vmatprep.subr.bf16.mxu0 0
      %9458 = vmatpush1.bf16.msra.mxu0 0
      %9459 = vmatprep.subr.bf16.mxu0 0
      %9460 = vmatpush1.bf16.msra.mxu0 0
      %9461 = vmatprep.subr.bf16.mxu0 0
      %9462 = vmatpush1.bf16.msra.mxu0 0
      %9463 = vmatprep.subr.bf16.mxu0 0
      %9464 = vmatpush1.bf16.msra.mxu0 0
      %9465 = vmatprep.subr.bf16.mxu0 0
      %9466 = vmatpush1.bf16.msra.mxu0 0
      %9467 = vmatprep.subr.bf16.mxu0 0
      %9468 = vmatpush1.bf16.msra.mxu0 0
      %9469 = vmatprep.subr.bf16.mxu0 %v9308
      %9470 = vmatpush1.bf16.msra.mxu0 %v9307
      %9471 = vmatprep.subr.bf16.mxu0 %v9300
      %9472 = vmatpush1.bf16.msra.mxu0 %v9299
      %9473 = vmatprep.subr.bf16.mxu0 0
      %9474 = vmatpush2.bf16.msra.mxu0 0
      %9475 = vmatprep.subr.bf16.mxu0 0
      %9476 = vmatpush2.bf16.msra.mxu0 0
      %9477 = vmatprep.subr.bf16.mxu0 0
      %9478 = vmatpush2.bf16.msra.mxu0 0
      %9479 = vmatprep.subr.bf16.mxu0 0
      %9480 = vmatpush2.bf16.msra.mxu0 0
      %9481 = vmatprep.subr.bf16.mxu0 0
      %9482 = vmatpush2.bf16.msra.mxu0 0
      %9483 = vmatprep.subr.bf16.mxu0 0
      %9484 = vmatpush2.bf16.msra.mxu0 0
      %9485 = vmatprep.subr.bf16.mxu0 0
      %9486 = vmatpush2.bf16.msra.mxu0 0
      %9487 = vmatprep.subr.bf16.mxu0 0
      %9488 = vmatpush2.bf16.msra.mxu0 0
      %9489 = vmatprep.mubr.bf16.mxu0 0
      %9490 = vmatmul.mubr.bf16.gmra.mxu0 %v9346
      %v9491 = vpop.f32.mrf.mxu0
      %v9492 = vadd.f32 %v9318, %v9491
      %v9493 = vpop.f32.mrf.mxu0
      %v9494 = vadd.f32 %v9318, %v9493
      %v9495 = vpop.f32.mrf.mxu0
      %v9496 = vadd.f32 %v9323, %v9495
      %v9497 = vpop.f32.mrf.mxu0
      %v9498 = vadd.f32 %v9323, %v9497
      %9499 = vmatprep.mubr.bf16.mxu0 0
      %9500 = vmatmul.mubr.bf16.gmra.mxu0 %v9349
      %v9501 = vpop.f32.mrf.mxu0
      %v9502 = vadd.f32 %v9328, %v9501
      %v9503 = vpop.f32.mrf.mxu0
      %v9504 = vadd.f32 %v9328, %v9503
      %v9505 = vpop.f32.mrf.mxu0
      %v9506 = vadd.f32 %v9333, %v9505
      %v9507 = vpop.f32.mrf.mxu0
      %v9508 = vadd.f32 %v9333, %v9507
      %9509 = vdwg.mxu0
      %9510 = vmatprep.subr.bf16.mxu0 0
      %9511 = vmatpush1.bf16.msra.mxu0 0
      %9512 = vmatprep.subr.bf16.mxu0 0
      %9513 = vmatpush1.bf16.msra.mxu0 0
      %9514 = vmatprep.subr.bf16.mxu0 0
      %9515 = vmatpush1.bf16.msra.mxu0 0
      %9516 = vmatprep.subr.bf16.mxu0 0
      %9517 = vmatpush1.bf16.msra.mxu0 0
      %9518 = vmatprep.subr.bf16.mxu0 0
      %9519 = vmatpush1.bf16.msra.mxu0 0
      %9520 = vmatprep.subr.bf16.mxu0 0
      %9521 = vmatpush1.bf16.msra.mxu0 0
      %9522 = vmatprep.subr.bf16.mxu0 %v9310
      %9523 = vmatpush1.bf16.msra.mxu0 %v9309
      %9524 = vmatprep.subr.bf16.mxu0 %v9302
      %9525 = vmatpush1.bf16.msra.mxu0 %v9301
      %9526 = vmatprep.subr.bf16.mxu0 0
      %9527 = vmatpush2.bf16.msra.mxu0 0
      %9528 = vmatprep.subr.bf16.mxu0 0
      %9529 = vmatpush2.bf16.msra.mxu0 0
      %9530 = vmatprep.subr.bf16.mxu0 0
      %9531 = vmatpush2.bf16.msra.mxu0 0
      %9532 = vmatprep.subr.bf16.mxu0 0
      %9533 = vmatpush2.bf16.msra.mxu0 0
      %9534 = vmatprep.subr.bf16.mxu0 0
      %9535 = vmatpush2.bf16.msra.mxu0 0
      %9536 = vmatprep.subr.bf16.mxu0 0
      %9537 = vmatpush2.bf16.msra.mxu0 0
      %9538 = vmatprep.subr.bf16.mxu0 0
      %9539 = vmatpush2.bf16.msra.mxu0 0
      %9540 = vmatprep.subr.bf16.mxu0 0
      %9541 = vmatpush2.bf16.msra.mxu0 0
      %9542 = vmatprep.mubr.bf16.mxu0 0
      %9543 = vmatmul.mubr.bf16.gmra.mxu0 %v9346
      %v9544 = vpop.f32.mrf.mxu0
      %v9545 = vadd.f32 %v9318, %v9544
      %v9546 = vpop.f32.mrf.mxu0
      %v9547 = vadd.f32 %v9318, %v9546
      %v9548 = vpop.f32.mrf.mxu0
      %v9549 = vadd.f32 %v9323, %v9548
      %v9550 = vpop.f32.mrf.mxu0
      %v9551 = vadd.f32 %v9323, %v9550
      %9552 = vmatprep.mubr.bf16.mxu0 0
      %9553 = vmatmul.mubr.bf16.gmra.mxu0 %v9349
      %v9554 = vpop.f32.mrf.mxu0
      %v9555 = vadd.f32 %v9328, %v9554
      %v9556 = vpop.f32.mrf.mxu0
      %v9557 = vadd.f32 %v9328, %v9556
      %v9558 = vpop.f32.mrf.mxu0
      %v9559 = vadd.f32 %v9333, %v9558
      %v9560 = vpop.f32.mrf.mxu0
      %v9561 = vadd.f32 %v9333, %v9560
      %9562 = vdwg.mxu0
      %vm9563 = vcmp.ge.f32.partialorder %v9386, 0.0
      %vm9564 = vcmp.ge.f32.partialorder %v9388, 0.0
      %vm9565 = vcmp.ge.f32.partialorder %v9439, 0.0
      %vm9566 = vcmp.ge.f32.partialorder %v9441, 0.0
      %vm9567 = vcmp.ge.f32.partialorder %v9492, 0.0
      %vm9568 = vcmp.ge.f32.partialorder %v9494, 0.0
      %vm9569 = vcmp.ge.f32.partialorder %v9545, 0.0
      %vm9570 = vcmp.ge.f32.partialorder %v9547, 0.0
      %vm9571 = vcmp.ge.f32.partialorder %v9390, 0.0
      %vm9572 = vcmp.ge.f32.partialorder %v9392, 0.0
      %vm9573 = vcmp.ge.f32.partialorder %v9443, 0.0
      %vm9574 = vcmp.ge.f32.partialorder %v9445, 0.0
      %vm9575 = vcmp.ge.f32.partialorder %v9496, 0.0
      %vm9576 = vcmp.ge.f32.partialorder %v9498, 0.0
      %vm9577 = vcmp.ge.f32.partialorder %v9549, 0.0
      %vm9578 = vcmp.ge.f32.partialorder %v9551, 0.0
      %vm9579 = vcmp.ge.f32.partialorder %v9396, 0.0
      %vm9580 = vcmp.ge.f32.partialorder %v9398, 0.0
      %vm9581 = vcmp.ge.f32.partialorder %v9449, 0.0
      %vm9582 = vcmp.ge.f32.partialorder %v9451, 0.0
      %vm9583 = vcmp.ge.f32.partialorder %v9502, 0.0
      %vm9584 = vcmp.ge.f32.partialorder %v9504, 0.0
      %vm9585 = vcmp.ge.f32.partialorder %v9555, 0.0
      %vm9586 = vcmp.ge.f32.partialorder %v9557, 0.0
      %vm9587 = vcmp.ge.f32.partialorder %v9400, 0.0
      %vm9588 = vcmp.ge.f32.partialorder %v9402, 0.0
      %vm9589 = vcmp.ge.f32.partialorder %v9453, 0.0
      %vm9590 = vcmp.ge.f32.partialorder %v9455, 0.0
      %vm9591 = vcmp.ge.f32.partialorder %v9506, 0.0
      %vm9592 = vcmp.ge.f32.partialorder %v9508, 0.0
      %vm9593 = vcmp.ge.f32.partialorder %v9559, 0.0
      %vm9594 = vcmp.ge.f32.partialorder %v9561, 0.0
      %v9595 = vmul.f32 %v9386, 0.1
      %v9596 = vmul.f32 %v9388, 0.1
      %v9597 = vmul.f32 %v9439, 0.1
      %v9598 = vmul.f32 %v9441, 0.1
      %v9599 = vmul.f32 %v9492, 0.1
      %v9600 = vmul.f32 %v9494, 0.1
      %v9601 = vmul.f32 %v9545, 0.1
      %v9602 = vmul.f32 %v9547, 0.1
      %v9603 = vmul.f32 %v9390, 0.1
      %v9604 = vmul.f32 %v9392, 0.1
      %v9605 = vmul.f32 %v9443, 0.1
      %v9606 = vmul.f32 %v9445, 0.1
      %v9607 = vmul.f32 %v9496, 0.1
      %v9608 = vmul.f32 %v9498, 0.1
      %v9609 = vmul.f32 %v9549, 0.1
      %v9610 = vmul.f32 %v9551, 0.1
      %v9611 = vmul.f32 %v9396, 0.1
      %v9612 = vmul.f32 %v9398, 0.1
      %v9613 = vmul.f32 %v9449, 0.1
      %v9614 = vmul.f32 %v9451, 0.1
      %v9615 = vmul.f32 %v9502, 0.1
      %v9616 = vmul.f32 %v9504, 0.1
      %v9617 = vmul.f32 %v9555, 0.1
      %v9618 = vmul.f32 %v9557, 0.1
      %v9619 = vmul.f32 %v9400, 0.1
      %v9620 = vmul.f32 %v9402, 0.1
      %v9621 = vmul.f32 %v9453, 0.1
      %v9622 = vmul.f32 %v9455, 0.1
      %v9623 = vmul.f32 %v9506, 0.1
      %v9624 = vmul.f32 %v9508, 0.1
      %v9625 = vmul.f32 %v9559, 0.1
      %v9626 = vmul.f32 %v9561, 0.1
      %v9627 = vsel %vm9563, %v9386, %v9595
      %v9628 = vsel %vm9564, %v9388, %v9596
      %v9629 = vsel %vm9565, %v9439, %v9597
      %v9630 = vsel %vm9566, %v9441, %v9598
      %v9631 = vsel %vm9567, %v9492, %v9599
      %v9632 = vsel %vm9568, %v9494, %v9600
      %v9633 = vsel %vm9569, %v9545, %v9601
      %v9634 = vsel %vm9570, %v9547, %v9602
      %v9635 = vsel %vm9571, %v9390, %v9603
      %v9636 = vsel %vm9572, %v9392, %v9604
      %v9637 = vsel %vm9573, %v9443, %v9605
      %v9638 = vsel %vm9574, %v9445, %v9606
      %v9639 = vsel %vm9575, %v9496, %v9607
      %v9640 = vsel %vm9576, %v9498, %v9608
      %v9641 = vsel %vm9577, %v9549, %v9609
      %v9642 = vsel %vm9578, %v9551, %v9610
      %v9643 = vsel %vm9579, %v9396, %v9611
      %v9644 = vsel %vm9580, %v9398, %v9612
      %v9645 = vsel %vm9581, %v9449, %v9613
      %v9646 = vsel %vm9582, %v9451, %v9614
      %v9647 = vsel %vm9583, %v9502, %v9615
      %v9648 = vsel %vm9584, %v9504, %v9616
      %v9649 = vsel %vm9585, %v9555, %v9617
      %v9650 = vsel %vm9586, %v9557, %v9618
      %v9651 = vsel %vm9587, %v9400, %v9619
      %v9652 = vsel %vm9588, %v9402, %v9620
      %v9653 = vsel %vm9589, %v9453, %v9621
      %v9654 = vsel %vm9590, %v9455, %v9622
      %v9655 = vsel %vm9591, %v9506, %v9623
      %v9656 = vsel %vm9592, %v9508, %v9624
      %v9657 = vsel %vm9593, %v9559, %v9625
      %v9658 = vsel %vm9594, %v9561, %v9626
      %v9659 = vld [vmem:[%s13] sm:$0xf]
      %v9660 = vld [vmem:[%s13 + $0x4] sm:$0xf]
      %v9661 = vld [vmem:[%s13 + $0x8] sm:$0xf]
      %v9662 = vld [vmem:[%s13 + $0xc] sm:$0xf]
      %v9663 = vpack.c.bf16 %v9635, %v9627
      %v9664 = vpack.c.bf16 %v9636, %v9628
      %v9665 = vpack.c.bf16 %v9637, %v9629
      %v9666 = vpack.c.bf16 %v9638, %v9630
      %v9667 = vpack.c.bf16 %v9639, %v9631
      %v9668 = vpack.c.bf16 %v9640, %v9632
      %v9669 = vpack.c.bf16 %v9641, %v9633
      %v9670 = vpack.c.bf16 %v9642, %v9634
      %v9671 = vpack.c.bf16 %v9651, %v9643
      %v9672 = vpack.c.bf16 %v9652, %v9644
      %v9673 = vpack.c.bf16 %v9653, %v9645
      %v9674 = vpack.c.bf16 %v9654, %v9646
      %v9675 = vpack.c.bf16 %v9655, %v9647
      %v9676 = vpack.c.bf16 %v9656, %v9648
      %v9677 = vpack.c.bf16 %v9657, %v9649
      %v9678 = vpack.c.bf16 %v9658, %v9650
      %v9679 = vld [vmem:[%s14] sm:$0xff]
      %v9680 = vld [vmem:[%s14 + $0x8] sm:$0xff]
      %v9681 = vld [vmem:[%s14 + $0x10] sm:$0xff]
      %v9682 = vld [vmem:[%s14 + $0x18] sm:$0xff]
      %9684 = vset.pattern.permute.xlu0 0
      %9685 = vperm.xlu0 %9684, %v9679
      %v9686 = vpop.permute.xlu0 %9685
      %9689 = vset.pattern.permute.xlu0 0
      %9690 = vperm.xlu0 %9689, %v9680
      %v9691 = vpop.permute.xlu0 %9690
      %9694 = vset.pattern.permute.xlu0 0
      %9695 = vperm.xlu0 %9694, %v9681
      %v9696 = vpop.permute.xlu0 %9695
      %9699 = vset.pattern.permute.xlu0 0
      %9700 = vperm.xlu0 %9699, %v9682
      %v9701 = vpop.permute.xlu0 %9700
      %v9707 = vunpack.c.l.b16 %v9659
      %v9708 = vunpack.c.l.b16 %v9660
      %v9709 = vunpack.c.l.b16 %v9661
      %v9710 = vunpack.c.l.b16 %v9662
      %v9711 = vpack.c.b16 %v9708, %v9707
      %v9712 = vpack.c.b16 %v9710, %v9709
      %v9714 = vsel %vm6378, %v9711, 0
      %v9717 = vsel %vm6378, %v9712, 0
      %9719 = vmatprep.subr.bf16.mxu0 0
      %9720 = vmatpush1.bf16.msra.mxu0 0
      %9721 = vmatprep.subr.bf16.mxu0 0
      %9722 = vmatpush1.bf16.msra.mxu0 0
      %9723 = vmatprep.subr.bf16.mxu0 0
      %9724 = vmatpush1.bf16.msra.mxu0 0
      %9725 = vmatprep.subr.bf16.mxu0 0
      %9726 = vmatpush1.bf16.msra.mxu0 0
      %9727 = vmatprep.subr.bf16.mxu0 0
      %9728 = vmatpush1.bf16.msra.mxu0 0
      %9729 = vmatprep.subr.bf16.mxu0 0
      %9730 = vmatpush1.bf16.msra.mxu0 0
      %9731 = vmatprep.subr.bf16.mxu0 %v9672
      %9732 = vmatpush1.bf16.msra.mxu0 %v9671
      %9733 = vmatprep.subr.bf16.mxu0 %v9664
      %9734 = vmatpush1.bf16.msra.mxu0 %v9663
      %9735 = vmatprep.subr.bf16.mxu0 0
      %9736 = vmatpush2.bf16.msra.mxu0 0
      %9737 = vmatprep.subr.bf16.mxu0 0
      %9738 = vmatpush2.bf16.msra.mxu0 0
      %9739 = vmatprep.subr.bf16.mxu0 0
      %9740 = vmatpush2.bf16.msra.mxu0 0
      %9741 = vmatprep.subr.bf16.mxu0 0
      %9742 = vmatpush2.bf16.msra.mxu0 0
      %9743 = vmatprep.subr.bf16.mxu0 0
      %9744 = vmatpush2.bf16.msra.mxu0 0
      %9745 = vmatprep.subr.bf16.mxu0 0
      %9746 = vmatpush2.bf16.msra.mxu0 0
      %9747 = vmatprep.subr.bf16.mxu0 0
      %9748 = vmatpush2.bf16.msra.mxu0 0
      %9749 = vmatprep.subr.bf16.mxu0 0
      %9750 = vmatpush2.bf16.msra.mxu0 0
      %9751 = vmatprep.mubr.bf16.mxu0 0
      %9752 = vmatmul.mubr.bf16.gmra.mxu0 %v9714
      %v9753 = vpop.f32.mrf.mxu0
      %v9754 = vadd.f32 %v9686, %v9753
      %v9755 = vpop.f32.mrf.mxu0
      %v9756 = vadd.f32 %v9686, %v9755
      %v9757 = vpop.f32.mrf.mxu0
      %v9758 = vadd.f32 %v9691, %v9757
      %v9759 = vpop.f32.mrf.mxu0
      %v9760 = vadd.f32 %v9691, %v9759
      %9761 = vmatprep.mubr.bf16.mxu0 0
      %9762 = vmatmul.mubr.bf16.gmra.mxu0 %v9717
      %v9763 = vpop.f32.mrf.mxu0
      %v9764 = vadd.f32 %v9696, %v9763
      %v9765 = vpop.f32.mrf.mxu0
      %v9766 = vadd.f32 %v9696, %v9765
      %v9767 = vpop.f32.mrf.mxu0
      %v9768 = vadd.f32 %v9701, %v9767
      %v9769 = vpop.f32.mrf.mxu0
      %v9770 = vadd.f32 %v9701, %v9769
      %9771 = vdwg.mxu0
      %9772 = vmatprep.subr.bf16.mxu0 0
      %9773 = vmatpush1.bf16.msra.mxu0 0
      %9774 = vmatprep.subr.bf16.mxu0 0
      %9775 = vmatpush1.bf16.msra.mxu0 0
      %9776 = vmatprep.subr.bf16.mxu0 0
      %9777 = vmatpush1.bf16.msra.mxu0 0
      %9778 = vmatprep.subr.bf16.mxu0 0
      %9779 = vmatpush1.bf16.msra.mxu0 0
      %9780 = vmatprep.subr.bf16.mxu0 0
      %9781 = vmatpush1.bf16.msra.mxu0 0
      %9782 = vmatprep.subr.bf16.mxu0 0
      %9783 = vmatpush1.bf16.msra.mxu0 0
      %9784 = vmatprep.subr.bf16.mxu0 %v9674
      %9785 = vmatpush1.bf16.msra.mxu0 %v9673
      %9786 = vmatprep.subr.bf16.mxu0 %v9666
      %9787 = vmatpush1.bf16.msra.mxu0 %v9665
      %9788 = vmatprep.subr.bf16.mxu0 0
      %9789 = vmatpush2.bf16.msra.mxu0 0
      %9790 = vmatprep.subr.bf16.mxu0 0
      %9791 = vmatpush2.bf16.msra.mxu0 0
      %9792 = vmatprep.subr.bf16.mxu0 0
      %9793 = vmatpush2.bf16.msra.mxu0 0
      %9794 = vmatprep.subr.bf16.mxu0 0
      %9795 = vmatpush2.bf16.msra.mxu0 0
      %9796 = vmatprep.subr.bf16.mxu0 0
      %9797 = vmatpush2.bf16.msra.mxu0 0
      %9798 = vmatprep.subr.bf16.mxu0 0
      %9799 = vmatpush2.bf16.msra.mxu0 0
      %9800 = vmatprep.subr.bf16.mxu0 0
      %9801 = vmatpush2.bf16.msra.mxu0 0
      %9802 = vmatprep.subr.bf16.mxu0 0
      %9803 = vmatpush2.bf16.msra.mxu0 0
      %9804 = vmatprep.mubr.bf16.mxu0 0
      %9805 = vmatmul.mubr.bf16.gmra.mxu0 %v9714
      %v9806 = vpop.f32.mrf.mxu0
      %v9807 = vadd.f32 %v9686, %v9806
      %v9808 = vpop.f32.mrf.mxu0
      %v9809 = vadd.f32 %v9686, %v9808
      %v9810 = vpop.f32.mrf.mxu0
      %v9811 = vadd.f32 %v9691, %v9810
      %v9812 = vpop.f32.mrf.mxu0
      %v9813 = vadd.f32 %v9691, %v9812
      %9814 = vmatprep.mubr.bf16.mxu0 0
      %9815 = vmatmul.mubr.bf16.gmra.mxu0 %v9717
      %v9816 = vpop.f32.mrf.mxu0
      %v9817 = vadd.f32 %v9696, %v9816
      %v9818 = vpop.f32.mrf.mxu0
      %v9819 = vadd.f32 %v9696, %v9818
      %v9820 = vpop.f32.mrf.mxu0
      %v9821 = vadd.f32 %v9701, %v9820
      %v9822 = vpop.f32.mrf.mxu0
      %v9823 = vadd.f32 %v9701, %v9822
      %9824 = vdwg.mxu0
      %9825 = vmatprep.subr.bf16.mxu0 0
      %9826 = vmatpush1.bf16.msra.mxu0 0
      %9827 = vmatprep.subr.bf16.mxu0 0
      %9828 = vmatpush1.bf16.msra.mxu0 0
      %9829 = vmatprep.subr.bf16.mxu0 0
      %9830 = vmatpush1.bf16.msra.mxu0 0
      %9831 = vmatprep.subr.bf16.mxu0 0
      %9832 = vmatpush1.bf16.msra.mxu0 0
      %9833 = vmatprep.subr.bf16.mxu0 0
      %9834 = vmatpush1.bf16.msra.mxu0 0
      %9835 = vmatprep.subr.bf16.mxu0 0
      %9836 = vmatpush1.bf16.msra.mxu0 0
      %9837 = vmatprep.subr.bf16.mxu0 %v9676
      %9838 = vmatpush1.bf16.msra.mxu0 %v9675
      %9839 = vmatprep.subr.bf16.mxu0 %v9668
      %9840 = vmatpush1.bf16.msra.mxu0 %v9667
      %9841 = vmatprep.subr.bf16.mxu0 0
      %9842 = vmatpush2.bf16.msra.mxu0 0
      %9843 = vmatprep.subr.bf16.mxu0 0
      %9844 = vmatpush2.bf16.msra.mxu0 0
      %9845 = vmatprep.subr.bf16.mxu0 0
      %9846 = vmatpush2.bf16.msra.mxu0 0
      %9847 = vmatprep.subr.bf16.mxu0 0
      %9848 = vmatpush2.bf16.msra.mxu0 0
      %9849 = vmatprep.subr.bf16.mxu0 0
      %9850 = vmatpush2.bf16.msra.mxu0 0
      %9851 = vmatprep.subr.bf16.mxu0 0
      %9852 = vmatpush2.bf16.msra.mxu0 0
      %9853 = vmatprep.subr.bf16.mxu0 0
      %9854 = vmatpush2.bf16.msra.mxu0 0
      %9855 = vmatprep.subr.bf16.mxu0 0
      %9856 = vmatpush2.bf16.msra.mxu0 0
      %9857 = vmatprep.mubr.bf16.mxu0 0
      %9858 = vmatmul.mubr.bf16.gmra.mxu0 %v9714
      %v9859 = vpop.f32.mrf.mxu0
      %v9860 = vadd.f32 %v9686, %v9859
      %v9861 = vpop.f32.mrf.mxu0
      %v9862 = vadd.f32 %v9686, %v9861
      %v9863 = vpop.f32.mrf.mxu0
      %v9864 = vadd.f32 %v9691, %v9863
      %v9865 = vpop.f32.mrf.mxu0
      %v9866 = vadd.f32 %v9691, %v9865
      %9867 = vmatprep.mubr.bf16.mxu0 0
      %9868 = vmatmul.mubr.bf16.gmra.mxu0 %v9717
      %v9869 = vpop.f32.mrf.mxu0
      %v9870 = vadd.f32 %v9696, %v9869
      %v9871 = vpop.f32.mrf.mxu0
      %v9872 = vadd.f32 %v9696, %v9871
      %v9873 = vpop.f32.mrf.mxu0
      %v9874 = vadd.f32 %v9701, %v9873
      %v9875 = vpop.f32.mrf.mxu0
      %v9876 = vadd.f32 %v9701, %v9875
      %9877 = vdwg.mxu0
      %9878 = vmatprep.subr.bf16.mxu0 0
      %9879 = vmatpush1.bf16.msra.mxu0 0
      %9880 = vmatprep.subr.bf16.mxu0 0
      %9881 = vmatpush1.bf16.msra.mxu0 0
      %9882 = vmatprep.subr.bf16.mxu0 0
      %9883 = vmatpush1.bf16.msra.mxu0 0
      %9884 = vmatprep.subr.bf16.mxu0 0
      %9885 = vmatpush1.bf16.msra.mxu0 0
      %9886 = vmatprep.subr.bf16.mxu0 0
      %9887 = vmatpush1.bf16.msra.mxu0 0
      %9888 = vmatprep.subr.bf16.mxu0 0
      %9889 = vmatpush1.bf16.msra.mxu0 0
      %9890 = vmatprep.subr.bf16.mxu0 %v9678
      %9891 = vmatpush1.bf16.msra.mxu0 %v9677
      %9892 = vmatprep.subr.bf16.mxu0 %v9670
      %9893 = vmatpush1.bf16.msra.mxu0 %v9669
      %9894 = vmatprep.subr.bf16.mxu0 0
      %9895 = vmatpush2.bf16.msra.mxu0 0
      %9896 = vmatprep.subr.bf16.mxu0 0
      %9897 = vmatpush2.bf16.msra.mxu0 0
      %9898 = vmatprep.subr.bf16.mxu0 0
      %9899 = vmatpush2.bf16.msra.mxu0 0
      %9900 = vmatprep.subr.bf16.mxu0 0
      %9901 = vmatpush2.bf16.msra.mxu0 0
      %9902 = vmatprep.subr.bf16.mxu0 0
      %9903 = vmatpush2.bf16.msra.mxu0 0
      %9904 = vmatprep.subr.bf16.mxu0 0
      %9905 = vmatpush2.bf16.msra.mxu0 0
      %9906 = vmatprep.subr.bf16.mxu0 0
      %9907 = vmatpush2.bf16.msra.mxu0 0
      %9908 = vmatprep.subr.bf16.mxu0 0
      %9909 = vmatpush2.bf16.msra.mxu0 0
      %9910 = vmatprep.mubr.bf16.mxu0 0
      %9911 = vmatmul.mubr.bf16.gmra.mxu0 %v9714
      %v9912 = vpop.f32.mrf.mxu0
      %v9913 = vadd.f32 %v9686, %v9912
      %v9914 = vpop.f32.mrf.mxu0
      %v9915 = vadd.f32 %v9686, %v9914
      %v9916 = vpop.f32.mrf.mxu0
      %v9917 = vadd.f32 %v9691, %v9916
      %v9918 = vpop.f32.mrf.mxu0
      %v9919 = vadd.f32 %v9691, %v9918
      %9920 = vmatprep.mubr.bf16.mxu0 0
      %9921 = vmatmul.mubr.bf16.gmra.mxu0 %v9717
      %v9922 = vpop.f32.mrf.mxu0
      %v9923 = vadd.f32 %v9696, %v9922
      %v9924 = vpop.f32.mrf.mxu0
      %v9925 = vadd.f32 %v9696, %v9924
      %v9926 = vpop.f32.mrf.mxu0
      %v9927 = vadd.f32 %v9701, %v9926
      %v9928 = vpop.f32.mrf.mxu0
      %v9929 = vadd.f32 %v9701, %v9928
      %9930 = vdwg.mxu0
      %vm9931 = vcmp.ge.f32.partialorder %v9754, 0.0
      %vm9932 = vcmp.ge.f32.partialorder %v9756, 0.0
      %vm9933 = vcmp.ge.f32.partialorder %v9807, 0.0
      %vm9934 = vcmp.ge.f32.partialorder %v9809, 0.0
      %vm9935 = vcmp.ge.f32.partialorder %v9860, 0.0
      %vm9936 = vcmp.ge.f32.partialorder %v9862, 0.0
      %vm9937 = vcmp.ge.f32.partialorder %v9913, 0.0
      %vm9938 = vcmp.ge.f32.partialorder %v9915, 0.0
      %vm9939 = vcmp.ge.f32.partialorder %v9758, 0.0
      %vm9940 = vcmp.ge.f32.partialorder %v9760, 0.0
      %vm9941 = vcmp.ge.f32.partialorder %v9811, 0.0
      %vm9942 = vcmp.ge.f32.partialorder %v9813, 0.0
      %vm9943 = vcmp.ge.f32.partialorder %v9864, 0.0
      %vm9944 = vcmp.ge.f32.partialorder %v9866, 0.0
      %vm9945 = vcmp.ge.f32.partialorder %v9917, 0.0
      %vm9946 = vcmp.ge.f32.partialorder %v9919, 0.0
      %vm9947 = vcmp.ge.f32.partialorder %v9764, 0.0
      %vm9948 = vcmp.ge.f32.partialorder %v9766, 0.0
      %vm9949 = vcmp.ge.f32.partialorder %v9817, 0.0
      %vm9950 = vcmp.ge.f32.partialorder %v9819, 0.0
      %vm9951 = vcmp.ge.f32.partialorder %v9870, 0.0
      %vm9952 = vcmp.ge.f32.partialorder %v9872, 0.0
      %vm9953 = vcmp.ge.f32.partialorder %v9923, 0.0
      %vm9954 = vcmp.ge.f32.partialorder %v9925, 0.0
      %vm9955 = vcmp.ge.f32.partialorder %v9768, 0.0
      %vm9956 = vcmp.ge.f32.partialorder %v9770, 0.0
      %vm9957 = vcmp.ge.f32.partialorder %v9821, 0.0
      %vm9958 = vcmp.ge.f32.partialorder %v9823, 0.0
      %vm9959 = vcmp.ge.f32.partialorder %v9874, 0.0
      %vm9960 = vcmp.ge.f32.partialorder %v9876, 0.0
      %vm9961 = vcmp.ge.f32.partialorder %v9927, 0.0
      %vm9962 = vcmp.ge.f32.partialorder %v9929, 0.0
      %v9963 = vmul.f32 %v9754, 0.1
      %v9964 = vmul.f32 %v9756, 0.1
      %v9965 = vmul.f32 %v9807, 0.1
      %v9966 = vmul.f32 %v9809, 0.1
      %v9967 = vmul.f32 %v9860, 0.1
      %v9968 = vmul.f32 %v9862, 0.1
      %v9969 = vmul.f32 %v9913, 0.1
      %v9970 = vmul.f32 %v9915, 0.1
      %v9971 = vmul.f32 %v9758, 0.1
      %v9972 = vmul.f32 %v9760, 0.1
      %v9973 = vmul.f32 %v9811, 0.1
      %v9974 = vmul.f32 %v9813, 0.1
      %v9975 = vmul.f32 %v9864, 0.1
      %v9976 = vmul.f32 %v9866, 0.1
      %v9977 = vmul.f32 %v9917, 0.1
      %v9978 = vmul.f32 %v9919, 0.1
      %v9979 = vmul.f32 %v9764, 0.1
      %v9980 = vmul.f32 %v9766, 0.1
      %v9981 = vmul.f32 %v9817, 0.1
      %v9982 = vmul.f32 %v9819, 0.1
      %v9983 = vmul.f32 %v9870, 0.1
      %v9984 = vmul.f32 %v9872, 0.1
      %v9985 = vmul.f32 %v9923, 0.1
      %v9986 = vmul.f32 %v9925, 0.1
      %v9987 = vmul.f32 %v9768, 0.1
      %v9988 = vmul.f32 %v9770, 0.1
      %v9989 = vmul.f32 %v9821, 0.1
      %v9990 = vmul.f32 %v9823, 0.1
      %v9991 = vmul.f32 %v9874, 0.1
      %v9992 = vmul.f32 %v9876, 0.1
      %v9993 = vmul.f32 %v9927, 0.1
      %v9994 = vmul.f32 %v9929, 0.1
      %v9995 = vsel %vm9931, %v9754, %v9963
      %v9996 = vsel %vm9932, %v9756, %v9964
      %v9997 = vsel %vm9933, %v9807, %v9965
      %v9998 = vsel %vm9934, %v9809, %v9966
      %v9999 = vsel %vm9935, %v9860, %v9967
      %v10000 = vsel %vm9936, %v9862, %v9968
      %v10001 = vsel %vm9937, %v9913, %v9969
      %v10002 = vsel %vm9938, %v9915, %v9970
      %v10003 = vsel %vm9939, %v9758, %v9971
      %v10004 = vsel %vm9940, %v9760, %v9972
      %v10005 = vsel %vm9941, %v9811, %v9973
      %v10006 = vsel %vm9942, %v9813, %v9974
      %v10007 = vsel %vm9943, %v9864, %v9975
      %v10008 = vsel %vm9944, %v9866, %v9976
      %v10009 = vsel %vm9945, %v9917, %v9977
      %v10010 = vsel %vm9946, %v9919, %v9978
      %v10011 = vsel %vm9947, %v9764, %v9979
      %v10012 = vsel %vm9948, %v9766, %v9980
      %v10013 = vsel %vm9949, %v9817, %v9981
      %v10014 = vsel %vm9950, %v9819, %v9982
      %v10015 = vsel %vm9951, %v9870, %v9983
      %v10016 = vsel %vm9952, %v9872, %v9984
      %v10017 = vsel %vm9953, %v9923, %v9985
      %v10018 = vsel %vm9954, %v9925, %v9986
      %v10019 = vsel %vm9955, %v9768, %v9987
      %v10020 = vsel %vm9956, %v9770, %v9988
      %v10021 = vsel %vm9957, %v9821, %v9989
      %v10022 = vsel %vm9958, %v9823, %v9990
      %v10023 = vsel %vm9959, %v9874, %v9991
      %v10024 = vsel %vm9960, %v9876, %v9992
      %v10025 = vsel %vm9961, %v9927, %v9993
      %v10026 = vsel %vm9962, %v9929, %v9994
      %v10027 = vld [vmem:[%s15] sm:$0xf]
      %v10028 = vpack.c.bf16 %v10003, %v9995
      %v10029 = vpack.c.bf16 %v10004, %v9996
      %v10030 = vpack.c.bf16 %v10005, %v9997
      %v10031 = vpack.c.bf16 %v10006, %v9998
      %v10032 = vpack.c.bf16 %v10007, %v9999
      %v10033 = vpack.c.bf16 %v10008, %v10000
      %v10034 = vpack.c.bf16 %v10009, %v10001
      %v10035 = vpack.c.bf16 %v10010, %v10002
      %v10036 = vpack.c.bf16 %v10019, %v10011
      %v10037 = vpack.c.bf16 %v10020, %v10012
      %v10038 = vpack.c.bf16 %v10021, %v10013
      %v10039 = vpack.c.bf16 %v10022, %v10014
      %v10040 = vpack.c.bf16 %v10023, %v10015
      %v10041 = vpack.c.bf16 %v10024, %v10016
      %v10042 = vpack.c.bf16 %v10025, %v10017
      %v10043 = vpack.c.bf16 %v10026, %v10018
      %v10044 = vld [vmem:[%s16] sm:$0xff]
      %10046 = vset.pattern.permute.xlu0 0
      %10047 = vperm.xlu0 %10046, %v10044
      %v10048 = vpop.permute.xlu0 %10047
      %v10051 = vsel %vm6378, %v10027, 0
      %10053 = vmatprep.subr.bf16.mxu0 0
      %10054 = vmatpush1.bf16.msra.mxu0 0
      %10055 = vmatprep.subr.bf16.mxu0 0
      %10056 = vmatpush1.bf16.msra.mxu0 0
      %10057 = vmatprep.subr.bf16.mxu0 0
      %10058 = vmatpush1.bf16.msra.mxu0 0
      %10059 = vmatprep.subr.bf16.mxu0 0
      %10060 = vmatpush1.bf16.msra.mxu0 0
      %10061 = vmatprep.subr.bf16.mxu0 0
      %10062 = vmatpush1.bf16.msra.mxu0 0
      %10063 = vmatprep.subr.bf16.mxu0 0
      %10064 = vmatpush1.bf16.msra.mxu0 0
      %10065 = vmatprep.subr.bf16.mxu0 %v10037
      %10066 = vmatpush1.bf16.msra.mxu0 %v10036
      %10067 = vmatprep.subr.bf16.mxu0 %v10029
      %10068 = vmatpush1.bf16.msra.mxu0 %v10028
      %10069 = vmatprep.subr.bf16.mxu0 0
      %10070 = vmatpush2.bf16.msra.mxu0 0
      %10071 = vmatprep.subr.bf16.mxu0 0
      %10072 = vmatpush2.bf16.msra.mxu0 0
      %10073 = vmatprep.subr.bf16.mxu0 0
      %10074 = vmatpush2.bf16.msra.mxu0 0
      %10075 = vmatprep.subr.bf16.mxu0 0
      %10076 = vmatpush2.bf16.msra.mxu0 0
      %10077 = vmatprep.subr.bf16.mxu0 0
      %10078 = vmatpush2.bf16.msra.mxu0 0
      %10079 = vmatprep.subr.bf16.mxu0 0
      %10080 = vmatpush2.bf16.msra.mxu0 0
      %10081 = vmatprep.subr.bf16.mxu0 0
      %10082 = vmatpush2.bf16.msra.mxu0 0
      %10083 = vmatprep.subr.bf16.mxu0 0
      %10084 = vmatpush2.bf16.msra.mxu0 0
      %10085 = vmatprep.mubr.bf16.mxu0 0
      %10086 = vmatmul.mubr.bf16.gmra.mxu0 %v10051
      %v10087 = vpop.f32.mrf.mxu0
      %v10088 = vadd.f32 %v10048, %v10087
      %v10089 = vpop.f32.mrf.mxu0
      %v10090 = vadd.f32 %v10048, %v10089
      %v10091 = vpop.f32.mrf.mxu0
      %v10092 = vpop.f32.mrf.mxu0
      %10093 = vdwg.mxu0
      %10094 = vmatprep.subr.bf16.mxu0 0
      %10095 = vmatpush1.bf16.msra.mxu0 0
      %10096 = vmatprep.subr.bf16.mxu0 0
      %10097 = vmatpush1.bf16.msra.mxu0 0
      %10098 = vmatprep.subr.bf16.mxu0 0
      %10099 = vmatpush1.bf16.msra.mxu0 0
      %10100 = vmatprep.subr.bf16.mxu0 0
      %10101 = vmatpush1.bf16.msra.mxu0 0
      %10102 = vmatprep.subr.bf16.mxu0 0
      %10103 = vmatpush1.bf16.msra.mxu0 0
      %10104 = vmatprep.subr.bf16.mxu0 0
      %10105 = vmatpush1.bf16.msra.mxu0 0
      %10106 = vmatprep.subr.bf16.mxu0 %v10039
      %10107 = vmatpush1.bf16.msra.mxu0 %v10038
      %10108 = vmatprep.subr.bf16.mxu0 %v10031
      %10109 = vmatpush1.bf16.msra.mxu0 %v10030
      %10110 = vmatprep.subr.bf16.mxu0 0
      %10111 = vmatpush2.bf16.msra.mxu0 0
      %10112 = vmatprep.subr.bf16.mxu0 0
      %10113 = vmatpush2.bf16.msra.mxu0 0
      %10114 = vmatprep.subr.bf16.mxu0 0
      %10115 = vmatpush2.bf16.msra.mxu0 0
      %10116 = vmatprep.subr.bf16.mxu0 0
      %10117 = vmatpush2.bf16.msra.mxu0 0
      %10118 = vmatprep.subr.bf16.mxu0 0
      %10119 = vmatpush2.bf16.msra.mxu0 0
      %10120 = vmatprep.subr.bf16.mxu0 0
      %10121 = vmatpush2.bf16.msra.mxu0 0
      %10122 = vmatprep.subr.bf16.mxu0 0
      %10123 = vmatpush2.bf16.msra.mxu0 0
      %10124 = vmatprep.subr.bf16.mxu0 0
      %10125 = vmatpush2.bf16.msra.mxu0 0
      %10126 = vmatprep.mubr.bf16.mxu0 0
      %10127 = vmatmul.mubr.bf16.gmra.mxu0 %v10051
      %v10128 = vpop.f32.mrf.mxu0
      %v10129 = vadd.f32 %v10048, %v10128
      %v10130 = vpop.f32.mrf.mxu0
      %v10131 = vadd.f32 %v10048, %v10130
      %v10132 = vpop.f32.mrf.mxu0
      %v10133 = vpop.f32.mrf.mxu0
      %10134 = vdwg.mxu0
      %10135 = vmatprep.subr.bf16.mxu0 0
      %10136 = vmatpush1.bf16.msra.mxu0 0
      %10137 = vmatprep.subr.bf16.mxu0 0
      %10138 = vmatpush1.bf16.msra.mxu0 0
      %10139 = vmatprep.subr.bf16.mxu0 0
      %10140 = vmatpush1.bf16.msra.mxu0 0
      %10141 = vmatprep.subr.bf16.mxu0 0
      %10142 = vmatpush1.bf16.msra.mxu0 0
      %10143 = vmatprep.subr.bf16.mxu0 0
      %10144 = vmatpush1.bf16.msra.mxu0 0
      %10145 = vmatprep.subr.bf16.mxu0 0
      %10146 = vmatpush1.bf16.msra.mxu0 0
      %10147 = vmatprep.subr.bf16.mxu0 %v10041
      %10148 = vmatpush1.bf16.msra.mxu0 %v10040
      %10149 = vmatprep.subr.bf16.mxu0 %v10033
      %10150 = vmatpush1.bf16.msra.mxu0 %v10032
      %10151 = vmatprep.subr.bf16.mxu0 0
      %10152 = vmatpush2.bf16.msra.mxu0 0
      %10153 = vmatprep.subr.bf16.mxu0 0
      %10154 = vmatpush2.bf16.msra.mxu0 0
      %10155 = vmatprep.subr.bf16.mxu0 0
      %10156 = vmatpush2.bf16.msra.mxu0 0
      %10157 = vmatprep.subr.bf16.mxu0 0
      %10158 = vmatpush2.bf16.msra.mxu0 0
      %10159 = vmatprep.subr.bf16.mxu0 0
      %10160 = vmatpush2.bf16.msra.mxu0 0
      %10161 = vmatprep.subr.bf16.mxu0 0
      %10162 = vmatpush2.bf16.msra.mxu0 0
      %10163 = vmatprep.subr.bf16.mxu0 0
      %10164 = vmatpush2.bf16.msra.mxu0 0
      %10165 = vmatprep.subr.bf16.mxu0 0
      %10166 = vmatpush2.bf16.msra.mxu0 0
      %10167 = vmatprep.mubr.bf16.mxu0 0
      %10168 = vmatmul.mubr.bf16.gmra.mxu0 %v10051
      %v10169 = vpop.f32.mrf.mxu0
      %v10170 = vadd.f32 %v10048, %v10169
      %v10171 = vpop.f32.mrf.mxu0
      %v10172 = vadd.f32 %v10048, %v10171
      %v10173 = vpop.f32.mrf.mxu0
      %v10174 = vpop.f32.mrf.mxu0
      %10175 = vdwg.mxu0
      %10176 = vmatprep.subr.bf16.mxu0 0
      %10177 = vmatpush1.bf16.msra.mxu0 0
      %10178 = vmatprep.subr.bf16.mxu0 0
      %10179 = vmatpush1.bf16.msra.mxu0 0
      %10180 = vmatprep.subr.bf16.mxu0 0
      %10181 = vmatpush1.bf16.msra.mxu0 0
      %10182 = vmatprep.subr.bf16.mxu0 0
      %10183 = vmatpush1.bf16.msra.mxu0 0
      %10184 = vmatprep.subr.bf16.mxu0 0
      %10185 = vmatpush1.bf16.msra.mxu0 0
      %10186 = vmatprep.subr.bf16.mxu0 0
      %10187 = vmatpush1.bf16.msra.mxu0 0
      %10188 = vmatprep.subr.bf16.mxu0 %v10043
      %10189 = vmatpush1.bf16.msra.mxu0 %v10042
      %10190 = vmatprep.subr.bf16.mxu0 %v10035
      %10191 = vmatpush1.bf16.msra.mxu0 %v10034
      %10192 = vmatprep.subr.bf16.mxu0 0
      %10193 = vmatpush2.bf16.msra.mxu0 0
      %10194 = vmatprep.subr.bf16.mxu0 0
      %10195 = vmatpush2.bf16.msra.mxu0 0
      %10196 = vmatprep.subr.bf16.mxu0 0
      %10197 = vmatpush2.bf16.msra.mxu0 0
      %10198 = vmatprep.subr.bf16.mxu0 0
      %10199 = vmatpush2.bf16.msra.mxu0 0
      %10200 = vmatprep.subr.bf16.mxu0 0
      %10201 = vmatpush2.bf16.msra.mxu0 0
      %10202 = vmatprep.subr.bf16.mxu0 0
      %10203 = vmatpush2.bf16.msra.mxu0 0
      %10204 = vmatprep.subr.bf16.mxu0 0
      %10205 = vmatpush2.bf16.msra.mxu0 0
      %10206 = vmatprep.subr.bf16.mxu0 0
      %10207 = vmatpush2.bf16.msra.mxu0 0
      %10208 = vmatprep.mubr.bf16.mxu0 0
      %10209 = vmatmul.mubr.bf16.gmra.mxu0 %v10051
      %v10210 = vpop.f32.mrf.mxu0
      %v10211 = vadd.f32 %v10048, %v10210
      %v10212 = vpop.f32.mrf.mxu0
      %v10213 = vadd.f32 %v10048, %v10212
      %v10214 = vpop.f32.mrf.mxu0
      %v10215 = vpop.f32.mrf.mxu0
      %10216 = vdwg.mxu0
      %10217 = vrot.lane.b32.xlu0 %v560, 16
      %v10218 = vpop.permute.xlu0 %10217
      %10219 = vrot.lane.b32.xlu0 %v561, 16
      %v10220 = vpop.permute.xlu0 %10219
      %v10221 = vsel %vm2269, %v10218, %v10220
      %v10222 = vsel %vm2269, %v10220, %v10218
      %v10225 = vcombine.low %v560, %v561
      %v10226 = vcombine.high %v560, %v561
      %v10227 = vrot.slane %v10225, 1
      %v10228 = vrot.slane %v10225, 2
      %v10229 = vrot.slane %v10225, 3
      %v10230 = vrot.slane %v10226, 1
      %v10231 = vrot.slane %v10226, 2
      %v10232 = vrot.slane %v10226, 3
      %v10243 = vcombine.low %v10222, %v10221
      %v10244 = vcombine.high %v10222, %v10221
      %v10245 = vrot.slane %v10243, 1
      %v10246 = vrot.slane %v10243, 2
      %v10247 = vrot.slane %v10243, 3
      %v10248 = vrot.slane %v10244, 1
      %v10249 = vrot.slane %v10244, 2
      %v10250 = vrot.slane %v10244, 3
      %v10259 = vsel %vm2279, %v10225, %v10243
      %v10260 = vsel %vm2279, %v10227, %v10245
      %v10261 = vsel %vm2279, %v10228, %v10246
      %v10262 = vsel %vm2279, %v10229, %v10247
      %v10263 = vsel %vm2279, %v10226, %v10244
      %v10264 = vsel %vm2279, %v10230, %v10248
      %v10265 = vsel %vm2279, %v10231, %v10249
      %v10266 = vsel %vm2279, %v10232, %v10250
      %v10267 = vmul.f32 %v10259, 0.25
      %v10268 = vmul.f32 %v10260, 0.25
      %v10269 = vmul.f32 %v10261, 0.25
      %v10270 = vmul.f32 %v10262, 0.25
      %v10271 = vmul.f32 %v10263, 0.25
      %v10272 = vmul.f32 %v10264, 0.25
      %v10273 = vmul.f32 %v10265, 0.25
      %v10274 = vmul.f32 %v10266, 0.25
      %v10275 = vmul.f32 %v560, 0.75
      %v10276 = vmul.f32 %v561, 0.75
      %v10279 = vcombine.low %v10275, %v10276
      %v10280 = vcombine.high %v10275, %v10276
      %v10281 = vrot.slane %v10279, 1
      %v10282 = vrot.slane %v10279, 2
      %v10283 = vrot.slane %v10279, 3
      %v10284 = vrot.slane %v10280, 1
      %v10285 = vrot.slane %v10280, 2
      %v10286 = vrot.slane %v10280, 3
      %v10295 = vadd.f32 %v10267, %v10279
      %v10296 = vadd.f32 %v10268, %v10281
      %v10297 = vadd.f32 %v10269, %v10282
      %v10298 = vadd.f32 %v10270, %v10283
      %v10299 = vadd.f32 %v10271, %v10280
      %v10300 = vadd.f32 %v10272, %v10284
      %v10301 = vadd.f32 %v10273, %v10285
      %v10302 = vadd.f32 %v10274, %v10286
      %10303 = vrot.lane.b32.xlu0 %v560, 112
      %v10304 = vpop.permute.xlu0 %10303
      %10305 = vrot.lane.b32.xlu0 %v561, 112
      %v10306 = vpop.permute.xlu0 %10305
      %v10307 = vsel %vm2616, %v10304, %v10306
      %v10308 = vsel %vm2616, %v10306, %v10304
      %v10309 = vrot.slane %v10225, 7
      %v10310 = vrot.slane %v10226, 7
      %v10315 = vcombine.low %v10307, %v10308
      %v10316 = vcombine.high %v10307, %v10308
      %v10317 = vrot.slane %v10315, 7
      %v10318 = vrot.slane %v10315, 1
      %v10319 = vrot.slane %v10315, 2
      %v10320 = vrot.slane %v10316, 7
      %v10321 = vrot.slane %v10316, 1
      %v10322 = vrot.slane %v10316, 2
      %v10331 = vsel %vm2279, %v10309, %v10317
      %v10332 = vsel %vm2279, %v10225, %v10315
      %v10333 = vsel %vm2279, %v10227, %v10318
      %v10334 = vsel %vm2279, %v10228, %v10319
      %v10335 = vsel %vm2279, %v10310, %v10320
      %v10336 = vsel %vm2279, %v10226, %v10316
      %v10337 = vsel %vm2279, %v10230, %v10321
      %v10338 = vsel %vm2279, %v10231, %v10322
      %v10339 = vmul.f32 %v10331, 0.25
      %v10340 = vmul.f32 %v10332, 0.25
      %v10341 = vmul.f32 %v10333, 0.25
      %v10342 = vmul.f32 %v10334, 0.25
      %v10343 = vmul.f32 %v10335, 0.25
      %v10344 = vmul.f32 %v10336, 0.25
      %v10345 = vmul.f32 %v10337, 0.25
      %v10346 = vmul.f32 %v10338, 0.25
      %v10355 = vlaneseq
      %v10356 = vshrl.u32 %v10355, 7
      %v10357 = vsub.s32 1, %v10356
      %v10358 = vrot.slane %v10339, %v10357
      %v10359 = vlaneseq
      %v10360 = vshrl.u32 %v10359, 7
      %v10361 = vsub.s32 5, %v10360
      %v10362 = vrot.slane %v10339, %v10361
      %v10363 = vlaneseq
      %v10364 = vshrl.u32 %v10363, 7
      %v10365 = vsub.s32 1, %v10364
      %v10366 = vrot.slane %v10340, %v10365
      %v10367 = vlaneseq
      %v10368 = vshrl.u32 %v10367, 7
      %v10369 = vsub.s32 5, %v10368
      %v10370 = vrot.slane %v10340, %v10369
      %v10371 = vlaneseq
      %v10372 = vshrl.u32 %v10371, 7
      %v10373 = vsub.s32 1, %v10372
      %v10374 = vrot.slane %v10341, %v10373
      %v10375 = vlaneseq
      %v10376 = vshrl.u32 %v10375, 7
      %v10377 = vsub.s32 5, %v10376
      %v10378 = vrot.slane %v10341, %v10377
      %v10379 = vlaneseq
      %v10380 = vshrl.u32 %v10379, 7
      %v10381 = vsub.s32 1, %v10380
      %v10382 = vrot.slane %v10342, %v10381
      %v10383 = vlaneseq
      %v10384 = vshrl.u32 %v10383, 7
      %v10385 = vsub.s32 5, %v10384
      %v10386 = vrot.slane %v10342, %v10385
      %v10387 = vlaneseq
      %v10388 = vshrl.u32 %v10387, 7
      %v10389 = vsub.s32 1, %v10388
      %v10390 = vrot.slane %v10343, %v10389
      %v10391 = vlaneseq
      %v10392 = vshrl.u32 %v10391, 7
      %v10393 = vsub.s32 5, %v10392
      %v10394 = vrot.slane %v10343, %v10393
      %v10395 = vlaneseq
      %v10396 = vshrl.u32 %v10395, 7
      %v10397 = vsub.s32 1, %v10396
      %v10398 = vrot.slane %v10344, %v10397
      %v10399 = vlaneseq
      %v10400 = vshrl.u32 %v10399, 7
      %v10401 = vsub.s32 5, %v10400
      %v10402 = vrot.slane %v10344, %v10401
      %v10403 = vlaneseq
      %v10404 = vshrl.u32 %v10403, 7
      %v10405 = vsub.s32 1, %v10404
      %v10406 = vrot.slane %v10345, %v10405
      %v10407 = vlaneseq
      %v10408 = vshrl.u32 %v10407, 7
      %v10409 = vsub.s32 5, %v10408
      %v10410 = vrot.slane %v10345, %v10409
      %v10411 = vlaneseq
      %v10412 = vshrl.u32 %v10411, 7
      %v10413 = vsub.s32 1, %v10412
      %v10414 = vrot.slane %v10346, %v10413
      %v10415 = vlaneseq
      %v10416 = vshrl.u32 %v10415, 7
      %v10417 = vsub.s32 5, %v10416
      %v10418 = vrot.slane %v10346, %v10417
      %v10419 = vsel %vm3065, %v10366, %v10358
      %v10420 = vsel %vm3067, %v10374, %v10419
      %v10421 = vsel %vm3069, %v10382, %v10420
      %v10422 = vsel %vm3071, %v10390, %v10421
      %v10423 = vsel %vm3073, %v10398, %v10422
      %v10424 = vsel %vm3075, %v10406, %v10423
      %v10425 = vsel %vm3077, %v10414, %v10424
      %v10426 = vsel %vm3065, %v10370, %v10362
      %v10427 = vsel %vm3067, %v10378, %v10426
      %v10428 = vsel %vm3069, %v10386, %v10427
      %v10429 = vsel %vm3071, %v10394, %v10428
      %v10430 = vsel %vm3073, %v10402, %v10429
      %v10431 = vsel %vm3075, %v10410, %v10430
      %v10432 = vsel %vm3077, %v10418, %v10431
      %v10435 = vadd.f32 %v10275, %v10425
      %v10436 = vadd.f32 %v10276, %v10432
      %v10445 = vlaneseq
      %v10446 = vshrl.u32 %v10445, 7
      %v10447 = vsub.s32 0, %v10446
      %v10448 = vrot.slane %v10295, %v10447
      %v10449 = vlaneseq
      %v10450 = vshrl.u32 %v10449, 7
      %v10451 = vsub.s32 4, %v10450
      %v10452 = vrot.slane %v10295, %v10451
      %v10453 = vlaneseq
      %v10454 = vshrl.u32 %v10453, 7
      %v10455 = vsub.s32 0, %v10454
      %v10456 = vrot.slane %v10296, %v10455
      %v10457 = vlaneseq
      %v10458 = vshrl.u32 %v10457, 7
      %v10459 = vsub.s32 4, %v10458
      %v10460 = vrot.slane %v10296, %v10459
      %v10461 = vlaneseq
      %v10462 = vshrl.u32 %v10461, 7
      %v10463 = vsub.s32 0, %v10462
      %v10464 = vrot.slane %v10297, %v10463
      %v10465 = vlaneseq
      %v10466 = vshrl.u32 %v10465, 7
      %v10467 = vsub.s32 4, %v10466
      %v10468 = vrot.slane %v10297, %v10467
      %v10469 = vlaneseq
      %v10470 = vshrl.u32 %v10469, 7
      %v10471 = vsub.s32 0, %v10470
      %v10472 = vrot.slane %v10298, %v10471
      %v10473 = vlaneseq
      %v10474 = vshrl.u32 %v10473, 7
      %v10475 = vsub.s32 4, %v10474
      %v10476 = vrot.slane %v10298, %v10475
      %v10477 = vlaneseq
      %v10478 = vshrl.u32 %v10477, 7
      %v10479 = vsub.s32 0, %v10478
      %v10480 = vrot.slane %v10299, %v10479
      %v10481 = vlaneseq
      %v10482 = vshrl.u32 %v10481, 7
      %v10483 = vsub.s32 4, %v10482
      %v10484 = vrot.slane %v10299, %v10483
      %v10485 = vlaneseq
      %v10486 = vshrl.u32 %v10485, 7
      %v10487 = vsub.s32 0, %v10486
      %v10488 = vrot.slane %v10300, %v10487
      %v10489 = vlaneseq
      %v10490 = vshrl.u32 %v10489, 7
      %v10491 = vsub.s32 4, %v10490
      %v10492 = vrot.slane %v10300, %v10491
      %v10493 = vlaneseq
      %v10494 = vshrl.u32 %v10493, 7
      %v10495 = vsub.s32 0, %v10494
      %v10496 = vrot.slane %v10301, %v10495
      %v10497 = vlaneseq
      %v10498 = vshrl.u32 %v10497, 7
      %v10499 = vsub.s32 4, %v10498
      %v10500 = vrot.slane %v10301, %v10499
      %v10501 = vlaneseq
      %v10502 = vshrl.u32 %v10501, 7
      %v10503 = vsub.s32 0, %v10502
      %v10504 = vrot.slane %v10302, %v10503
      %v10505 = vlaneseq
      %v10506 = vshrl.u32 %v10505, 7
      %v10507 = vsub.s32 4, %v10506
      %v10508 = vrot.slane %v10302, %v10507
      %v10509 = vsel %vm3065, %v10456, %v10448
      %v10510 = vsel %vm3067, %v10464, %v10509
      %v10511 = vsel %vm3069, %v10472, %v10510
      %v10512 = vsel %vm3071, %v10480, %v10511
      %v10513 = vsel %vm3073, %v10488, %v10512
      %v10514 = vsel %vm3075, %v10496, %v10513
      %v10515 = vsel %vm3077, %v10504, %v10514
      %v10516 = vsel %vm3065, %v10460, %v10452
      %v10517 = vsel %vm3067, %v10468, %v10516
      %v10518 = vsel %vm3069, %v10476, %v10517
      %v10519 = vsel %vm3071, %v10484, %v10518
      %v10520 = vsel %vm3073, %v10492, %v10519
      %v10521 = vsel %vm3075, %v10500, %v10520
      %v10522 = vsel %vm3077, %v10508, %v10521
      %10525 = vrot.lane.b32.xlu0 %v10515, 1
      %v10526 = vpop.permute.xlu0 %10525
      %10527 = vrot.lane.b32.xlu0 %v10522, 1
      %v10528 = vpop.permute.xlu0 %10527
      %v10529 = vsel %vm3512, %v10526, %v10528
      %v10530 = vsel %vm3512, %v10528, %v10526
      %v10531 = vrot.slane %v10295, 6
      %v10532 = vrot.slane %v10296, 6
      %v10533 = vrot.slane %v10297, 6
      %v10534 = vrot.slane %v10298, 6
      %v10535 = vrot.slane %v10299, 6
      %v10536 = vrot.slane %v10300, 6
      %v10537 = vrot.slane %v10301, 6
      %v10538 = vrot.slane %v10302, 6
      %v10549 = vcombine.low %v10530, %v10529
      %v10550 = vcombine.high %v10530, %v10529
      %v10551 = vrot.slane %v10549, 6
      %v10552 = vrot.slane %v10549, 7
      %v10553 = vrot.slane %v10549, 1
      %v10554 = vrot.slane %v10550, 6
      %v10555 = vrot.slane %v10550, 7
      %v10556 = vrot.slane %v10550, 1
      %v10565 = vsel %vm2279, %v10531, %v10551
      %v10566 = vsel %vm2279, %v10532, %v10552
      %v10567 = vsel %vm2279, %v10533, %v10549
      %v10568 = vsel %vm2279, %v10534, %v10553
      %v10569 = vsel %vm2279, %v10535, %v10554
      %v10570 = vsel %vm2279, %v10536, %v10555
      %v10571 = vsel %vm2279, %v10537, %v10550
      %v10572 = vsel %vm2279, %v10538, %v10556
      %v10573 = vmul.f32 %v10565, 0.25
      %v10574 = vmul.f32 %v10566, 0.25
      %v10575 = vmul.f32 %v10567, 0.25
      %v10576 = vmul.f32 %v10568, 0.25
      %v10577 = vmul.f32 %v10569, 0.25
      %v10578 = vmul.f32 %v10570, 0.25
      %v10579 = vmul.f32 %v10571, 0.25
      %v10580 = vmul.f32 %v10572, 0.25
      %v10581 = vmul.f32 %v10295, 0.75
      %v10582 = vmul.f32 %v10296, 0.75
      %v10583 = vmul.f32 %v10297, 0.75
      %v10584 = vmul.f32 %v10298, 0.75
      %v10585 = vmul.f32 %v10299, 0.75
      %v10586 = vmul.f32 %v10300, 0.75
      %v10587 = vmul.f32 %v10301, 0.75
      %v10588 = vmul.f32 %v10302, 0.75
      %v10597 = vrot.slane %v10581, 6
      %v10598 = vrot.slane %v10582, 6
      %v10599 = vrot.slane %v10583, 6
      %v10600 = vrot.slane %v10584, 6
      %v10601 = vrot.slane %v10585, 6
      %v10602 = vrot.slane %v10586, 6
      %v10603 = vrot.slane %v10587, 6
      %v10604 = vrot.slane %v10588, 6
      %v10613 = vadd.f32 %v10573, %v10597
      %v10614 = vadd.f32 %v10574, %v10598
      %v10615 = vadd.f32 %v10575, %v10599
      %v10616 = vadd.f32 %v10576, %v10600
      %v10617 = vadd.f32 %v10577, %v10601
      %v10618 = vadd.f32 %v10578, %v10602
      %v10619 = vadd.f32 %v10579, %v10603
      %v10620 = vadd.f32 %v10580, %v10604
      %10621 = vrot.lane.b32.xlu0 %v10515, 127
      %v10622 = vpop.permute.xlu0 %10621
      %10623 = vrot.lane.b32.xlu0 %v10522, 127
      %v10624 = vpop.permute.xlu0 %10623
      %v10625 = vsel %vm3897, %v10622, %v10624
      %v10626 = vsel %vm3897, %v10624, %v10622
      %v10627 = vrot.slane %v10295, 5
      %v10628 = vrot.slane %v10296, 5
      %v10629 = vrot.slane %v10297, 5
      %v10630 = vrot.slane %v10298, 5
      %v10631 = vrot.slane %v10299, 5
      %v10632 = vrot.slane %v10300, 5
      %v10633 = vrot.slane %v10301, 5
      %v10634 = vrot.slane %v10302, 5
      %v10645 = vcombine.low %v10625, %v10626
      %v10646 = vcombine.high %v10625, %v10626
      %v10647 = vrot.slane %v10645, 5
      %v10648 = vrot.slane %v10645, 6
      %v10649 = vrot.slane %v10645, 7
      %v10650 = vrot.slane %v10646, 5
      %v10651 = vrot.slane %v10646, 6
      %v10652 = vrot.slane %v10646, 7
      %v10661 = vsel %vm2279, %v10627, %v10647
      %v10662 = vsel %vm2279, %v10628, %v10648
      %v10663 = vsel %vm2279, %v10629, %v10649
      %v10664 = vsel %vm2279, %v10630, %v10645
      %v10665 = vsel %vm2279, %v10631, %v10650
      %v10666 = vsel %vm2279, %v10632, %v10651
      %v10667 = vsel %vm2279, %v10633, %v10652
      %v10668 = vsel %vm2279, %v10634, %v10646
      %v10669 = vmul.f32 %v10661, 0.25
      %v10670 = vmul.f32 %v10662, 0.25
      %v10671 = vmul.f32 %v10663, 0.25
      %v10672 = vmul.f32 %v10664, 0.25
      %v10673 = vmul.f32 %v10665, 0.25
      %v10674 = vmul.f32 %v10666, 0.25
      %v10675 = vmul.f32 %v10667, 0.25
      %v10676 = vmul.f32 %v10668, 0.25
      %v10685 = vrot.slane %v10669, 7
      %v10686 = vrot.slane %v10685, 4
      %v10687 = vrot.slane %v10670, 7
      %v10688 = vrot.slane %v10687, 4
      %v10689 = vrot.slane %v10671, 7
      %v10690 = vrot.slane %v10689, 4
      %v10691 = vrot.slane %v10672, 7
      %v10692 = vrot.slane %v10691, 4
      %v10693 = vrot.slane %v10673, 7
      %v10694 = vrot.slane %v10693, 4
      %v10695 = vrot.slane %v10674, 7
      %v10696 = vrot.slane %v10695, 4
      %v10697 = vrot.slane %v10675, 7
      %v10698 = vrot.slane %v10697, 4
      %v10699 = vrot.slane %v10676, 7
      %v10700 = vrot.slane %v10699, 4
      %v10709 = vadd.f32 %v10581, %v10686
      %v10710 = vadd.f32 %v10582, %v10688
      %v10711 = vadd.f32 %v10583, %v10690
      %v10712 = vadd.f32 %v10584, %v10692
      %v10713 = vadd.f32 %v10585, %v10694
      %v10714 = vadd.f32 %v10586, %v10696
      %v10715 = vadd.f32 %v10587, %v10698
      %v10716 = vadd.f32 %v10588, %v10700
      %10717 = vrot.lane.b32.xlu0 %v10435, 1
      %v10718 = vpop.permute.xlu0 %10717
      %10719 = vrot.lane.b32.xlu0 %v10436, 1
      %v10720 = vpop.permute.xlu0 %10719
      %v10721 = vsel %vm3512, %v10718, %v10720
      %v10722 = vsel %vm3512, %v10720, %v10718
      %v10725 = vcombine.low %v10435, %v10436
      %v10726 = vcombine.high %v10435, %v10436
      %v10727 = vrot.slane %v10725, 6
      %v10728 = vrot.slane %v10725, 7
      %v10729 = vrot.slane %v10725, 1
      %v10730 = vrot.slane %v10726, 6
      %v10731 = vrot.slane %v10726, 7
      %v10732 = vrot.slane %v10726, 1
      %v10743 = vcombine.low %v10722, %v10721
      %v10744 = vcombine.high %v10722, %v10721
      %v10745 = vrot.slane %v10743, 6
      %v10746 = vrot.slane %v10743, 7
      %v10747 = vrot.slane %v10743, 1
      %v10748 = vrot.slane %v10744, 6
      %v10749 = vrot.slane %v10744, 7
      %v10750 = vrot.slane %v10744, 1
      %v10759 = vsel %vm2279, %v10727, %v10745
      %v10760 = vsel %vm2279, %v10728, %v10746
      %v10761 = vsel %vm2279, %v10725, %v10743
      %v10762 = vsel %vm2279, %v10729, %v10747
      %v10763 = vsel %vm2279, %v10730, %v10748
      %v10764 = vsel %vm2279, %v10731, %v10749
      %v10765 = vsel %vm2279, %v10726, %v10744
      %v10766 = vsel %vm2279, %v10732, %v10750
      %v10767 = vmul.f32 %v10759, 0.25
      %v10768 = vmul.f32 %v10760, 0.25
      %v10769 = vmul.f32 %v10761, 0.25
      %v10770 = vmul.f32 %v10762, 0.25
      %v10771 = vmul.f32 %v10763, 0.25
      %v10772 = vmul.f32 %v10764, 0.25
      %v10773 = vmul.f32 %v10765, 0.25
      %v10774 = vmul.f32 %v10766, 0.25
      %v10775 = vmul.f32 %v10435, 0.75
      %v10776 = vmul.f32 %v10436, 0.75
      %v10779 = vcombine.low %v10775, %v10776
      %v10780 = vcombine.high %v10775, %v10776
      %v10781 = vrot.slane %v10779, 6
      %v10782 = vrot.slane %v10779, 7
      %v10783 = vrot.slane %v10779, 1
      %v10784 = vrot.slane %v10780, 6
      %v10785 = vrot.slane %v10780, 7
      %v10786 = vrot.slane %v10780, 1
      %v10795 = vadd.f32 %v10767, %v10781
      %v10796 = vadd.f32 %v10768, %v10782
      %v10797 = vadd.f32 %v10769, %v10779
      %v10798 = vadd.f32 %v10770, %v10783
      %v10799 = vadd.f32 %v10771, %v10784
      %v10800 = vadd.f32 %v10772, %v10785
      %v10801 = vadd.f32 %v10773, %v10780
      %v10802 = vadd.f32 %v10774, %v10786
      %10803 = vrot.lane.b32.xlu0 %v10435, 127
      %v10804 = vpop.permute.xlu0 %10803
      %10805 = vrot.lane.b32.xlu0 %v10436, 127
      %v10806 = vpop.permute.xlu0 %10805
      %v10807 = vsel %vm3897, %v10804, %v10806
      %v10808 = vsel %vm3897, %v10806, %v10804
      %v10809 = vrot.slane %v10725, 5
      %v10810 = vrot.slane %v10726, 5
      %v10815 = vcombine.low %v10807, %v10808
      %v10816 = vcombine.high %v10807, %v10808
      %v10817 = vrot.slane %v10815, 5
      %v10818 = vrot.slane %v10815, 6
      %v10819 = vrot.slane %v10815, 7
      %v10820 = vrot.slane %v10816, 5
      %v10821 = vrot.slane %v10816, 6
      %v10822 = vrot.slane %v10816, 7
      %v10831 = vsel %vm2279, %v10809, %v10817
      %v10832 = vsel %vm2279, %v10727, %v10818
      %v10833 = vsel %vm2279, %v10728, %v10819
      %v10834 = vsel %vm2279, %v10725, %v10815
      %v10835 = vsel %vm2279, %v10810, %v10820
      %v10836 = vsel %vm2279, %v10730, %v10821
      %v10837 = vsel %vm2279, %v10731, %v10822
      %v10838 = vsel %vm2279, %v10726, %v10816
      %v10839 = vmul.f32 %v10831, 0.25
      %v10840 = vmul.f32 %v10832, 0.25
      %v10841 = vmul.f32 %v10833, 0.25
      %v10842 = vmul.f32 %v10834, 0.25
      %v10843 = vmul.f32 %v10835, 0.25
      %v10844 = vmul.f32 %v10836, 0.25
      %v10845 = vmul.f32 %v10837, 0.25
      %v10846 = vmul.f32 %v10838, 0.25
      %v10855 = vlaneseq
      %v10856 = vshrl.u32 %v10855, 7
      %v10857 = vsub.s32 3, %v10856
      %v10858 = vrot.slane %v10839, %v10857
      %v10859 = vlaneseq
      %v10860 = vshrl.u32 %v10859, 7
      %v10861 = vsub.s32 7, %v10860
      %v10862 = vrot.slane %v10839, %v10861
      %v10863 = vlaneseq
      %v10864 = vshrl.u32 %v10863, 7
      %v10865 = vsub.s32 3, %v10864
      %v10866 = vrot.slane %v10840, %v10865
      %v10867 = vlaneseq
      %v10868 = vshrl.u32 %v10867, 7
      %v10869 = vsub.s32 7, %v10868
      %v10870 = vrot.slane %v10840, %v10869
      %v10871 = vlaneseq
      %v10872 = vshrl.u32 %v10871, 7
      %v10873 = vsub.s32 3, %v10872
      %v10874 = vrot.slane %v10841, %v10873
      %v10875 = vlaneseq
      %v10876 = vshrl.u32 %v10875, 7
      %v10877 = vsub.s32 7, %v10876
      %v10878 = vrot.slane %v10841, %v10877
      %v10879 = vlaneseq
      %v10880 = vshrl.u32 %v10879, 7
      %v10881 = vsub.s32 3, %v10880
      %v10882 = vrot.slane %v10842, %v10881
      %v10883 = vlaneseq
      %v10884 = vshrl.u32 %v10883, 7
      %v10885 = vsub.s32 7, %v10884
      %v10886 = vrot.slane %v10842, %v10885
      %v10887 = vlaneseq
      %v10888 = vshrl.u32 %v10887, 7
      %v10889 = vsub.s32 3, %v10888
      %v10890 = vrot.slane %v10843, %v10889
      %v10891 = vlaneseq
      %v10892 = vshrl.u32 %v10891, 7
      %v10893 = vsub.s32 7, %v10892
      %v10894 = vrot.slane %v10843, %v10893
      %v10895 = vlaneseq
      %v10896 = vshrl.u32 %v10895, 7
      %v10897 = vsub.s32 3, %v10896
      %v10898 = vrot.slane %v10844, %v10897
      %v10899 = vlaneseq
      %v10900 = vshrl.u32 %v10899, 7
      %v10901 = vsub.s32 7, %v10900
      %v10902 = vrot.slane %v10844, %v10901
      %v10903 = vlaneseq
      %v10904 = vshrl.u32 %v10903, 7
      %v10905 = vsub.s32 3, %v10904
      %v10906 = vrot.slane %v10845, %v10905
      %v10907 = vlaneseq
      %v10908 = vshrl.u32 %v10907, 7
      %v10909 = vsub.s32 7, %v10908
      %v10910 = vrot.slane %v10845, %v10909
      %v10911 = vlaneseq
      %v10912 = vshrl.u32 %v10911, 7
      %v10913 = vsub.s32 3, %v10912
      %v10914 = vrot.slane %v10846, %v10913
      %v10915 = vlaneseq
      %v10916 = vshrl.u32 %v10915, 7
      %v10917 = vsub.s32 7, %v10916
      %v10918 = vrot.slane %v10846, %v10917
      %v10919 = vsel %vm3065, %v10866, %v10858
      %v10920 = vsel %vm3067, %v10874, %v10919
      %v10921 = vsel %vm3069, %v10882, %v10920
      %v10922 = vsel %vm3071, %v10890, %v10921
      %v10923 = vsel %vm3073, %v10898, %v10922
      %v10924 = vsel %vm3075, %v10906, %v10923
      %v10925 = vsel %vm3077, %v10914, %v10924
      %v10926 = vsel %vm3065, %v10870, %v10862
      %v10927 = vsel %vm3067, %v10878, %v10926
      %v10928 = vsel %vm3069, %v10886, %v10927
      %v10929 = vsel %vm3071, %v10894, %v10928
      %v10930 = vsel %vm3073, %v10902, %v10929
      %v10931 = vsel %vm3075, %v10910, %v10930
      %v10932 = vsel %vm3077, %v10918, %v10931
      %v10935 = vadd.f32 %v10775, %v10925
      %v10936 = vadd.f32 %v10776, %v10932
      %v10945 = vlaneseq
      %v10946 = vshrl.u32 %v10945, 7
      %v10947 = vsub.s32 2, %v10946
      %v10948 = vrot.slane %v10613, %v10947
      %v10949 = vlaneseq
      %v10950 = vshrl.u32 %v10949, 7
      %v10951 = vsub.s32 6, %v10950
      %v10952 = vrot.slane %v10613, %v10951
      %v10953 = vlaneseq
      %v10954 = vshrl.u32 %v10953, 7
      %v10955 = vsub.s32 2, %v10954
      %v10956 = vrot.slane %v10614, %v10955
      %v10957 = vlaneseq
      %v10958 = vshrl.u32 %v10957, 7
      %v10959 = vsub.s32 6, %v10958
      %v10960 = vrot.slane %v10614, %v10959
      %v10961 = vlaneseq
      %v10962 = vshrl.u32 %v10961, 7
      %v10963 = vsub.s32 2, %v10962
      %v10964 = vrot.slane %v10615, %v10963
      %v10965 = vlaneseq
      %v10966 = vshrl.u32 %v10965, 7
      %v10967 = vsub.s32 6, %v10966
      %v10968 = vrot.slane %v10615, %v10967
      %v10969 = vlaneseq
      %v10970 = vshrl.u32 %v10969, 7
      %v10971 = vsub.s32 2, %v10970
      %v10972 = vrot.slane %v10616, %v10971
      %v10973 = vlaneseq
      %v10974 = vshrl.u32 %v10973, 7
      %v10975 = vsub.s32 6, %v10974
      %v10976 = vrot.slane %v10616, %v10975
      %v10977 = vlaneseq
      %v10978 = vshrl.u32 %v10977, 7
      %v10979 = vsub.s32 2, %v10978
      %v10980 = vrot.slane %v10617, %v10979
      %v10981 = vlaneseq
      %v10982 = vshrl.u32 %v10981, 7
      %v10983 = vsub.s32 6, %v10982
      %v10984 = vrot.slane %v10617, %v10983
      %v10985 = vlaneseq
      %v10986 = vshrl.u32 %v10985, 7
      %v10987 = vsub.s32 2, %v10986
      %v10988 = vrot.slane %v10618, %v10987
      %v10989 = vlaneseq
      %v10990 = vshrl.u32 %v10989, 7
      %v10991 = vsub.s32 6, %v10990
      %v10992 = vrot.slane %v10618, %v10991
      %v10993 = vlaneseq
      %v10994 = vshrl.u32 %v10993, 7
      %v10995 = vsub.s32 2, %v10994
      %v10996 = vrot.slane %v10619, %v10995
      %v10997 = vlaneseq
      %v10998 = vshrl.u32 %v10997, 7
      %v10999 = vsub.s32 6, %v10998
      %v11000 = vrot.slane %v10619, %v10999
      %v11001 = vlaneseq
      %v11002 = vshrl.u32 %v11001, 7
      %v11003 = vsub.s32 2, %v11002
      %v11004 = vrot.slane %v10620, %v11003
      %v11005 = vlaneseq
      %v11006 = vshrl.u32 %v11005, 7
      %v11007 = vsub.s32 6, %v11006
      %v11008 = vrot.slane %v10620, %v11007
      %v11009 = vsel %vm3069, %v10956, %v10948
      %v11010 = vsel %vm3071, %v10964, %v11009
      %v11011 = vsel %vm3073, %v10972, %v11010
      %v11012 = vsel %vm3075, %v10980, %v11011
      %v11013 = vsel %vm3077, %v10988, %v11012
      %v11014 = vsel %vm3069, %v10960, %v10952
      %v11015 = vsel %vm3071, %v10968, %v11014
      %v11016 = vsel %vm3073, %v10976, %v11015
      %v11017 = vsel %vm3075, %v10984, %v11016
      %v11018 = vsel %vm3077, %v10992, %v11017
      %v11019 = vsel %vm3065, %v11004, %v10996
      %v11020 = vsel %vm3065, %v11008, %v11000
      %v11029 = vlaneseq
      %v11030 = vshrl.u32 %v11029, 7
      %v11031 = vsub.s32 0, %v11030
      %v11032 = vrot.slane %v10709, %v11031
      %v11033 = vlaneseq
      %v11034 = vshrl.u32 %v11033, 7
      %v11035 = vsub.s32 4, %v11034
      %v11036 = vrot.slane %v10709, %v11035
      %v11037 = vlaneseq
      %v11038 = vshrl.u32 %v11037, 7
      %v11039 = vsub.s32 0, %v11038
      %v11040 = vrot.slane %v10710, %v11039
      %v11041 = vlaneseq
      %v11042 = vshrl.u32 %v11041, 7
      %v11043 = vsub.s32 4, %v11042
      %v11044 = vrot.slane %v10710, %v11043
      %v11045 = vlaneseq
      %v11046 = vshrl.u32 %v11045, 7
      %v11047 = vsub.s32 0, %v11046
      %v11048 = vrot.slane %v10711, %v11047
      %v11049 = vlaneseq
      %v11050 = vshrl.u32 %v11049, 7
      %v11051 = vsub.s32 4, %v11050
      %v11052 = vrot.slane %v10711, %v11051
      %v11053 = vlaneseq
      %v11054 = vshrl.u32 %v11053, 7
      %v11055 = vsub.s32 0, %v11054
      %v11056 = vrot.slane %v10712, %v11055
      %v11057 = vlaneseq
      %v11058 = vshrl.u32 %v11057, 7
      %v11059 = vsub.s32 4, %v11058
      %v11060 = vrot.slane %v10712, %v11059
      %v11061 = vlaneseq
      %v11062 = vshrl.u32 %v11061, 7
      %v11063 = vsub.s32 0, %v11062
      %v11064 = vrot.slane %v10713, %v11063
      %v11065 = vlaneseq
      %v11066 = vshrl.u32 %v11065, 7
      %v11067 = vsub.s32 4, %v11066
      %v11068 = vrot.slane %v10713, %v11067
      %v11069 = vlaneseq
      %v11070 = vshrl.u32 %v11069, 7
      %v11071 = vsub.s32 0, %v11070
      %v11072 = vrot.slane %v10714, %v11071
      %v11073 = vlaneseq
      %v11074 = vshrl.u32 %v11073, 7
      %v11075 = vsub.s32 4, %v11074
      %v11076 = vrot.slane %v10714, %v11075
      %v11077 = vlaneseq
      %v11078 = vshrl.u32 %v11077, 7
      %v11079 = vsub.s32 0, %v11078
      %v11080 = vrot.slane %v10715, %v11079
      %v11081 = vlaneseq
      %v11082 = vshrl.u32 %v11081, 7
      %v11083 = vsub.s32 4, %v11082
      %v11084 = vrot.slane %v10715, %v11083
      %v11085 = vlaneseq
      %v11086 = vshrl.u32 %v11085, 7
      %v11087 = vsub.s32 0, %v11086
      %v11088 = vrot.slane %v10716, %v11087
      %v11089 = vlaneseq
      %v11090 = vshrl.u32 %v11089, 7
      %v11091 = vsub.s32 4, %v11090
      %v11092 = vrot.slane %v10716, %v11091
      %v11093 = vsel %vm3069, %v11040, %v11032
      %v11094 = vsel %vm3071, %v11048, %v11093
      %v11095 = vsel %vm3073, %v11056, %v11094
      %v11096 = vsel %vm3075, %v11064, %v11095
      %v11097 = vsel %vm3077, %v11072, %v11096
      %v11098 = vsel %vm3069, %v11044, %v11036
      %v11099 = vsel %vm3071, %v11052, %v11098
      %v11100 = vsel %vm3073, %v11060, %v11099
      %v11101 = vsel %vm3075, %v11068, %v11100
      %v11102 = vsel %vm3077, %v11076, %v11101
      %v11103 = vsel %vm3065, %v11088, %v11080
      %v11104 = vsel %vm3065, %v11092, %v11084
      %v11113 = vlaneseq
      %v11114 = vshrl.u32 %v11113, 7
      %v11115 = vsub.s32 2, %v11114
      %v11116 = vrot.slane %v10795, %v11115
      %v11117 = vlaneseq
      %v11118 = vshrl.u32 %v11117, 7
      %v11119 = vsub.s32 6, %v11118
      %v11120 = vrot.slane %v10795, %v11119
      %v11121 = vlaneseq
      %v11122 = vshrl.u32 %v11121, 7
      %v11123 = vsub.s32 2, %v11122
      %v11124 = vrot.slane %v10796, %v11123
      %v11125 = vlaneseq
      %v11126 = vshrl.u32 %v11125, 7
      %v11127 = vsub.s32 6, %v11126
      %v11128 = vrot.slane %v10796, %v11127
      %v11129 = vlaneseq
      %v11130 = vshrl.u32 %v11129, 7
      %v11131 = vsub.s32 2, %v11130
      %v11132 = vrot.slane %v10797, %v11131
      %v11133 = vlaneseq
      %v11134 = vshrl.u32 %v11133, 7
      %v11135 = vsub.s32 6, %v11134
      %v11136 = vrot.slane %v10797, %v11135
      %v11137 = vlaneseq
      %v11138 = vshrl.u32 %v11137, 7
      %v11139 = vsub.s32 2, %v11138
      %v11140 = vrot.slane %v10798, %v11139
      %v11141 = vlaneseq
      %v11142 = vshrl.u32 %v11141, 7
      %v11143 = vsub.s32 6, %v11142
      %v11144 = vrot.slane %v10798, %v11143
      %v11145 = vlaneseq
      %v11146 = vshrl.u32 %v11145, 7
      %v11147 = vsub.s32 2, %v11146
      %v11148 = vrot.slane %v10799, %v11147
      %v11149 = vlaneseq
      %v11150 = vshrl.u32 %v11149, 7
      %v11151 = vsub.s32 6, %v11150
      %v11152 = vrot.slane %v10799, %v11151
      %v11153 = vlaneseq
      %v11154 = vshrl.u32 %v11153, 7
      %v11155 = vsub.s32 2, %v11154
      %v11156 = vrot.slane %v10800, %v11155
      %v11157 = vlaneseq
      %v11158 = vshrl.u32 %v11157, 7
      %v11159 = vsub.s32 6, %v11158
      %v11160 = vrot.slane %v10800, %v11159
      %v11161 = vlaneseq
      %v11162 = vshrl.u32 %v11161, 7
      %v11163 = vsub.s32 2, %v11162
      %v11164 = vrot.slane %v10801, %v11163
      %v11165 = vlaneseq
      %v11166 = vshrl.u32 %v11165, 7
      %v11167 = vsub.s32 6, %v11166
      %v11168 = vrot.slane %v10801, %v11167
      %v11169 = vlaneseq
      %v11170 = vshrl.u32 %v11169, 7
      %v11171 = vsub.s32 2, %v11170
      %v11172 = vrot.slane %v10802, %v11171
      %v11173 = vlaneseq
      %v11174 = vshrl.u32 %v11173, 7
      %v11175 = vsub.s32 6, %v11174
      %v11176 = vrot.slane %v10802, %v11175
      %v11177 = vsel %vm3069, %v11124, %v11116
      %v11178 = vsel %vm3071, %v11132, %v11177
      %v11179 = vsel %vm3073, %v11140, %v11178
      %v11180 = vsel %vm3075, %v11148, %v11179
      %v11181 = vsel %vm3077, %v11156, %v11180
      %v11182 = vsel %vm3069, %v11128, %v11120
      %v11183 = vsel %vm3071, %v11136, %v11182
      %v11184 = vsel %vm3073, %v11144, %v11183
      %v11185 = vsel %vm3075, %v11152, %v11184
      %v11186 = vsel %vm3077, %v11160, %v11185
      %v11187 = vsel %vm3065, %v11172, %v11164
      %v11188 = vsel %vm3065, %v11176, %v11168
      %v11191 = vrot.slane %v10935, 6
      %v11192 = vrot.slane %v10936, 6
      %vm11193 = vcmask 1045504
      %v11194 = vrot.slane %v11013, 2
      %v11195 = vrot.slane %v11019, 2
      %v11196 = vsel %vm11193, %v11194, %v11195
      %v11197 = vrot.slane %v11018, 2
      %v11198 = vrot.slane %v11020, 2
      %v11199 = vsel %vm11193, %v11197, %v11198
      %v11200 = vrot.slane %v11097, 2
      %v11201 = vrot.slane %v11103, 2
      %v11202 = vsel %vm11193, %v11200, %v11201
      %v11203 = vrot.slane %v11102, 2
      %v11204 = vrot.slane %v11104, 2
      %v11205 = vsel %vm11193, %v11203, %v11204
      %v11206 = vrot.slane %v11181, 2
      %v11207 = vrot.slane %v11187, 2
      %v11208 = vsel %vm11193, %v11206, %v11207
      %v11209 = vrot.slane %v11186, 2
      %v11210 = vrot.slane %v11188, 2
      %v11211 = vsel %vm11193, %v11209, %v11210
      %v11212 = vrot.slane %v11191, 2
      %v11213 = vsel %vm11193, %v11212, %v11212
      %v11214 = vrot.slane %v11192, 2
      %v11215 = vsel %vm11193, %v11214, %v11214
      %v11224 = vadd.f32 %v10088, %v11196
      %v11225 = vadd.f32 %v10090, %v11199
      %v11226 = vadd.f32 %v10129, %v11202
      %v11227 = vadd.f32 %v10131, %v11205
      %v11228 = vadd.f32 %v10170, %v11208
      %v11229 = vadd.f32 %v10172, %v11211
      %v11230 = vadd.f32 %v10211, %v11213
      %v11231 = vadd.f32 %v10213, %v11215
      %11232 = vst [vmem:[%s548] sm:$0xff] %v11224
      %11233 = vst [vmem:[%s548 + $0x8] sm:$0xff] %v11225
      %11234 = vst [vmem:[%s548 + $0x10] sm:$0xff] %v11226
      %11235 = vst [vmem:[%s548 + $0x18] sm:$0xff] %v11227
      %11236 = vst [vmem:[%s548 + $0x20] sm:$0xff] %v11228
      %11237 = vst [vmem:[%s548 + $0x28] sm:$0xff] %v11229
      %11238 = vst [vmem:[%s548 + $0x30] sm:$0xff] %v11230
      %11239 = vst [vmem:[%s548 + $0x38] sm:$0xff] %v11231
      %p11240 = scmp.lt.s32.totalorder %s28, 1
      %s11241 = scalar_select %p11240, %s28, 1
      %s11242 = smul.addr %s11241, 8
      %s11243 = smul.addr %s11242, 8
      %s11244 = scalar_lea.vmem %s17, %s11243
      // Predicated region
      $region96: #{srscnet_forward.1} parent=87 // pred_check
        %p11245 = pneg %p408
      $region97: #{srscnet_forward.1} parent=87 // pred_check_branch
        %11247 = sbr.rel (%p11245) target = $region99
      $region98: #{srscnet_forward.1} parent=87 // pred_region
        _
      $region99: #{srscnet_forward.1} parent=87 // pred_fallthru
        _
    $region88: #{srscnet_forward.1} parent=5 // pred_fallthru
      _
    %p11248 = scmp.le.s32.totalorder 2, %s23
    // Predicated region
    $region100: #{srscnet_forward.1} parent=5 // pred_check
      %p11249 = pneg %p11248
    $region101: #{srscnet_forward.1} parent=5 // pred_check_branch
      %11251 = sbr.rel (%p11249) target = $region103
    $region102: #{srscnet_forward.1} parent=5 // pred_region
      %s11252 = ssub.s32 %s23, 2
      // Predicated region
      $region104: #{srscnet_forward.1} parent=102 // pred_check
        %p11253 = pneg %p414
      $region105: #{srscnet_forward.1} parent=102 // pred_check_branch
        %11255 = sbr.rel (%p11253) target = $region107
      $region106: #{srscnet_forward.1} parent=102 // pred_region
        %p11256 = scmp.lt.s32.totalorder %s29, 1
        %s11257 = scalar_select %p11256, %s29, 1
        %s11258 = smul.addr %s11257, 8
        %s11259 = smul.addr %s11258, 8
        %s11260 = scalar_lea.vmem %s17, %s11259
      $region107: #{srscnet_forward.1} parent=102 // pred_fallthru
        _
    $region103: #{srscnet_forward.1} parent=5 // pred_fallthru
      _
  $region6: #{srscnet_forward.1} parent=0 // loop_footer
    %s27 = sadd.s32 1, %s23
  $region7: #{srscnet_forward.1} parent=0 // loop_footer_branch
    %22 = sbr.rel target = $region3
  $region8: #{srscnet_forward.1} parent=0 // loop_exit
    _

</llo_original>
